<compile_context>
chip_gen: v7x
topology: tpu7x:2x2x1
jax: 0.10.0
libtpu: 0.0.40
codegen_flags: <defaults>
</compile_context>

<pallas_src>
import jax
import jax.numpy as jnp
from jax.experimental import pallas as pl
from jax.experimental.pallas import tpu as pltpu

IN_FEATURES = 128 * 28   # 3584
H1 = 1024
H2 = 256
TK = 1792                # fc1 reduction tile: 3584 / 1792 = 2 grid steps


def hnet_kernel(x_ref, w1_ref, b1_ref, w2_ref, b2_ref, w3_ref, b3_ref,
                probs_ref, logits_ref, acc_ref):
    """Grid axis 0 tiles the fc1 reduction (K = 3584). Only W1 is streamed."""
    k = pl.program_id(0)

    @pl.when(k == 0)
    def _():
        acc_ref[...] = jnp.zeros_like(acc_ref)

    # fc1 partial: (B, TK) bf16 @ (TK, H1) bf16 -> f32 accumulator on the MXU.
    start = pl.multiple_of(k * TK, TK)
    x_tile = x_ref[:, pl.ds(start, TK)]
    acc_ref[...] += jnp.dot(x_tile, w1_ref[...],
                            preferred_element_type=jnp.float32)

    @pl.when(k == pl.num_programs(0) - 1)
    def _():
        # fc1 bias + (dropout = identity in eval) + relu
        h1 = jnp.maximum(acc_ref[...] + b1_ref[...], 0.0)            # (B, H1) f32
        h1 = h1.astype(jnp.bfloat16)
        # fc2 + (dropout = identity) + relu
        h2 = jnp.dot(h1, w2_ref[...], preferred_element_type=jnp.float32)
        h2 = jnp.maximum(h2 + b2_ref[...], 0.0)                       # (B, H2) f32
        # fc3: out_features == 1 -> lane reduction instead of a (H2, 1) matmul.
        logits = (jnp.sum(h2 * w3_ref[...].astype(jnp.float32),
                          axis=-1, keepdims=True)
                  + b3_ref[...])                                      # (B, 1)
        logits_ref[...] = logits
        # softmax over the size-1 feature axis (F.softmax legacy dim=1)
        e = jnp.exp(logits - jnp.max(logits, axis=-1, keepdims=True))
        probs_ref[...] = e / jnp.sum(e, axis=-1, keepdims=True)


def hnet_forward(x, w1, b1, w2, b2, w3, b3):
    B_in, K = x.shape
    assert K == IN_FEATURES and K % TK == 0
    n_k = K // TK

    # Pad batch to a sublane multiple (8 for f32 accumulator rows).
    B = max(8, ((B_in + 7) // 8) * 8)
    if B != B_in:
        x = jnp.pad(x, ((0, B - B_in), (0, 0)))

    x = x.astype(jnp.bfloat16)
    w1 = w1.astype(jnp.bfloat16)
    w2 = w2.astype(jnp.bfloat16)
    w3 = w3.astype(jnp.bfloat16)
    b1 = b1.astype(jnp.float32)
    b2 = b2.astype(jnp.float32)
    b3 = b3.astype(jnp.float32)

    const = dict(pipeline_mode=pl.Buffered(1))   # never changes across grid steps

    probs, logits = pl.pallas_call(
        hnet_kernel,
        out_shape=(jax.ShapeDtypeStruct((B, 1), jnp.float32),
                   jax.ShapeDtypeStruct((B, 1), jnp.float32)),
        grid_spec=pltpu.PrefetchScalarGridSpec(
            num_scalar_prefetch=0,
            grid=(n_k,),
            in_specs=[
                pl.BlockSpec((B, K), lambda k: (0, 0), **const),    # x resident
                pl.BlockSpec((TK, H1), lambda k: (k, 0)),           # W1 streamed
                pl.BlockSpec((1, H1), lambda k: (0, 0), **const),   # b1
                pl.BlockSpec((H1, H2), lambda k: (0, 0), **const),  # W2 resident
                pl.BlockSpec((1, H2), lambda k: (0, 0), **const),   # b2
                pl.BlockSpec((1, H2), lambda k: (0, 0), **const),   # W3 row vector
                pl.BlockSpec((1, 1), lambda k: (0, 0), **const),    # b3
            ],
            out_specs=[
                pl.BlockSpec((B, 1), lambda k: (0, 0)),             # softmax output
                pl.BlockSpec((B, 1), lambda k: (0, 0)),             # pre-softmax logits
            ],
            scratch_shapes=[pltpu.VMEM((B, H1), jnp.float32)],
        ),
        compiler_params=pltpu.CompilerParams(
            dimension_semantics=("arbitrary",),
            vmem_limit_bytes=32 << 20,
        ),
    )(x, w1, b1, w2, b2, w3, b3)

    if B != B_in:
        probs = probs[:B_in]
        logits = logits[:B_in]
    return probs, logits


def init_params(key):
    """Deterministic synthetic parameters matching nn.Linear shapes (weights bf16)."""
    k1, k2, k3, k4, k5, k6 = jax.random.split(key, 6)
    # Stored as (in, out); equivalent to PyTorch weight.T
    w1 = (jax.random.normal(k1, (IN_FEATURES, H1), jnp.float32) * 0.02).astype(jnp.bfloat16)
    b1 = jax.random.normal(k2, (1, H1), jnp.float32) * 0.02
    w2 = (jax.random.normal(k3, (H1, H2), jnp.float32) * 0.02).astype(jnp.bfloat16)
    b2 = jax.random.normal(k4, (1, H2), jnp.float32) * 0.02
    w3 = (jax.random.normal(k5, (1, H2), jnp.float32) * 0.02).astype(jnp.bfloat16)  # fc3 weight (1, 256)
    b3 = jax.random.normal(k6, (1, 1), jnp.float32) * 0.02
    return w1, b1, w2, b2, w3, b3


def reference_forward(x_bf16, w1, b1, w2, b2, w3, b3):
    """Pure-JAX reference mirroring the kernel's precision choices."""
    f32 = jnp.float32
    h1 = jnp.maximum(jnp.dot(x_bf16.astype(f32), w1.astype(f32)) + b1, 0.0)  # dropout = identity
    h1 = h1.astype(jnp.bfloat16)
    h2 = jnp.maximum(jnp.dot(h1.astype(f32), w2.astype(f32)) + b2, 0.0)
    logits = jnp.sum(h2 * w3.astype(f32), axis=-1, keepdims=True) + b3        # (B, 1)
    probs = jax.nn.softmax(logits, axis=-1)
    return probs, logits


if __name__ == "__main__":
    key = jax.random.PRNGKey(0)
    kx, kp = jax.random.split(key)

    B = 8  # f32 sublane tile wants B a multiple of 8 (wrapper also pads if not)
    x = jax.random.normal(kx, (B, IN_FEATURES), jnp.float32).astype(jnp.bfloat16)
    params = init_params(kp)

    probs, logits = hnet_forward(x, *params)
    probs = jax.block_until_ready(probs)
    logits = jax.block_until_ready(logits)

    ref_probs, ref_logits = reference_forward(x, *params)

    assert probs.shape == (B, 1) and logits.shape == (B, 1)
    # softmax over a width-1 head is identically 1 — check it, but validate the
    # matmul/accumulation path on the pre-softmax logits.
    assert jnp.allclose(probs, ref_probs, atol=1e-6), (probs, ref_probs)
    assert jnp.allclose(logits, ref_logits, atol=1e-2, rtol=1e-2), (logits, ref_logits)

    print("KERNEL_OK")
</pallas_src>

<mosaic_0001>
module attributes {stable_mosaic.version = 11 : i64} {
  func.func @hnet_kernel(%arg0: i32, %arg1: memref<8x3584xbf16, #tpu.memory_space<vmem>>, %arg2: memref<1792x1024xbf16, #tpu.memory_space<vmem>>, %arg3: memref<1x1024xf32, #tpu.memory_space<vmem>>, %arg4: memref<1024x256xbf16, #tpu.memory_space<vmem>>, %arg5: memref<1x256xf32, #tpu.memory_space<vmem>>, %arg6: memref<1x256xbf16, #tpu.memory_space<vmem>>, %arg7: memref<1x1xf32, #tpu.memory_space<vmem>>, %arg8: memref<8x1xf32, #tpu.memory_space<vmem>>, %arg9: memref<8x1xf32, #tpu.memory_space<vmem>>, %arg10: memref<8x1024xf32, #tpu.memory_space<vmem>>) attributes {dimension_semantics = [#tpu.dimension_semantics<arbitrary>], iteration_bounds = array<i64: 2>, scalar_prefetch = 0 : i64, scratch_operands = 1 : i64, tpu.core_type = #tpu.core_type<tc>, window_params = [{pipeline_mode = #tpu.pipeline_mode<synchronous>, transform_indices = @transform_0, window_bounds = array<i64: 8, 3584>}, {transform_indices = @transform_1, window_bounds = array<i64: 1792, 1024>}, {pipeline_mode = #tpu.pipeline_mode<synchronous>, transform_indices = @transform_2, window_bounds = array<i64: 1, 1024>}, {pipeline_mode = #tpu.pipeline_mode<synchronous>, transform_indices = @transform_3, window_bounds = array<i64: 1024, 256>}, {pipeline_mode = #tpu.pipeline_mode<synchronous>, transform_indices = @transform_4, window_bounds = array<i64: 1, 256>}, {pipeline_mode = #tpu.pipeline_mode<synchronous>, transform_indices = @transform_5, window_bounds = array<i64: 1, 256>}, {pipeline_mode = #tpu.pipeline_mode<synchronous>, transform_indices = @transform_6, window_bounds = array<i64: 1, 1>}, {pipeline_mode = #tpu.pipeline_mode<synchronous>, transform_indices = @transform_7, window_bounds = array<i64: 8, 1>}, {pipeline_mode = #tpu.pipeline_mode<synchronous>, transform_indices = @transform_8, window_bounds = array<i64: 8, 1>}]} {
    %c0_i32 = arith.constant 0 : i32
    %0 = arith.cmpi eq, %arg0, %c0_i32 : i32
    %1 = arith.extui %0 : i1 to i32
    %c0_i32_0 = arith.constant 0 : i32
    %2 = arith.cmpi ne, %1, %c0_i32_0 : i32
    scf.if %2 {
      %cst_8 = arith.constant 0.000000e+00 : f32
      %15 = vector.broadcast %cst_8 : f32 to vector<8x1024xf32>
      %c0_9 = arith.constant 0 : index
      %c0_10 = arith.constant 0 : index
      %16 = vector.load %arg10[%c0_9, %c0_10] : memref<8x1024xf32, #tpu.memory_space<vmem>>, vector<8x1024xf32>
      tpu.vector_store %arg10[%c0_9, %c0_10], %15 {strides = array<i32>} : memref<8x1024xf32, #tpu.memory_space<vmem>>, vector<8x1024xf32>,
    } else {
    }
    %c1792_i32 = arith.constant 1792 : i32
    %3 = arith.muli %arg0, %c1792_i32 : i32
    %4 = tpu.assume_multiple %3, 1792 : i32
    %c0 = arith.constant 0 : index
    %5 = arith.index_cast %4 : i32 to index
    %6 = vector.load %arg1[%c0, %5] : memref<8x3584xbf16, #tpu.memory_space<vmem>>, vector<8x1792xbf16>
    %c0_1 = arith.constant 0 : index
    %c0_2 = arith.constant 0 : index
    %7 = vector.load %arg10[%c0_1, %c0_2] : memref<8x1024xf32, #tpu.memory_space<vmem>>, vector<8x1024xf32>
    %c0_3 = arith.constant 0 : index
    %c0_4 = arith.constant 0 : index
    %8 = vector.load %arg2[%c0_3, %c0_4] : memref<1792x1024xbf16, #tpu.memory_space<vmem>>, vector<1792x1024xbf16>
    %cst = arith.constant dense<0.000000e+00> : vector<8x1024xf32>
    %9 = tpu.matmul %6, %8, %cst {dimension_numbers = #tpu.dot_dimension_numbers<[1], [0], [0], [1], [0, 0, 1, 1], [], []>} : vector<8x1792xbf16>, vector<1792x1024xbf16>, vector<8x1024xf32> -> vector<8x1024xf32>
    %10 = arith.addf %7, %9 : vector<8x1024xf32>
    %c0_5 = arith.constant 0 : index
    %c0_6 = arith.constant 0 : index
    %11 = vector.load %arg10[%c0_5, %c0_6] : memref<8x1024xf32, #tpu.memory_space<vmem>>, vector<8x1024xf32>
    tpu.vector_store %arg10[%c0_5, %c0_6], %10 {strides = array<i32>} : memref<8x1024xf32, #tpu.memory_space<vmem>>, vector<8x1024xf32>,
    %c1_i32 = arith.constant 1 : i32
    %12 = arith.cmpi eq, %arg0, %c1_i32 : i32
    %13 = arith.extui %12 : i1 to i32
    %c0_i32_7 = arith.constant 0 : i32
    %14 = arith.cmpi ne, %13, %c0_i32_7 : i32
    scf.if %14 {
      %c0_8 = arith.constant 0 : index
      %c0_9 = arith.constant 0 : index
      %15 = vector.load %arg10[%c0_8, %c0_9] : memref<8x1024xf32, #tpu.memory_space<vmem>>, vector<8x1024xf32>
      %c0_10 = arith.constant 0 : index
      %c0_11 = arith.constant 0 : index
      %16 = vector.load %arg3[%c0_10, %c0_11] : memref<1x1024xf32, #tpu.memory_space<vmem>>, vector<1x1024xf32>
      %17 = vector.broadcast %16 : vector<1x1024xf32> to vector<8x1024xf32>
      %18 = arith.addf %15, %17 : vector<8x1024xf32>
      %cst_12 = arith.constant 0.000000e+00 : f32
      %19 = vector.broadcast %cst_12 : f32 to vector<8x1024xf32>
      %20 = arith.maximumf %18, %19 : vector<8x1024xf32>
      %21 = arith.truncf %20 : vector<8x1024xf32> to vector<8x1024xbf16>
      %c0_13 = arith.constant 0 : index
      %c0_14 = arith.constant 0 : index
      %22 = vector.load %arg4[%c0_13, %c0_14] : memref<1024x256xbf16, #tpu.memory_space<vmem>>, vector<1024x256xbf16>
      %cst_15 = arith.constant dense<0.000000e+00> : vector<8x256xf32>
      %23 = tpu.matmul %21, %22, %cst_15 {dimension_numbers = #tpu.dot_dimension_numbers<[1], [0], [0], [1], [0, 0, 1, 1], [], []>} : vector<8x1024xbf16>, vector<1024x256xbf16>, vector<8x256xf32> -> vector<8x256xf32>
      %c0_16 = arith.constant 0 : index
      %c0_17 = arith.constant 0 : index
      %24 = vector.load %arg5[%c0_16, %c0_17] : memref<1x256xf32, #tpu.memory_space<vmem>>, vector<1x256xf32>
      %25 = vector.broadcast %24 : vector<1x256xf32> to vector<8x256xf32>
      %26 = arith.addf %23, %25 : vector<8x256xf32>
      %cst_18 = arith.constant 0.000000e+00 : f32
      %27 = vector.broadcast %cst_18 : f32 to vector<8x256xf32>
      %28 = arith.maximumf %26, %27 : vector<8x256xf32>
      %c0_19 = arith.constant 0 : index
      %c0_20 = arith.constant 0 : index
      %29 = vector.load %arg6[%c0_19, %c0_20] : memref<1x256xbf16, #tpu.memory_space<vmem>>, vector<1x256xbf16>
      %30 = arith.extf %29 : vector<1x256xbf16> to vector<1x256xf32>
      %31 = vector.broadcast %30 : vector<1x256xf32> to vector<8x256xf32>
      %32 = arith.mulf %28, %31 : vector<8x256xf32>
      %cst_21 = arith.constant dense<0.000000e+00> : vector<8xf32>
      %33 = vector.multi_reduction <add>, %32, %cst_21 [1] : vector<8x256xf32> to vector<8xf32>
      %34 = vector.shape_cast %33 : vector<8xf32> to vector<8x1xf32>
      %c0_22 = arith.constant 0 : index
      %c0_23 = arith.constant 0 : index
      %35 = vector.load %arg7[%c0_22, %c0_23] : memref<1x1xf32, #tpu.memory_space<vmem>>, vector<1x1xf32>
      %36 = vector.broadcast %35 : vector<1x1xf32> to vector<8x1xf32>
      %37 = arith.addf %34, %36 : vector<8x1xf32>
      %c0_24 = arith.constant 0 : index
      %c0_25 = arith.constant 0 : index
      %38 = vector.load %arg9[%c0_24, %c0_25] : memref<8x1xf32, #tpu.memory_space<vmem>>, vector<8x1xf32>
      tpu.vector_store %arg9[%c0_24, %c0_25], %37 {strides = array<i32>} : memref<8x1xf32, #tpu.memory_space<vmem>>, vector<8x1xf32>,
      %cst_26 = arith.constant dense<0xFF800000> : vector<8xf32>
      %39 = vector.multi_reduction <maximumf>, %37, %cst_26 [1] : vector<8x1xf32> to vector<8xf32>
      %40 = vector.shape_cast %39 : vector<8xf32> to vector<8x1xf32>
      %41 = arith.subf %37, %40 : vector<8x1xf32>
      %42 = math.exp %41 : vector<8x1xf32>
      %cst_27 = arith.constant dense<0.000000e+00> : vector<8xf32>
      %43 = vector.multi_reduction <add>, %42, %cst_27 [1] : vector<8x1xf32> to vector<8xf32>
      %44 = vector.shape_cast %43 : vector<8xf32> to vector<8x1xf32>
      %45 = arith.divf %42, %44 : vector<8x1xf32>
      %c0_28 = arith.constant 0 : index
      %c0_29 = arith.constant 0 : index
      %46 = vector.load %arg8[%c0_28, %c0_29] : memref<8x1xf32, #tpu.memory_space<vmem>>, vector<8x1xf32>
      tpu.vector_store %arg8[%c0_28, %c0_29], %45 {strides = array<i32>} : memref<8x1xf32, #tpu.memory_space<vmem>>, vector<8x1xf32>,
    } else {
    }
    return
  }
  func.func @transform_0(%arg0: i32) -> (i32, i32) {
    %c0_i32 = arith.constant 0 : i32
    %c0_i32_0 = arith.constant 0 : i32
    %c0_i32_1 = arith.constant 0 : i32
    return %c0_i32, %c0_i32_0 : i32, i32
  }
  func.func @transform_1(%arg0: i32) -> (i32, i32) {
    %c0_i32 = arith.constant 0 : i32
    %c0_i32_0 = arith.constant 0 : i32
    return %arg0, %c0_i32 : i32, i32
  }
  func.func @transform_2(%arg0: i32) -> (i32, i32) {
    %c0_i32 = arith.constant 0 : i32
    %c0_i32_0 = arith.constant 0 : i32
    %c0_i32_1 = arith.constant 0 : i32
    return %c0_i32, %c0_i32_0 : i32, i32
  }
  func.func @transform_3(%arg0: i32) -> (i32, i32) {
    %c0_i32 = arith.constant 0 : i32
    %c0_i32_0 = arith.constant 0 : i32
    %c0_i32_1 = arith.constant 0 : i32
    return %c0_i32, %c0_i32_0 : i32, i32
  }
  func.func @transform_4(%arg0: i32) -> (i32, i32) {
    %c0_i32 = arith.constant 0 : i32
    %c0_i32_0 = arith.constant 0 : i32
    %c0_i32_1 = arith.constant 0 : i32
    return %c0_i32, %c0_i32_0 : i32, i32
  }
  func.func @transform_5(%arg0: i32) -> (i32, i32) {
    %c0_i32 = arith.constant 0 : i32
    %c0_i32_0 = arith.constant 0 : i32
    %c0_i32_1 = arith.constant 0 : i32
    return %c0_i32, %c0_i32_0 : i32, i32
  }
  func.func @transform_6(%arg0: i32) -> (i32, i32) {
    %c0_i32 = arith.constant 0 : i32
    %c0_i32_0 = arith.constant 0 : i32
    %c0_i32_1 = arith.constant 0 : i32
    return %c0_i32, %c0_i32_0 : i32, i32
  }
  func.func @transform_7(%arg0: i32) -> (i32, i32) {
    %c0_i32 = arith.constant 0 : i32
    %c0_i32_0 = arith.constant 0 : i32
    %c0_i32_1 = arith.constant 0 : i32
    return %c0_i32, %c0_i32_0 : i32, i32
  }
  func.func @transform_8(%arg0: i32) -> (i32, i32) {
    %c0_i32 = arith.constant 0 : i32
    %c0_i32_0 = arith.constant 0 : i32
    %c0_i32_1 = arith.constant 0 : i32
    return %c0_i32, %c0_i32_0 : i32, i32
  }
}

</mosaic_0001>

<llo_original>
// kernel: tpu_custom_call.1
$region0: #{tpu_custom_call.1}
  #allocation0 [shape = 'u32[]', space=smem, size = 0x4, offset = 0x4, fixed_abs, tag = 'smem constant byte address 0x4 - core index']
  #allocation1 [shape = 'u32[144,128]{1,0:T(1,128)}', space=vmem, size = 0x12000, scoped, tag = 'internal scratch']
  #allocation2 [shape = 'f32[8,1024]{1,0:T(8,128)}', space=vmem, size = 0x8000, scoped, tag = 'scratch operand']
  #allocation3 [shape = 'f32[1,1]{1,0:T(1,128)S(1)}', space=vmem, size = 0x200, scoped, tag = 'scoped memory for tpu_custom_call.1']
  %s0 = inlined_call_operand.hbm [shape: bf16[8,3584], index: 0, kind: input, shape index: {}]
  %s1 = inlined_call_operand.hbm [shape: bf16[3584,1024], index: 1, kind: input, shape index: {}]
  %s2 = inlined_call_operand.hbm [shape: f32[1,1024], index: 2, kind: input, shape index: {}]
  %s3 = inlined_call_operand.hbm [shape: bf16[1024,256], index: 3, kind: input, shape index: {}]
  %s4 = inlined_call_operand.hbm [shape: f32[1,256], index: 4, kind: input, shape index: {}]
  %s5 = inlined_call_operand.hbm [shape: bf16[1,256], index: 5, kind: input, shape index: {}]
  %s6 = inlined_call_operand.<no memory space> [shape: f32[1,1], index: 6, kind: input, shape index: {}]
  %s7 = inlined_call_operand.vmem [shape: f32[8,1], index: 7, kind: output, shape index: {0}]
  %s8 = inlined_call_operand.vmem [shape: f32[8,1], index: 8, kind: output, shape index: {1}]
  %9 = xla_tuple %s7, %s8
  %s10 = sld [smem:[#allocation0]]
  $region101: #{tpu_custom_call.1} parent=0
    _
  %s12 = ssub.s32 1, %s10
  %s13 = scalar_select 0, %s12, %s10
  %v14 = vstv %s6
  %15 = vst [vmem:[#allocation3] sm:$0x1] %v14
  $region1: #{tpu_custom_call.1} parent=0
    #allocation4 [shape = 'u8[57344]{0}', space=vmem, size = 0xe000, scoped, tag = 'input window, operand 0, single buffered']
    #allocation5 [shape = 's32[2]{0}', space=sflag, size = 0x8, scoped, tag = 'scoped memory for tpu_custom_call.1']
    #allocation6 [shape = 'u8[7340032]{0}', space=vmem, size = 0x700000, scoped, tag = 'input window, operand 1']
    #allocation7 [shape = 's32[2]{0}', space=sflag, size = 0x8, scoped, tag = 'scoped memory for tpu_custom_call.1']
    #allocation8 [shape = 'u8[4096]{0}', space=vmem, size = 0x1000, scoped, tag = 'input window, operand 2, single buffered']
    #allocation9 [shape = 'u8[524288]{0}', space=vmem, size = 0x80000, scoped, tag = 'input window, operand 3, single buffered']
    #allocation10 [shape = 's32[1]{0}', space=sflag, size = 0x4, scoped, tag = 'scoped memory for tpu_custom_call.1']
    #allocation11 [shape = 'u8[1024]{0}', space=vmem, size = 0x400, scoped, tag = 'input window, operand 4, single buffered']
    #allocation12 [shape = 'u8[1024]{0}', space=vmem, size = 0x400, scoped, tag = 'input window, operand 5, single buffered']
    #allocation13 [shape = 's32[1]{0}', space=sflag, size = 0x4, scoped, tag = 'scoped memory for tpu_custom_call.1']
    %16 = vsyncpa [#allocation5], 0
    %17 = vsyncpa [#allocation7], 0
    %s18 = scalar_lea.sflag [#allocation7], 1
    %19 = vsyncpa %s18, 0
    %20 = vsyncpa [#allocation10], 0
    %21 = vsyncpa [#allocation13], 0
    loop: start=0, step=1, limit=4
    $region2: #{tpu_custom_call.1} parent=1 // loop_pre_header
      _
    $region3: #{tpu_custom_call.1} parent=1 // loop_header
      %s23 = sphi 0, %s27
      %p24 = scmp.ge.s32.totalorder %s23, 4
      %s31 = sphi 0, %s31
      %s33 = sphi 0, %s31
      %s34 = sphi 0, %s33
      %s48 = sphi 0, %s34
      %s54 = sphi 0, %s56
      %s57 = sphi 0, %s54
      %s58 = sphi 0, %s57
      %s74 = sphi 0, %s58
      %s78 = sphi 0, %s78
      %s80 = sphi 0, %s78
      %s81 = sphi 0, %s80
      %s95 = sphi 0, %s81
      %s99 = sphi 0, %s99
      %s101 = sphi 0, %s99
      %s102 = sphi 0, %s101
      %s116 = sphi 0, %s102
      %s120 = sphi 0, %s120
      %s122 = sphi 0, %s120
      %s123 = sphi 0, %s122
      %s137 = sphi 0, %s123
      %s141 = sphi 0, %s141
      %s143 = sphi 0, %s141
      %s144 = sphi 0, %s143
      %s158 = sphi 0, %s144
      %s162 = sphi 0, %s162
      %s164 = sphi 0, %s162
      %s165 = sphi 0, %s164
      %s179 = sphi 0, %s165
      %s183 = sphi 0, %s183
      %s185 = sphi 0, %s183
      %s186 = sphi 0, %s185
      %s200 = sphi 0, %s186
      %s204 = sphi 0, %s204
      %s206 = sphi 0, %s204
      %s207 = sphi 0, %s206
      %s221 = sphi 0, %s207
    $region4: #{tpu_custom_call.1} parent=1 // loop_header_branch
      %26 = sbr.rel (%p24) target = $region8
    $region5: #{tpu_custom_call.1} parent=1 // loop_body
      %s28 = ssub.s32 %s23, 1
      %s29 = ssub.s32 %s23, 2
      %s30 = sadd.s32 %s23, 1
      %s32 = sadd.s32 %s31, 1
      %p35 = scmp.eq.s32.totalorder %s23, 1
      %p36 = scmp.ne.s32.totalorder %s31, %s33
      %p37 = scmp.eq.s32.totalorder %s23, 0
      %p38 = por %p36, %p37
      %p39 = scmp.ne.s32.totalorder %s31, %s33
      %p40 = scmp.eq.s32.totalorder %s28, 1
      %p41 = por %p39, %p40
      %p42 = scmp.ne.s32.totalorder %s33, %s34
      %p43 = scmp.eq.s32.totalorder %s28, 0
      %p44 = por %p42, %p43
      %p45 = scmp.ne.s32.totalorder %s33, %s34
      %p46 = scmp.eq.s32.totalorder %s29, 1
      %p47 = por %p45, %p46
      %p49 = scmp.ne.s32.totalorder %s34, %s48
      %p50 = scmp.eq.s32.totalorder %s29, 0
      %p51 = por %p49, %p50
      %s52 = ssub.s32 %s23, %s30
      %p53 = scmp.eq.s32.totalorder %s52, 0
      %s55 = sadd.s32 %s54, 1
      %s56 = scalar_select %p53, %s54, %s55
      %p59 = pneg %p53
      %p60 = scmp.eq.s32.totalorder %s23, 1
      %p61 = por %p59, %p60
      %p62 = scmp.ne.s32.totalorder %s54, %s57
      %p63 = scmp.eq.s32.totalorder %s23, 0
      %p64 = por %p62, %p63
      %p65 = scmp.ne.s32.totalorder %s54, %s57
      %p66 = scmp.eq.s32.totalorder %s28, 1
      %p67 = por %p65, %p66
      %p68 = scmp.ne.s32.totalorder %s57, %s58
      %p69 = scmp.eq.s32.totalorder %s28, 0
      %p70 = por %p68, %p69
      %p71 = scmp.ne.s32.totalorder %s57, %s58
      %p72 = scmp.eq.s32.totalorder %s29, 1
      %p73 = por %p71, %p72
      %p75 = scmp.ne.s32.totalorder %s58, %s74
      %p76 = scmp.eq.s32.totalorder %s29, 0
      %p77 = por %p75, %p76
      %s79 = sadd.s32 %s78, 1
      %p82 = scmp.eq.s32.totalorder %s23, 1
      %p83 = scmp.ne.s32.totalorder %s78, %s80
      %p84 = scmp.eq.s32.totalorder %s23, 0
      %p85 = por %p83, %p84
      %p86 = scmp.ne.s32.totalorder %s78, %s80
      %p87 = scmp.eq.s32.totalorder %s28, 1
      %p88 = por %p86, %p87
      %p89 = scmp.ne.s32.totalorder %s80, %s81
      %p90 = scmp.eq.s32.totalorder %s28, 0
      %p91 = por %p89, %p90
      %p92 = scmp.ne.s32.totalorder %s80, %s81
      %p93 = scmp.eq.s32.totalorder %s29, 1
      %p94 = por %p92, %p93
      %p96 = scmp.ne.s32.totalorder %s81, %s95
      %p97 = scmp.eq.s32.totalorder %s29, 0
      %p98 = por %p96, %p97
      %s100 = sadd.s32 %s99, 1
      %p103 = scmp.eq.s32.totalorder %s23, 1
      %p104 = scmp.ne.s32.totalorder %s99, %s101
      %p105 = scmp.eq.s32.totalorder %s23, 0
      %p106 = por %p104, %p105
      %p107 = scmp.ne.s32.totalorder %s99, %s101
      %p108 = scmp.eq.s32.totalorder %s28, 1
      %p109 = por %p107, %p108
      %p110 = scmp.ne.s32.totalorder %s101, %s102
      %p111 = scmp.eq.s32.totalorder %s28, 0
      %p112 = por %p110, %p111
      %p113 = scmp.ne.s32.totalorder %s101, %s102
      %p114 = scmp.eq.s32.totalorder %s29, 1
      %p115 = por %p113, %p114
      %p117 = scmp.ne.s32.totalorder %s102, %s116
      %p118 = scmp.eq.s32.totalorder %s29, 0
      %p119 = por %p117, %p118
      %s121 = sadd.s32 %s120, 1
      %p124 = scmp.eq.s32.totalorder %s23, 1
      %p125 = scmp.ne.s32.totalorder %s120, %s122
      %p126 = scmp.eq.s32.totalorder %s23, 0
      %p127 = por %p125, %p126
      %p128 = scmp.ne.s32.totalorder %s120, %s122
      %p129 = scmp.eq.s32.totalorder %s28, 1
      %p130 = por %p128, %p129
      %p131 = scmp.ne.s32.totalorder %s122, %s123
      %p132 = scmp.eq.s32.totalorder %s28, 0
      %p133 = por %p131, %p132
      %p134 = scmp.ne.s32.totalorder %s122, %s123
      %p135 = scmp.eq.s32.totalorder %s29, 1
      %p136 = por %p134, %p135
      %p138 = scmp.ne.s32.totalorder %s123, %s137
      %p139 = scmp.eq.s32.totalorder %s29, 0
      %p140 = por %p138, %p139
      %s142 = sadd.s32 %s141, 1
      %p145 = scmp.eq.s32.totalorder %s23, 1
      %p146 = scmp.ne.s32.totalorder %s141, %s143
      %p147 = scmp.eq.s32.totalorder %s23, 0
      %p148 = por %p146, %p147
      %p149 = scmp.ne.s32.totalorder %s141, %s143
      %p150 = scmp.eq.s32.totalorder %s28, 1
      %p151 = por %p149, %p150
      %p152 = scmp.ne.s32.totalorder %s143, %s144
      %p153 = scmp.eq.s32.totalorder %s28, 0
      %p154 = por %p152, %p153
      %p155 = scmp.ne.s32.totalorder %s143, %s144
      %p156 = scmp.eq.s32.totalorder %s29, 1
      %p157 = por %p155, %p156
      %p159 = scmp.ne.s32.totalorder %s144, %s158
      %p160 = scmp.eq.s32.totalorder %s29, 0
      %p161 = por %p159, %p160
      %s163 = sadd.s32 %s162, 1
      %p166 = scmp.eq.s32.totalorder %s23, 1
      %p167 = scmp.ne.s32.totalorder %s162, %s164
      %p168 = scmp.eq.s32.totalorder %s23, 0
      %p169 = por %p167, %p168
      %p170 = scmp.ne.s32.totalorder %s162, %s164
      %p171 = scmp.eq.s32.totalorder %s28, 1
      %p172 = por %p170, %p171
      %p173 = scmp.ne.s32.totalorder %s164, %s165
      %p174 = scmp.eq.s32.totalorder %s28, 0
      %p175 = por %p173, %p174
      %p176 = scmp.ne.s32.totalorder %s164, %s165
      %p177 = scmp.eq.s32.totalorder %s29, 1
      %p178 = por %p176, %p177
      %p180 = scmp.ne.s32.totalorder %s165, %s179
      %p181 = scmp.eq.s32.totalorder %s29, 0
      %p182 = por %p180, %p181
      %s184 = sadd.s32 %s183, 1
      %p187 = scmp.eq.s32.totalorder %s23, 1
      %p188 = scmp.ne.s32.totalorder %s183, %s185
      %p189 = scmp.eq.s32.totalorder %s23, 0
      %p190 = por %p188, %p189
      %p191 = scmp.ne.s32.totalorder %s183, %s185
      %p192 = scmp.eq.s32.totalorder %s28, 1
      %p193 = por %p191, %p192
      %p194 = scmp.ne.s32.totalorder %s185, %s186
      %p195 = scmp.eq.s32.totalorder %s28, 0
      %p196 = por %p194, %p195
      %p197 = scmp.ne.s32.totalorder %s185, %s186
      %p198 = scmp.eq.s32.totalorder %s29, 1
      %p199 = por %p197, %p198
      %p201 = scmp.ne.s32.totalorder %s186, %s200
      %p202 = scmp.eq.s32.totalorder %s29, 0
      %p203 = por %p201, %p202
      %s205 = sadd.s32 %s204, 1
      %p208 = scmp.eq.s32.totalorder %s23, 1
      %p209 = scmp.ne.s32.totalorder %s204, %s206
      %p210 = scmp.eq.s32.totalorder %s23, 0
      %p211 = por %p209, %p210
      %p212 = scmp.ne.s32.totalorder %s204, %s206
      %p213 = scmp.eq.s32.totalorder %s28, 1
      %p214 = por %p212, %p213
      %p215 = scmp.ne.s32.totalorder %s206, %s207
      %p216 = scmp.eq.s32.totalorder %s28, 0
      %p217 = por %p215, %p216
      %p218 = scmp.ne.s32.totalorder %s206, %s207
      %p219 = scmp.eq.s32.totalorder %s29, 1
      %p220 = por %p218, %p219
      %p222 = scmp.ne.s32.totalorder %s207, %s221
      %p223 = scmp.eq.s32.totalorder %s29, 0
      %p224 = por %p222, %p223
      %p225 = scmp.le.s32.totalorder 1, %s23
      %p226 = scmp.lt.s32.totalorder %s23, 3
      %p227 = pnand %p225, %p226
      %p228 = pneg %p227
      // Predicated region
      $region9: #{tpu_custom_call.1} parent=5 // pred_check
        _
      $region10: #{tpu_custom_call.1} parent=5 // pred_check_branch
        %230 = sbr.rel (%p227) target = $region12
      $region11: #{tpu_custom_call.1} parent=5 // pred_region
        %s231 = ssub.s32 %s23, 1
        // Predicated region
        $region13: #{tpu_custom_call.1} parent=11 // pred_check
          %p232 = pneg %p44
        $region14: #{tpu_custom_call.1} parent=11 // pred_check_branch
          %234 = sbr.rel (%p232) target = $region16
        $region15: #{tpu_custom_call.1} parent=11 // pred_region
          %s236 = ssub.s32 1792, 1792
          %237 = vsyncadd [#allocation5], %s236
          %s239 = sshll.u32 [#allocation4], 4
          %s240 = int_to_ptr.vmem [resolvable:$true] %s239
          %242 = dma.hbm_to_vmem [thread:$0]  %s0, 1792, %s240, [#allocation5]
        $region16: #{tpu_custom_call.1} parent=11 // pred_fallthru
          _
        // Predicated region
        $region17: #{tpu_custom_call.1} parent=11 // pred_check
          %p243 = pneg %p91
        $region18: #{tpu_custom_call.1} parent=11 // pred_check_branch
          %245 = sbr.rel (%p243) target = $region20
        $region19: #{tpu_custom_call.1} parent=11 // pred_region
          %s247 = ssub.s32 128, 128
          %248 = vsyncadd [#allocation7], %s247
          %s250 = sshll.u32 [#allocation8], 4
          %s251 = int_to_ptr.vmem [resolvable:$true] %s250
          %253 = dma.hbm_to_vmem [thread:$0]  %s2, 128, %s251, [#allocation7]
        $region20: #{tpu_custom_call.1} parent=11 // pred_fallthru
          _
        // Predicated region
        $region21: #{tpu_custom_call.1} parent=11 // pred_check
          %p254 = pneg %p112
        $region22: #{tpu_custom_call.1} parent=11 // pred_check_branch
          %256 = sbr.rel (%p254) target = $region24
        $region23: #{tpu_custom_call.1} parent=11 // pred_region
          %s258 = ssub.s32 16384, 16384
          %259 = vsyncadd [#allocation10], %s258
          %s260 = sshll.u32 [#allocation9], 4
          %s261 = int_to_ptr.vmem [resolvable:$true] %s260
          %266 = dma.hbm_to_vmem [thread:$0]  %s3, 16384, %s261, [#allocation10], 128, 128, 8
        $region24: #{tpu_custom_call.1} parent=11 // pred_fallthru
          _
        // Predicated region
        $region25: #{tpu_custom_call.1} parent=11 // pred_check
          %p267 = pneg %p133
        $region26: #{tpu_custom_call.1} parent=11 // pred_check_branch
          %269 = sbr.rel (%p267) target = $region28
        $region27: #{tpu_custom_call.1} parent=11 // pred_region
          %s271 = ssub.s32 32, 32
          %272 = vsyncadd [#allocation10], %s271
          %s274 = sshll.u32 [#allocation11], 4
          %s275 = int_to_ptr.vmem [resolvable:$true] %s274
          %277 = dma.hbm_to_vmem [thread:$0]  %s4, 32, %s275, [#allocation10]
        $region28: #{tpu_custom_call.1} parent=11 // pred_fallthru
          _
        // Predicated region
        $region29: #{tpu_custom_call.1} parent=11 // pred_check
          %p278 = pneg %p154
        $region30: #{tpu_custom_call.1} parent=11 // pred_check_branch
          %280 = sbr.rel (%p278) target = $region32
        $region31: #{tpu_custom_call.1} parent=11 // pred_region
          %s282 = ssub.s32 32, 32
          %283 = vsyncadd [#allocation13], %s282
          %s285 = sshll.u32 [#allocation12], 4
          %s286 = int_to_ptr.vmem [resolvable:$true] %s285
          %288 = dma.hbm_to_vmem [thread:$0]  %s5, 32, %s286, [#allocation13]
        $region32: #{tpu_custom_call.1} parent=11 // pred_fallthru
          _
        // Predicated region
        $region33: #{tpu_custom_call.1} parent=11 // pred_check
          %p289 = pneg %p175
        $region34: #{tpu_custom_call.1} parent=11 // pred_check_branch
          %291 = sbr.rel (%p289) target = $region36
        $region35: #{tpu_custom_call.1} parent=11 // pred_region
          _
        $region36: #{tpu_custom_call.1} parent=11 // pred_fallthru
          _
      $region12: #{tpu_custom_call.1} parent=5 // pred_fallthru
        _
      %p292 = scmp.lt.s32.totalorder %s23, 2
      // Predicated region
      $region37: #{tpu_custom_call.1} parent=5 // pred_check
        %p293 = pneg %p292
      $region38: #{tpu_custom_call.1} parent=5 // pred_check_branch
        %295 = sbr.rel (%p293) target = $region40
      $region39: #{tpu_custom_call.1} parent=5 // pred_region
        // Predicated region
        $region41: #{tpu_custom_call.1} parent=39 // pred_check
          %p296 = pneg %p64
        $region42: #{tpu_custom_call.1} parent=39 // pred_check_branch
          %298 = sbr.rel (%p296) target = $region44
        $region43: #{tpu_custom_call.1} parent=39 // pred_region
          %s299 = sand.u32 %s23, 1
          %s300 = scalar_lea.sflag [#allocation7], %s299
          %s301 = sand.u32 %s54, 1
          %s302 = smul.addr %s301, 7168
          %s303 = scalar_lea.vmem [#allocation6], %s302
          %s304 = smul.u32 224, %s23
          %s306 = ssub.s32 114688, 114688
          %307 = vsyncadd %s300, %s306
          %s308 = smul.addr %s304, 8
          %s309 = smul.addr %s308, 64
          %s310 = scalar_lea.hbm %s1, %s309
          %s311 = sshll.u32 %s303, 4
          %s312 = int_to_ptr.vmem [resolvable:$true] %s311
          %317 = dma.hbm_to_vmem [thread:$0]  %s310, 114688, %s312, %s300, 512, 512, 32
        $region44: #{tpu_custom_call.1} parent=39 // pred_fallthru
          _
      $region40: #{tpu_custom_call.1} parent=5 // pred_fallthru
        _
      %p318 = scmp.le.s32.totalorder 1, %s23
      %p319 = scmp.lt.s32.totalorder %s23, 3
      %p320 = pnand %p318, %p319
      %p321 = pneg %p320
      // Predicated region
      $region45: #{tpu_custom_call.1} parent=5 // pred_check
        _
      $region46: #{tpu_custom_call.1} parent=5 // pred_check_branch
        %323 = sbr.rel (%p320) target = $region48
      $region47: #{tpu_custom_call.1} parent=5 // pred_region
        %s324 = ssub.s32 %s23, 1
        // Predicated region
        $region49: #{tpu_custom_call.1} parent=47 // pred_check
          %p325 = pneg %p44
        $region50: #{tpu_custom_call.1} parent=47 // pred_check_branch
          %327 = sbr.rel (%p325) target = $region52
        $region51: #{tpu_custom_call.1} parent=47 // pred_region
          %328 = dma.done [#allocation5], 1792
        $region52: #{tpu_custom_call.1} parent=47 // pred_fallthru
          _
        %s329 = sand.u32 %s28, 1
        %s330 = scalar_lea.sflag [#allocation7], %s329
        %s331 = sand.u32 %s57, 1
        %s332 = smul.addr %s331, 7168
        %s333 = scalar_lea.vmem [#allocation6], %s332
        // Predicated region
        $region53: #{tpu_custom_call.1} parent=47 // pred_check
          %p334 = pneg %p70
        $region54: #{tpu_custom_call.1} parent=47 // pred_check_branch
          %336 = sbr.rel (%p334) target = $region56
        $region55: #{tpu_custom_call.1} parent=47 // pred_region
          %337 = dma.done %s330, 114688
        $region56: #{tpu_custom_call.1} parent=47 // pred_fallthru
          _
        // Predicated region
        $region57: #{tpu_custom_call.1} parent=47 // pred_check
          %p338 = pneg %p91
        $region58: #{tpu_custom_call.1} parent=47 // pred_check_branch
          %340 = sbr.rel (%p338) target = $region60
        $region59: #{tpu_custom_call.1} parent=47 // pred_region
          %341 = dma.done [#allocation7], 128
        $region60: #{tpu_custom_call.1} parent=47 // pred_fallthru
          _
        // Predicated region
        $region61: #{tpu_custom_call.1} parent=47 // pred_check
          %p342 = pneg %p112
        $region62: #{tpu_custom_call.1} parent=47 // pred_check_branch
          %344 = sbr.rel (%p342) target = $region64
        $region63: #{tpu_custom_call.1} parent=47 // pred_region
          %345 = dma.done [#allocation10], 16384
        $region64: #{tpu_custom_call.1} parent=47 // pred_fallthru
          _
        // Predicated region
        $region65: #{tpu_custom_call.1} parent=47 // pred_check
          %p346 = pneg %p133
        $region66: #{tpu_custom_call.1} parent=47 // pred_check_branch
          %348 = sbr.rel (%p346) target = $region68
        $region67: #{tpu_custom_call.1} parent=47 // pred_region
          %349 = dma.done [#allocation10], 32
        $region68: #{tpu_custom_call.1} parent=47 // pred_fallthru
          _
        // Predicated region
        $region69: #{tpu_custom_call.1} parent=47 // pred_check
          %p350 = pneg %p154
        $region70: #{tpu_custom_call.1} parent=47 // pred_check_branch
          %352 = sbr.rel (%p350) target = $region72
        $region71: #{tpu_custom_call.1} parent=47 // pred_region
          %353 = dma.done [#allocation13], 32
        $region72: #{tpu_custom_call.1} parent=47 // pred_fallthru
          _
        %p354 = pneg %p44
        %p355 = pneg %p41
        %s356 = sand.u32 %s28, 1
        %s357 = scalar_lea.sflag [#allocation7], %s356
        %s358 = sand.u32 %s57, 1
        %s359 = smul.addr %s358, 7168
        %s360 = scalar_lea.vmem [#allocation6], %s359
        %p361 = pneg %p70
        %p362 = pneg %p67
        %p363 = pneg %p91
        %p364 = pneg %p88
        %p365 = pneg %p112
        %p366 = pneg %p109
        %p367 = pneg %p133
        %p368 = pneg %p130
        %p369 = pneg %p154
        %p370 = pneg %p151
        %p371 = pneg %p175
        %p372 = pneg %p172
        %p373 = pneg %p196
        %p374 = pneg %p193
        %p375 = pneg %p217
        %p376 = pneg %p214
        %s377 = smul.u32 224, %s28
        %p378 = scmp.eq.s32.totalorder %s28, 0
        // Predicated region
        $region73: #{tpu_custom_call.1} parent=47 // pred_check
          %p379 = pneg %p378
        $region74: #{tpu_custom_call.1} parent=47 // pred_check_branch
          %381 = sbr.rel (%p379) target = $region76
        $region75: #{tpu_custom_call.1} parent=47 // pred_region
          %382 = vst [vmem:[#allocation2] sm:$0xff] 0.0
          %383 = vst [vmem:[#allocation2 + $0x8] sm:$0xff] 0.0
          %384 = vst [vmem:[#allocation2 + $0x10] sm:$0xff] 0.0
          %385 = vst [vmem:[#allocation2 + $0x18] sm:$0xff] 0.0
          %386 = vst [vmem:[#allocation2 + $0x20] sm:$0xff] 0.0
          %387 = vst [vmem:[#allocation2 + $0x28] sm:$0xff] 0.0
          %388 = vst [vmem:[#allocation2 + $0x30] sm:$0xff] 0.0
          %389 = vst [vmem:[#allocation2 + $0x38] sm:$0xff] 0.0
        $region76: #{tpu_custom_call.1} parent=47 // pred_fallthru
          _
        %s390 = smul.u32 %s28, 1792
        %s391 = sshra.s32 %s390, 7
        %s392 = sand.u32 %s390, 127
        %s393 = smul.addr %s391, 4
        %s394 = scalar_lea.vmem [#allocation4], %s393
        %v395 = vld [vmem:[%s394] sm:$0xff]
        %v396 = vld [vmem:[%s394 + $0x8] sm:$0xff]
        %v397 = vld [vmem:[%s394 + $0x10] sm:$0xff]
        %v398 = vld [vmem:[%s394 + $0x18] sm:$0xff]
        %v399 = vld [vmem:[%s394 + $0x20] sm:$0xff]
        %v400 = vld [vmem:[%s394 + $0x28] sm:$0xff]
        %v401 = vld [vmem:[%s394 + $0x30] sm:$0xff]
        %v402 = vld [vmem:[#allocation2] sm:$0xff]
        %v403 = vld [vmem:[#allocation2 + $0x8] sm:$0xff]
        %v404 = vld [vmem:[#allocation2 + $0x10] sm:$0xff]
        %v405 = vld [vmem:[#allocation2 + $0x18] sm:$0xff]
        %v406 = vld [vmem:[#allocation2 + $0x20] sm:$0xff]
        %v407 = vld [vmem:[#allocation2 + $0x28] sm:$0xff]
        %v408 = vld [vmem:[#allocation2 + $0x30] sm:$0xff]
        %v409 = vld [vmem:[#allocation2 + $0x38] sm:$0xff]
        %v410 = vld [vmem:[%s333] sm:$0xff]
        %v411 = vld [vmem:[%s333 + $0x8] sm:$0xff]
        %v412 = vld [vmem:[%s333 + $0x10] sm:$0xff]
        %v413 = vld [vmem:[%s333 + $0x18] sm:$0xff]
        %v414 = vld [vmem:[%s333 + $0x20] sm:$0xff]
        %v415 = vld [vmem:[%s333 + $0x28] sm:$0xff]
        %v416 = vld [vmem:[%s333 + $0x30] sm:$0xff]
        %v417 = vld [vmem:[%s333 + $0x38] sm:$0xff]
        %v418 = vld [vmem:[%s333 + $0x40] sm:$0xff]
        %v419 = vld [vmem:[%s333 + $0x48] sm:$0xff]
        %v420 = vld [vmem:[%s333 + $0x50] sm:$0xff]
        %v421 = vld [vmem:[%s333 + $0x58] sm:$0xff]
        %v422 = vld [vmem:[%s333 + $0x60] sm:$0xff]
        %v423 = vld [vmem:[%s333 + $0x68] sm:$0xff]
        %v424 = vld [vmem:[%s333 + $0x70] sm:$0xff]
        %v425 = vld [vmem:[%s333 + $0x78] sm:$0xff]
        %v426 = vld [vmem:[%s333 + $0x80] sm:$0xff]
        %v427 = vld [vmem:[%s333 + $0x88] sm:$0xff]
        %v428 = vld [vmem:[%s333 + $0x90] sm:$0xff]
        %v429 = vld [vmem:[%s333 + $0x98] sm:$0xff]
        %v430 = vld [vmem:[%s333 + $0xa0] sm:$0xff]
        %v431 = vld [vmem:[%s333 + $0xa8] sm:$0xff]
        %v432 = vld [vmem:[%s333 + $0xb0] sm:$0xff]
        %v433 = vld [vmem:[%s333 + $0xb8] sm:$0xff]
        %v434 = vld [vmem:[%s333 + $0xc0] sm:$0xff]
        %v435 = vld [vmem:[%s333 + $0xc8] sm:$0xff]
        %v436 = vld [vmem:[%s333 + $0xd0] sm:$0xff]
        %v437 = vld [vmem:[%s333 + $0xd8] sm:$0xff]
        %v438 = vld [vmem:[%s333 + $0xe0] sm:$0xff]
        %v439 = vld [vmem:[%s333 + $0xe8] sm:$0xff]
        %v440 = vld [vmem:[%s333 + $0xf0] sm:$0xff]
        %v441 = vld [vmem:[%s333 + $0xf8] sm:$0xff]
        %v442 = vld [vmem:[%s333 + $0x100] sm:$0xff]
        %v443 = vld [vmem:[%s333 + $0x108] sm:$0xff]
        %v444 = vld [vmem:[%s333 + $0x110] sm:$0xff]
        %v445 = vld [vmem:[%s333 + $0x118] sm:$0xff]
        %v446 = vld [vmem:[%s333 + $0x120] sm:$0xff]
        %v447 = vld [vmem:[%s333 + $0x128] sm:$0xff]
        %v448 = vld [vmem:[%s333 + $0x130] sm:$0xff]
        %v449 = vld [vmem:[%s333 + $0x138] sm:$0xff]
        %v450 = vld [vmem:[%s333 + $0x140] sm:$0xff]
        %v451 = vld [vmem:[%s333 + $0x148] sm:$0xff]
        %v452 = vld [vmem:[%s333 + $0x150] sm:$0xff]
        %v453 = vld [vmem:[%s333 + $0x158] sm:$0xff]
        %v454 = vld [vmem:[%s333 + $0x160] sm:$0xff]
        %v455 = vld [vmem:[%s333 + $0x168] sm:$0xff]
        %v456 = vld [vmem:[%s333 + $0x170] sm:$0xff]
        %v457 = vld [vmem:[%s333 + $0x178] sm:$0xff]
        %v458 = vld [vmem:[%s333 + $0x180] sm:$0xff]
        %v459 = vld [vmem:[%s333 + $0x188] sm:$0xff]
        %v460 = vld [vmem:[%s333 + $0x190] sm:$0xff]
        %v461 = vld [vmem:[%s333 + $0x198] sm:$0xff]
        %v462 = vld [vmem:[%s333 + $0x1a0] sm:$0xff]
        %v463 = vld [vmem:[%s333 + $0x1a8] sm:$0xff]
        %v464 = vld [vmem:[%s333 + $0x1b0] sm:$0xff]
        %v465 = vld [vmem:[%s333 + $0x1b8] sm:$0xff]
        %v466 = vld [vmem:[%s333 + $0x1c0] sm:$0xff]
        %v467 = vld [vmem:[%s333 + $0x1c8] sm:$0xff]
        %v468 = vld [vmem:[%s333 + $0x1d0] sm:$0xff]
        %v469 = vld [vmem:[%s333 + $0x1d8] sm:$0xff]
        %v470 = vld [vmem:[%s333 + $0x1e0] sm:$0xff]
        %v471 = vld [vmem:[%s333 + $0x1e8] sm:$0xff]
        %v472 = vld [vmem:[%s333 + $0x1f0] sm:$0xff]
        %v473 = vld [vmem:[%s333 + $0x1f8] sm:$0xff]
        %v474 = vld [vmem:[%s333 + $0x200] sm:$0xff]
        %v475 = vld [vmem:[%s333 + $0x208] sm:$0xff]
        %v476 = vld [vmem:[%s333 + $0x210] sm:$0xff]
        %v477 = vld [vmem:[%s333 + $0x218] sm:$0xff]
        %v478 = vld [vmem:[%s333 + $0x220] sm:$0xff]
        %v479 = vld [vmem:[%s333 + $0x228] sm:$0xff]
        %v480 = vld [vmem:[%s333 + $0x230] sm:$0xff]
        %v481 = vld [vmem:[%s333 + $0x238] sm:$0xff]
        %v482 = vld [vmem:[%s333 + $0x240] sm:$0xff]
        %v483 = vld [vmem:[%s333 + $0x248] sm:$0xff]
        %v484 = vld [vmem:[%s333 + $0x250] sm:$0xff]
        %v485 = vld [vmem:[%s333 + $0x258] sm:$0xff]
        %v486 = vld [vmem:[%s333 + $0x260] sm:$0xff]
        %v487 = vld [vmem:[%s333 + $0x268] sm:$0xff]
        %v488 = vld [vmem:[%s333 + $0x270] sm:$0xff]
        %v489 = vld [vmem:[%s333 + $0x278] sm:$0xff]
        %v490 = vld [vmem:[%s333 + $0x280] sm:$0xff]
        %v491 = vld [vmem:[%s333 + $0x288] sm:$0xff]
        %v492 = vld [vmem:[%s333 + $0x290] sm:$0xff]
        %v493 = vld [vmem:[%s333 + $0x298] sm:$0xff]
        %v494 = vld [vmem:[%s333 + $0x2a0] sm:$0xff]
        %v495 = vld [vmem:[%s333 + $0x2a8] sm:$0xff]
        %v496 = vld [vmem:[%s333 + $0x2b0] sm:$0xff]
        %v497 = vld [vmem:[%s333 + $0x2b8] sm:$0xff]
        %v498 = vld [vmem:[%s333 + $0x2c0] sm:$0xff]
        %v499 = vld [vmem:[%s333 + $0x2c8] sm:$0xff]
        %v500 = vld [vmem:[%s333 + $0x2d0] sm:$0xff]
        %v501 = vld [vmem:[%s333 + $0x2d8] sm:$0xff]
        %v502 = vld [vmem:[%s333 + $0x2e0] sm:$0xff]
        %v503 = vld [vmem:[%s333 + $0x2e8] sm:$0xff]
        %v504 = vld [vmem:[%s333 + $0x2f0] sm:$0xff]
        %v505 = vld [vmem:[%s333 + $0x2f8] sm:$0xff]
        %v506 = vld [vmem:[%s333 + $0x300] sm:$0xff]
        %v507 = vld [vmem:[%s333 + $0x308] sm:$0xff]
        %v508 = vld [vmem:[%s333 + $0x310] sm:$0xff]
        %v509 = vld [vmem:[%s333 + $0x318] sm:$0xff]
        %v510 = vld [vmem:[%s333 + $0x320] sm:$0xff]
        %v511 = vld [vmem:[%s333 + $0x328] sm:$0xff]
        %v512 = vld [vmem:[%s333 + $0x330] sm:$0xff]
        %v513 = vld [vmem:[%s333 + $0x338] sm:$0xff]
        %v514 = vld [vmem:[%s333 + $0x340] sm:$0xff]
        %v515 = vld [vmem:[%s333 + $0x348] sm:$0xff]
        %v516 = vld [vmem:[%s333 + $0x350] sm:$0xff]
        %v517 = vld [vmem:[%s333 + $0x358] sm:$0xff]
        %v518 = vld [vmem:[%s333 + $0x360] sm:$0xff]
        %v519 = vld [vmem:[%s333 + $0x368] sm:$0xff]
        %v520 = vld [vmem:[%s333 + $0x370] sm:$0xff]
        %v521 = vld [vmem:[%s333 + $0x378] sm:$0xff]
        %v522 = vld [vmem:[%s333 + $0x380] sm:$0xff]
        %v523 = vld [vmem:[%s333 + $0x388] sm:$0xff]
        %v524 = vld [vmem:[%s333 + $0x390] sm:$0xff]
        %v525 = vld [vmem:[%s333 + $0x398] sm:$0xff]
        %v526 = vld [vmem:[%s333 + $0x3a0] sm:$0xff]
        %v527 = vld [vmem:[%s333 + $0x3a8] sm:$0xff]
        %v528 = vld [vmem:[%s333 + $0x3b0] sm:$0xff]
        %v529 = vld [vmem:[%s333 + $0x3b8] sm:$0xff]
        %v530 = vld [vmem:[%s333 + $0x3c0] sm:$0xff]
        %v531 = vld [vmem:[%s333 + $0x3c8] sm:$0xff]
        %v532 = vld [vmem:[%s333 + $0x3d0] sm:$0xff]
        %v533 = vld [vmem:[%s333 + $0x3d8] sm:$0xff]
        %v534 = vld [vmem:[%s333 + $0x3e0] sm:$0xff]
        %v535 = vld [vmem:[%s333 + $0x3e8] sm:$0xff]
        %v536 = vld [vmem:[%s333 + $0x3f0] sm:$0xff]
        %v537 = vld [vmem:[%s333 + $0x3f8] sm:$0xff]
        %v538 = vld [vmem:[%s333 + $0x400] sm:$0xff]
        %v539 = vld [vmem:[%s333 + $0x408] sm:$0xff]
        %v540 = vld [vmem:[%s333 + $0x410] sm:$0xff]
        %v541 = vld [vmem:[%s333 + $0x418] sm:$0xff]
        %v542 = vld [vmem:[%s333 + $0x420] sm:$0xff]
        %v543 = vld [vmem:[%s333 + $0x428] sm:$0xff]
        %v544 = vld [vmem:[%s333 + $0x430] sm:$0xff]
        %v545 = vld [vmem:[%s333 + $0x438] sm:$0xff]
        %v546 = vld [vmem:[%s333 + $0x440] sm:$0xff]
        %v547 = vld [vmem:[%s333 + $0x448] sm:$0xff]
        %v548 = vld [vmem:[%s333 + $0x450] sm:$0xff]
        %v549 = vld [vmem:[%s333 + $0x458] sm:$0xff]
        %v550 = vld [vmem:[%s333 + $0x460] sm:$0xff]
        %v551 = vld [vmem:[%s333 + $0x468] sm:$0xff]
        %v552 = vld [vmem:[%s333 + $0x470] sm:$0xff]
        %v553 = vld [vmem:[%s333 + $0x478] sm:$0xff]
        %v554 = vld [vmem:[%s333 + $0x480] sm:$0xff]
        %v555 = vld [vmem:[%s333 + $0x488] sm:$0xff]
        %v556 = vld [vmem:[%s333 + $0x490] sm:$0xff]
        %v557 = vld [vmem:[%s333 + $0x498] sm:$0xff]
        %v558 = vld [vmem:[%s333 + $0x4a0] sm:$0xff]
        %v559 = vld [vmem:[%s333 + $0x4a8] sm:$0xff]
        %v560 = vld [vmem:[%s333 + $0x4b0] sm:$0xff]
        %v561 = vld [vmem:[%s333 + $0x4b8] sm:$0xff]
        %v562 = vld [vmem:[%s333 + $0x4c0] sm:$0xff]
        %v563 = vld [vmem:[%s333 + $0x4c8] sm:$0xff]
        %v564 = vld [vmem:[%s333 + $0x4d0] sm:$0xff]
        %v565 = vld [vmem:[%s333 + $0x4d8] sm:$0xff]
        %v566 = vld [vmem:[%s333 + $0x4e0] sm:$0xff]
        %v567 = vld [vmem:[%s333 + $0x4e8] sm:$0xff]
        %v568 = vld [vmem:[%s333 + $0x4f0] sm:$0xff]
        %v569 = vld [vmem:[%s333 + $0x4f8] sm:$0xff]
        %v570 = vld [vmem:[%s333 + $0x500] sm:$0xff]
        %v571 = vld [vmem:[%s333 + $0x508] sm:$0xff]
        %v572 = vld [vmem:[%s333 + $0x510] sm:$0xff]
        %v573 = vld [vmem:[%s333 + $0x518] sm:$0xff]
        %v574 = vld [vmem:[%s333 + $0x520] sm:$0xff]
        %v575 = vld [vmem:[%s333 + $0x528] sm:$0xff]
        %v576 = vld [vmem:[%s333 + $0x530] sm:$0xff]
        %v577 = vld [vmem:[%s333 + $0x538] sm:$0xff]
        %v578 = vld [vmem:[%s333 + $0x540] sm:$0xff]
        %v579 = vld [vmem:[%s333 + $0x548] sm:$0xff]
        %v580 = vld [vmem:[%s333 + $0x550] sm:$0xff]
        %v581 = vld [vmem:[%s333 + $0x558] sm:$0xff]
        %v582 = vld [vmem:[%s333 + $0x560] sm:$0xff]
        %v583 = vld [vmem:[%s333 + $0x568] sm:$0xff]
        %v584 = vld [vmem:[%s333 + $0x570] sm:$0xff]
        %v585 = vld [vmem:[%s333 + $0x578] sm:$0xff]
        %v586 = vld [vmem:[%s333 + $0x580] sm:$0xff]
        %v587 = vld [vmem:[%s333 + $0x588] sm:$0xff]
        %v588 = vld [vmem:[%s333 + $0x590] sm:$0xff]
        %v589 = vld [vmem:[%s333 + $0x598] sm:$0xff]
        %v590 = vld [vmem:[%s333 + $0x5a0] sm:$0xff]
        %v591 = vld [vmem:[%s333 + $0x5a8] sm:$0xff]
        %v592 = vld [vmem:[%s333 + $0x5b0] sm:$0xff]
        %v593 = vld [vmem:[%s333 + $0x5b8] sm:$0xff]
        %v594 = vld [vmem:[%s333 + $0x5c0] sm:$0xff]
        %v595 = vld [vmem:[%s333 + $0x5c8] sm:$0xff]
        %v596 = vld [vmem:[%s333 + $0x5d0] sm:$0xff]
        %v597 = vld [vmem:[%s333 + $0x5d8] sm:$0xff]
        %v598 = vld [vmem:[%s333 + $0x5e0] sm:$0xff]
        %v599 = vld [vmem:[%s333 + $0x5e8] sm:$0xff]
        %v600 = vld [vmem:[%s333 + $0x5f0] sm:$0xff]
        %v601 = vld [vmem:[%s333 + $0x5f8] sm:$0xff]
        %v602 = vld [vmem:[%s333 + $0x600] sm:$0xff]
        %v603 = vld [vmem:[%s333 + $0x608] sm:$0xff]
        %v604 = vld [vmem:[%s333 + $0x610] sm:$0xff]
        %v605 = vld [vmem:[%s333 + $0x618] sm:$0xff]
        %v606 = vld [vmem:[%s333 + $0x620] sm:$0xff]
        %v607 = vld [vmem:[%s333 + $0x628] sm:$0xff]
        %v608 = vld [vmem:[%s333 + $0x630] sm:$0xff]
        %v609 = vld [vmem:[%s333 + $0x638] sm:$0xff]
        %v610 = vld [vmem:[%s333 + $0x640] sm:$0xff]
        %v611 = vld [vmem:[%s333 + $0x648] sm:$0xff]
        %v612 = vld [vmem:[%s333 + $0x650] sm:$0xff]
        %v613 = vld [vmem:[%s333 + $0x658] sm:$0xff]
        %v614 = vld [vmem:[%s333 + $0x660] sm:$0xff]
        %v615 = vld [vmem:[%s333 + $0x668] sm:$0xff]
        %v616 = vld [vmem:[%s333 + $0x670] sm:$0xff]
        %v617 = vld [vmem:[%s333 + $0x678] sm:$0xff]
        %v618 = vld [vmem:[%s333 + $0x680] sm:$0xff]
        %v619 = vld [vmem:[%s333 + $0x688] sm:$0xff]
        %v620 = vld [vmem:[%s333 + $0x690] sm:$0xff]
        %v621 = vld [vmem:[%s333 + $0x698] sm:$0xff]
        %v622 = vld [vmem:[%s333 + $0x6a0] sm:$0xff]
        %v623 = vld [vmem:[%s333 + $0x6a8] sm:$0xff]
        %v624 = vld [vmem:[%s333 + $0x6b0] sm:$0xff]
        %v625 = vld [vmem:[%s333 + $0x6b8] sm:$0xff]
        %v626 = vld [vmem:[%s333 + $0x6c0] sm:$0xff]
        %v627 = vld [vmem:[%s333 + $0x6c8] sm:$0xff]
        %v628 = vld [vmem:[%s333 + $0x6d0] sm:$0xff]
        %v629 = vld [vmem:[%s333 + $0x6d8] sm:$0xff]
        %v630 = vld [vmem:[%s333 + $0x6e0] sm:$0xff]
        %v631 = vld [vmem:[%s333 + $0x6e8] sm:$0xff]
        %v632 = vld [vmem:[%s333 + $0x6f0] sm:$0xff]
        %v633 = vld [vmem:[%s333 + $0x6f8] sm:$0xff]
        %v634 = vld [vmem:[%s333 + $0x700] sm:$0xff]
        %v635 = vld [vmem:[%s333 + $0x708] sm:$0xff]
        %v636 = vld [vmem:[%s333 + $0x710] sm:$0xff]
        %v637 = vld [vmem:[%s333 + $0x718] sm:$0xff]
        %v638 = vld [vmem:[%s333 + $0x720] sm:$0xff]
        %v639 = vld [vmem:[%s333 + $0x728] sm:$0xff]
        %v640 = vld [vmem:[%s333 + $0x730] sm:$0xff]
        %v641 = vld [vmem:[%s333 + $0x738] sm:$0xff]
        %v642 = vld [vmem:[%s333 + $0x740] sm:$0xff]
        %v643 = vld [vmem:[%s333 + $0x748] sm:$0xff]
        %v644 = vld [vmem:[%s333 + $0x750] sm:$0xff]
        %v645 = vld [vmem:[%s333 + $0x758] sm:$0xff]
        %v646 = vld [vmem:[%s333 + $0x760] sm:$0xff]
        %v647 = vld [vmem:[%s333 + $0x768] sm:$0xff]
        %v648 = vld [vmem:[%s333 + $0x770] sm:$0xff]
        %v649 = vld [vmem:[%s333 + $0x778] sm:$0xff]
        %v650 = vld [vmem:[%s333 + $0x780] sm:$0xff]
        %v651 = vld [vmem:[%s333 + $0x788] sm:$0xff]
        %v652 = vld [vmem:[%s333 + $0x790] sm:$0xff]
        %v653 = vld [vmem:[%s333 + $0x798] sm:$0xff]
        %v654 = vld [vmem:[%s333 + $0x7a0] sm:$0xff]
        %v655 = vld [vmem:[%s333 + $0x7a8] sm:$0xff]
        %v656 = vld [vmem:[%s333 + $0x7b0] sm:$0xff]
        %v657 = vld [vmem:[%s333 + $0x7b8] sm:$0xff]
        %v658 = vld [vmem:[%s333 + $0x7c0] sm:$0xff]
        %v659 = vld [vmem:[%s333 + $0x7c8] sm:$0xff]
        %v660 = vld [vmem:[%s333 + $0x7d0] sm:$0xff]
        %v661 = vld [vmem:[%s333 + $0x7d8] sm:$0xff]
        %v662 = vld [vmem:[%s333 + $0x7e0] sm:$0xff]
        %v663 = vld [vmem:[%s333 + $0x7e8] sm:$0xff]
        %v664 = vld [vmem:[%s333 + $0x7f0] sm:$0xff]
        %v665 = vld [vmem:[%s333 + $0x7f8] sm:$0xff]
        %v666 = vld [vmem:[%s333 + $0x800] sm:$0xff]
        %v667 = vld [vmem:[%s333 + $0x808] sm:$0xff]
        %v668 = vld [vmem:[%s333 + $0x810] sm:$0xff]
        %v669 = vld [vmem:[%s333 + $0x818] sm:$0xff]
        %v670 = vld [vmem:[%s333 + $0x820] sm:$0xff]
        %v671 = vld [vmem:[%s333 + $0x828] sm:$0xff]
        %v672 = vld [vmem:[%s333 + $0x830] sm:$0xff]
        %v673 = vld [vmem:[%s333 + $0x838] sm:$0xff]
        %v674 = vld [vmem:[%s333 + $0x840] sm:$0xff]
        %v675 = vld [vmem:[%s333 + $0x848] sm:$0xff]
        %v676 = vld [vmem:[%s333 + $0x850] sm:$0xff]
        %v677 = vld [vmem:[%s333 + $0x858] sm:$0xff]
        %v678 = vld [vmem:[%s333 + $0x860] sm:$0xff]
        %v679 = vld [vmem:[%s333 + $0x868] sm:$0xff]
        %v680 = vld [vmem:[%s333 + $0x870] sm:$0xff]
        %v681 = vld [vmem:[%s333 + $0x878] sm:$0xff]
        %v682 = vld [vmem:[%s333 + $0x880] sm:$0xff]
        %v683 = vld [vmem:[%s333 + $0x888] sm:$0xff]
        %v684 = vld [vmem:[%s333 + $0x890] sm:$0xff]
        %v685 = vld [vmem:[%s333 + $0x898] sm:$0xff]
        %v686 = vld [vmem:[%s333 + $0x8a0] sm:$0xff]
        %v687 = vld [vmem:[%s333 + $0x8a8] sm:$0xff]
        %v688 = vld [vmem:[%s333 + $0x8b0] sm:$0xff]
        %v689 = vld [vmem:[%s333 + $0x8b8] sm:$0xff]
        %v690 = vld [vmem:[%s333 + $0x8c0] sm:$0xff]
        %v691 = vld [vmem:[%s333 + $0x8c8] sm:$0xff]
        %v692 = vld [vmem:[%s333 + $0x8d0] sm:$0xff]
        %v693 = vld [vmem:[%s333 + $0x8d8] sm:$0xff]
        %v694 = vld [vmem:[%s333 + $0x8e0] sm:$0xff]
        %v695 = vld [vmem:[%s333 + $0x8e8] sm:$0xff]
        %v696 = vld [vmem:[%s333 + $0x8f0] sm:$0xff]
        %v697 = vld [vmem:[%s333 + $0x8f8] sm:$0xff]
        %v698 = vld [vmem:[%s333 + $0x900] sm:$0xff]
        %v699 = vld [vmem:[%s333 + $0x908] sm:$0xff]
        %v700 = vld [vmem:[%s333 + $0x910] sm:$0xff]
        %v701 = vld [vmem:[%s333 + $0x918] sm:$0xff]
        %v702 = vld [vmem:[%s333 + $0x920] sm:$0xff]
        %v703 = vld [vmem:[%s333 + $0x928] sm:$0xff]
        %v704 = vld [vmem:[%s333 + $0x930] sm:$0xff]
        %v705 = vld [vmem:[%s333 + $0x938] sm:$0xff]
        %v706 = vld [vmem:[%s333 + $0x940] sm:$0xff]
        %v707 = vld [vmem:[%s333 + $0x948] sm:$0xff]
        %v708 = vld [vmem:[%s333 + $0x950] sm:$0xff]
        %v709 = vld [vmem:[%s333 + $0x958] sm:$0xff]
        %v710 = vld [vmem:[%s333 + $0x960] sm:$0xff]
        %v711 = vld [vmem:[%s333 + $0x968] sm:$0xff]
        %v712 = vld [vmem:[%s333 + $0x970] sm:$0xff]
        %v713 = vld [vmem:[%s333 + $0x978] sm:$0xff]
        %v714 = vld [vmem:[%s333 + $0x980] sm:$0xff]
        %v715 = vld [vmem:[%s333 + $0x988] sm:$0xff]
        %v716 = vld [vmem:[%s333 + $0x990] sm:$0xff]
        %v717 = vld [vmem:[%s333 + $0x998] sm:$0xff]
        %v718 = vld [vmem:[%s333 + $0x9a0] sm:$0xff]
        %v719 = vld [vmem:[%s333 + $0x9a8] sm:$0xff]
        %v720 = vld [vmem:[%s333 + $0x9b0] sm:$0xff]
        %v721 = vld [vmem:[%s333 + $0x9b8] sm:$0xff]
        %v722 = vld [vmem:[%s333 + $0x9c0] sm:$0xff]
        %v723 = vld [vmem:[%s333 + $0x9c8] sm:$0xff]
        %v724 = vld [vmem:[%s333 + $0x9d0] sm:$0xff]
        %v725 = vld [vmem:[%s333 + $0x9d8] sm:$0xff]
        %v726 = vld [vmem:[%s333 + $0x9e0] sm:$0xff]
        %v727 = vld [vmem:[%s333 + $0x9e8] sm:$0xff]
        %v728 = vld [vmem:[%s333 + $0x9f0] sm:$0xff]
        %v729 = vld [vmem:[%s333 + $0x9f8] sm:$0xff]
        %v730 = vld [vmem:[%s333 + $0xa00] sm:$0xff]
        %v731 = vld [vmem:[%s333 + $0xa08] sm:$0xff]
        %v732 = vld [vmem:[%s333 + $0xa10] sm:$0xff]
        %v733 = vld [vmem:[%s333 + $0xa18] sm:$0xff]
        %v734 = vld [vmem:[%s333 + $0xa20] sm:$0xff]
        %v735 = vld [vmem:[%s333 + $0xa28] sm:$0xff]
        %v736 = vld [vmem:[%s333 + $0xa30] sm:$0xff]
        %v737 = vld [vmem:[%s333 + $0xa38] sm:$0xff]
        %v738 = vld [vmem:[%s333 + $0xa40] sm:$0xff]
        %v739 = vld [vmem:[%s333 + $0xa48] sm:$0xff]
        %v740 = vld [vmem:[%s333 + $0xa50] sm:$0xff]
        %v741 = vld [vmem:[%s333 + $0xa58] sm:$0xff]
        %v742 = vld [vmem:[%s333 + $0xa60] sm:$0xff]
        %v743 = vld [vmem:[%s333 + $0xa68] sm:$0xff]
        %v744 = vld [vmem:[%s333 + $0xa70] sm:$0xff]
        %v745 = vld [vmem:[%s333 + $0xa78] sm:$0xff]
        %v746 = vld [vmem:[%s333 + $0xa80] sm:$0xff]
        %v747 = vld [vmem:[%s333 + $0xa88] sm:$0xff]
        %v748 = vld [vmem:[%s333 + $0xa90] sm:$0xff]
        %v749 = vld [vmem:[%s333 + $0xa98] sm:$0xff]
        %v750 = vld [vmem:[%s333 + $0xaa0] sm:$0xff]
        %v751 = vld [vmem:[%s333 + $0xaa8] sm:$0xff]
        %v752 = vld [vmem:[%s333 + $0xab0] sm:$0xff]
        %v753 = vld [vmem:[%s333 + $0xab8] sm:$0xff]
        %v754 = vld [vmem:[%s333 + $0xac0] sm:$0xff]
        %v755 = vld [vmem:[%s333 + $0xac8] sm:$0xff]
        %v756 = vld [vmem:[%s333 + $0xad0] sm:$0xff]
        %v757 = vld [vmem:[%s333 + $0xad8] sm:$0xff]
        %v758 = vld [vmem:[%s333 + $0xae0] sm:$0xff]
        %v759 = vld [vmem:[%s333 + $0xae8] sm:$0xff]
        %v760 = vld [vmem:[%s333 + $0xaf0] sm:$0xff]
        %v761 = vld [vmem:[%s333 + $0xaf8] sm:$0xff]
        %v762 = vld [vmem:[%s333 + $0xb00] sm:$0xff]
        %v763 = vld [vmem:[%s333 + $0xb08] sm:$0xff]
        %v764 = vld [vmem:[%s333 + $0xb10] sm:$0xff]
        %v765 = vld [vmem:[%s333 + $0xb18] sm:$0xff]
        %v766 = vld [vmem:[%s333 + $0xb20] sm:$0xff]
        %v767 = vld [vmem:[%s333 + $0xb28] sm:$0xff]
        %v768 = vld [vmem:[%s333 + $0xb30] sm:$0xff]
        %v769 = vld [vmem:[%s333 + $0xb38] sm:$0xff]
        %v770 = vld [vmem:[%s333 + $0xb40] sm:$0xff]
        %v771 = vld [vmem:[%s333 + $0xb48] sm:$0xff]
        %v772 = vld [vmem:[%s333 + $0xb50] sm:$0xff]
        %v773 = vld [vmem:[%s333 + $0xb58] sm:$0xff]
        %v774 = vld [vmem:[%s333 + $0xb60] sm:$0xff]
        %v775 = vld [vmem:[%s333 + $0xb68] sm:$0xff]
        %v776 = vld [vmem:[%s333 + $0xb70] sm:$0xff]
        %v777 = vld [vmem:[%s333 + $0xb78] sm:$0xff]
        %v778 = vld [vmem:[%s333 + $0xb80] sm:$0xff]
        %v779 = vld [vmem:[%s333 + $0xb88] sm:$0xff]
        %v780 = vld [vmem:[%s333 + $0xb90] sm:$0xff]
        %v781 = vld [vmem:[%s333 + $0xb98] sm:$0xff]
        %v782 = vld [vmem:[%s333 + $0xba0] sm:$0xff]
        %v783 = vld [vmem:[%s333 + $0xba8] sm:$0xff]
        %v784 = vld [vmem:[%s333 + $0xbb0] sm:$0xff]
        %v785 = vld [vmem:[%s333 + $0xbb8] sm:$0xff]
        %v786 = vld [vmem:[%s333 + $0xbc0] sm:$0xff]
        %v787 = vld [vmem:[%s333 + $0xbc8] sm:$0xff]
        %v788 = vld [vmem:[%s333 + $0xbd0] sm:$0xff]
        %v789 = vld [vmem:[%s333 + $0xbd8] sm:$0xff]
        %v790 = vld [vmem:[%s333 + $0xbe0] sm:$0xff]
        %v791 = vld [vmem:[%s333 + $0xbe8] sm:$0xff]
        %v792 = vld [vmem:[%s333 + $0xbf0] sm:$0xff]
        %v793 = vld [vmem:[%s333 + $0xbf8] sm:$0xff]
        %v794 = vld [vmem:[%s333 + $0xc00] sm:$0xff]
        %v795 = vld [vmem:[%s333 + $0xc08] sm:$0xff]
        %v796 = vld [vmem:[%s333 + $0xc10] sm:$0xff]
        %v797 = vld [vmem:[%s333 + $0xc18] sm:$0xff]
        %v798 = vld [vmem:[%s333 + $0xc20] sm:$0xff]
        %v799 = vld [vmem:[%s333 + $0xc28] sm:$0xff]
        %v800 = vld [vmem:[%s333 + $0xc30] sm:$0xff]
        %v801 = vld [vmem:[%s333 + $0xc38] sm:$0xff]
        %v802 = vld [vmem:[%s333 + $0xc40] sm:$0xff]
        %v803 = vld [vmem:[%s333 + $0xc48] sm:$0xff]
        %v804 = vld [vmem:[%s333 + $0xc50] sm:$0xff]
        %v805 = vld [vmem:[%s333 + $0xc58] sm:$0xff]
        %v806 = vld [vmem:[%s333 + $0xc60] sm:$0xff]
        %v807 = vld [vmem:[%s333 + $0xc68] sm:$0xff]
        %v808 = vld [vmem:[%s333 + $0xc70] sm:$0xff]
        %v809 = vld [vmem:[%s333 + $0xc78] sm:$0xff]
        %v810 = vld [vmem:[%s333 + $0xc80] sm:$0xff]
        %v811 = vld [vmem:[%s333 + $0xc88] sm:$0xff]
        %v812 = vld [vmem:[%s333 + $0xc90] sm:$0xff]
        %v813 = vld [vmem:[%s333 + $0xc98] sm:$0xff]
        %v814 = vld [vmem:[%s333 + $0xca0] sm:$0xff]
        %v815 = vld [vmem:[%s333 + $0xca8] sm:$0xff]
        %v816 = vld [vmem:[%s333 + $0xcb0] sm:$0xff]
        %v817 = vld [vmem:[%s333 + $0xcb8] sm:$0xff]
        %v818 = vld [vmem:[%s333 + $0xcc0] sm:$0xff]
        %v819 = vld [vmem:[%s333 + $0xcc8] sm:$0xff]
        %v820 = vld [vmem:[%s333 + $0xcd0] sm:$0xff]
        %v821 = vld [vmem:[%s333 + $0xcd8] sm:$0xff]
        %v822 = vld [vmem:[%s333 + $0xce0] sm:$0xff]
        %v823 = vld [vmem:[%s333 + $0xce8] sm:$0xff]
        %v824 = vld [vmem:[%s333 + $0xcf0] sm:$0xff]
        %v825 = vld [vmem:[%s333 + $0xcf8] sm:$0xff]
        %v826 = vld [vmem:[%s333 + $0xd00] sm:$0xff]
        %v827 = vld [vmem:[%s333 + $0xd08] sm:$0xff]
        %v828 = vld [vmem:[%s333 + $0xd10] sm:$0xff]
        %v829 = vld [vmem:[%s333 + $0xd18] sm:$0xff]
        %v830 = vld [vmem:[%s333 + $0xd20] sm:$0xff]
        %v831 = vld [vmem:[%s333 + $0xd28] sm:$0xff]
        %v832 = vld [vmem:[%s333 + $0xd30] sm:$0xff]
        %v833 = vld [vmem:[%s333 + $0xd38] sm:$0xff]
        %v834 = vld [vmem:[%s333 + $0xd40] sm:$0xff]
        %v835 = vld [vmem:[%s333 + $0xd48] sm:$0xff]
        %v836 = vld [vmem:[%s333 + $0xd50] sm:$0xff]
        %v837 = vld [vmem:[%s333 + $0xd58] sm:$0xff]
        %v838 = vld [vmem:[%s333 + $0xd60] sm:$0xff]
        %v839 = vld [vmem:[%s333 + $0xd68] sm:$0xff]
        %v840 = vld [vmem:[%s333 + $0xd70] sm:$0xff]
        %v841 = vld [vmem:[%s333 + $0xd78] sm:$0xff]
        %v842 = vld [vmem:[%s333 + $0xd80] sm:$0xff]
        %v843 = vld [vmem:[%s333 + $0xd88] sm:$0xff]
        %v844 = vld [vmem:[%s333 + $0xd90] sm:$0xff]
        %v845 = vld [vmem:[%s333 + $0xd98] sm:$0xff]
        %v846 = vld [vmem:[%s333 + $0xda0] sm:$0xff]
        %v847 = vld [vmem:[%s333 + $0xda8] sm:$0xff]
        %v848 = vld [vmem:[%s333 + $0xdb0] sm:$0xff]
        %v849 = vld [vmem:[%s333 + $0xdb8] sm:$0xff]
        %v850 = vld [vmem:[%s333 + $0xdc0] sm:$0xff]
        %v851 = vld [vmem:[%s333 + $0xdc8] sm:$0xff]
        %v852 = vld [vmem:[%s333 + $0xdd0] sm:$0xff]
        %v853 = vld [vmem:[%s333 + $0xdd8] sm:$0xff]
        %v854 = vld [vmem:[%s333 + $0xde0] sm:$0xff]
        %v855 = vld [vmem:[%s333 + $0xde8] sm:$0xff]
        %v856 = vld [vmem:[%s333 + $0xdf0] sm:$0xff]
        %v857 = vld [vmem:[%s333 + $0xdf8] sm:$0xff]
        %v858 = vld [vmem:[%s333 + $0xe00] sm:$0xff]
        %v859 = vld [vmem:[%s333 + $0xe08] sm:$0xff]
        %v860 = vld [vmem:[%s333 + $0xe10] sm:$0xff]
        %v861 = vld [vmem:[%s333 + $0xe18] sm:$0xff]
        %v862 = vld [vmem:[%s333 + $0xe20] sm:$0xff]
        %v863 = vld [vmem:[%s333 + $0xe28] sm:$0xff]
        %v864 = vld [vmem:[%s333 + $0xe30] sm:$0xff]
        %v865 = vld [vmem:[%s333 + $0xe38] sm:$0xff]
        %v866 = vld [vmem:[%s333 + $0xe40] sm:$0xff]
        %v867 = vld [vmem:[%s333 + $0xe48] sm:$0xff]
        %v868 = vld [vmem:[%s333 + $0xe50] sm:$0xff]
        %v869 = vld [vmem:[%s333 + $0xe58] sm:$0xff]
        %v870 = vld [vmem:[%s333 + $0xe60] sm:$0xff]
        %v871 = vld [vmem:[%s333 + $0xe68] sm:$0xff]
        %v872 = vld [vmem:[%s333 + $0xe70] sm:$0xff]
        %v873 = vld [vmem:[%s333 + $0xe78] sm:$0xff]
        %v874 = vld [vmem:[%s333 + $0xe80] sm:$0xff]
        %v875 = vld [vmem:[%s333 + $0xe88] sm:$0xff]
        %v876 = vld [vmem:[%s333 + $0xe90] sm:$0xff]
        %v877 = vld [vmem:[%s333 + $0xe98] sm:$0xff]
        %v878 = vld [vmem:[%s333 + $0xea0] sm:$0xff]
        %v879 = vld [vmem:[%s333 + $0xea8] sm:$0xff]
        %v880 = vld [vmem:[%s333 + $0xeb0] sm:$0xff]
        %v881 = vld [vmem:[%s333 + $0xeb8] sm:$0xff]
        %v882 = vld [vmem:[%s333 + $0xec0] sm:$0xff]
        %v883 = vld [vmem:[%s333 + $0xec8] sm:$0xff]
        %v884 = vld [vmem:[%s333 + $0xed0] sm:$0xff]
        %v885 = vld [vmem:[%s333 + $0xed8] sm:$0xff]
        %v886 = vld [vmem:[%s333 + $0xee0] sm:$0xff]
        %v887 = vld [vmem:[%s333 + $0xee8] sm:$0xff]
        %v888 = vld [vmem:[%s333 + $0xef0] sm:$0xff]
        %v889 = vld [vmem:[%s333 + $0xef8] sm:$0xff]
        %v890 = vld [vmem:[%s333 + $0xf00] sm:$0xff]
        %v891 = vld [vmem:[%s333 + $0xf08] sm:$0xff]
        %v892 = vld [vmem:[%s333 + $0xf10] sm:$0xff]
        %v893 = vld [vmem:[%s333 + $0xf18] sm:$0xff]
        %v894 = vld [vmem:[%s333 + $0xf20] sm:$0xff]
        %v895 = vld [vmem:[%s333 + $0xf28] sm:$0xff]
        %v896 = vld [vmem:[%s333 + $0xf30] sm:$0xff]
        %v897 = vld [vmem:[%s333 + $0xf38] sm:$0xff]
        %v898 = vld [vmem:[%s333 + $0xf40] sm:$0xff]
        %v899 = vld [vmem:[%s333 + $0xf48] sm:$0xff]
        %v900 = vld [vmem:[%s333 + $0xf50] sm:$0xff]
        %v901 = vld [vmem:[%s333 + $0xf58] sm:$0xff]
        %v902 = vld [vmem:[%s333 + $0xf60] sm:$0xff]
        %v903 = vld [vmem:[%s333 + $0xf68] sm:$0xff]
        %v904 = vld [vmem:[%s333 + $0xf70] sm:$0xff]
        %v905 = vld [vmem:[%s333 + $0xf78] sm:$0xff]
        %v906 = vld [vmem:[%s333 + $0xf80] sm:$0xff]
        %v907 = vld [vmem:[%s333 + $0xf88] sm:$0xff]
        %v908 = vld [vmem:[%s333 + $0xf90] sm:$0xff]
        %v909 = vld [vmem:[%s333 + $0xf98] sm:$0xff]
        %v910 = vld [vmem:[%s333 + $0xfa0] sm:$0xff]
        %v911 = vld [vmem:[%s333 + $0xfa8] sm:$0xff]
        %v912 = vld [vmem:[%s333 + $0xfb0] sm:$0xff]
        %v913 = vld [vmem:[%s333 + $0xfb8] sm:$0xff]
        %v914 = vld [vmem:[%s333 + $0xfc0] sm:$0xff]
        %v915 = vld [vmem:[%s333 + $0xfc8] sm:$0xff]
        %v916 = vld [vmem:[%s333 + $0xfd0] sm:$0xff]
        %v917 = vld [vmem:[%s333 + $0xfd8] sm:$0xff]
        %v918 = vld [vmem:[%s333 + $0xfe0] sm:$0xff]
        %v919 = vld [vmem:[%s333 + $0xfe8] sm:$0xff]
        %v920 = vld [vmem:[%s333 + $0xff0] sm:$0xff]
        %v921 = vld [vmem:[%s333 + $0xff8] sm:$0xff]
        %v922 = vld [vmem:[%s333 + $0x1000] sm:$0xff]
        %v923 = vld [vmem:[%s333 + $0x1008] sm:$0xff]
        %v924 = vld [vmem:[%s333 + $0x1010] sm:$0xff]
        %v925 = vld [vmem:[%s333 + $0x1018] sm:$0xff]
        %v926 = vld [vmem:[%s333 + $0x1020] sm:$0xff]
        %v927 = vld [vmem:[%s333 + $0x1028] sm:$0xff]
        %v928 = vld [vmem:[%s333 + $0x1030] sm:$0xff]
        %v929 = vld [vmem:[%s333 + $0x1038] sm:$0xff]
        %v930 = vld [vmem:[%s333 + $0x1040] sm:$0xff]
        %v931 = vld [vmem:[%s333 + $0x1048] sm:$0xff]
        %v932 = vld [vmem:[%s333 + $0x1050] sm:$0xff]
        %v933 = vld [vmem:[%s333 + $0x1058] sm:$0xff]
        %v934 = vld [vmem:[%s333 + $0x1060] sm:$0xff]
        %v935 = vld [vmem:[%s333 + $0x1068] sm:$0xff]
        %v936 = vld [vmem:[%s333 + $0x1070] sm:$0xff]
        %v937 = vld [vmem:[%s333 + $0x1078] sm:$0xff]
        %v938 = vld [vmem:[%s333 + $0x1080] sm:$0xff]
        %v939 = vld [vmem:[%s333 + $0x1088] sm:$0xff]
        %v940 = vld [vmem:[%s333 + $0x1090] sm:$0xff]
        %v941 = vld [vmem:[%s333 + $0x1098] sm:$0xff]
        %v942 = vld [vmem:[%s333 + $0x10a0] sm:$0xff]
        %v943 = vld [vmem:[%s333 + $0x10a8] sm:$0xff]
        %v944 = vld [vmem:[%s333 + $0x10b0] sm:$0xff]
        %v945 = vld [vmem:[%s333 + $0x10b8] sm:$0xff]
        %v946 = vld [vmem:[%s333 + $0x10c0] sm:$0xff]
        %v947 = vld [vmem:[%s333 + $0x10c8] sm:$0xff]
        %v948 = vld [vmem:[%s333 + $0x10d0] sm:$0xff]
        %v949 = vld [vmem:[%s333 + $0x10d8] sm:$0xff]
        %v950 = vld [vmem:[%s333 + $0x10e0] sm:$0xff]
        %v951 = vld [vmem:[%s333 + $0x10e8] sm:$0xff]
        %v952 = vld [vmem:[%s333 + $0x10f0] sm:$0xff]
        %v953 = vld [vmem:[%s333 + $0x10f8] sm:$0xff]
        %v954 = vld [vmem:[%s333 + $0x1100] sm:$0xff]
        %v955 = vld [vmem:[%s333 + $0x1108] sm:$0xff]
        %v956 = vld [vmem:[%s333 + $0x1110] sm:$0xff]
        %v957 = vld [vmem:[%s333 + $0x1118] sm:$0xff]
        %v958 = vld [vmem:[%s333 + $0x1120] sm:$0xff]
        %v959 = vld [vmem:[%s333 + $0x1128] sm:$0xff]
        %v960 = vld [vmem:[%s333 + $0x1130] sm:$0xff]
        %v961 = vld [vmem:[%s333 + $0x1138] sm:$0xff]
        %v962 = vld [vmem:[%s333 + $0x1140] sm:$0xff]
        %v963 = vld [vmem:[%s333 + $0x1148] sm:$0xff]
        %v964 = vld [vmem:[%s333 + $0x1150] sm:$0xff]
        %v965 = vld [vmem:[%s333 + $0x1158] sm:$0xff]
        %v966 = vld [vmem:[%s333 + $0x1160] sm:$0xff]
        %v967 = vld [vmem:[%s333 + $0x1168] sm:$0xff]
        %v968 = vld [vmem:[%s333 + $0x1170] sm:$0xff]
        %v969 = vld [vmem:[%s333 + $0x1178] sm:$0xff]
        %v970 = vld [vmem:[%s333 + $0x1180] sm:$0xff]
        %v971 = vld [vmem:[%s333 + $0x1188] sm:$0xff]
        %v972 = vld [vmem:[%s333 + $0x1190] sm:$0xff]
        %v973 = vld [vmem:[%s333 + $0x1198] sm:$0xff]
        %v974 = vld [vmem:[%s333 + $0x11a0] sm:$0xff]
        %v975 = vld [vmem:[%s333 + $0x11a8] sm:$0xff]
        %v976 = vld [vmem:[%s333 + $0x11b0] sm:$0xff]
        %v977 = vld [vmem:[%s333 + $0x11b8] sm:$0xff]
        %v978 = vld [vmem:[%s333 + $0x11c0] sm:$0xff]
        %v979 = vld [vmem:[%s333 + $0x11c8] sm:$0xff]
        %v980 = vld [vmem:[%s333 + $0x11d0] sm:$0xff]
        %v981 = vld [vmem:[%s333 + $0x11d8] sm:$0xff]
        %v982 = vld [vmem:[%s333 + $0x11e0] sm:$0xff]
        %v983 = vld [vmem:[%s333 + $0x11e8] sm:$0xff]
        %v984 = vld [vmem:[%s333 + $0x11f0] sm:$0xff]
        %v985 = vld [vmem:[%s333 + $0x11f8] sm:$0xff]
        %v986 = vld [vmem:[%s333 + $0x1200] sm:$0xff]
        %v987 = vld [vmem:[%s333 + $0x1208] sm:$0xff]
        %v988 = vld [vmem:[%s333 + $0x1210] sm:$0xff]
        %v989 = vld [vmem:[%s333 + $0x1218] sm:$0xff]
        %v990 = vld [vmem:[%s333 + $0x1220] sm:$0xff]
        %v991 = vld [vmem:[%s333 + $0x1228] sm:$0xff]
        %v992 = vld [vmem:[%s333 + $0x1230] sm:$0xff]
        %v993 = vld [vmem:[%s333 + $0x1238] sm:$0xff]
        %v994 = vld [vmem:[%s333 + $0x1240] sm:$0xff]
        %v995 = vld [vmem:[%s333 + $0x1248] sm:$0xff]
        %v996 = vld [vmem:[%s333 + $0x1250] sm:$0xff]
        %v997 = vld [vmem:[%s333 + $0x1258] sm:$0xff]
        %v998 = vld [vmem:[%s333 + $0x1260] sm:$0xff]
        %v999 = vld [vmem:[%s333 + $0x1268] sm:$0xff]
        %v1000 = vld [vmem:[%s333 + $0x1270] sm:$0xff]
        %v1001 = vld [vmem:[%s333 + $0x1278] sm:$0xff]
        %v1002 = vld [vmem:[%s333 + $0x1280] sm:$0xff]
        %v1003 = vld [vmem:[%s333 + $0x1288] sm:$0xff]
        %v1004 = vld [vmem:[%s333 + $0x1290] sm:$0xff]
        %v1005 = vld [vmem:[%s333 + $0x1298] sm:$0xff]
        %v1006 = vld [vmem:[%s333 + $0x12a0] sm:$0xff]
        %v1007 = vld [vmem:[%s333 + $0x12a8] sm:$0xff]
        %v1008 = vld [vmem:[%s333 + $0x12b0] sm:$0xff]
        %v1009 = vld [vmem:[%s333 + $0x12b8] sm:$0xff]
        %v1010 = vld [vmem:[%s333 + $0x12c0] sm:$0xff]
        %v1011 = vld [vmem:[%s333 + $0x12c8] sm:$0xff]
        %v1012 = vld [vmem:[%s333 + $0x12d0] sm:$0xff]
        %v1013 = vld [vmem:[%s333 + $0x12d8] sm:$0xff]
        %v1014 = vld [vmem:[%s333 + $0x12e0] sm:$0xff]
        %v1015 = vld [vmem:[%s333 + $0x12e8] sm:$0xff]
        %v1016 = vld [vmem:[%s333 + $0x12f0] sm:$0xff]
        %v1017 = vld [vmem:[%s333 + $0x12f8] sm:$0xff]
        %v1018 = vld [vmem:[%s333 + $0x1300] sm:$0xff]
        %v1019 = vld [vmem:[%s333 + $0x1308] sm:$0xff]
        %v1020 = vld [vmem:[%s333 + $0x1310] sm:$0xff]
        %v1021 = vld [vmem:[%s333 + $0x1318] sm:$0xff]
        %v1022 = vld [vmem:[%s333 + $0x1320] sm:$0xff]
        %v1023 = vld [vmem:[%s333 + $0x1328] sm:$0xff]
        %v1024 = vld [vmem:[%s333 + $0x1330] sm:$0xff]
        %v1025 = vld [vmem:[%s333 + $0x1338] sm:$0xff]
        %v1026 = vld [vmem:[%s333 + $0x1340] sm:$0xff]
        %v1027 = vld [vmem:[%s333 + $0x1348] sm:$0xff]
        %v1028 = vld [vmem:[%s333 + $0x1350] sm:$0xff]
        %v1029 = vld [vmem:[%s333 + $0x1358] sm:$0xff]
        %v1030 = vld [vmem:[%s333 + $0x1360] sm:$0xff]
        %v1031 = vld [vmem:[%s333 + $0x1368] sm:$0xff]
        %v1032 = vld [vmem:[%s333 + $0x1370] sm:$0xff]
        %v1033 = vld [vmem:[%s333 + $0x1378] sm:$0xff]
        %v1034 = vld [vmem:[%s333 + $0x1380] sm:$0xff]
        %v1035 = vld [vmem:[%s333 + $0x1388] sm:$0xff]
        %v1036 = vld [vmem:[%s333 + $0x1390] sm:$0xff]
        %v1037 = vld [vmem:[%s333 + $0x1398] sm:$0xff]
        %v1038 = vld [vmem:[%s333 + $0x13a0] sm:$0xff]
        %v1039 = vld [vmem:[%s333 + $0x13a8] sm:$0xff]
        %v1040 = vld [vmem:[%s333 + $0x13b0] sm:$0xff]
        %v1041 = vld [vmem:[%s333 + $0x13b8] sm:$0xff]
        %v1042 = vld [vmem:[%s333 + $0x13c0] sm:$0xff]
        %v1043 = vld [vmem:[%s333 + $0x13c8] sm:$0xff]
        %v1044 = vld [vmem:[%s333 + $0x13d0] sm:$0xff]
        %v1045 = vld [vmem:[%s333 + $0x13d8] sm:$0xff]
        %v1046 = vld [vmem:[%s333 + $0x13e0] sm:$0xff]
        %v1047 = vld [vmem:[%s333 + $0x13e8] sm:$0xff]
        %v1048 = vld [vmem:[%s333 + $0x13f0] sm:$0xff]
        %v1049 = vld [vmem:[%s333 + $0x13f8] sm:$0xff]
        %v1050 = vld [vmem:[%s333 + $0x1400] sm:$0xff]
        %v1051 = vld [vmem:[%s333 + $0x1408] sm:$0xff]
        %v1052 = vld [vmem:[%s333 + $0x1410] sm:$0xff]
        %v1053 = vld [vmem:[%s333 + $0x1418] sm:$0xff]
        %v1054 = vld [vmem:[%s333 + $0x1420] sm:$0xff]
        %v1055 = vld [vmem:[%s333 + $0x1428] sm:$0xff]
        %v1056 = vld [vmem:[%s333 + $0x1430] sm:$0xff]
        %v1057 = vld [vmem:[%s333 + $0x1438] sm:$0xff]
        %v1058 = vld [vmem:[%s333 + $0x1440] sm:$0xff]
        %v1059 = vld [vmem:[%s333 + $0x1448] sm:$0xff]
        %v1060 = vld [vmem:[%s333 + $0x1450] sm:$0xff]
        %v1061 = vld [vmem:[%s333 + $0x1458] sm:$0xff]
        %v1062 = vld [vmem:[%s333 + $0x1460] sm:$0xff]
        %v1063 = vld [vmem:[%s333 + $0x1468] sm:$0xff]
        %v1064 = vld [vmem:[%s333 + $0x1470] sm:$0xff]
        %v1065 = vld [vmem:[%s333 + $0x1478] sm:$0xff]
        %v1066 = vld [vmem:[%s333 + $0x1480] sm:$0xff]
        %v1067 = vld [vmem:[%s333 + $0x1488] sm:$0xff]
        %v1068 = vld [vmem:[%s333 + $0x1490] sm:$0xff]
        %v1069 = vld [vmem:[%s333 + $0x1498] sm:$0xff]
        %v1070 = vld [vmem:[%s333 + $0x14a0] sm:$0xff]
        %v1071 = vld [vmem:[%s333 + $0x14a8] sm:$0xff]
        %v1072 = vld [vmem:[%s333 + $0x14b0] sm:$0xff]
        %v1073 = vld [vmem:[%s333 + $0x14b8] sm:$0xff]
        %v1074 = vld [vmem:[%s333 + $0x14c0] sm:$0xff]
        %v1075 = vld [vmem:[%s333 + $0x14c8] sm:$0xff]
        %v1076 = vld [vmem:[%s333 + $0x14d0] sm:$0xff]
        %v1077 = vld [vmem:[%s333 + $0x14d8] sm:$0xff]
        %v1078 = vld [vmem:[%s333 + $0x14e0] sm:$0xff]
        %v1079 = vld [vmem:[%s333 + $0x14e8] sm:$0xff]
        %v1080 = vld [vmem:[%s333 + $0x14f0] sm:$0xff]
        %v1081 = vld [vmem:[%s333 + $0x14f8] sm:$0xff]
        %v1082 = vld [vmem:[%s333 + $0x1500] sm:$0xff]
        %v1083 = vld [vmem:[%s333 + $0x1508] sm:$0xff]
        %v1084 = vld [vmem:[%s333 + $0x1510] sm:$0xff]
        %v1085 = vld [vmem:[%s333 + $0x1518] sm:$0xff]
        %v1086 = vld [vmem:[%s333 + $0x1520] sm:$0xff]
        %v1087 = vld [vmem:[%s333 + $0x1528] sm:$0xff]
        %v1088 = vld [vmem:[%s333 + $0x1530] sm:$0xff]
        %v1089 = vld [vmem:[%s333 + $0x1538] sm:$0xff]
        %v1090 = vld [vmem:[%s333 + $0x1540] sm:$0xff]
        %v1091 = vld [vmem:[%s333 + $0x1548] sm:$0xff]
        %v1092 = vld [vmem:[%s333 + $0x1550] sm:$0xff]
        %v1093 = vld [vmem:[%s333 + $0x1558] sm:$0xff]
        %v1094 = vld [vmem:[%s333 + $0x1560] sm:$0xff]
        %v1095 = vld [vmem:[%s333 + $0x1568] sm:$0xff]
        %v1096 = vld [vmem:[%s333 + $0x1570] sm:$0xff]
        %v1097 = vld [vmem:[%s333 + $0x1578] sm:$0xff]
        %v1098 = vld [vmem:[%s333 + $0x1580] sm:$0xff]
        %v1099 = vld [vmem:[%s333 + $0x1588] sm:$0xff]
        %v1100 = vld [vmem:[%s333 + $0x1590] sm:$0xff]
        %v1101 = vld [vmem:[%s333 + $0x1598] sm:$0xff]
        %v1102 = vld [vmem:[%s333 + $0x15a0] sm:$0xff]
        %v1103 = vld [vmem:[%s333 + $0x15a8] sm:$0xff]
        %v1104 = vld [vmem:[%s333 + $0x15b0] sm:$0xff]
        %v1105 = vld [vmem:[%s333 + $0x15b8] sm:$0xff]
        %v1106 = vld [vmem:[%s333 + $0x15c0] sm:$0xff]
        %v1107 = vld [vmem:[%s333 + $0x15c8] sm:$0xff]
        %v1108 = vld [vmem:[%s333 + $0x15d0] sm:$0xff]
        %v1109 = vld [vmem:[%s333 + $0x15d8] sm:$0xff]
        %v1110 = vld [vmem:[%s333 + $0x15e0] sm:$0xff]
        %v1111 = vld [vmem:[%s333 + $0x15e8] sm:$0xff]
        %v1112 = vld [vmem:[%s333 + $0x15f0] sm:$0xff]
        %v1113 = vld [vmem:[%s333 + $0x15f8] sm:$0xff]
        %v1114 = vld [vmem:[%s333 + $0x1600] sm:$0xff]
        %v1115 = vld [vmem:[%s333 + $0x1608] sm:$0xff]
        %v1116 = vld [vmem:[%s333 + $0x1610] sm:$0xff]
        %v1117 = vld [vmem:[%s333 + $0x1618] sm:$0xff]
        %v1118 = vld [vmem:[%s333 + $0x1620] sm:$0xff]
        %v1119 = vld [vmem:[%s333 + $0x1628] sm:$0xff]
        %v1120 = vld [vmem:[%s333 + $0x1630] sm:$0xff]
        %v1121 = vld [vmem:[%s333 + $0x1638] sm:$0xff]
        %v1122 = vld [vmem:[%s333 + $0x1640] sm:$0xff]
        %v1123 = vld [vmem:[%s333 + $0x1648] sm:$0xff]
        %v1124 = vld [vmem:[%s333 + $0x1650] sm:$0xff]
        %v1125 = vld [vmem:[%s333 + $0x1658] sm:$0xff]
        %v1126 = vld [vmem:[%s333 + $0x1660] sm:$0xff]
        %v1127 = vld [vmem:[%s333 + $0x1668] sm:$0xff]
        %v1128 = vld [vmem:[%s333 + $0x1670] sm:$0xff]
        %v1129 = vld [vmem:[%s333 + $0x1678] sm:$0xff]
        %v1130 = vld [vmem:[%s333 + $0x1680] sm:$0xff]
        %v1131 = vld [vmem:[%s333 + $0x1688] sm:$0xff]
        %v1132 = vld [vmem:[%s333 + $0x1690] sm:$0xff]
        %v1133 = vld [vmem:[%s333 + $0x1698] sm:$0xff]
        %v1134 = vld [vmem:[%s333 + $0x16a0] sm:$0xff]
        %v1135 = vld [vmem:[%s333 + $0x16a8] sm:$0xff]
        %v1136 = vld [vmem:[%s333 + $0x16b0] sm:$0xff]
        %v1137 = vld [vmem:[%s333 + $0x16b8] sm:$0xff]
        %v1138 = vld [vmem:[%s333 + $0x16c0] sm:$0xff]
        %v1139 = vld [vmem:[%s333 + $0x16c8] sm:$0xff]
        %v1140 = vld [vmem:[%s333 + $0x16d0] sm:$0xff]
        %v1141 = vld [vmem:[%s333 + $0x16d8] sm:$0xff]
        %v1142 = vld [vmem:[%s333 + $0x16e0] sm:$0xff]
        %v1143 = vld [vmem:[%s333 + $0x16e8] sm:$0xff]
        %v1144 = vld [vmem:[%s333 + $0x16f0] sm:$0xff]
        %v1145 = vld [vmem:[%s333 + $0x16f8] sm:$0xff]
        %v1146 = vld [vmem:[%s333 + $0x1700] sm:$0xff]
        %v1147 = vld [vmem:[%s333 + $0x1708] sm:$0xff]
        %v1148 = vld [vmem:[%s333 + $0x1710] sm:$0xff]
        %v1149 = vld [vmem:[%s333 + $0x1718] sm:$0xff]
        %v1150 = vld [vmem:[%s333 + $0x1720] sm:$0xff]
        %v1151 = vld [vmem:[%s333 + $0x1728] sm:$0xff]
        %v1152 = vld [vmem:[%s333 + $0x1730] sm:$0xff]
        %v1153 = vld [vmem:[%s333 + $0x1738] sm:$0xff]
        %v1154 = vld [vmem:[%s333 + $0x1740] sm:$0xff]
        %v1155 = vld [vmem:[%s333 + $0x1748] sm:$0xff]
        %v1156 = vld [vmem:[%s333 + $0x1750] sm:$0xff]
        %v1157 = vld [vmem:[%s333 + $0x1758] sm:$0xff]
        %v1158 = vld [vmem:[%s333 + $0x1760] sm:$0xff]
        %v1159 = vld [vmem:[%s333 + $0x1768] sm:$0xff]
        %v1160 = vld [vmem:[%s333 + $0x1770] sm:$0xff]
        %v1161 = vld [vmem:[%s333 + $0x1778] sm:$0xff]
        %v1162 = vld [vmem:[%s333 + $0x1780] sm:$0xff]
        %v1163 = vld [vmem:[%s333 + $0x1788] sm:$0xff]
        %v1164 = vld [vmem:[%s333 + $0x1790] sm:$0xff]
        %v1165 = vld [vmem:[%s333 + $0x1798] sm:$0xff]
        %v1166 = vld [vmem:[%s333 + $0x17a0] sm:$0xff]
        %v1167 = vld [vmem:[%s333 + $0x17a8] sm:$0xff]
        %v1168 = vld [vmem:[%s333 + $0x17b0] sm:$0xff]
        %v1169 = vld [vmem:[%s333 + $0x17b8] sm:$0xff]
        %v1170 = vld [vmem:[%s333 + $0x17c0] sm:$0xff]
        %v1171 = vld [vmem:[%s333 + $0x17c8] sm:$0xff]
        %v1172 = vld [vmem:[%s333 + $0x17d0] sm:$0xff]
        %v1173 = vld [vmem:[%s333 + $0x17d8] sm:$0xff]
        %v1174 = vld [vmem:[%s333 + $0x17e0] sm:$0xff]
        %v1175 = vld [vmem:[%s333 + $0x17e8] sm:$0xff]
        %v1176 = vld [vmem:[%s333 + $0x17f0] sm:$0xff]
        %v1177 = vld [vmem:[%s333 + $0x17f8] sm:$0xff]
        %v1178 = vld [vmem:[%s333 + $0x1800] sm:$0xff]
        %v1179 = vld [vmem:[%s333 + $0x1808] sm:$0xff]
        %v1180 = vld [vmem:[%s333 + $0x1810] sm:$0xff]
        %v1181 = vld [vmem:[%s333 + $0x1818] sm:$0xff]
        %v1182 = vld [vmem:[%s333 + $0x1820] sm:$0xff]
        %v1183 = vld [vmem:[%s333 + $0x1828] sm:$0xff]
        %v1184 = vld [vmem:[%s333 + $0x1830] sm:$0xff]
        %v1185 = vld [vmem:[%s333 + $0x1838] sm:$0xff]
        %v1186 = vld [vmem:[%s333 + $0x1840] sm:$0xff]
        %v1187 = vld [vmem:[%s333 + $0x1848] sm:$0xff]
        %v1188 = vld [vmem:[%s333 + $0x1850] sm:$0xff]
        %v1189 = vld [vmem:[%s333 + $0x1858] sm:$0xff]
        %v1190 = vld [vmem:[%s333 + $0x1860] sm:$0xff]
        %v1191 = vld [vmem:[%s333 + $0x1868] sm:$0xff]
        %v1192 = vld [vmem:[%s333 + $0x1870] sm:$0xff]
        %v1193 = vld [vmem:[%s333 + $0x1878] sm:$0xff]
        %v1194 = vld [vmem:[%s333 + $0x1880] sm:$0xff]
        %v1195 = vld [vmem:[%s333 + $0x1888] sm:$0xff]
        %v1196 = vld [vmem:[%s333 + $0x1890] sm:$0xff]
        %v1197 = vld [vmem:[%s333 + $0x1898] sm:$0xff]
        %v1198 = vld [vmem:[%s333 + $0x18a0] sm:$0xff]
        %v1199 = vld [vmem:[%s333 + $0x18a8] sm:$0xff]
        %v1200 = vld [vmem:[%s333 + $0x18b0] sm:$0xff]
        %v1201 = vld [vmem:[%s333 + $0x18b8] sm:$0xff]
        %v1202 = vld [vmem:[%s333 + $0x18c0] sm:$0xff]
        %v1203 = vld [vmem:[%s333 + $0x18c8] sm:$0xff]
        %v1204 = vld [vmem:[%s333 + $0x18d0] sm:$0xff]
        %v1205 = vld [vmem:[%s333 + $0x18d8] sm:$0xff]
        %v1206 = vld [vmem:[%s333 + $0x18e0] sm:$0xff]
        %v1207 = vld [vmem:[%s333 + $0x18e8] sm:$0xff]
        %v1208 = vld [vmem:[%s333 + $0x18f0] sm:$0xff]
        %v1209 = vld [vmem:[%s333 + $0x18f8] sm:$0xff]
        %v1210 = vld [vmem:[%s333 + $0x1900] sm:$0xff]
        %v1211 = vld [vmem:[%s333 + $0x1908] sm:$0xff]
        %v1212 = vld [vmem:[%s333 + $0x1910] sm:$0xff]
        %v1213 = vld [vmem:[%s333 + $0x1918] sm:$0xff]
        %v1214 = vld [vmem:[%s333 + $0x1920] sm:$0xff]
        %v1215 = vld [vmem:[%s333 + $0x1928] sm:$0xff]
        %v1216 = vld [vmem:[%s333 + $0x1930] sm:$0xff]
        %v1217 = vld [vmem:[%s333 + $0x1938] sm:$0xff]
        %v1218 = vld [vmem:[%s333 + $0x1940] sm:$0xff]
        %v1219 = vld [vmem:[%s333 + $0x1948] sm:$0xff]
        %v1220 = vld [vmem:[%s333 + $0x1950] sm:$0xff]
        %v1221 = vld [vmem:[%s333 + $0x1958] sm:$0xff]
        %v1222 = vld [vmem:[%s333 + $0x1960] sm:$0xff]
        %v1223 = vld [vmem:[%s333 + $0x1968] sm:$0xff]
        %v1224 = vld [vmem:[%s333 + $0x1970] sm:$0xff]
        %v1225 = vld [vmem:[%s333 + $0x1978] sm:$0xff]
        %v1226 = vld [vmem:[%s333 + $0x1980] sm:$0xff]
        %v1227 = vld [vmem:[%s333 + $0x1988] sm:$0xff]
        %v1228 = vld [vmem:[%s333 + $0x1990] sm:$0xff]
        %v1229 = vld [vmem:[%s333 + $0x1998] sm:$0xff]
        %v1230 = vld [vmem:[%s333 + $0x19a0] sm:$0xff]
        %v1231 = vld [vmem:[%s333 + $0x19a8] sm:$0xff]
        %v1232 = vld [vmem:[%s333 + $0x19b0] sm:$0xff]
        %v1233 = vld [vmem:[%s333 + $0x19b8] sm:$0xff]
        %v1234 = vld [vmem:[%s333 + $0x19c0] sm:$0xff]
        %v1235 = vld [vmem:[%s333 + $0x19c8] sm:$0xff]
        %v1236 = vld [vmem:[%s333 + $0x19d0] sm:$0xff]
        %v1237 = vld [vmem:[%s333 + $0x19d8] sm:$0xff]
        %v1238 = vld [vmem:[%s333 + $0x19e0] sm:$0xff]
        %v1239 = vld [vmem:[%s333 + $0x19e8] sm:$0xff]
        %v1240 = vld [vmem:[%s333 + $0x19f0] sm:$0xff]
        %v1241 = vld [vmem:[%s333 + $0x19f8] sm:$0xff]
        %v1242 = vld [vmem:[%s333 + $0x1a00] sm:$0xff]
        %v1243 = vld [vmem:[%s333 + $0x1a08] sm:$0xff]
        %v1244 = vld [vmem:[%s333 + $0x1a10] sm:$0xff]
        %v1245 = vld [vmem:[%s333 + $0x1a18] sm:$0xff]
        %v1246 = vld [vmem:[%s333 + $0x1a20] sm:$0xff]
        %v1247 = vld [vmem:[%s333 + $0x1a28] sm:$0xff]
        %v1248 = vld [vmem:[%s333 + $0x1a30] sm:$0xff]
        %v1249 = vld [vmem:[%s333 + $0x1a38] sm:$0xff]
        %v1250 = vld [vmem:[%s333 + $0x1a40] sm:$0xff]
        %v1251 = vld [vmem:[%s333 + $0x1a48] sm:$0xff]
        %v1252 = vld [vmem:[%s333 + $0x1a50] sm:$0xff]
        %v1253 = vld [vmem:[%s333 + $0x1a58] sm:$0xff]
        %v1254 = vld [vmem:[%s333 + $0x1a60] sm:$0xff]
        %v1255 = vld [vmem:[%s333 + $0x1a68] sm:$0xff]
        %v1256 = vld [vmem:[%s333 + $0x1a70] sm:$0xff]
        %v1257 = vld [vmem:[%s333 + $0x1a78] sm:$0xff]
        %v1258 = vld [vmem:[%s333 + $0x1a80] sm:$0xff]
        %v1259 = vld [vmem:[%s333 + $0x1a88] sm:$0xff]
        %v1260 = vld [vmem:[%s333 + $0x1a90] sm:$0xff]
        %v1261 = vld [vmem:[%s333 + $0x1a98] sm:$0xff]
        %v1262 = vld [vmem:[%s333 + $0x1aa0] sm:$0xff]
        %v1263 = vld [vmem:[%s333 + $0x1aa8] sm:$0xff]
        %v1264 = vld [vmem:[%s333 + $0x1ab0] sm:$0xff]
        %v1265 = vld [vmem:[%s333 + $0x1ab8] sm:$0xff]
        %v1266 = vld [vmem:[%s333 + $0x1ac0] sm:$0xff]
        %v1267 = vld [vmem:[%s333 + $0x1ac8] sm:$0xff]
        %v1268 = vld [vmem:[%s333 + $0x1ad0] sm:$0xff]
        %v1269 = vld [vmem:[%s333 + $0x1ad8] sm:$0xff]
        %v1270 = vld [vmem:[%s333 + $0x1ae0] sm:$0xff]
        %v1271 = vld [vmem:[%s333 + $0x1ae8] sm:$0xff]
        %v1272 = vld [vmem:[%s333 + $0x1af0] sm:$0xff]
        %v1273 = vld [vmem:[%s333 + $0x1af8] sm:$0xff]
        %v1274 = vld [vmem:[%s333 + $0x1b00] sm:$0xff]
        %v1275 = vld [vmem:[%s333 + $0x1b08] sm:$0xff]
        %v1276 = vld [vmem:[%s333 + $0x1b10] sm:$0xff]
        %v1277 = vld [vmem:[%s333 + $0x1b18] sm:$0xff]
        %v1278 = vld [vmem:[%s333 + $0x1b20] sm:$0xff]
        %v1279 = vld [vmem:[%s333 + $0x1b28] sm:$0xff]
        %v1280 = vld [vmem:[%s333 + $0x1b30] sm:$0xff]
        %v1281 = vld [vmem:[%s333 + $0x1b38] sm:$0xff]
        %v1282 = vld [vmem:[%s333 + $0x1b40] sm:$0xff]
        %v1283 = vld [vmem:[%s333 + $0x1b48] sm:$0xff]
        %v1284 = vld [vmem:[%s333 + $0x1b50] sm:$0xff]
        %v1285 = vld [vmem:[%s333 + $0x1b58] sm:$0xff]
        %v1286 = vld [vmem:[%s333 + $0x1b60] sm:$0xff]
        %v1287 = vld [vmem:[%s333 + $0x1b68] sm:$0xff]
        %v1288 = vld [vmem:[%s333 + $0x1b70] sm:$0xff]
        %v1289 = vld [vmem:[%s333 + $0x1b78] sm:$0xff]
        %v1290 = vld [vmem:[%s333 + $0x1b80] sm:$0xff]
        %v1291 = vld [vmem:[%s333 + $0x1b88] sm:$0xff]
        %v1292 = vld [vmem:[%s333 + $0x1b90] sm:$0xff]
        %v1293 = vld [vmem:[%s333 + $0x1b98] sm:$0xff]
        %v1294 = vld [vmem:[%s333 + $0x1ba0] sm:$0xff]
        %v1295 = vld [vmem:[%s333 + $0x1ba8] sm:$0xff]
        %v1296 = vld [vmem:[%s333 + $0x1bb0] sm:$0xff]
        %v1297 = vld [vmem:[%s333 + $0x1bb8] sm:$0xff]
        %v1298 = vld [vmem:[%s333 + $0x1bc0] sm:$0xff]
        %v1299 = vld [vmem:[%s333 + $0x1bc8] sm:$0xff]
        %v1300 = vld [vmem:[%s333 + $0x1bd0] sm:$0xff]
        %v1301 = vld [vmem:[%s333 + $0x1bd8] sm:$0xff]
        %v1302 = vld [vmem:[%s333 + $0x1be0] sm:$0xff]
        %v1303 = vld [vmem:[%s333 + $0x1be8] sm:$0xff]
        %v1304 = vld [vmem:[%s333 + $0x1bf0] sm:$0xff]
        %v1305 = vld [vmem:[%s333 + $0x1bf8] sm:$0xff]
        %v1313 = vunpack.c.l.b16 %v395
        %v1314 = vunpack.c.h.b16 %v395
        %v1315 = vunpack.c.l.b16 %v396
        %v1316 = vunpack.c.h.b16 %v396
        %v1317 = vunpack.c.l.b16 %v397
        %v1318 = vunpack.c.h.b16 %v397
        %v1319 = vunpack.c.l.b16 %v398
        %v1320 = vunpack.c.h.b16 %v398
        %v1321 = vunpack.c.l.b16 %v399
        %v1322 = vunpack.c.h.b16 %v399
        %v1323 = vunpack.c.l.b16 %v400
        %v1324 = vunpack.c.h.b16 %v400
        %v1325 = vunpack.c.l.b16 %v401
        %v1326 = vunpack.c.h.b16 %v401
        %v1327 = vpack.c.b16 %v1313, %v1313
        %v1328 = vpack.c.b16 %v1314, %v1314
        %v1329 = vpack.c.b16 %v1315, %v1315
        %v1330 = vpack.c.b16 %v1316, %v1316
        %v1331 = vpack.c.b16 %v1317, %v1317
        %v1332 = vpack.c.b16 %v1318, %v1318
        %v1333 = vpack.c.b16 %v1319, %v1319
        %v1334 = vpack.c.b16 %v1320, %v1320
        %v1335 = vpack.c.b16 %v1321, %v1321
        %v1336 = vpack.c.b16 %v1322, %v1322
        %v1337 = vpack.c.b16 %v1323, %v1323
        %v1338 = vpack.c.b16 %v1324, %v1324
        %v1339 = vpack.c.b16 %v1325, %v1325
        %v1340 = vpack.c.b16 %v1326, %v1326
        %v2251 = vunpack.c.l.b16 %v410
        %v2252 = vunpack.c.h.b16 %v410
        %v2253 = vunpack.c.l.b16 %v411
        %v2254 = vunpack.c.h.b16 %v411
        %v2255 = vunpack.c.l.b16 %v412
        %v2256 = vunpack.c.h.b16 %v412
        %v2257 = vunpack.c.l.b16 %v413
        %v2258 = vunpack.c.h.b16 %v413
        %v2259 = vunpack.c.l.b16 %v414
        %v2260 = vunpack.c.h.b16 %v414
        %v2261 = vunpack.c.l.b16 %v415
        %v2262 = vunpack.c.h.b16 %v415
        %v2263 = vunpack.c.l.b16 %v416
        %v2264 = vunpack.c.h.b16 %v416
        %v2265 = vunpack.c.l.b16 %v417
        %v2266 = vunpack.c.h.b16 %v417
        %v2267 = vunpack.c.l.b16 %v418
        %v2268 = vunpack.c.h.b16 %v418
        %v2269 = vunpack.c.l.b16 %v419
        %v2270 = vunpack.c.h.b16 %v419
        %v2271 = vunpack.c.l.b16 %v420
        %v2272 = vunpack.c.h.b16 %v420
        %v2273 = vunpack.c.l.b16 %v421
        %v2274 = vunpack.c.h.b16 %v421
        %v2275 = vunpack.c.l.b16 %v422
        %v2276 = vunpack.c.h.b16 %v422
        %v2277 = vunpack.c.l.b16 %v423
        %v2278 = vunpack.c.h.b16 %v423
        %v2279 = vunpack.c.l.b16 %v424
        %v2280 = vunpack.c.h.b16 %v424
        %v2281 = vunpack.c.l.b16 %v425
        %v2282 = vunpack.c.h.b16 %v425
        %v2283 = vunpack.c.l.b16 %v426
        %v2284 = vunpack.c.h.b16 %v426
        %v2285 = vunpack.c.l.b16 %v427
        %v2286 = vunpack.c.h.b16 %v427
        %v2287 = vunpack.c.l.b16 %v428
        %v2288 = vunpack.c.h.b16 %v428
        %v2289 = vunpack.c.l.b16 %v429
        %v2290 = vunpack.c.h.b16 %v429
        %v2291 = vunpack.c.l.b16 %v430
        %v2292 = vunpack.c.h.b16 %v430
        %v2293 = vunpack.c.l.b16 %v431
        %v2294 = vunpack.c.h.b16 %v431
        %v2295 = vunpack.c.l.b16 %v432
        %v2296 = vunpack.c.h.b16 %v432
        %v2297 = vunpack.c.l.b16 %v433
        %v2298 = vunpack.c.h.b16 %v433
        %v2299 = vunpack.c.l.b16 %v434
        %v2300 = vunpack.c.h.b16 %v434
        %v2301 = vunpack.c.l.b16 %v435
        %v2302 = vunpack.c.h.b16 %v435
        %v2303 = vunpack.c.l.b16 %v436
        %v2304 = vunpack.c.h.b16 %v436
        %v2305 = vunpack.c.l.b16 %v437
        %v2306 = vunpack.c.h.b16 %v437
        %v2307 = vunpack.c.l.b16 %v438
        %v2308 = vunpack.c.h.b16 %v438
        %v2309 = vunpack.c.l.b16 %v439
        %v2310 = vunpack.c.h.b16 %v439
        %v2311 = vunpack.c.l.b16 %v440
        %v2312 = vunpack.c.h.b16 %v440
        %v2313 = vunpack.c.l.b16 %v441
        %v2314 = vunpack.c.h.b16 %v441
        %v2315 = vunpack.c.l.b16 %v442
        %v2316 = vunpack.c.h.b16 %v442
        %v2317 = vunpack.c.l.b16 %v443
        %v2318 = vunpack.c.h.b16 %v443
        %v2319 = vunpack.c.l.b16 %v444
        %v2320 = vunpack.c.h.b16 %v444
        %v2321 = vunpack.c.l.b16 %v445
        %v2322 = vunpack.c.h.b16 %v445
        %v2323 = vunpack.c.l.b16 %v446
        %v2324 = vunpack.c.h.b16 %v446
        %v2325 = vunpack.c.l.b16 %v447
        %v2326 = vunpack.c.h.b16 %v447
        %v2327 = vunpack.c.l.b16 %v448
        %v2328 = vunpack.c.h.b16 %v448
        %v2329 = vunpack.c.l.b16 %v449
        %v2330 = vunpack.c.h.b16 %v449
        %v2331 = vunpack.c.l.b16 %v450
        %v2332 = vunpack.c.h.b16 %v450
        %v2333 = vunpack.c.l.b16 %v451
        %v2334 = vunpack.c.h.b16 %v451
        %v2335 = vunpack.c.l.b16 %v452
        %v2336 = vunpack.c.h.b16 %v452
        %v2337 = vunpack.c.l.b16 %v453
        %v2338 = vunpack.c.h.b16 %v453
        %v2339 = vunpack.c.l.b16 %v454
        %v2340 = vunpack.c.h.b16 %v454
        %v2341 = vunpack.c.l.b16 %v455
        %v2342 = vunpack.c.h.b16 %v455
        %v2343 = vunpack.c.l.b16 %v456
        %v2344 = vunpack.c.h.b16 %v456
        %v2345 = vunpack.c.l.b16 %v457
        %v2346 = vunpack.c.h.b16 %v457
        %v2347 = vunpack.c.l.b16 %v458
        %v2348 = vunpack.c.h.b16 %v458
        %v2349 = vunpack.c.l.b16 %v459
        %v2350 = vunpack.c.h.b16 %v459
        %v2351 = vunpack.c.l.b16 %v460
        %v2352 = vunpack.c.h.b16 %v460
        %v2353 = vunpack.c.l.b16 %v461
        %v2354 = vunpack.c.h.b16 %v461
        %v2355 = vunpack.c.l.b16 %v462
        %v2356 = vunpack.c.h.b16 %v462
        %v2357 = vunpack.c.l.b16 %v463
        %v2358 = vunpack.c.h.b16 %v463
        %v2359 = vunpack.c.l.b16 %v464
        %v2360 = vunpack.c.h.b16 %v464
        %v2361 = vunpack.c.l.b16 %v465
        %v2362 = vunpack.c.h.b16 %v465
        %v2363 = vunpack.c.l.b16 %v466
        %v2364 = vunpack.c.h.b16 %v466
        %v2365 = vunpack.c.l.b16 %v467
        %v2366 = vunpack.c.h.b16 %v467
        %v2367 = vunpack.c.l.b16 %v468
        %v2368 = vunpack.c.h.b16 %v468
        %v2369 = vunpack.c.l.b16 %v469
        %v2370 = vunpack.c.h.b16 %v469
        %v2371 = vunpack.c.l.b16 %v470
        %v2372 = vunpack.c.h.b16 %v470
        %v2373 = vunpack.c.l.b16 %v471
        %v2374 = vunpack.c.h.b16 %v471
        %v2375 = vunpack.c.l.b16 %v472
        %v2376 = vunpack.c.h.b16 %v472
        %v2377 = vunpack.c.l.b16 %v473
        %v2378 = vunpack.c.h.b16 %v473
        %v2379 = vunpack.c.l.b16 %v474
        %v2380 = vunpack.c.h.b16 %v474
        %v2381 = vunpack.c.l.b16 %v475
        %v2382 = vunpack.c.h.b16 %v475
        %v2383 = vunpack.c.l.b16 %v476
        %v2384 = vunpack.c.h.b16 %v476
        %v2385 = vunpack.c.l.b16 %v477
        %v2386 = vunpack.c.h.b16 %v477
        %v2387 = vunpack.c.l.b16 %v478
        %v2388 = vunpack.c.h.b16 %v478
        %v2389 = vunpack.c.l.b16 %v479
        %v2390 = vunpack.c.h.b16 %v479
        %v2391 = vunpack.c.l.b16 %v480
        %v2392 = vunpack.c.h.b16 %v480
        %v2393 = vunpack.c.l.b16 %v481
        %v2394 = vunpack.c.h.b16 %v481
        %v2395 = vunpack.c.l.b16 %v482
        %v2396 = vunpack.c.h.b16 %v482
        %v2397 = vunpack.c.l.b16 %v483
        %v2398 = vunpack.c.h.b16 %v483
        %v2399 = vunpack.c.l.b16 %v484
        %v2400 = vunpack.c.h.b16 %v484
        %v2401 = vunpack.c.l.b16 %v485
        %v2402 = vunpack.c.h.b16 %v485
        %v2403 = vunpack.c.l.b16 %v486
        %v2404 = vunpack.c.h.b16 %v486
        %v2405 = vunpack.c.l.b16 %v487
        %v2406 = vunpack.c.h.b16 %v487
        %v2407 = vunpack.c.l.b16 %v488
        %v2408 = vunpack.c.h.b16 %v488
        %v2409 = vunpack.c.l.b16 %v489
        %v2410 = vunpack.c.h.b16 %v489
        %v2411 = vunpack.c.l.b16 %v490
        %v2412 = vunpack.c.h.b16 %v490
        %v2413 = vunpack.c.l.b16 %v491
        %v2414 = vunpack.c.h.b16 %v491
        %v2415 = vunpack.c.l.b16 %v492
        %v2416 = vunpack.c.h.b16 %v492
        %v2417 = vunpack.c.l.b16 %v493
        %v2418 = vunpack.c.h.b16 %v493
        %v2419 = vunpack.c.l.b16 %v494
        %v2420 = vunpack.c.h.b16 %v494
        %v2421 = vunpack.c.l.b16 %v495
        %v2422 = vunpack.c.h.b16 %v495
        %v2423 = vunpack.c.l.b16 %v496
        %v2424 = vunpack.c.h.b16 %v496
        %v2425 = vunpack.c.l.b16 %v497
        %v2426 = vunpack.c.h.b16 %v497
        %v2427 = vunpack.c.l.b16 %v498
        %v2428 = vunpack.c.h.b16 %v498
        %v2429 = vunpack.c.l.b16 %v499
        %v2430 = vunpack.c.h.b16 %v499
        %v2431 = vunpack.c.l.b16 %v500
        %v2432 = vunpack.c.h.b16 %v500
        %v2433 = vunpack.c.l.b16 %v501
        %v2434 = vunpack.c.h.b16 %v501
        %v2435 = vunpack.c.l.b16 %v502
        %v2436 = vunpack.c.h.b16 %v502
        %v2437 = vunpack.c.l.b16 %v503
        %v2438 = vunpack.c.h.b16 %v503
        %v2439 = vunpack.c.l.b16 %v504
        %v2440 = vunpack.c.h.b16 %v504
        %v2441 = vunpack.c.l.b16 %v505
        %v2442 = vunpack.c.h.b16 %v505
        %v2443 = vunpack.c.l.b16 %v506
        %v2444 = vunpack.c.h.b16 %v506
        %v2445 = vunpack.c.l.b16 %v507
        %v2446 = vunpack.c.h.b16 %v507
        %v2447 = vunpack.c.l.b16 %v508
        %v2448 = vunpack.c.h.b16 %v508
        %v2449 = vunpack.c.l.b16 %v509
        %v2450 = vunpack.c.h.b16 %v509
        %v2451 = vunpack.c.l.b16 %v510
        %v2452 = vunpack.c.h.b16 %v510
        %v2453 = vunpack.c.l.b16 %v511
        %v2454 = vunpack.c.h.b16 %v511
        %v2455 = vunpack.c.l.b16 %v512
        %v2456 = vunpack.c.h.b16 %v512
        %v2457 = vunpack.c.l.b16 %v513
        %v2458 = vunpack.c.h.b16 %v513
        %v2459 = vunpack.c.l.b16 %v514
        %v2460 = vunpack.c.h.b16 %v514
        %v2461 = vunpack.c.l.b16 %v515
        %v2462 = vunpack.c.h.b16 %v515
        %v2463 = vunpack.c.l.b16 %v516
        %v2464 = vunpack.c.h.b16 %v516
        %v2465 = vunpack.c.l.b16 %v517
        %v2466 = vunpack.c.h.b16 %v517
        %v2467 = vunpack.c.l.b16 %v518
        %v2468 = vunpack.c.h.b16 %v518
        %v2469 = vunpack.c.l.b16 %v519
        %v2470 = vunpack.c.h.b16 %v519
        %v2471 = vunpack.c.l.b16 %v520
        %v2472 = vunpack.c.h.b16 %v520
        %v2473 = vunpack.c.l.b16 %v521
        %v2474 = vunpack.c.h.b16 %v521
        %v2475 = vunpack.c.l.b16 %v522
        %v2476 = vunpack.c.h.b16 %v522
        %v2477 = vunpack.c.l.b16 %v523
        %v2478 = vunpack.c.h.b16 %v523
        %v2479 = vunpack.c.l.b16 %v524
        %v2480 = vunpack.c.h.b16 %v524
        %v2481 = vunpack.c.l.b16 %v525
        %v2482 = vunpack.c.h.b16 %v525
        %v2483 = vunpack.c.l.b16 %v526
        %v2484 = vunpack.c.h.b16 %v526
        %v2485 = vunpack.c.l.b16 %v527
        %v2486 = vunpack.c.h.b16 %v527
        %v2487 = vunpack.c.l.b16 %v528
        %v2488 = vunpack.c.h.b16 %v528
        %v2489 = vunpack.c.l.b16 %v529
        %v2490 = vunpack.c.h.b16 %v529
        %v2491 = vunpack.c.l.b16 %v530
        %v2492 = vunpack.c.h.b16 %v530
        %v2493 = vunpack.c.l.b16 %v531
        %v2494 = vunpack.c.h.b16 %v531
        %v2495 = vunpack.c.l.b16 %v532
        %v2496 = vunpack.c.h.b16 %v532
        %v2497 = vunpack.c.l.b16 %v533
        %v2498 = vunpack.c.h.b16 %v533
        %v2499 = vunpack.c.l.b16 %v534
        %v2500 = vunpack.c.h.b16 %v534
        %v2501 = vunpack.c.l.b16 %v535
        %v2502 = vunpack.c.h.b16 %v535
        %v2503 = vunpack.c.l.b16 %v536
        %v2504 = vunpack.c.h.b16 %v536
        %v2505 = vunpack.c.l.b16 %v537
        %v2506 = vunpack.c.h.b16 %v537
        %v2507 = vunpack.c.l.b16 %v538
        %v2508 = vunpack.c.h.b16 %v538
        %v2509 = vunpack.c.l.b16 %v539
        %v2510 = vunpack.c.h.b16 %v539
        %v2511 = vunpack.c.l.b16 %v540
        %v2512 = vunpack.c.h.b16 %v540
        %v2513 = vunpack.c.l.b16 %v541
        %v2514 = vunpack.c.h.b16 %v541
        %v2515 = vunpack.c.l.b16 %v542
        %v2516 = vunpack.c.h.b16 %v542
        %v2517 = vunpack.c.l.b16 %v543
        %v2518 = vunpack.c.h.b16 %v543
        %v2519 = vunpack.c.l.b16 %v544
        %v2520 = vunpack.c.h.b16 %v544
        %v2521 = vunpack.c.l.b16 %v545
        %v2522 = vunpack.c.h.b16 %v545
        %v2523 = vunpack.c.l.b16 %v546
        %v2524 = vunpack.c.h.b16 %v546
        %v2525 = vunpack.c.l.b16 %v547
        %v2526 = vunpack.c.h.b16 %v547
        %v2527 = vunpack.c.l.b16 %v548
        %v2528 = vunpack.c.h.b16 %v548
        %v2529 = vunpack.c.l.b16 %v549
        %v2530 = vunpack.c.h.b16 %v549
        %v2531 = vunpack.c.l.b16 %v550
        %v2532 = vunpack.c.h.b16 %v550
        %v2533 = vunpack.c.l.b16 %v551
        %v2534 = vunpack.c.h.b16 %v551
        %v2535 = vunpack.c.l.b16 %v552
        %v2536 = vunpack.c.h.b16 %v552
        %v2537 = vunpack.c.l.b16 %v553
        %v2538 = vunpack.c.h.b16 %v553
        %v2539 = vunpack.c.l.b16 %v554
        %v2540 = vunpack.c.h.b16 %v554
        %v2541 = vunpack.c.l.b16 %v555
        %v2542 = vunpack.c.h.b16 %v555
        %v2543 = vunpack.c.l.b16 %v556
        %v2544 = vunpack.c.h.b16 %v556
        %v2545 = vunpack.c.l.b16 %v557
        %v2546 = vunpack.c.h.b16 %v557
        %v2547 = vunpack.c.l.b16 %v558
        %v2548 = vunpack.c.h.b16 %v558
        %v2549 = vunpack.c.l.b16 %v559
        %v2550 = vunpack.c.h.b16 %v559
        %v2551 = vunpack.c.l.b16 %v560
        %v2552 = vunpack.c.h.b16 %v560
        %v2553 = vunpack.c.l.b16 %v561
        %v2554 = vunpack.c.h.b16 %v561
        %v2555 = vunpack.c.l.b16 %v562
        %v2556 = vunpack.c.h.b16 %v562
        %v2557 = vunpack.c.l.b16 %v563
        %v2558 = vunpack.c.h.b16 %v563
        %v2559 = vunpack.c.l.b16 %v564
        %v2560 = vunpack.c.h.b16 %v564
        %v2561 = vunpack.c.l.b16 %v565
        %v2562 = vunpack.c.h.b16 %v565
        %v2563 = vunpack.c.l.b16 %v566
        %v2564 = vunpack.c.h.b16 %v566
        %v2565 = vunpack.c.l.b16 %v567
        %v2566 = vunpack.c.h.b16 %v567
        %v2567 = vunpack.c.l.b16 %v568
        %v2568 = vunpack.c.h.b16 %v568
        %v2569 = vunpack.c.l.b16 %v569
        %v2570 = vunpack.c.h.b16 %v569
        %v2571 = vunpack.c.l.b16 %v570
        %v2572 = vunpack.c.h.b16 %v570
        %v2573 = vunpack.c.l.b16 %v571
        %v2574 = vunpack.c.h.b16 %v571
        %v2575 = vunpack.c.l.b16 %v572
        %v2576 = vunpack.c.h.b16 %v572
        %v2577 = vunpack.c.l.b16 %v573
        %v2578 = vunpack.c.h.b16 %v573
        %v2579 = vunpack.c.l.b16 %v574
        %v2580 = vunpack.c.h.b16 %v574
        %v2581 = vunpack.c.l.b16 %v575
        %v2582 = vunpack.c.h.b16 %v575
        %v2583 = vunpack.c.l.b16 %v576
        %v2584 = vunpack.c.h.b16 %v576
        %v2585 = vunpack.c.l.b16 %v577
        %v2586 = vunpack.c.h.b16 %v577
        %v2587 = vunpack.c.l.b16 %v578
        %v2588 = vunpack.c.h.b16 %v578
        %v2589 = vunpack.c.l.b16 %v579
        %v2590 = vunpack.c.h.b16 %v579
        %v2591 = vunpack.c.l.b16 %v580
        %v2592 = vunpack.c.h.b16 %v580
        %v2593 = vunpack.c.l.b16 %v581
        %v2594 = vunpack.c.h.b16 %v581
        %v2595 = vunpack.c.l.b16 %v582
        %v2596 = vunpack.c.h.b16 %v582
        %v2597 = vunpack.c.l.b16 %v583
        %v2598 = vunpack.c.h.b16 %v583
        %v2599 = vunpack.c.l.b16 %v584
        %v2600 = vunpack.c.h.b16 %v584
        %v2601 = vunpack.c.l.b16 %v585
        %v2602 = vunpack.c.h.b16 %v585
        %v2603 = vunpack.c.l.b16 %v586
        %v2604 = vunpack.c.h.b16 %v586
        %v2605 = vunpack.c.l.b16 %v587
        %v2606 = vunpack.c.h.b16 %v587
        %v2607 = vunpack.c.l.b16 %v588
        %v2608 = vunpack.c.h.b16 %v588
        %v2609 = vunpack.c.l.b16 %v589
        %v2610 = vunpack.c.h.b16 %v589
        %v2611 = vunpack.c.l.b16 %v590
        %v2612 = vunpack.c.h.b16 %v590
        %v2613 = vunpack.c.l.b16 %v591
        %v2614 = vunpack.c.h.b16 %v591
        %v2615 = vunpack.c.l.b16 %v592
        %v2616 = vunpack.c.h.b16 %v592
        %v2617 = vunpack.c.l.b16 %v593
        %v2618 = vunpack.c.h.b16 %v593
        %v2619 = vunpack.c.l.b16 %v594
        %v2620 = vunpack.c.h.b16 %v594
        %v2621 = vunpack.c.l.b16 %v595
        %v2622 = vunpack.c.h.b16 %v595
        %v2623 = vunpack.c.l.b16 %v596
        %v2624 = vunpack.c.h.b16 %v596
        %v2625 = vunpack.c.l.b16 %v597
        %v2626 = vunpack.c.h.b16 %v597
        %v2627 = vunpack.c.l.b16 %v598
        %v2628 = vunpack.c.h.b16 %v598
        %v2629 = vunpack.c.l.b16 %v599
        %v2630 = vunpack.c.h.b16 %v599
        %v2631 = vunpack.c.l.b16 %v600
        %v2632 = vunpack.c.h.b16 %v600
        %v2633 = vunpack.c.l.b16 %v601
        %v2634 = vunpack.c.h.b16 %v601
        %v2635 = vunpack.c.l.b16 %v602
        %v2636 = vunpack.c.h.b16 %v602
        %v2637 = vunpack.c.l.b16 %v603
        %v2638 = vunpack.c.h.b16 %v603
        %v2639 = vunpack.c.l.b16 %v604
        %v2640 = vunpack.c.h.b16 %v604
        %v2641 = vunpack.c.l.b16 %v605
        %v2642 = vunpack.c.h.b16 %v605
        %v2643 = vunpack.c.l.b16 %v606
        %v2644 = vunpack.c.h.b16 %v606
        %v2645 = vunpack.c.l.b16 %v607
        %v2646 = vunpack.c.h.b16 %v607
        %v2647 = vunpack.c.l.b16 %v608
        %v2648 = vunpack.c.h.b16 %v608
        %v2649 = vunpack.c.l.b16 %v609
        %v2650 = vunpack.c.h.b16 %v609
        %v2651 = vunpack.c.l.b16 %v610
        %v2652 = vunpack.c.h.b16 %v610
        %v2653 = vunpack.c.l.b16 %v611
        %v2654 = vunpack.c.h.b16 %v611
        %v2655 = vunpack.c.l.b16 %v612
        %v2656 = vunpack.c.h.b16 %v612
        %v2657 = vunpack.c.l.b16 %v613
        %v2658 = vunpack.c.h.b16 %v613
        %v2659 = vunpack.c.l.b16 %v614
        %v2660 = vunpack.c.h.b16 %v614
        %v2661 = vunpack.c.l.b16 %v615
        %v2662 = vunpack.c.h.b16 %v615
        %v2663 = vunpack.c.l.b16 %v616
        %v2664 = vunpack.c.h.b16 %v616
        %v2665 = vunpack.c.l.b16 %v617
        %v2666 = vunpack.c.h.b16 %v617
        %v2667 = vunpack.c.l.b16 %v618
        %v2668 = vunpack.c.h.b16 %v618
        %v2669 = vunpack.c.l.b16 %v619
        %v2670 = vunpack.c.h.b16 %v619
        %v2671 = vunpack.c.l.b16 %v620
        %v2672 = vunpack.c.h.b16 %v620
        %v2673 = vunpack.c.l.b16 %v621
        %v2674 = vunpack.c.h.b16 %v621
        %v2675 = vunpack.c.l.b16 %v622
        %v2676 = vunpack.c.h.b16 %v622
        %v2677 = vunpack.c.l.b16 %v623
        %v2678 = vunpack.c.h.b16 %v623
        %v2679 = vunpack.c.l.b16 %v624
        %v2680 = vunpack.c.h.b16 %v624
        %v2681 = vunpack.c.l.b16 %v625
        %v2682 = vunpack.c.h.b16 %v625
        %v2683 = vunpack.c.l.b16 %v626
        %v2684 = vunpack.c.h.b16 %v626
        %v2685 = vunpack.c.l.b16 %v627
        %v2686 = vunpack.c.h.b16 %v627
        %v2687 = vunpack.c.l.b16 %v628
        %v2688 = vunpack.c.h.b16 %v628
        %v2689 = vunpack.c.l.b16 %v629
        %v2690 = vunpack.c.h.b16 %v629
        %v2691 = vunpack.c.l.b16 %v630
        %v2692 = vunpack.c.h.b16 %v630
        %v2693 = vunpack.c.l.b16 %v631
        %v2694 = vunpack.c.h.b16 %v631
        %v2695 = vunpack.c.l.b16 %v632
        %v2696 = vunpack.c.h.b16 %v632
        %v2697 = vunpack.c.l.b16 %v633
        %v2698 = vunpack.c.h.b16 %v633
        %v2699 = vunpack.c.l.b16 %v634
        %v2700 = vunpack.c.h.b16 %v634
        %v2701 = vunpack.c.l.b16 %v635
        %v2702 = vunpack.c.h.b16 %v635
        %v2703 = vunpack.c.l.b16 %v636
        %v2704 = vunpack.c.h.b16 %v636
        %v2705 = vunpack.c.l.b16 %v637
        %v2706 = vunpack.c.h.b16 %v637
        %v2707 = vunpack.c.l.b16 %v638
        %v2708 = vunpack.c.h.b16 %v638
        %v2709 = vunpack.c.l.b16 %v639
        %v2710 = vunpack.c.h.b16 %v639
        %v2711 = vunpack.c.l.b16 %v640
        %v2712 = vunpack.c.h.b16 %v640
        %v2713 = vunpack.c.l.b16 %v641
        %v2714 = vunpack.c.h.b16 %v641
        %v2715 = vunpack.c.l.b16 %v642
        %v2716 = vunpack.c.h.b16 %v642
        %v2717 = vunpack.c.l.b16 %v643
        %v2718 = vunpack.c.h.b16 %v643
        %v2719 = vunpack.c.l.b16 %v644
        %v2720 = vunpack.c.h.b16 %v644
        %v2721 = vunpack.c.l.b16 %v645
        %v2722 = vunpack.c.h.b16 %v645
        %v2723 = vunpack.c.l.b16 %v646
        %v2724 = vunpack.c.h.b16 %v646
        %v2725 = vunpack.c.l.b16 %v647
        %v2726 = vunpack.c.h.b16 %v647
        %v2727 = vunpack.c.l.b16 %v648
        %v2728 = vunpack.c.h.b16 %v648
        %v2729 = vunpack.c.l.b16 %v649
        %v2730 = vunpack.c.h.b16 %v649
        %v2731 = vunpack.c.l.b16 %v650
        %v2732 = vunpack.c.h.b16 %v650
        %v2733 = vunpack.c.l.b16 %v651
        %v2734 = vunpack.c.h.b16 %v651
        %v2735 = vunpack.c.l.b16 %v652
        %v2736 = vunpack.c.h.b16 %v652
        %v2737 = vunpack.c.l.b16 %v653
        %v2738 = vunpack.c.h.b16 %v653
        %v2739 = vunpack.c.l.b16 %v654
        %v2740 = vunpack.c.h.b16 %v654
        %v2741 = vunpack.c.l.b16 %v655
        %v2742 = vunpack.c.h.b16 %v655
        %v2743 = vunpack.c.l.b16 %v656
        %v2744 = vunpack.c.h.b16 %v656
        %v2745 = vunpack.c.l.b16 %v657
        %v2746 = vunpack.c.h.b16 %v657
        %v2747 = vunpack.c.l.b16 %v658
        %v2748 = vunpack.c.h.b16 %v658
        %v2749 = vunpack.c.l.b16 %v659
        %v2750 = vunpack.c.h.b16 %v659
        %v2751 = vunpack.c.l.b16 %v660
        %v2752 = vunpack.c.h.b16 %v660
        %v2753 = vunpack.c.l.b16 %v661
        %v2754 = vunpack.c.h.b16 %v661
        %v2755 = vunpack.c.l.b16 %v662
        %v2756 = vunpack.c.h.b16 %v662
        %v2757 = vunpack.c.l.b16 %v663
        %v2758 = vunpack.c.h.b16 %v663
        %v2759 = vunpack.c.l.b16 %v664
        %v2760 = vunpack.c.h.b16 %v664
        %v2761 = vunpack.c.l.b16 %v665
        %v2762 = vunpack.c.h.b16 %v665
        %v2763 = vunpack.c.l.b16 %v666
        %v2764 = vunpack.c.h.b16 %v666
        %v2765 = vunpack.c.l.b16 %v667
        %v2766 = vunpack.c.h.b16 %v667
        %v2767 = vunpack.c.l.b16 %v668
        %v2768 = vunpack.c.h.b16 %v668
        %v2769 = vunpack.c.l.b16 %v669
        %v2770 = vunpack.c.h.b16 %v669
        %v2771 = vunpack.c.l.b16 %v670
        %v2772 = vunpack.c.h.b16 %v670
        %v2773 = vunpack.c.l.b16 %v671
        %v2774 = vunpack.c.h.b16 %v671
        %v2775 = vunpack.c.l.b16 %v672
        %v2776 = vunpack.c.h.b16 %v672
        %v2777 = vunpack.c.l.b16 %v673
        %v2778 = vunpack.c.h.b16 %v673
        %v2779 = vunpack.c.l.b16 %v674
        %v2780 = vunpack.c.h.b16 %v674
        %v2781 = vunpack.c.l.b16 %v675
        %v2782 = vunpack.c.h.b16 %v675
        %v2783 = vunpack.c.l.b16 %v676
        %v2784 = vunpack.c.h.b16 %v676
        %v2785 = vunpack.c.l.b16 %v677
        %v2786 = vunpack.c.h.b16 %v677
        %v2787 = vunpack.c.l.b16 %v678
        %v2788 = vunpack.c.h.b16 %v678
        %v2789 = vunpack.c.l.b16 %v679
        %v2790 = vunpack.c.h.b16 %v679
        %v2791 = vunpack.c.l.b16 %v680
        %v2792 = vunpack.c.h.b16 %v680
        %v2793 = vunpack.c.l.b16 %v681
        %v2794 = vunpack.c.h.b16 %v681
        %v2795 = vunpack.c.l.b16 %v682
        %v2796 = vunpack.c.h.b16 %v682
        %v2797 = vunpack.c.l.b16 %v683
        %v2798 = vunpack.c.h.b16 %v683
        %v2799 = vunpack.c.l.b16 %v684
        %v2800 = vunpack.c.h.b16 %v684
        %v2801 = vunpack.c.l.b16 %v685
        %v2802 = vunpack.c.h.b16 %v685
        %v2803 = vunpack.c.l.b16 %v686
        %v2804 = vunpack.c.h.b16 %v686
        %v2805 = vunpack.c.l.b16 %v687
        %v2806 = vunpack.c.h.b16 %v687
        %v2807 = vunpack.c.l.b16 %v688
        %v2808 = vunpack.c.h.b16 %v688
        %v2809 = vunpack.c.l.b16 %v689
        %v2810 = vunpack.c.h.b16 %v689
        %v2811 = vunpack.c.l.b16 %v690
        %v2812 = vunpack.c.h.b16 %v690
        %v2813 = vunpack.c.l.b16 %v691
        %v2814 = vunpack.c.h.b16 %v691
        %v2815 = vunpack.c.l.b16 %v692
        %v2816 = vunpack.c.h.b16 %v692
        %v2817 = vunpack.c.l.b16 %v693
        %v2818 = vunpack.c.h.b16 %v693
        %v2819 = vunpack.c.l.b16 %v694
        %v2820 = vunpack.c.h.b16 %v694
        %v2821 = vunpack.c.l.b16 %v695
        %v2822 = vunpack.c.h.b16 %v695
        %v2823 = vunpack.c.l.b16 %v696
        %v2824 = vunpack.c.h.b16 %v696
        %v2825 = vunpack.c.l.b16 %v697
        %v2826 = vunpack.c.h.b16 %v697
        %v2827 = vunpack.c.l.b16 %v698
        %v2828 = vunpack.c.h.b16 %v698
        %v2829 = vunpack.c.l.b16 %v699
        %v2830 = vunpack.c.h.b16 %v699
        %v2831 = vunpack.c.l.b16 %v700
        %v2832 = vunpack.c.h.b16 %v700
        %v2833 = vunpack.c.l.b16 %v701
        %v2834 = vunpack.c.h.b16 %v701
        %v2835 = vunpack.c.l.b16 %v702
        %v2836 = vunpack.c.h.b16 %v702
        %v2837 = vunpack.c.l.b16 %v703
        %v2838 = vunpack.c.h.b16 %v703
        %v2839 = vunpack.c.l.b16 %v704
        %v2840 = vunpack.c.h.b16 %v704
        %v2841 = vunpack.c.l.b16 %v705
        %v2842 = vunpack.c.h.b16 %v705
        %v2843 = vunpack.c.l.b16 %v706
        %v2844 = vunpack.c.h.b16 %v706
        %v2845 = vunpack.c.l.b16 %v707
        %v2846 = vunpack.c.h.b16 %v707
        %v2847 = vunpack.c.l.b16 %v708
        %v2848 = vunpack.c.h.b16 %v708
        %v2849 = vunpack.c.l.b16 %v709
        %v2850 = vunpack.c.h.b16 %v709
        %v2851 = vunpack.c.l.b16 %v710
        %v2852 = vunpack.c.h.b16 %v710
        %v2853 = vunpack.c.l.b16 %v711
        %v2854 = vunpack.c.h.b16 %v711
        %v2855 = vunpack.c.l.b16 %v712
        %v2856 = vunpack.c.h.b16 %v712
        %v2857 = vunpack.c.l.b16 %v713
        %v2858 = vunpack.c.h.b16 %v713
        %v2859 = vunpack.c.l.b16 %v714
        %v2860 = vunpack.c.h.b16 %v714
        %v2861 = vunpack.c.l.b16 %v715
        %v2862 = vunpack.c.h.b16 %v715
        %v2863 = vunpack.c.l.b16 %v716
        %v2864 = vunpack.c.h.b16 %v716
        %v2865 = vunpack.c.l.b16 %v717
        %v2866 = vunpack.c.h.b16 %v717
        %v2867 = vunpack.c.l.b16 %v718
        %v2868 = vunpack.c.h.b16 %v718
        %v2869 = vunpack.c.l.b16 %v719
        %v2870 = vunpack.c.h.b16 %v719
        %v2871 = vunpack.c.l.b16 %v720
        %v2872 = vunpack.c.h.b16 %v720
        %v2873 = vunpack.c.l.b16 %v721
        %v2874 = vunpack.c.h.b16 %v721
        %v2875 = vunpack.c.l.b16 %v722
        %v2876 = vunpack.c.h.b16 %v722
        %v2877 = vunpack.c.l.b16 %v723
        %v2878 = vunpack.c.h.b16 %v723
        %v2879 = vunpack.c.l.b16 %v724
        %v2880 = vunpack.c.h.b16 %v724
        %v2881 = vunpack.c.l.b16 %v725
        %v2882 = vunpack.c.h.b16 %v725
        %v2883 = vunpack.c.l.b16 %v726
        %v2884 = vunpack.c.h.b16 %v726
        %v2885 = vunpack.c.l.b16 %v727
        %v2886 = vunpack.c.h.b16 %v727
        %v2887 = vunpack.c.l.b16 %v728
        %v2888 = vunpack.c.h.b16 %v728
        %v2889 = vunpack.c.l.b16 %v729
        %v2890 = vunpack.c.h.b16 %v729
        %v2891 = vunpack.c.l.b16 %v730
        %v2892 = vunpack.c.h.b16 %v730
        %v2893 = vunpack.c.l.b16 %v731
        %v2894 = vunpack.c.h.b16 %v731
        %v2895 = vunpack.c.l.b16 %v732
        %v2896 = vunpack.c.h.b16 %v732
        %v2897 = vunpack.c.l.b16 %v733
        %v2898 = vunpack.c.h.b16 %v733
        %v2899 = vunpack.c.l.b16 %v734
        %v2900 = vunpack.c.h.b16 %v734
        %v2901 = vunpack.c.l.b16 %v735
        %v2902 = vunpack.c.h.b16 %v735
        %v2903 = vunpack.c.l.b16 %v736
        %v2904 = vunpack.c.h.b16 %v736
        %v2905 = vunpack.c.l.b16 %v737
        %v2906 = vunpack.c.h.b16 %v737
        %v2907 = vunpack.c.l.b16 %v738
        %v2908 = vunpack.c.h.b16 %v738
        %v2909 = vunpack.c.l.b16 %v739
        %v2910 = vunpack.c.h.b16 %v739
        %v2911 = vunpack.c.l.b16 %v740
        %v2912 = vunpack.c.h.b16 %v740
        %v2913 = vunpack.c.l.b16 %v741
        %v2914 = vunpack.c.h.b16 %v741
        %v2915 = vunpack.c.l.b16 %v742
        %v2916 = vunpack.c.h.b16 %v742
        %v2917 = vunpack.c.l.b16 %v743
        %v2918 = vunpack.c.h.b16 %v743
        %v2919 = vunpack.c.l.b16 %v744
        %v2920 = vunpack.c.h.b16 %v744
        %v2921 = vunpack.c.l.b16 %v745
        %v2922 = vunpack.c.h.b16 %v745
        %v2923 = vunpack.c.l.b16 %v746
        %v2924 = vunpack.c.h.b16 %v746
        %v2925 = vunpack.c.l.b16 %v747
        %v2926 = vunpack.c.h.b16 %v747
        %v2927 = vunpack.c.l.b16 %v748
        %v2928 = vunpack.c.h.b16 %v748
        %v2929 = vunpack.c.l.b16 %v749
        %v2930 = vunpack.c.h.b16 %v749
        %v2931 = vunpack.c.l.b16 %v750
        %v2932 = vunpack.c.h.b16 %v750
        %v2933 = vunpack.c.l.b16 %v751
        %v2934 = vunpack.c.h.b16 %v751
        %v2935 = vunpack.c.l.b16 %v752
        %v2936 = vunpack.c.h.b16 %v752
        %v2937 = vunpack.c.l.b16 %v753
        %v2938 = vunpack.c.h.b16 %v753
        %v2939 = vunpack.c.l.b16 %v754
        %v2940 = vunpack.c.h.b16 %v754
        %v2941 = vunpack.c.l.b16 %v755
        %v2942 = vunpack.c.h.b16 %v755
        %v2943 = vunpack.c.l.b16 %v756
        %v2944 = vunpack.c.h.b16 %v756
        %v2945 = vunpack.c.l.b16 %v757
        %v2946 = vunpack.c.h.b16 %v757
        %v2947 = vunpack.c.l.b16 %v758
        %v2948 = vunpack.c.h.b16 %v758
        %v2949 = vunpack.c.l.b16 %v759
        %v2950 = vunpack.c.h.b16 %v759
        %v2951 = vunpack.c.l.b16 %v760
        %v2952 = vunpack.c.h.b16 %v760
        %v2953 = vunpack.c.l.b16 %v761
        %v2954 = vunpack.c.h.b16 %v761
        %v2955 = vunpack.c.l.b16 %v762
        %v2956 = vunpack.c.h.b16 %v762
        %v2957 = vunpack.c.l.b16 %v763
        %v2958 = vunpack.c.h.b16 %v763
        %v2959 = vunpack.c.l.b16 %v764
        %v2960 = vunpack.c.h.b16 %v764
        %v2961 = vunpack.c.l.b16 %v765
        %v2962 = vunpack.c.h.b16 %v765
        %v2963 = vunpack.c.l.b16 %v766
        %v2964 = vunpack.c.h.b16 %v766
        %v2965 = vunpack.c.l.b16 %v767
        %v2966 = vunpack.c.h.b16 %v767
        %v2967 = vunpack.c.l.b16 %v768
        %v2968 = vunpack.c.h.b16 %v768
        %v2969 = vunpack.c.l.b16 %v769
        %v2970 = vunpack.c.h.b16 %v769
        %v2971 = vunpack.c.l.b16 %v770
        %v2972 = vunpack.c.h.b16 %v770
        %v2973 = vunpack.c.l.b16 %v771
        %v2974 = vunpack.c.h.b16 %v771
        %v2975 = vunpack.c.l.b16 %v772
        %v2976 = vunpack.c.h.b16 %v772
        %v2977 = vunpack.c.l.b16 %v773
        %v2978 = vunpack.c.h.b16 %v773
        %v2979 = vunpack.c.l.b16 %v774
        %v2980 = vunpack.c.h.b16 %v774
        %v2981 = vunpack.c.l.b16 %v775
        %v2982 = vunpack.c.h.b16 %v775
        %v2983 = vunpack.c.l.b16 %v776
        %v2984 = vunpack.c.h.b16 %v776
        %v2985 = vunpack.c.l.b16 %v777
        %v2986 = vunpack.c.h.b16 %v777
        %v2987 = vunpack.c.l.b16 %v778
        %v2988 = vunpack.c.h.b16 %v778
        %v2989 = vunpack.c.l.b16 %v779
        %v2990 = vunpack.c.h.b16 %v779
        %v2991 = vunpack.c.l.b16 %v780
        %v2992 = vunpack.c.h.b16 %v780
        %v2993 = vunpack.c.l.b16 %v781
        %v2994 = vunpack.c.h.b16 %v781
        %v2995 = vunpack.c.l.b16 %v782
        %v2996 = vunpack.c.h.b16 %v782
        %v2997 = vunpack.c.l.b16 %v783
        %v2998 = vunpack.c.h.b16 %v783
        %v2999 = vunpack.c.l.b16 %v784
        %v3000 = vunpack.c.h.b16 %v784
        %v3001 = vunpack.c.l.b16 %v785
        %v3002 = vunpack.c.h.b16 %v785
        %v3003 = vunpack.c.l.b16 %v786
        %v3004 = vunpack.c.h.b16 %v786
        %v3005 = vunpack.c.l.b16 %v787
        %v3006 = vunpack.c.h.b16 %v787
        %v3007 = vunpack.c.l.b16 %v788
        %v3008 = vunpack.c.h.b16 %v788
        %v3009 = vunpack.c.l.b16 %v789
        %v3010 = vunpack.c.h.b16 %v789
        %v3011 = vunpack.c.l.b16 %v790
        %v3012 = vunpack.c.h.b16 %v790
        %v3013 = vunpack.c.l.b16 %v791
        %v3014 = vunpack.c.h.b16 %v791
        %v3015 = vunpack.c.l.b16 %v792
        %v3016 = vunpack.c.h.b16 %v792
        %v3017 = vunpack.c.l.b16 %v793
        %v3018 = vunpack.c.h.b16 %v793
        %v3019 = vunpack.c.l.b16 %v794
        %v3020 = vunpack.c.h.b16 %v794
        %v3021 = vunpack.c.l.b16 %v795
        %v3022 = vunpack.c.h.b16 %v795
        %v3023 = vunpack.c.l.b16 %v796
        %v3024 = vunpack.c.h.b16 %v796
        %v3025 = vunpack.c.l.b16 %v797
        %v3026 = vunpack.c.h.b16 %v797
        %v3027 = vunpack.c.l.b16 %v798
        %v3028 = vunpack.c.h.b16 %v798
        %v3029 = vunpack.c.l.b16 %v799
        %v3030 = vunpack.c.h.b16 %v799
        %v3031 = vunpack.c.l.b16 %v800
        %v3032 = vunpack.c.h.b16 %v800
        %v3033 = vunpack.c.l.b16 %v801
        %v3034 = vunpack.c.h.b16 %v801
        %v3035 = vunpack.c.l.b16 %v802
        %v3036 = vunpack.c.h.b16 %v802
        %v3037 = vunpack.c.l.b16 %v803
        %v3038 = vunpack.c.h.b16 %v803
        %v3039 = vunpack.c.l.b16 %v804
        %v3040 = vunpack.c.h.b16 %v804
        %v3041 = vunpack.c.l.b16 %v805
        %v3042 = vunpack.c.h.b16 %v805
        %v3043 = vunpack.c.l.b16 %v806
        %v3044 = vunpack.c.h.b16 %v806
        %v3045 = vunpack.c.l.b16 %v807
        %v3046 = vunpack.c.h.b16 %v807
        %v3047 = vunpack.c.l.b16 %v808
        %v3048 = vunpack.c.h.b16 %v808
        %v3049 = vunpack.c.l.b16 %v809
        %v3050 = vunpack.c.h.b16 %v809
        %v3051 = vunpack.c.l.b16 %v810
        %v3052 = vunpack.c.h.b16 %v810
        %v3053 = vunpack.c.l.b16 %v811
        %v3054 = vunpack.c.h.b16 %v811
        %v3055 = vunpack.c.l.b16 %v812
        %v3056 = vunpack.c.h.b16 %v812
        %v3057 = vunpack.c.l.b16 %v813
        %v3058 = vunpack.c.h.b16 %v813
        %v3059 = vunpack.c.l.b16 %v814
        %v3060 = vunpack.c.h.b16 %v814
        %v3061 = vunpack.c.l.b16 %v815
        %v3062 = vunpack.c.h.b16 %v815
        %v3063 = vunpack.c.l.b16 %v816
        %v3064 = vunpack.c.h.b16 %v816
        %v3065 = vunpack.c.l.b16 %v817
        %v3066 = vunpack.c.h.b16 %v817
        %v3067 = vunpack.c.l.b16 %v818
        %v3068 = vunpack.c.h.b16 %v818
        %v3069 = vunpack.c.l.b16 %v819
        %v3070 = vunpack.c.h.b16 %v819
        %v3071 = vunpack.c.l.b16 %v820
        %v3072 = vunpack.c.h.b16 %v820
        %v3073 = vunpack.c.l.b16 %v821
        %v3074 = vunpack.c.h.b16 %v821
        %v3075 = vunpack.c.l.b16 %v822
        %v3076 = vunpack.c.h.b16 %v822
        %v3077 = vunpack.c.l.b16 %v823
        %v3078 = vunpack.c.h.b16 %v823
        %v3079 = vunpack.c.l.b16 %v824
        %v3080 = vunpack.c.h.b16 %v824
        %v3081 = vunpack.c.l.b16 %v825
        %v3082 = vunpack.c.h.b16 %v825
        %v3083 = vunpack.c.l.b16 %v826
        %v3084 = vunpack.c.h.b16 %v826
        %v3085 = vunpack.c.l.b16 %v827
        %v3086 = vunpack.c.h.b16 %v827
        %v3087 = vunpack.c.l.b16 %v828
        %v3088 = vunpack.c.h.b16 %v828
        %v3089 = vunpack.c.l.b16 %v829
        %v3090 = vunpack.c.h.b16 %v829
        %v3091 = vunpack.c.l.b16 %v830
        %v3092 = vunpack.c.h.b16 %v830
        %v3093 = vunpack.c.l.b16 %v831
        %v3094 = vunpack.c.h.b16 %v831
        %v3095 = vunpack.c.l.b16 %v832
        %v3096 = vunpack.c.h.b16 %v832
        %v3097 = vunpack.c.l.b16 %v833
        %v3098 = vunpack.c.h.b16 %v833
        %v3099 = vunpack.c.l.b16 %v834
        %v3100 = vunpack.c.h.b16 %v834
        %v3101 = vunpack.c.l.b16 %v835
        %v3102 = vunpack.c.h.b16 %v835
        %v3103 = vunpack.c.l.b16 %v836
        %v3104 = vunpack.c.h.b16 %v836
        %v3105 = vunpack.c.l.b16 %v837
        %v3106 = vunpack.c.h.b16 %v837
        %v3107 = vunpack.c.l.b16 %v838
        %v3108 = vunpack.c.h.b16 %v838
        %v3109 = vunpack.c.l.b16 %v839
        %v3110 = vunpack.c.h.b16 %v839
        %v3111 = vunpack.c.l.b16 %v840
        %v3112 = vunpack.c.h.b16 %v840
        %v3113 = vunpack.c.l.b16 %v841
        %v3114 = vunpack.c.h.b16 %v841
        %v3115 = vunpack.c.l.b16 %v842
        %v3116 = vunpack.c.h.b16 %v842
        %v3117 = vunpack.c.l.b16 %v843
        %v3118 = vunpack.c.h.b16 %v843
        %v3119 = vunpack.c.l.b16 %v844
        %v3120 = vunpack.c.h.b16 %v844
        %v3121 = vunpack.c.l.b16 %v845
        %v3122 = vunpack.c.h.b16 %v845
        %v3123 = vunpack.c.l.b16 %v846
        %v3124 = vunpack.c.h.b16 %v846
        %v3125 = vunpack.c.l.b16 %v847
        %v3126 = vunpack.c.h.b16 %v847
        %v3127 = vunpack.c.l.b16 %v848
        %v3128 = vunpack.c.h.b16 %v848
        %v3129 = vunpack.c.l.b16 %v849
        %v3130 = vunpack.c.h.b16 %v849
        %v3131 = vunpack.c.l.b16 %v850
        %v3132 = vunpack.c.h.b16 %v850
        %v3133 = vunpack.c.l.b16 %v851
        %v3134 = vunpack.c.h.b16 %v851
        %v3135 = vunpack.c.l.b16 %v852
        %v3136 = vunpack.c.h.b16 %v852
        %v3137 = vunpack.c.l.b16 %v853
        %v3138 = vunpack.c.h.b16 %v853
        %v3139 = vunpack.c.l.b16 %v854
        %v3140 = vunpack.c.h.b16 %v854
        %v3141 = vunpack.c.l.b16 %v855
        %v3142 = vunpack.c.h.b16 %v855
        %v3143 = vunpack.c.l.b16 %v856
        %v3144 = vunpack.c.h.b16 %v856
        %v3145 = vunpack.c.l.b16 %v857
        %v3146 = vunpack.c.h.b16 %v857
        %v3147 = vunpack.c.l.b16 %v858
        %v3148 = vunpack.c.h.b16 %v858
        %v3149 = vunpack.c.l.b16 %v859
        %v3150 = vunpack.c.h.b16 %v859
        %v3151 = vunpack.c.l.b16 %v860
        %v3152 = vunpack.c.h.b16 %v860
        %v3153 = vunpack.c.l.b16 %v861
        %v3154 = vunpack.c.h.b16 %v861
        %v3155 = vunpack.c.l.b16 %v862
        %v3156 = vunpack.c.h.b16 %v862
        %v3157 = vunpack.c.l.b16 %v863
        %v3158 = vunpack.c.h.b16 %v863
        %v3159 = vunpack.c.l.b16 %v864
        %v3160 = vunpack.c.h.b16 %v864
        %v3161 = vunpack.c.l.b16 %v865
        %v3162 = vunpack.c.h.b16 %v865
        %v3163 = vunpack.c.l.b16 %v866
        %v3164 = vunpack.c.h.b16 %v866
        %v3165 = vunpack.c.l.b16 %v867
        %v3166 = vunpack.c.h.b16 %v867
        %v3167 = vunpack.c.l.b16 %v868
        %v3168 = vunpack.c.h.b16 %v868
        %v3169 = vunpack.c.l.b16 %v869
        %v3170 = vunpack.c.h.b16 %v869
        %v3171 = vunpack.c.l.b16 %v870
        %v3172 = vunpack.c.h.b16 %v870
        %v3173 = vunpack.c.l.b16 %v871
        %v3174 = vunpack.c.h.b16 %v871
        %v3175 = vunpack.c.l.b16 %v872
        %v3176 = vunpack.c.h.b16 %v872
        %v3177 = vunpack.c.l.b16 %v873
        %v3178 = vunpack.c.h.b16 %v873
        %v3179 = vunpack.c.l.b16 %v874
        %v3180 = vunpack.c.h.b16 %v874
        %v3181 = vunpack.c.l.b16 %v875
        %v3182 = vunpack.c.h.b16 %v875
        %v3183 = vunpack.c.l.b16 %v876
        %v3184 = vunpack.c.h.b16 %v876
        %v3185 = vunpack.c.l.b16 %v877
        %v3186 = vunpack.c.h.b16 %v877
        %v3187 = vunpack.c.l.b16 %v878
        %v3188 = vunpack.c.h.b16 %v878
        %v3189 = vunpack.c.l.b16 %v879
        %v3190 = vunpack.c.h.b16 %v879
        %v3191 = vunpack.c.l.b16 %v880
        %v3192 = vunpack.c.h.b16 %v880
        %v3193 = vunpack.c.l.b16 %v881
        %v3194 = vunpack.c.h.b16 %v881
        %v3195 = vunpack.c.l.b16 %v882
        %v3196 = vunpack.c.h.b16 %v882
        %v3197 = vunpack.c.l.b16 %v883
        %v3198 = vunpack.c.h.b16 %v883
        %v3199 = vunpack.c.l.b16 %v884
        %v3200 = vunpack.c.h.b16 %v884
        %v3201 = vunpack.c.l.b16 %v885
        %v3202 = vunpack.c.h.b16 %v885
        %v3203 = vunpack.c.l.b16 %v886
        %v3204 = vunpack.c.h.b16 %v886
        %v3205 = vunpack.c.l.b16 %v887
        %v3206 = vunpack.c.h.b16 %v887
        %v3207 = vunpack.c.l.b16 %v888
        %v3208 = vunpack.c.h.b16 %v888
        %v3209 = vunpack.c.l.b16 %v889
        %v3210 = vunpack.c.h.b16 %v889
        %v3211 = vunpack.c.l.b16 %v890
        %v3212 = vunpack.c.h.b16 %v890
        %v3213 = vunpack.c.l.b16 %v891
        %v3214 = vunpack.c.h.b16 %v891
        %v3215 = vunpack.c.l.b16 %v892
        %v3216 = vunpack.c.h.b16 %v892
        %v3217 = vunpack.c.l.b16 %v893
        %v3218 = vunpack.c.h.b16 %v893
        %v3219 = vunpack.c.l.b16 %v894
        %v3220 = vunpack.c.h.b16 %v894
        %v3221 = vunpack.c.l.b16 %v895
        %v3222 = vunpack.c.h.b16 %v895
        %v3223 = vunpack.c.l.b16 %v896
        %v3224 = vunpack.c.h.b16 %v896
        %v3225 = vunpack.c.l.b16 %v897
        %v3226 = vunpack.c.h.b16 %v897
        %v3227 = vunpack.c.l.b16 %v898
        %v3228 = vunpack.c.h.b16 %v898
        %v3229 = vunpack.c.l.b16 %v899
        %v3230 = vunpack.c.h.b16 %v899
        %v3231 = vunpack.c.l.b16 %v900
        %v3232 = vunpack.c.h.b16 %v900
        %v3233 = vunpack.c.l.b16 %v901
        %v3234 = vunpack.c.h.b16 %v901
        %v3235 = vunpack.c.l.b16 %v902
        %v3236 = vunpack.c.h.b16 %v902
        %v3237 = vunpack.c.l.b16 %v903
        %v3238 = vunpack.c.h.b16 %v903
        %v3239 = vunpack.c.l.b16 %v904
        %v3240 = vunpack.c.h.b16 %v904
        %v3241 = vunpack.c.l.b16 %v905
        %v3242 = vunpack.c.h.b16 %v905
        %v3243 = vunpack.c.l.b16 %v906
        %v3244 = vunpack.c.h.b16 %v906
        %v3245 = vunpack.c.l.b16 %v907
        %v3246 = vunpack.c.h.b16 %v907
        %v3247 = vunpack.c.l.b16 %v908
        %v3248 = vunpack.c.h.b16 %v908
        %v3249 = vunpack.c.l.b16 %v909
        %v3250 = vunpack.c.h.b16 %v909
        %v3251 = vunpack.c.l.b16 %v910
        %v3252 = vunpack.c.h.b16 %v910
        %v3253 = vunpack.c.l.b16 %v911
        %v3254 = vunpack.c.h.b16 %v911
        %v3255 = vunpack.c.l.b16 %v912
        %v3256 = vunpack.c.h.b16 %v912
        %v3257 = vunpack.c.l.b16 %v913
        %v3258 = vunpack.c.h.b16 %v913
        %v3259 = vunpack.c.l.b16 %v914
        %v3260 = vunpack.c.h.b16 %v914
        %v3261 = vunpack.c.l.b16 %v915
        %v3262 = vunpack.c.h.b16 %v915
        %v3263 = vunpack.c.l.b16 %v916
        %v3264 = vunpack.c.h.b16 %v916
        %v3265 = vunpack.c.l.b16 %v917
        %v3266 = vunpack.c.h.b16 %v917
        %v3267 = vunpack.c.l.b16 %v918
        %v3268 = vunpack.c.h.b16 %v918
        %v3269 = vunpack.c.l.b16 %v919
        %v3270 = vunpack.c.h.b16 %v919
        %v3271 = vunpack.c.l.b16 %v920
        %v3272 = vunpack.c.h.b16 %v920
        %v3273 = vunpack.c.l.b16 %v921
        %v3274 = vunpack.c.h.b16 %v921
        %v3275 = vunpack.c.l.b16 %v922
        %v3276 = vunpack.c.h.b16 %v922
        %v3277 = vunpack.c.l.b16 %v923
        %v3278 = vunpack.c.h.b16 %v923
        %v3279 = vunpack.c.l.b16 %v924
        %v3280 = vunpack.c.h.b16 %v924
        %v3281 = vunpack.c.l.b16 %v925
        %v3282 = vunpack.c.h.b16 %v925
        %v3283 = vunpack.c.l.b16 %v926
        %v3284 = vunpack.c.h.b16 %v926
        %v3285 = vunpack.c.l.b16 %v927
        %v3286 = vunpack.c.h.b16 %v927
        %v3287 = vunpack.c.l.b16 %v928
        %v3288 = vunpack.c.h.b16 %v928
        %v3289 = vunpack.c.l.b16 %v929
        %v3290 = vunpack.c.h.b16 %v929
        %v3291 = vunpack.c.l.b16 %v930
        %v3292 = vunpack.c.h.b16 %v930
        %v3293 = vunpack.c.l.b16 %v931
        %v3294 = vunpack.c.h.b16 %v931
        %v3295 = vunpack.c.l.b16 %v932
        %v3296 = vunpack.c.h.b16 %v932
        %v3297 = vunpack.c.l.b16 %v933
        %v3298 = vunpack.c.h.b16 %v933
        %v3299 = vunpack.c.l.b16 %v934
        %v3300 = vunpack.c.h.b16 %v934
        %v3301 = vunpack.c.l.b16 %v935
        %v3302 = vunpack.c.h.b16 %v935
        %v3303 = vunpack.c.l.b16 %v936
        %v3304 = vunpack.c.h.b16 %v936
        %v3305 = vunpack.c.l.b16 %v937
        %v3306 = vunpack.c.h.b16 %v937
        %v3307 = vunpack.c.l.b16 %v938
        %v3308 = vunpack.c.h.b16 %v938
        %v3309 = vunpack.c.l.b16 %v939
        %v3310 = vunpack.c.h.b16 %v939
        %v3311 = vunpack.c.l.b16 %v940
        %v3312 = vunpack.c.h.b16 %v940
        %v3313 = vunpack.c.l.b16 %v941
        %v3314 = vunpack.c.h.b16 %v941
        %v3315 = vunpack.c.l.b16 %v942
        %v3316 = vunpack.c.h.b16 %v942
        %v3317 = vunpack.c.l.b16 %v943
        %v3318 = vunpack.c.h.b16 %v943
        %v3319 = vunpack.c.l.b16 %v944
        %v3320 = vunpack.c.h.b16 %v944
        %v3321 = vunpack.c.l.b16 %v945
        %v3322 = vunpack.c.h.b16 %v945
        %v3323 = vunpack.c.l.b16 %v946
        %v3324 = vunpack.c.h.b16 %v946
        %v3325 = vunpack.c.l.b16 %v947
        %v3326 = vunpack.c.h.b16 %v947
        %v3327 = vunpack.c.l.b16 %v948
        %v3328 = vunpack.c.h.b16 %v948
        %v3329 = vunpack.c.l.b16 %v949
        %v3330 = vunpack.c.h.b16 %v949
        %v3331 = vunpack.c.l.b16 %v950
        %v3332 = vunpack.c.h.b16 %v950
        %v3333 = vunpack.c.l.b16 %v951
        %v3334 = vunpack.c.h.b16 %v951
        %v3335 = vunpack.c.l.b16 %v952
        %v3336 = vunpack.c.h.b16 %v952
        %v3337 = vunpack.c.l.b16 %v953
        %v3338 = vunpack.c.h.b16 %v953
        %v3339 = vunpack.c.l.b16 %v954
        %v3340 = vunpack.c.h.b16 %v954
        %v3341 = vunpack.c.l.b16 %v955
        %v3342 = vunpack.c.h.b16 %v955
        %v3343 = vunpack.c.l.b16 %v956
        %v3344 = vunpack.c.h.b16 %v956
        %v3345 = vunpack.c.l.b16 %v957
        %v3346 = vunpack.c.h.b16 %v957
        %v3347 = vunpack.c.l.b16 %v958
        %v3348 = vunpack.c.h.b16 %v958
        %v3349 = vunpack.c.l.b16 %v959
        %v3350 = vunpack.c.h.b16 %v959
        %v3351 = vunpack.c.l.b16 %v960
        %v3352 = vunpack.c.h.b16 %v960
        %v3353 = vunpack.c.l.b16 %v961
        %v3354 = vunpack.c.h.b16 %v961
        %v3355 = vunpack.c.l.b16 %v962
        %v3356 = vunpack.c.h.b16 %v962
        %v3357 = vunpack.c.l.b16 %v963
        %v3358 = vunpack.c.h.b16 %v963
        %v3359 = vunpack.c.l.b16 %v964
        %v3360 = vunpack.c.h.b16 %v964
        %v3361 = vunpack.c.l.b16 %v965
        %v3362 = vunpack.c.h.b16 %v965
        %v3363 = vunpack.c.l.b16 %v966
        %v3364 = vunpack.c.h.b16 %v966
        %v3365 = vunpack.c.l.b16 %v967
        %v3366 = vunpack.c.h.b16 %v967
        %v3367 = vunpack.c.l.b16 %v968
        %v3368 = vunpack.c.h.b16 %v968
        %v3369 = vunpack.c.l.b16 %v969
        %v3370 = vunpack.c.h.b16 %v969
        %v3371 = vunpack.c.l.b16 %v970
        %v3372 = vunpack.c.h.b16 %v970
        %v3373 = vunpack.c.l.b16 %v971
        %v3374 = vunpack.c.h.b16 %v971
        %v3375 = vunpack.c.l.b16 %v972
        %v3376 = vunpack.c.h.b16 %v972
        %v3377 = vunpack.c.l.b16 %v973
        %v3378 = vunpack.c.h.b16 %v973
        %v3379 = vunpack.c.l.b16 %v974
        %v3380 = vunpack.c.h.b16 %v974
        %v3381 = vunpack.c.l.b16 %v975
        %v3382 = vunpack.c.h.b16 %v975
        %v3383 = vunpack.c.l.b16 %v976
        %v3384 = vunpack.c.h.b16 %v976
        %v3385 = vunpack.c.l.b16 %v977
        %v3386 = vunpack.c.h.b16 %v977
        %v3387 = vunpack.c.l.b16 %v978
        %v3388 = vunpack.c.h.b16 %v978
        %v3389 = vunpack.c.l.b16 %v979
        %v3390 = vunpack.c.h.b16 %v979
        %v3391 = vunpack.c.l.b16 %v980
        %v3392 = vunpack.c.h.b16 %v980
        %v3393 = vunpack.c.l.b16 %v981
        %v3394 = vunpack.c.h.b16 %v981
        %v3395 = vunpack.c.l.b16 %v982
        %v3396 = vunpack.c.h.b16 %v982
        %v3397 = vunpack.c.l.b16 %v983
        %v3398 = vunpack.c.h.b16 %v983
        %v3399 = vunpack.c.l.b16 %v984
        %v3400 = vunpack.c.h.b16 %v984
        %v3401 = vunpack.c.l.b16 %v985
        %v3402 = vunpack.c.h.b16 %v985
        %v3403 = vunpack.c.l.b16 %v986
        %v3404 = vunpack.c.h.b16 %v986
        %v3405 = vunpack.c.l.b16 %v987
        %v3406 = vunpack.c.h.b16 %v987
        %v3407 = vunpack.c.l.b16 %v988
        %v3408 = vunpack.c.h.b16 %v988
        %v3409 = vunpack.c.l.b16 %v989
        %v3410 = vunpack.c.h.b16 %v989
        %v3411 = vunpack.c.l.b16 %v990
        %v3412 = vunpack.c.h.b16 %v990
        %v3413 = vunpack.c.l.b16 %v991
        %v3414 = vunpack.c.h.b16 %v991
        %v3415 = vunpack.c.l.b16 %v992
        %v3416 = vunpack.c.h.b16 %v992
        %v3417 = vunpack.c.l.b16 %v993
        %v3418 = vunpack.c.h.b16 %v993
        %v3419 = vunpack.c.l.b16 %v994
        %v3420 = vunpack.c.h.b16 %v994
        %v3421 = vunpack.c.l.b16 %v995
        %v3422 = vunpack.c.h.b16 %v995
        %v3423 = vunpack.c.l.b16 %v996
        %v3424 = vunpack.c.h.b16 %v996
        %v3425 = vunpack.c.l.b16 %v997
        %v3426 = vunpack.c.h.b16 %v997
        %v3427 = vunpack.c.l.b16 %v998
        %v3428 = vunpack.c.h.b16 %v998
        %v3429 = vunpack.c.l.b16 %v999
        %v3430 = vunpack.c.h.b16 %v999
        %v3431 = vunpack.c.l.b16 %v1000
        %v3432 = vunpack.c.h.b16 %v1000
        %v3433 = vunpack.c.l.b16 %v1001
        %v3434 = vunpack.c.h.b16 %v1001
        %v3435 = vunpack.c.l.b16 %v1002
        %v3436 = vunpack.c.h.b16 %v1002
        %v3437 = vunpack.c.l.b16 %v1003
        %v3438 = vunpack.c.h.b16 %v1003
        %v3439 = vunpack.c.l.b16 %v1004
        %v3440 = vunpack.c.h.b16 %v1004
        %v3441 = vunpack.c.l.b16 %v1005
        %v3442 = vunpack.c.h.b16 %v1005
        %v3443 = vunpack.c.l.b16 %v1006
        %v3444 = vunpack.c.h.b16 %v1006
        %v3445 = vunpack.c.l.b16 %v1007
        %v3446 = vunpack.c.h.b16 %v1007
        %v3447 = vunpack.c.l.b16 %v1008
        %v3448 = vunpack.c.h.b16 %v1008
        %v3449 = vunpack.c.l.b16 %v1009
        %v3450 = vunpack.c.h.b16 %v1009
        %v3451 = vunpack.c.l.b16 %v1010
        %v3452 = vunpack.c.h.b16 %v1010
        %v3453 = vunpack.c.l.b16 %v1011
        %v3454 = vunpack.c.h.b16 %v1011
        %v3455 = vunpack.c.l.b16 %v1012
        %v3456 = vunpack.c.h.b16 %v1012
        %v3457 = vunpack.c.l.b16 %v1013
        %v3458 = vunpack.c.h.b16 %v1013
        %v3459 = vunpack.c.l.b16 %v1014
        %v3460 = vunpack.c.h.b16 %v1014
        %v3461 = vunpack.c.l.b16 %v1015
        %v3462 = vunpack.c.h.b16 %v1015
        %v3463 = vunpack.c.l.b16 %v1016
        %v3464 = vunpack.c.h.b16 %v1016
        %v3465 = vunpack.c.l.b16 %v1017
        %v3466 = vunpack.c.h.b16 %v1017
        %v3467 = vunpack.c.l.b16 %v1018
        %v3468 = vunpack.c.h.b16 %v1018
        %v3469 = vunpack.c.l.b16 %v1019
        %v3470 = vunpack.c.h.b16 %v1019
        %v3471 = vunpack.c.l.b16 %v1020
        %v3472 = vunpack.c.h.b16 %v1020
        %v3473 = vunpack.c.l.b16 %v1021
        %v3474 = vunpack.c.h.b16 %v1021
        %v3475 = vunpack.c.l.b16 %v1022
        %v3476 = vunpack.c.h.b16 %v1022
        %v3477 = vunpack.c.l.b16 %v1023
        %v3478 = vunpack.c.h.b16 %v1023
        %v3479 = vunpack.c.l.b16 %v1024
        %v3480 = vunpack.c.h.b16 %v1024
        %v3481 = vunpack.c.l.b16 %v1025
        %v3482 = vunpack.c.h.b16 %v1025
        %v3483 = vunpack.c.l.b16 %v1026
        %v3484 = vunpack.c.h.b16 %v1026
        %v3485 = vunpack.c.l.b16 %v1027
        %v3486 = vunpack.c.h.b16 %v1027
        %v3487 = vunpack.c.l.b16 %v1028
        %v3488 = vunpack.c.h.b16 %v1028
        %v3489 = vunpack.c.l.b16 %v1029
        %v3490 = vunpack.c.h.b16 %v1029
        %v3491 = vunpack.c.l.b16 %v1030
        %v3492 = vunpack.c.h.b16 %v1030
        %v3493 = vunpack.c.l.b16 %v1031
        %v3494 = vunpack.c.h.b16 %v1031
        %v3495 = vunpack.c.l.b16 %v1032
        %v3496 = vunpack.c.h.b16 %v1032
        %v3497 = vunpack.c.l.b16 %v1033
        %v3498 = vunpack.c.h.b16 %v1033
        %v3499 = vunpack.c.l.b16 %v1034
        %v3500 = vunpack.c.h.b16 %v1034
        %v3501 = vunpack.c.l.b16 %v1035
        %v3502 = vunpack.c.h.b16 %v1035
        %v3503 = vunpack.c.l.b16 %v1036
        %v3504 = vunpack.c.h.b16 %v1036
        %v3505 = vunpack.c.l.b16 %v1037
        %v3506 = vunpack.c.h.b16 %v1037
        %v3507 = vunpack.c.l.b16 %v1038
        %v3508 = vunpack.c.h.b16 %v1038
        %v3509 = vunpack.c.l.b16 %v1039
        %v3510 = vunpack.c.h.b16 %v1039
        %v3511 = vunpack.c.l.b16 %v1040
        %v3512 = vunpack.c.h.b16 %v1040
        %v3513 = vunpack.c.l.b16 %v1041
        %v3514 = vunpack.c.h.b16 %v1041
        %v3515 = vunpack.c.l.b16 %v1042
        %v3516 = vunpack.c.h.b16 %v1042
        %v3517 = vunpack.c.l.b16 %v1043
        %v3518 = vunpack.c.h.b16 %v1043
        %v3519 = vunpack.c.l.b16 %v1044
        %v3520 = vunpack.c.h.b16 %v1044
        %v3521 = vunpack.c.l.b16 %v1045
        %v3522 = vunpack.c.h.b16 %v1045
        %v3523 = vunpack.c.l.b16 %v1046
        %v3524 = vunpack.c.h.b16 %v1046
        %v3525 = vunpack.c.l.b16 %v1047
        %v3526 = vunpack.c.h.b16 %v1047
        %v3527 = vunpack.c.l.b16 %v1048
        %v3528 = vunpack.c.h.b16 %v1048
        %v3529 = vunpack.c.l.b16 %v1049
        %v3530 = vunpack.c.h.b16 %v1049
        %v3531 = vunpack.c.l.b16 %v1050
        %v3532 = vunpack.c.h.b16 %v1050
        %v3533 = vunpack.c.l.b16 %v1051
        %v3534 = vunpack.c.h.b16 %v1051
        %v3535 = vunpack.c.l.b16 %v1052
        %v3536 = vunpack.c.h.b16 %v1052
        %v3537 = vunpack.c.l.b16 %v1053
        %v3538 = vunpack.c.h.b16 %v1053
        %v3539 = vunpack.c.l.b16 %v1054
        %v3540 = vunpack.c.h.b16 %v1054
        %v3541 = vunpack.c.l.b16 %v1055
        %v3542 = vunpack.c.h.b16 %v1055
        %v3543 = vunpack.c.l.b16 %v1056
        %v3544 = vunpack.c.h.b16 %v1056
        %v3545 = vunpack.c.l.b16 %v1057
        %v3546 = vunpack.c.h.b16 %v1057
        %v3547 = vunpack.c.l.b16 %v1058
        %v3548 = vunpack.c.h.b16 %v1058
        %v3549 = vunpack.c.l.b16 %v1059
        %v3550 = vunpack.c.h.b16 %v1059
        %v3551 = vunpack.c.l.b16 %v1060
        %v3552 = vunpack.c.h.b16 %v1060
        %v3553 = vunpack.c.l.b16 %v1061
        %v3554 = vunpack.c.h.b16 %v1061
        %v3555 = vunpack.c.l.b16 %v1062
        %v3556 = vunpack.c.h.b16 %v1062
        %v3557 = vunpack.c.l.b16 %v1063
        %v3558 = vunpack.c.h.b16 %v1063
        %v3559 = vunpack.c.l.b16 %v1064
        %v3560 = vunpack.c.h.b16 %v1064
        %v3561 = vunpack.c.l.b16 %v1065
        %v3562 = vunpack.c.h.b16 %v1065
        %v3563 = vunpack.c.l.b16 %v1066
        %v3564 = vunpack.c.h.b16 %v1066
        %v3565 = vunpack.c.l.b16 %v1067
        %v3566 = vunpack.c.h.b16 %v1067
        %v3567 = vunpack.c.l.b16 %v1068
        %v3568 = vunpack.c.h.b16 %v1068
        %v3569 = vunpack.c.l.b16 %v1069
        %v3570 = vunpack.c.h.b16 %v1069
        %v3571 = vunpack.c.l.b16 %v1070
        %v3572 = vunpack.c.h.b16 %v1070
        %v3573 = vunpack.c.l.b16 %v1071
        %v3574 = vunpack.c.h.b16 %v1071
        %v3575 = vunpack.c.l.b16 %v1072
        %v3576 = vunpack.c.h.b16 %v1072
        %v3577 = vunpack.c.l.b16 %v1073
        %v3578 = vunpack.c.h.b16 %v1073
        %v3579 = vunpack.c.l.b16 %v1074
        %v3580 = vunpack.c.h.b16 %v1074
        %v3581 = vunpack.c.l.b16 %v1075
        %v3582 = vunpack.c.h.b16 %v1075
        %v3583 = vunpack.c.l.b16 %v1076
        %v3584 = vunpack.c.h.b16 %v1076
        %v3585 = vunpack.c.l.b16 %v1077
        %v3586 = vunpack.c.h.b16 %v1077
        %v3587 = vunpack.c.l.b16 %v1078
        %v3588 = vunpack.c.h.b16 %v1078
        %v3589 = vunpack.c.l.b16 %v1079
        %v3590 = vunpack.c.h.b16 %v1079
        %v3591 = vunpack.c.l.b16 %v1080
        %v3592 = vunpack.c.h.b16 %v1080
        %v3593 = vunpack.c.l.b16 %v1081
        %v3594 = vunpack.c.h.b16 %v1081
        %v3595 = vunpack.c.l.b16 %v1082
        %v3596 = vunpack.c.h.b16 %v1082
        %v3597 = vunpack.c.l.b16 %v1083
        %v3598 = vunpack.c.h.b16 %v1083
        %v3599 = vunpack.c.l.b16 %v1084
        %v3600 = vunpack.c.h.b16 %v1084
        %v3601 = vunpack.c.l.b16 %v1085
        %v3602 = vunpack.c.h.b16 %v1085
        %v3603 = vunpack.c.l.b16 %v1086
        %v3604 = vunpack.c.h.b16 %v1086
        %v3605 = vunpack.c.l.b16 %v1087
        %v3606 = vunpack.c.h.b16 %v1087
        %v3607 = vunpack.c.l.b16 %v1088
        %v3608 = vunpack.c.h.b16 %v1088
        %v3609 = vunpack.c.l.b16 %v1089
        %v3610 = vunpack.c.h.b16 %v1089
        %v3611 = vunpack.c.l.b16 %v1090
        %v3612 = vunpack.c.h.b16 %v1090
        %v3613 = vunpack.c.l.b16 %v1091
        %v3614 = vunpack.c.h.b16 %v1091
        %v3615 = vunpack.c.l.b16 %v1092
        %v3616 = vunpack.c.h.b16 %v1092
        %v3617 = vunpack.c.l.b16 %v1093
        %v3618 = vunpack.c.h.b16 %v1093
        %v3619 = vunpack.c.l.b16 %v1094
        %v3620 = vunpack.c.h.b16 %v1094
        %v3621 = vunpack.c.l.b16 %v1095
        %v3622 = vunpack.c.h.b16 %v1095
        %v3623 = vunpack.c.l.b16 %v1096
        %v3624 = vunpack.c.h.b16 %v1096
        %v3625 = vunpack.c.l.b16 %v1097
        %v3626 = vunpack.c.h.b16 %v1097
        %v3627 = vunpack.c.l.b16 %v1098
        %v3628 = vunpack.c.h.b16 %v1098
        %v3629 = vunpack.c.l.b16 %v1099
        %v3630 = vunpack.c.h.b16 %v1099
        %v3631 = vunpack.c.l.b16 %v1100
        %v3632 = vunpack.c.h.b16 %v1100
        %v3633 = vunpack.c.l.b16 %v1101
        %v3634 = vunpack.c.h.b16 %v1101
        %v3635 = vunpack.c.l.b16 %v1102
        %v3636 = vunpack.c.h.b16 %v1102
        %v3637 = vunpack.c.l.b16 %v1103
        %v3638 = vunpack.c.h.b16 %v1103
        %v3639 = vunpack.c.l.b16 %v1104
        %v3640 = vunpack.c.h.b16 %v1104
        %v3641 = vunpack.c.l.b16 %v1105
        %v3642 = vunpack.c.h.b16 %v1105
        %v3643 = vunpack.c.l.b16 %v1106
        %v3644 = vunpack.c.h.b16 %v1106
        %v3645 = vunpack.c.l.b16 %v1107
        %v3646 = vunpack.c.h.b16 %v1107
        %v3647 = vunpack.c.l.b16 %v1108
        %v3648 = vunpack.c.h.b16 %v1108
        %v3649 = vunpack.c.l.b16 %v1109
        %v3650 = vunpack.c.h.b16 %v1109
        %v3651 = vunpack.c.l.b16 %v1110
        %v3652 = vunpack.c.h.b16 %v1110
        %v3653 = vunpack.c.l.b16 %v1111
        %v3654 = vunpack.c.h.b16 %v1111
        %v3655 = vunpack.c.l.b16 %v1112
        %v3656 = vunpack.c.h.b16 %v1112
        %v3657 = vunpack.c.l.b16 %v1113
        %v3658 = vunpack.c.h.b16 %v1113
        %v3659 = vunpack.c.l.b16 %v1114
        %v3660 = vunpack.c.h.b16 %v1114
        %v3661 = vunpack.c.l.b16 %v1115
        %v3662 = vunpack.c.h.b16 %v1115
        %v3663 = vunpack.c.l.b16 %v1116
        %v3664 = vunpack.c.h.b16 %v1116
        %v3665 = vunpack.c.l.b16 %v1117
        %v3666 = vunpack.c.h.b16 %v1117
        %v3667 = vunpack.c.l.b16 %v1118
        %v3668 = vunpack.c.h.b16 %v1118
        %v3669 = vunpack.c.l.b16 %v1119
        %v3670 = vunpack.c.h.b16 %v1119
        %v3671 = vunpack.c.l.b16 %v1120
        %v3672 = vunpack.c.h.b16 %v1120
        %v3673 = vunpack.c.l.b16 %v1121
        %v3674 = vunpack.c.h.b16 %v1121
        %v3675 = vunpack.c.l.b16 %v1122
        %v3676 = vunpack.c.h.b16 %v1122
        %v3677 = vunpack.c.l.b16 %v1123
        %v3678 = vunpack.c.h.b16 %v1123
        %v3679 = vunpack.c.l.b16 %v1124
        %v3680 = vunpack.c.h.b16 %v1124
        %v3681 = vunpack.c.l.b16 %v1125
        %v3682 = vunpack.c.h.b16 %v1125
        %v3683 = vunpack.c.l.b16 %v1126
        %v3684 = vunpack.c.h.b16 %v1126
        %v3685 = vunpack.c.l.b16 %v1127
        %v3686 = vunpack.c.h.b16 %v1127
        %v3687 = vunpack.c.l.b16 %v1128
        %v3688 = vunpack.c.h.b16 %v1128
        %v3689 = vunpack.c.l.b16 %v1129
        %v3690 = vunpack.c.h.b16 %v1129
        %v3691 = vunpack.c.l.b16 %v1130
        %v3692 = vunpack.c.h.b16 %v1130
        %v3693 = vunpack.c.l.b16 %v1131
        %v3694 = vunpack.c.h.b16 %v1131
        %v3695 = vunpack.c.l.b16 %v1132
        %v3696 = vunpack.c.h.b16 %v1132
        %v3697 = vunpack.c.l.b16 %v1133
        %v3698 = vunpack.c.h.b16 %v1133
        %v3699 = vunpack.c.l.b16 %v1134
        %v3700 = vunpack.c.h.b16 %v1134
        %v3701 = vunpack.c.l.b16 %v1135
        %v3702 = vunpack.c.h.b16 %v1135
        %v3703 = vunpack.c.l.b16 %v1136
        %v3704 = vunpack.c.h.b16 %v1136
        %v3705 = vunpack.c.l.b16 %v1137
        %v3706 = vunpack.c.h.b16 %v1137
        %v3707 = vunpack.c.l.b16 %v1138
        %v3708 = vunpack.c.h.b16 %v1138
        %v3709 = vunpack.c.l.b16 %v1139
        %v3710 = vunpack.c.h.b16 %v1139
        %v3711 = vunpack.c.l.b16 %v1140
        %v3712 = vunpack.c.h.b16 %v1140
        %v3713 = vunpack.c.l.b16 %v1141
        %v3714 = vunpack.c.h.b16 %v1141
        %v3715 = vunpack.c.l.b16 %v1142
        %v3716 = vunpack.c.h.b16 %v1142
        %v3717 = vunpack.c.l.b16 %v1143
        %v3718 = vunpack.c.h.b16 %v1143
        %v3719 = vunpack.c.l.b16 %v1144
        %v3720 = vunpack.c.h.b16 %v1144
        %v3721 = vunpack.c.l.b16 %v1145
        %v3722 = vunpack.c.h.b16 %v1145
        %v3723 = vunpack.c.l.b16 %v1146
        %v3724 = vunpack.c.h.b16 %v1146
        %v3725 = vunpack.c.l.b16 %v1147
        %v3726 = vunpack.c.h.b16 %v1147
        %v3727 = vunpack.c.l.b16 %v1148
        %v3728 = vunpack.c.h.b16 %v1148
        %v3729 = vunpack.c.l.b16 %v1149
        %v3730 = vunpack.c.h.b16 %v1149
        %v3731 = vunpack.c.l.b16 %v1150
        %v3732 = vunpack.c.h.b16 %v1150
        %v3733 = vunpack.c.l.b16 %v1151
        %v3734 = vunpack.c.h.b16 %v1151
        %v3735 = vunpack.c.l.b16 %v1152
        %v3736 = vunpack.c.h.b16 %v1152
        %v3737 = vunpack.c.l.b16 %v1153
        %v3738 = vunpack.c.h.b16 %v1153
        %v3739 = vunpack.c.l.b16 %v1154
        %v3740 = vunpack.c.h.b16 %v1154
        %v3741 = vunpack.c.l.b16 %v1155
        %v3742 = vunpack.c.h.b16 %v1155
        %v3743 = vunpack.c.l.b16 %v1156
        %v3744 = vunpack.c.h.b16 %v1156
        %v3745 = vunpack.c.l.b16 %v1157
        %v3746 = vunpack.c.h.b16 %v1157
        %v3747 = vunpack.c.l.b16 %v1158
        %v3748 = vunpack.c.h.b16 %v1158
        %v3749 = vunpack.c.l.b16 %v1159
        %v3750 = vunpack.c.h.b16 %v1159
        %v3751 = vunpack.c.l.b16 %v1160
        %v3752 = vunpack.c.h.b16 %v1160
        %v3753 = vunpack.c.l.b16 %v1161
        %v3754 = vunpack.c.h.b16 %v1161
        %v3755 = vunpack.c.l.b16 %v1162
        %v3756 = vunpack.c.h.b16 %v1162
        %v3757 = vunpack.c.l.b16 %v1163
        %v3758 = vunpack.c.h.b16 %v1163
        %v3759 = vunpack.c.l.b16 %v1164
        %v3760 = vunpack.c.h.b16 %v1164
        %v3761 = vunpack.c.l.b16 %v1165
        %v3762 = vunpack.c.h.b16 %v1165
        %v3763 = vunpack.c.l.b16 %v1166
        %v3764 = vunpack.c.h.b16 %v1166
        %v3765 = vunpack.c.l.b16 %v1167
        %v3766 = vunpack.c.h.b16 %v1167
        %v3767 = vunpack.c.l.b16 %v1168
        %v3768 = vunpack.c.h.b16 %v1168
        %v3769 = vunpack.c.l.b16 %v1169
        %v3770 = vunpack.c.h.b16 %v1169
        %v3771 = vunpack.c.l.b16 %v1170
        %v3772 = vunpack.c.h.b16 %v1170
        %v3773 = vunpack.c.l.b16 %v1171
        %v3774 = vunpack.c.h.b16 %v1171
        %v3775 = vunpack.c.l.b16 %v1172
        %v3776 = vunpack.c.h.b16 %v1172
        %v3777 = vunpack.c.l.b16 %v1173
        %v3778 = vunpack.c.h.b16 %v1173
        %v3779 = vunpack.c.l.b16 %v1174
        %v3780 = vunpack.c.h.b16 %v1174
        %v3781 = vunpack.c.l.b16 %v1175
        %v3782 = vunpack.c.h.b16 %v1175
        %v3783 = vunpack.c.l.b16 %v1176
        %v3784 = vunpack.c.h.b16 %v1176
        %v3785 = vunpack.c.l.b16 %v1177
        %v3786 = vunpack.c.h.b16 %v1177
        %v3787 = vunpack.c.l.b16 %v1178
        %v3788 = vunpack.c.h.b16 %v1178
        %v3789 = vunpack.c.l.b16 %v1179
        %v3790 = vunpack.c.h.b16 %v1179
        %v3791 = vunpack.c.l.b16 %v1180
        %v3792 = vunpack.c.h.b16 %v1180
        %v3793 = vunpack.c.l.b16 %v1181
        %v3794 = vunpack.c.h.b16 %v1181
        %v3795 = vunpack.c.l.b16 %v1182
        %v3796 = vunpack.c.h.b16 %v1182
        %v3797 = vunpack.c.l.b16 %v1183
        %v3798 = vunpack.c.h.b16 %v1183
        %v3799 = vunpack.c.l.b16 %v1184
        %v3800 = vunpack.c.h.b16 %v1184
        %v3801 = vunpack.c.l.b16 %v1185
        %v3802 = vunpack.c.h.b16 %v1185
        %v3803 = vunpack.c.l.b16 %v1186
        %v3804 = vunpack.c.h.b16 %v1186
        %v3805 = vunpack.c.l.b16 %v1187
        %v3806 = vunpack.c.h.b16 %v1187
        %v3807 = vunpack.c.l.b16 %v1188
        %v3808 = vunpack.c.h.b16 %v1188
        %v3809 = vunpack.c.l.b16 %v1189
        %v3810 = vunpack.c.h.b16 %v1189
        %v3811 = vunpack.c.l.b16 %v1190
        %v3812 = vunpack.c.h.b16 %v1190
        %v3813 = vunpack.c.l.b16 %v1191
        %v3814 = vunpack.c.h.b16 %v1191
        %v3815 = vunpack.c.l.b16 %v1192
        %v3816 = vunpack.c.h.b16 %v1192
        %v3817 = vunpack.c.l.b16 %v1193
        %v3818 = vunpack.c.h.b16 %v1193
        %v3819 = vunpack.c.l.b16 %v1194
        %v3820 = vunpack.c.h.b16 %v1194
        %v3821 = vunpack.c.l.b16 %v1195
        %v3822 = vunpack.c.h.b16 %v1195
        %v3823 = vunpack.c.l.b16 %v1196
        %v3824 = vunpack.c.h.b16 %v1196
        %v3825 = vunpack.c.l.b16 %v1197
        %v3826 = vunpack.c.h.b16 %v1197
        %v3827 = vunpack.c.l.b16 %v1198
        %v3828 = vunpack.c.h.b16 %v1198
        %v3829 = vunpack.c.l.b16 %v1199
        %v3830 = vunpack.c.h.b16 %v1199
        %v3831 = vunpack.c.l.b16 %v1200
        %v3832 = vunpack.c.h.b16 %v1200
        %v3833 = vunpack.c.l.b16 %v1201
        %v3834 = vunpack.c.h.b16 %v1201
        %v3835 = vunpack.c.l.b16 %v1202
        %v3836 = vunpack.c.h.b16 %v1202
        %v3837 = vunpack.c.l.b16 %v1203
        %v3838 = vunpack.c.h.b16 %v1203
        %v3839 = vunpack.c.l.b16 %v1204
        %v3840 = vunpack.c.h.b16 %v1204
        %v3841 = vunpack.c.l.b16 %v1205
        %v3842 = vunpack.c.h.b16 %v1205
        %v3843 = vunpack.c.l.b16 %v1206
        %v3844 = vunpack.c.h.b16 %v1206
        %v3845 = vunpack.c.l.b16 %v1207
        %v3846 = vunpack.c.h.b16 %v1207
        %v3847 = vunpack.c.l.b16 %v1208
        %v3848 = vunpack.c.h.b16 %v1208
        %v3849 = vunpack.c.l.b16 %v1209
        %v3850 = vunpack.c.h.b16 %v1209
        %v3851 = vunpack.c.l.b16 %v1210
        %v3852 = vunpack.c.h.b16 %v1210
        %v3853 = vunpack.c.l.b16 %v1211
        %v3854 = vunpack.c.h.b16 %v1211
        %v3855 = vunpack.c.l.b16 %v1212
        %v3856 = vunpack.c.h.b16 %v1212
        %v3857 = vunpack.c.l.b16 %v1213
        %v3858 = vunpack.c.h.b16 %v1213
        %v3859 = vunpack.c.l.b16 %v1214
        %v3860 = vunpack.c.h.b16 %v1214
        %v3861 = vunpack.c.l.b16 %v1215
        %v3862 = vunpack.c.h.b16 %v1215
        %v3863 = vunpack.c.l.b16 %v1216
        %v3864 = vunpack.c.h.b16 %v1216
        %v3865 = vunpack.c.l.b16 %v1217
        %v3866 = vunpack.c.h.b16 %v1217
        %v3867 = vunpack.c.l.b16 %v1218
        %v3868 = vunpack.c.h.b16 %v1218
        %v3869 = vunpack.c.l.b16 %v1219
        %v3870 = vunpack.c.h.b16 %v1219
        %v3871 = vunpack.c.l.b16 %v1220
        %v3872 = vunpack.c.h.b16 %v1220
        %v3873 = vunpack.c.l.b16 %v1221
        %v3874 = vunpack.c.h.b16 %v1221
        %v3875 = vunpack.c.l.b16 %v1222
        %v3876 = vunpack.c.h.b16 %v1222
        %v3877 = vunpack.c.l.b16 %v1223
        %v3878 = vunpack.c.h.b16 %v1223
        %v3879 = vunpack.c.l.b16 %v1224
        %v3880 = vunpack.c.h.b16 %v1224
        %v3881 = vunpack.c.l.b16 %v1225
        %v3882 = vunpack.c.h.b16 %v1225
        %v3883 = vunpack.c.l.b16 %v1226
        %v3884 = vunpack.c.h.b16 %v1226
        %v3885 = vunpack.c.l.b16 %v1227
        %v3886 = vunpack.c.h.b16 %v1227
        %v3887 = vunpack.c.l.b16 %v1228
        %v3888 = vunpack.c.h.b16 %v1228
        %v3889 = vunpack.c.l.b16 %v1229
        %v3890 = vunpack.c.h.b16 %v1229
        %v3891 = vunpack.c.l.b16 %v1230
        %v3892 = vunpack.c.h.b16 %v1230
        %v3893 = vunpack.c.l.b16 %v1231
        %v3894 = vunpack.c.h.b16 %v1231
        %v3895 = vunpack.c.l.b16 %v1232
        %v3896 = vunpack.c.h.b16 %v1232
        %v3897 = vunpack.c.l.b16 %v1233
        %v3898 = vunpack.c.h.b16 %v1233
        %v3899 = vunpack.c.l.b16 %v1234
        %v3900 = vunpack.c.h.b16 %v1234
        %v3901 = vunpack.c.l.b16 %v1235
        %v3902 = vunpack.c.h.b16 %v1235
        %v3903 = vunpack.c.l.b16 %v1236
        %v3904 = vunpack.c.h.b16 %v1236
        %v3905 = vunpack.c.l.b16 %v1237
        %v3906 = vunpack.c.h.b16 %v1237
        %v3907 = vunpack.c.l.b16 %v1238
        %v3908 = vunpack.c.h.b16 %v1238
        %v3909 = vunpack.c.l.b16 %v1239
        %v3910 = vunpack.c.h.b16 %v1239
        %v3911 = vunpack.c.l.b16 %v1240
        %v3912 = vunpack.c.h.b16 %v1240
        %v3913 = vunpack.c.l.b16 %v1241
        %v3914 = vunpack.c.h.b16 %v1241
        %v3915 = vunpack.c.l.b16 %v1242
        %v3916 = vunpack.c.h.b16 %v1242
        %v3917 = vunpack.c.l.b16 %v1243
        %v3918 = vunpack.c.h.b16 %v1243
        %v3919 = vunpack.c.l.b16 %v1244
        %v3920 = vunpack.c.h.b16 %v1244
        %v3921 = vunpack.c.l.b16 %v1245
        %v3922 = vunpack.c.h.b16 %v1245
        %v3923 = vunpack.c.l.b16 %v1246
        %v3924 = vunpack.c.h.b16 %v1246
        %v3925 = vunpack.c.l.b16 %v1247
        %v3926 = vunpack.c.h.b16 %v1247
        %v3927 = vunpack.c.l.b16 %v1248
        %v3928 = vunpack.c.h.b16 %v1248
        %v3929 = vunpack.c.l.b16 %v1249
        %v3930 = vunpack.c.h.b16 %v1249
        %v3931 = vunpack.c.l.b16 %v1250
        %v3932 = vunpack.c.h.b16 %v1250
        %v3933 = vunpack.c.l.b16 %v1251
        %v3934 = vunpack.c.h.b16 %v1251
        %v3935 = vunpack.c.l.b16 %v1252
        %v3936 = vunpack.c.h.b16 %v1252
        %v3937 = vunpack.c.l.b16 %v1253
        %v3938 = vunpack.c.h.b16 %v1253
        %v3939 = vunpack.c.l.b16 %v1254
        %v3940 = vunpack.c.h.b16 %v1254
        %v3941 = vunpack.c.l.b16 %v1255
        %v3942 = vunpack.c.h.b16 %v1255
        %v3943 = vunpack.c.l.b16 %v1256
        %v3944 = vunpack.c.h.b16 %v1256
        %v3945 = vunpack.c.l.b16 %v1257
        %v3946 = vunpack.c.h.b16 %v1257
        %v3947 = vunpack.c.l.b16 %v1258
        %v3948 = vunpack.c.h.b16 %v1258
        %v3949 = vunpack.c.l.b16 %v1259
        %v3950 = vunpack.c.h.b16 %v1259
        %v3951 = vunpack.c.l.b16 %v1260
        %v3952 = vunpack.c.h.b16 %v1260
        %v3953 = vunpack.c.l.b16 %v1261
        %v3954 = vunpack.c.h.b16 %v1261
        %v3955 = vunpack.c.l.b16 %v1262
        %v3956 = vunpack.c.h.b16 %v1262
        %v3957 = vunpack.c.l.b16 %v1263
        %v3958 = vunpack.c.h.b16 %v1263
        %v3959 = vunpack.c.l.b16 %v1264
        %v3960 = vunpack.c.h.b16 %v1264
        %v3961 = vunpack.c.l.b16 %v1265
        %v3962 = vunpack.c.h.b16 %v1265
        %v3963 = vunpack.c.l.b16 %v1266
        %v3964 = vunpack.c.h.b16 %v1266
        %v3965 = vunpack.c.l.b16 %v1267
        %v3966 = vunpack.c.h.b16 %v1267
        %v3967 = vunpack.c.l.b16 %v1268
        %v3968 = vunpack.c.h.b16 %v1268
        %v3969 = vunpack.c.l.b16 %v1269
        %v3970 = vunpack.c.h.b16 %v1269
        %v3971 = vunpack.c.l.b16 %v1270
        %v3972 = vunpack.c.h.b16 %v1270
        %v3973 = vunpack.c.l.b16 %v1271
        %v3974 = vunpack.c.h.b16 %v1271
        %v3975 = vunpack.c.l.b16 %v1272
        %v3976 = vunpack.c.h.b16 %v1272
        %v3977 = vunpack.c.l.b16 %v1273
        %v3978 = vunpack.c.h.b16 %v1273
        %v3979 = vunpack.c.l.b16 %v1274
        %v3980 = vunpack.c.h.b16 %v1274
        %v3981 = vunpack.c.l.b16 %v1275
        %v3982 = vunpack.c.h.b16 %v1275
        %v3983 = vunpack.c.l.b16 %v1276
        %v3984 = vunpack.c.h.b16 %v1276
        %v3985 = vunpack.c.l.b16 %v1277
        %v3986 = vunpack.c.h.b16 %v1277
        %v3987 = vunpack.c.l.b16 %v1278
        %v3988 = vunpack.c.h.b16 %v1278
        %v3989 = vunpack.c.l.b16 %v1279
        %v3990 = vunpack.c.h.b16 %v1279
        %v3991 = vunpack.c.l.b16 %v1280
        %v3992 = vunpack.c.h.b16 %v1280
        %v3993 = vunpack.c.l.b16 %v1281
        %v3994 = vunpack.c.h.b16 %v1281
        %v3995 = vunpack.c.l.b16 %v1282
        %v3996 = vunpack.c.h.b16 %v1282
        %v3997 = vunpack.c.l.b16 %v1283
        %v3998 = vunpack.c.h.b16 %v1283
        %v3999 = vunpack.c.l.b16 %v1284
        %v4000 = vunpack.c.h.b16 %v1284
        %v4001 = vunpack.c.l.b16 %v1285
        %v4002 = vunpack.c.h.b16 %v1285
        %v4003 = vunpack.c.l.b16 %v1286
        %v4004 = vunpack.c.h.b16 %v1286
        %v4005 = vunpack.c.l.b16 %v1287
        %v4006 = vunpack.c.h.b16 %v1287
        %v4007 = vunpack.c.l.b16 %v1288
        %v4008 = vunpack.c.h.b16 %v1288
        %v4009 = vunpack.c.l.b16 %v1289
        %v4010 = vunpack.c.h.b16 %v1289
        %v4011 = vunpack.c.l.b16 %v1290
        %v4012 = vunpack.c.h.b16 %v1290
        %v4013 = vunpack.c.l.b16 %v1291
        %v4014 = vunpack.c.h.b16 %v1291
        %v4015 = vunpack.c.l.b16 %v1292
        %v4016 = vunpack.c.h.b16 %v1292
        %v4017 = vunpack.c.l.b16 %v1293
        %v4018 = vunpack.c.h.b16 %v1293
        %v4019 = vunpack.c.l.b16 %v1294
        %v4020 = vunpack.c.h.b16 %v1294
        %v4021 = vunpack.c.l.b16 %v1295
        %v4022 = vunpack.c.h.b16 %v1295
        %v4023 = vunpack.c.l.b16 %v1296
        %v4024 = vunpack.c.h.b16 %v1296
        %v4025 = vunpack.c.l.b16 %v1297
        %v4026 = vunpack.c.h.b16 %v1297
        %v4027 = vunpack.c.l.b16 %v1298
        %v4028 = vunpack.c.h.b16 %v1298
        %v4029 = vunpack.c.l.b16 %v1299
        %v4030 = vunpack.c.h.b16 %v1299
        %v4031 = vunpack.c.l.b16 %v1300
        %v4032 = vunpack.c.h.b16 %v1300
        %v4033 = vunpack.c.l.b16 %v1301
        %v4034 = vunpack.c.h.b16 %v1301
        %v4035 = vunpack.c.l.b16 %v1302
        %v4036 = vunpack.c.h.b16 %v1302
        %v4037 = vunpack.c.l.b16 %v1303
        %v4038 = vunpack.c.h.b16 %v1303
        %v4039 = vunpack.c.l.b16 %v1304
        %v4040 = vunpack.c.h.b16 %v1304
        %v4041 = vunpack.c.l.b16 %v1305
        %v4042 = vunpack.c.h.b16 %v1305
        %v4043 = vpack.c.b16 %v2259, %v2251
        %v4044 = vpack.c.b16 %v2260, %v2252
        %v4045 = vpack.c.b16 %v2261, %v2253
        %v4046 = vpack.c.b16 %v2262, %v2254
        %v4047 = vpack.c.b16 %v2263, %v2255
        %v4048 = vpack.c.b16 %v2264, %v2256
        %v4049 = vpack.c.b16 %v2265, %v2257
        %v4050 = vpack.c.b16 %v2266, %v2258
        %v4051 = vpack.c.b16 %v2275, %v2267
        %v4052 = vpack.c.b16 %v2276, %v2268
        %v4053 = vpack.c.b16 %v2277, %v2269
        %v4054 = vpack.c.b16 %v2278, %v2270
        %v4055 = vpack.c.b16 %v2279, %v2271
        %v4056 = vpack.c.b16 %v2280, %v2272
        %v4057 = vpack.c.b16 %v2281, %v2273
        %v4058 = vpack.c.b16 %v2282, %v2274
        %v4059 = vpack.c.b16 %v2291, %v2283
        %v4060 = vpack.c.b16 %v2292, %v2284
        %v4061 = vpack.c.b16 %v2293, %v2285
        %v4062 = vpack.c.b16 %v2294, %v2286
        %v4063 = vpack.c.b16 %v2295, %v2287
        %v4064 = vpack.c.b16 %v2296, %v2288
        %v4065 = vpack.c.b16 %v2297, %v2289
        %v4066 = vpack.c.b16 %v2298, %v2290
        %v4067 = vpack.c.b16 %v2307, %v2299
        %v4068 = vpack.c.b16 %v2308, %v2300
        %v4069 = vpack.c.b16 %v2309, %v2301
        %v4070 = vpack.c.b16 %v2310, %v2302
        %v4071 = vpack.c.b16 %v2311, %v2303
        %v4072 = vpack.c.b16 %v2312, %v2304
        %v4073 = vpack.c.b16 %v2313, %v2305
        %v4074 = vpack.c.b16 %v2314, %v2306
        %v4075 = vpack.c.b16 %v2323, %v2315
        %v4076 = vpack.c.b16 %v2324, %v2316
        %v4077 = vpack.c.b16 %v2325, %v2317
        %v4078 = vpack.c.b16 %v2326, %v2318
        %v4079 = vpack.c.b16 %v2327, %v2319
        %v4080 = vpack.c.b16 %v2328, %v2320
        %v4081 = vpack.c.b16 %v2329, %v2321
        %v4082 = vpack.c.b16 %v2330, %v2322
        %v4083 = vpack.c.b16 %v2339, %v2331
        %v4084 = vpack.c.b16 %v2340, %v2332
        %v4085 = vpack.c.b16 %v2341, %v2333
        %v4086 = vpack.c.b16 %v2342, %v2334
        %v4087 = vpack.c.b16 %v2343, %v2335
        %v4088 = vpack.c.b16 %v2344, %v2336
        %v4089 = vpack.c.b16 %v2345, %v2337
        %v4090 = vpack.c.b16 %v2346, %v2338
        %v4091 = vpack.c.b16 %v2355, %v2347
        %v4092 = vpack.c.b16 %v2356, %v2348
        %v4093 = vpack.c.b16 %v2357, %v2349
        %v4094 = vpack.c.b16 %v2358, %v2350
        %v4095 = vpack.c.b16 %v2359, %v2351
        %v4096 = vpack.c.b16 %v2360, %v2352
        %v4097 = vpack.c.b16 %v2361, %v2353
        %v4098 = vpack.c.b16 %v2362, %v2354
        %v4099 = vpack.c.b16 %v2371, %v2363
        %v4100 = vpack.c.b16 %v2372, %v2364
        %v4101 = vpack.c.b16 %v2373, %v2365
        %v4102 = vpack.c.b16 %v2374, %v2366
        %v4103 = vpack.c.b16 %v2375, %v2367
        %v4104 = vpack.c.b16 %v2376, %v2368
        %v4105 = vpack.c.b16 %v2377, %v2369
        %v4106 = vpack.c.b16 %v2378, %v2370
        %v4107 = vpack.c.b16 %v2387, %v2379
        %v4108 = vpack.c.b16 %v2388, %v2380
        %v4109 = vpack.c.b16 %v2389, %v2381
        %v4110 = vpack.c.b16 %v2390, %v2382
        %v4111 = vpack.c.b16 %v2391, %v2383
        %v4112 = vpack.c.b16 %v2392, %v2384
        %v4113 = vpack.c.b16 %v2393, %v2385
        %v4114 = vpack.c.b16 %v2394, %v2386
        %v4115 = vpack.c.b16 %v2403, %v2395
        %v4116 = vpack.c.b16 %v2404, %v2396
        %v4117 = vpack.c.b16 %v2405, %v2397
        %v4118 = vpack.c.b16 %v2406, %v2398
        %v4119 = vpack.c.b16 %v2407, %v2399
        %v4120 = vpack.c.b16 %v2408, %v2400
        %v4121 = vpack.c.b16 %v2409, %v2401
        %v4122 = vpack.c.b16 %v2410, %v2402
        %v4123 = vpack.c.b16 %v2419, %v2411
        %v4124 = vpack.c.b16 %v2420, %v2412
        %v4125 = vpack.c.b16 %v2421, %v2413
        %v4126 = vpack.c.b16 %v2422, %v2414
        %v4127 = vpack.c.b16 %v2423, %v2415
        %v4128 = vpack.c.b16 %v2424, %v2416
        %v4129 = vpack.c.b16 %v2425, %v2417
        %v4130 = vpack.c.b16 %v2426, %v2418
        %v4131 = vpack.c.b16 %v2435, %v2427
        %v4132 = vpack.c.b16 %v2436, %v2428
        %v4133 = vpack.c.b16 %v2437, %v2429
        %v4134 = vpack.c.b16 %v2438, %v2430
        %v4135 = vpack.c.b16 %v2439, %v2431
        %v4136 = vpack.c.b16 %v2440, %v2432
        %v4137 = vpack.c.b16 %v2441, %v2433
        %v4138 = vpack.c.b16 %v2442, %v2434
        %v4139 = vpack.c.b16 %v2451, %v2443
        %v4140 = vpack.c.b16 %v2452, %v2444
        %v4141 = vpack.c.b16 %v2453, %v2445
        %v4142 = vpack.c.b16 %v2454, %v2446
        %v4143 = vpack.c.b16 %v2455, %v2447
        %v4144 = vpack.c.b16 %v2456, %v2448
        %v4145 = vpack.c.b16 %v2457, %v2449
        %v4146 = vpack.c.b16 %v2458, %v2450
        %v4147 = vpack.c.b16 %v2467, %v2459
        %v4148 = vpack.c.b16 %v2468, %v2460
        %v4149 = vpack.c.b16 %v2469, %v2461
        %v4150 = vpack.c.b16 %v2470, %v2462
        %v4151 = vpack.c.b16 %v2471, %v2463
        %v4152 = vpack.c.b16 %v2472, %v2464
        %v4153 = vpack.c.b16 %v2473, %v2465
        %v4154 = vpack.c.b16 %v2474, %v2466
        %v4155 = vpack.c.b16 %v2483, %v2475
        %v4156 = vpack.c.b16 %v2484, %v2476
        %v4157 = vpack.c.b16 %v2485, %v2477
        %v4158 = vpack.c.b16 %v2486, %v2478
        %v4159 = vpack.c.b16 %v2487, %v2479
        %v4160 = vpack.c.b16 %v2488, %v2480
        %v4161 = vpack.c.b16 %v2489, %v2481
        %v4162 = vpack.c.b16 %v2490, %v2482
        %v4163 = vpack.c.b16 %v2499, %v2491
        %v4164 = vpack.c.b16 %v2500, %v2492
        %v4165 = vpack.c.b16 %v2501, %v2493
        %v4166 = vpack.c.b16 %v2502, %v2494
        %v4167 = vpack.c.b16 %v2503, %v2495
        %v4168 = vpack.c.b16 %v2504, %v2496
        %v4169 = vpack.c.b16 %v2505, %v2497
        %v4170 = vpack.c.b16 %v2506, %v2498
        %v4171 = vpack.c.b16 %v2515, %v2507
        %v4172 = vpack.c.b16 %v2516, %v2508
        %v4173 = vpack.c.b16 %v2517, %v2509
        %v4174 = vpack.c.b16 %v2518, %v2510
        %v4175 = vpack.c.b16 %v2519, %v2511
        %v4176 = vpack.c.b16 %v2520, %v2512
        %v4177 = vpack.c.b16 %v2521, %v2513
        %v4178 = vpack.c.b16 %v2522, %v2514
        %v4179 = vpack.c.b16 %v2531, %v2523
        %v4180 = vpack.c.b16 %v2532, %v2524
        %v4181 = vpack.c.b16 %v2533, %v2525
        %v4182 = vpack.c.b16 %v2534, %v2526
        %v4183 = vpack.c.b16 %v2535, %v2527
        %v4184 = vpack.c.b16 %v2536, %v2528
        %v4185 = vpack.c.b16 %v2537, %v2529
        %v4186 = vpack.c.b16 %v2538, %v2530
        %v4187 = vpack.c.b16 %v2547, %v2539
        %v4188 = vpack.c.b16 %v2548, %v2540
        %v4189 = vpack.c.b16 %v2549, %v2541
        %v4190 = vpack.c.b16 %v2550, %v2542
        %v4191 = vpack.c.b16 %v2551, %v2543
        %v4192 = vpack.c.b16 %v2552, %v2544
        %v4193 = vpack.c.b16 %v2553, %v2545
        %v4194 = vpack.c.b16 %v2554, %v2546
        %v4195 = vpack.c.b16 %v2563, %v2555
        %v4196 = vpack.c.b16 %v2564, %v2556
        %v4197 = vpack.c.b16 %v2565, %v2557
        %v4198 = vpack.c.b16 %v2566, %v2558
        %v4199 = vpack.c.b16 %v2567, %v2559
        %v4200 = vpack.c.b16 %v2568, %v2560
        %v4201 = vpack.c.b16 %v2569, %v2561
        %v4202 = vpack.c.b16 %v2570, %v2562
        %v4203 = vpack.c.b16 %v2579, %v2571
        %v4204 = vpack.c.b16 %v2580, %v2572
        %v4205 = vpack.c.b16 %v2581, %v2573
        %v4206 = vpack.c.b16 %v2582, %v2574
        %v4207 = vpack.c.b16 %v2583, %v2575
        %v4208 = vpack.c.b16 %v2584, %v2576
        %v4209 = vpack.c.b16 %v2585, %v2577
        %v4210 = vpack.c.b16 %v2586, %v2578
        %v4211 = vpack.c.b16 %v2595, %v2587
        %v4212 = vpack.c.b16 %v2596, %v2588
        %v4213 = vpack.c.b16 %v2597, %v2589
        %v4214 = vpack.c.b16 %v2598, %v2590
        %v4215 = vpack.c.b16 %v2599, %v2591
        %v4216 = vpack.c.b16 %v2600, %v2592
        %v4217 = vpack.c.b16 %v2601, %v2593
        %v4218 = vpack.c.b16 %v2602, %v2594
        %v4219 = vpack.c.b16 %v2611, %v2603
        %v4220 = vpack.c.b16 %v2612, %v2604
        %v4221 = vpack.c.b16 %v2613, %v2605
        %v4222 = vpack.c.b16 %v2614, %v2606
        %v4223 = vpack.c.b16 %v2615, %v2607
        %v4224 = vpack.c.b16 %v2616, %v2608
        %v4225 = vpack.c.b16 %v2617, %v2609
        %v4226 = vpack.c.b16 %v2618, %v2610
        %v4227 = vpack.c.b16 %v2627, %v2619
        %v4228 = vpack.c.b16 %v2628, %v2620
        %v4229 = vpack.c.b16 %v2629, %v2621
        %v4230 = vpack.c.b16 %v2630, %v2622
        %v4231 = vpack.c.b16 %v2631, %v2623
        %v4232 = vpack.c.b16 %v2632, %v2624
        %v4233 = vpack.c.b16 %v2633, %v2625
        %v4234 = vpack.c.b16 %v2634, %v2626
        %v4235 = vpack.c.b16 %v2643, %v2635
        %v4236 = vpack.c.b16 %v2644, %v2636
        %v4237 = vpack.c.b16 %v2645, %v2637
        %v4238 = vpack.c.b16 %v2646, %v2638
        %v4239 = vpack.c.b16 %v2647, %v2639
        %v4240 = vpack.c.b16 %v2648, %v2640
        %v4241 = vpack.c.b16 %v2649, %v2641
        %v4242 = vpack.c.b16 %v2650, %v2642
        %v4243 = vpack.c.b16 %v2659, %v2651
        %v4244 = vpack.c.b16 %v2660, %v2652
        %v4245 = vpack.c.b16 %v2661, %v2653
        %v4246 = vpack.c.b16 %v2662, %v2654
        %v4247 = vpack.c.b16 %v2663, %v2655
        %v4248 = vpack.c.b16 %v2664, %v2656
        %v4249 = vpack.c.b16 %v2665, %v2657
        %v4250 = vpack.c.b16 %v2666, %v2658
        %v4251 = vpack.c.b16 %v2675, %v2667
        %v4252 = vpack.c.b16 %v2676, %v2668
        %v4253 = vpack.c.b16 %v2677, %v2669
        %v4254 = vpack.c.b16 %v2678, %v2670
        %v4255 = vpack.c.b16 %v2679, %v2671
        %v4256 = vpack.c.b16 %v2680, %v2672
        %v4257 = vpack.c.b16 %v2681, %v2673
        %v4258 = vpack.c.b16 %v2682, %v2674
        %v4259 = vpack.c.b16 %v2691, %v2683
        %v4260 = vpack.c.b16 %v2692, %v2684
        %v4261 = vpack.c.b16 %v2693, %v2685
        %v4262 = vpack.c.b16 %v2694, %v2686
        %v4263 = vpack.c.b16 %v2695, %v2687
        %v4264 = vpack.c.b16 %v2696, %v2688
        %v4265 = vpack.c.b16 %v2697, %v2689
        %v4266 = vpack.c.b16 %v2698, %v2690
        %v4267 = vpack.c.b16 %v2707, %v2699
        %v4268 = vpack.c.b16 %v2708, %v2700
        %v4269 = vpack.c.b16 %v2709, %v2701
        %v4270 = vpack.c.b16 %v2710, %v2702
        %v4271 = vpack.c.b16 %v2711, %v2703
        %v4272 = vpack.c.b16 %v2712, %v2704
        %v4273 = vpack.c.b16 %v2713, %v2705
        %v4274 = vpack.c.b16 %v2714, %v2706
        %v4275 = vpack.c.b16 %v2723, %v2715
        %v4276 = vpack.c.b16 %v2724, %v2716
        %v4277 = vpack.c.b16 %v2725, %v2717
        %v4278 = vpack.c.b16 %v2726, %v2718
        %v4279 = vpack.c.b16 %v2727, %v2719
        %v4280 = vpack.c.b16 %v2728, %v2720
        %v4281 = vpack.c.b16 %v2729, %v2721
        %v4282 = vpack.c.b16 %v2730, %v2722
        %v4283 = vpack.c.b16 %v2739, %v2731
        %v4284 = vpack.c.b16 %v2740, %v2732
        %v4285 = vpack.c.b16 %v2741, %v2733
        %v4286 = vpack.c.b16 %v2742, %v2734
        %v4287 = vpack.c.b16 %v2743, %v2735
        %v4288 = vpack.c.b16 %v2744, %v2736
        %v4289 = vpack.c.b16 %v2745, %v2737
        %v4290 = vpack.c.b16 %v2746, %v2738
        %v4291 = vpack.c.b16 %v2755, %v2747
        %v4292 = vpack.c.b16 %v2756, %v2748
        %v4293 = vpack.c.b16 %v2757, %v2749
        %v4294 = vpack.c.b16 %v2758, %v2750
        %v4295 = vpack.c.b16 %v2759, %v2751
        %v4296 = vpack.c.b16 %v2760, %v2752
        %v4297 = vpack.c.b16 %v2761, %v2753
        %v4298 = vpack.c.b16 %v2762, %v2754
        %v4299 = vpack.c.b16 %v2771, %v2763
        %v4300 = vpack.c.b16 %v2772, %v2764
        %v4301 = vpack.c.b16 %v2773, %v2765
        %v4302 = vpack.c.b16 %v2774, %v2766
        %v4303 = vpack.c.b16 %v2775, %v2767
        %v4304 = vpack.c.b16 %v2776, %v2768
        %v4305 = vpack.c.b16 %v2777, %v2769
        %v4306 = vpack.c.b16 %v2778, %v2770
        %v4307 = vpack.c.b16 %v2787, %v2779
        %v4308 = vpack.c.b16 %v2788, %v2780
        %v4309 = vpack.c.b16 %v2789, %v2781
        %v4310 = vpack.c.b16 %v2790, %v2782
        %v4311 = vpack.c.b16 %v2791, %v2783
        %v4312 = vpack.c.b16 %v2792, %v2784
        %v4313 = vpack.c.b16 %v2793, %v2785
        %v4314 = vpack.c.b16 %v2794, %v2786
        %v4315 = vpack.c.b16 %v2803, %v2795
        %v4316 = vpack.c.b16 %v2804, %v2796
        %v4317 = vpack.c.b16 %v2805, %v2797
        %v4318 = vpack.c.b16 %v2806, %v2798
        %v4319 = vpack.c.b16 %v2807, %v2799
        %v4320 = vpack.c.b16 %v2808, %v2800
        %v4321 = vpack.c.b16 %v2809, %v2801
        %v4322 = vpack.c.b16 %v2810, %v2802
        %v4323 = vpack.c.b16 %v2819, %v2811
        %v4324 = vpack.c.b16 %v2820, %v2812
        %v4325 = vpack.c.b16 %v2821, %v2813
        %v4326 = vpack.c.b16 %v2822, %v2814
        %v4327 = vpack.c.b16 %v2823, %v2815
        %v4328 = vpack.c.b16 %v2824, %v2816
        %v4329 = vpack.c.b16 %v2825, %v2817
        %v4330 = vpack.c.b16 %v2826, %v2818
        %v4331 = vpack.c.b16 %v2835, %v2827
        %v4332 = vpack.c.b16 %v2836, %v2828
        %v4333 = vpack.c.b16 %v2837, %v2829
        %v4334 = vpack.c.b16 %v2838, %v2830
        %v4335 = vpack.c.b16 %v2839, %v2831
        %v4336 = vpack.c.b16 %v2840, %v2832
        %v4337 = vpack.c.b16 %v2841, %v2833
        %v4338 = vpack.c.b16 %v2842, %v2834
        %v4339 = vpack.c.b16 %v2851, %v2843
        %v4340 = vpack.c.b16 %v2852, %v2844
        %v4341 = vpack.c.b16 %v2853, %v2845
        %v4342 = vpack.c.b16 %v2854, %v2846
        %v4343 = vpack.c.b16 %v2855, %v2847
        %v4344 = vpack.c.b16 %v2856, %v2848
        %v4345 = vpack.c.b16 %v2857, %v2849
        %v4346 = vpack.c.b16 %v2858, %v2850
        %v4347 = vpack.c.b16 %v2867, %v2859
        %v4348 = vpack.c.b16 %v2868, %v2860
        %v4349 = vpack.c.b16 %v2869, %v2861
        %v4350 = vpack.c.b16 %v2870, %v2862
        %v4351 = vpack.c.b16 %v2871, %v2863
        %v4352 = vpack.c.b16 %v2872, %v2864
        %v4353 = vpack.c.b16 %v2873, %v2865
        %v4354 = vpack.c.b16 %v2874, %v2866
        %v4355 = vpack.c.b16 %v2883, %v2875
        %v4356 = vpack.c.b16 %v2884, %v2876
        %v4357 = vpack.c.b16 %v2885, %v2877
        %v4358 = vpack.c.b16 %v2886, %v2878
        %v4359 = vpack.c.b16 %v2887, %v2879
        %v4360 = vpack.c.b16 %v2888, %v2880
        %v4361 = vpack.c.b16 %v2889, %v2881
        %v4362 = vpack.c.b16 %v2890, %v2882
        %v4363 = vpack.c.b16 %v2899, %v2891
        %v4364 = vpack.c.b16 %v2900, %v2892
        %v4365 = vpack.c.b16 %v2901, %v2893
        %v4366 = vpack.c.b16 %v2902, %v2894
        %v4367 = vpack.c.b16 %v2903, %v2895
        %v4368 = vpack.c.b16 %v2904, %v2896
        %v4369 = vpack.c.b16 %v2905, %v2897
        %v4370 = vpack.c.b16 %v2906, %v2898
        %v4371 = vpack.c.b16 %v2915, %v2907
        %v4372 = vpack.c.b16 %v2916, %v2908
        %v4373 = vpack.c.b16 %v2917, %v2909
        %v4374 = vpack.c.b16 %v2918, %v2910
        %v4375 = vpack.c.b16 %v2919, %v2911
        %v4376 = vpack.c.b16 %v2920, %v2912
        %v4377 = vpack.c.b16 %v2921, %v2913
        %v4378 = vpack.c.b16 %v2922, %v2914
        %v4379 = vpack.c.b16 %v2931, %v2923
        %v4380 = vpack.c.b16 %v2932, %v2924
        %v4381 = vpack.c.b16 %v2933, %v2925
        %v4382 = vpack.c.b16 %v2934, %v2926
        %v4383 = vpack.c.b16 %v2935, %v2927
        %v4384 = vpack.c.b16 %v2936, %v2928
        %v4385 = vpack.c.b16 %v2937, %v2929
        %v4386 = vpack.c.b16 %v2938, %v2930
        %v4387 = vpack.c.b16 %v2947, %v2939
        %v4388 = vpack.c.b16 %v2948, %v2940
        %v4389 = vpack.c.b16 %v2949, %v2941
        %v4390 = vpack.c.b16 %v2950, %v2942
        %v4391 = vpack.c.b16 %v2951, %v2943
        %v4392 = vpack.c.b16 %v2952, %v2944
        %v4393 = vpack.c.b16 %v2953, %v2945
        %v4394 = vpack.c.b16 %v2954, %v2946
        %v4395 = vpack.c.b16 %v2963, %v2955
        %v4396 = vpack.c.b16 %v2964, %v2956
        %v4397 = vpack.c.b16 %v2965, %v2957
        %v4398 = vpack.c.b16 %v2966, %v2958
        %v4399 = vpack.c.b16 %v2967, %v2959
        %v4400 = vpack.c.b16 %v2968, %v2960
        %v4401 = vpack.c.b16 %v2969, %v2961
        %v4402 = vpack.c.b16 %v2970, %v2962
        %v4403 = vpack.c.b16 %v2979, %v2971
        %v4404 = vpack.c.b16 %v2980, %v2972
        %v4405 = vpack.c.b16 %v2981, %v2973
        %v4406 = vpack.c.b16 %v2982, %v2974
        %v4407 = vpack.c.b16 %v2983, %v2975
        %v4408 = vpack.c.b16 %v2984, %v2976
        %v4409 = vpack.c.b16 %v2985, %v2977
        %v4410 = vpack.c.b16 %v2986, %v2978
        %v4411 = vpack.c.b16 %v2995, %v2987
        %v4412 = vpack.c.b16 %v2996, %v2988
        %v4413 = vpack.c.b16 %v2997, %v2989
        %v4414 = vpack.c.b16 %v2998, %v2990
        %v4415 = vpack.c.b16 %v2999, %v2991
        %v4416 = vpack.c.b16 %v3000, %v2992
        %v4417 = vpack.c.b16 %v3001, %v2993
        %v4418 = vpack.c.b16 %v3002, %v2994
        %v4419 = vpack.c.b16 %v3011, %v3003
        %v4420 = vpack.c.b16 %v3012, %v3004
        %v4421 = vpack.c.b16 %v3013, %v3005
        %v4422 = vpack.c.b16 %v3014, %v3006
        %v4423 = vpack.c.b16 %v3015, %v3007
        %v4424 = vpack.c.b16 %v3016, %v3008
        %v4425 = vpack.c.b16 %v3017, %v3009
        %v4426 = vpack.c.b16 %v3018, %v3010
        %v4427 = vpack.c.b16 %v3027, %v3019
        %v4428 = vpack.c.b16 %v3028, %v3020
        %v4429 = vpack.c.b16 %v3029, %v3021
        %v4430 = vpack.c.b16 %v3030, %v3022
        %v4431 = vpack.c.b16 %v3031, %v3023
        %v4432 = vpack.c.b16 %v3032, %v3024
        %v4433 = vpack.c.b16 %v3033, %v3025
        %v4434 = vpack.c.b16 %v3034, %v3026
        %v4435 = vpack.c.b16 %v3043, %v3035
        %v4436 = vpack.c.b16 %v3044, %v3036
        %v4437 = vpack.c.b16 %v3045, %v3037
        %v4438 = vpack.c.b16 %v3046, %v3038
        %v4439 = vpack.c.b16 %v3047, %v3039
        %v4440 = vpack.c.b16 %v3048, %v3040
        %v4441 = vpack.c.b16 %v3049, %v3041
        %v4442 = vpack.c.b16 %v3050, %v3042
        %v4443 = vpack.c.b16 %v3059, %v3051
        %v4444 = vpack.c.b16 %v3060, %v3052
        %v4445 = vpack.c.b16 %v3061, %v3053
        %v4446 = vpack.c.b16 %v3062, %v3054
        %v4447 = vpack.c.b16 %v3063, %v3055
        %v4448 = vpack.c.b16 %v3064, %v3056
        %v4449 = vpack.c.b16 %v3065, %v3057
        %v4450 = vpack.c.b16 %v3066, %v3058
        %v4451 = vpack.c.b16 %v3075, %v3067
        %v4452 = vpack.c.b16 %v3076, %v3068
        %v4453 = vpack.c.b16 %v3077, %v3069
        %v4454 = vpack.c.b16 %v3078, %v3070
        %v4455 = vpack.c.b16 %v3079, %v3071
        %v4456 = vpack.c.b16 %v3080, %v3072
        %v4457 = vpack.c.b16 %v3081, %v3073
        %v4458 = vpack.c.b16 %v3082, %v3074
        %v4459 = vpack.c.b16 %v3091, %v3083
        %v4460 = vpack.c.b16 %v3092, %v3084
        %v4461 = vpack.c.b16 %v3093, %v3085
        %v4462 = vpack.c.b16 %v3094, %v3086
        %v4463 = vpack.c.b16 %v3095, %v3087
        %v4464 = vpack.c.b16 %v3096, %v3088
        %v4465 = vpack.c.b16 %v3097, %v3089
        %v4466 = vpack.c.b16 %v3098, %v3090
        %v4467 = vpack.c.b16 %v3107, %v3099
        %v4468 = vpack.c.b16 %v3108, %v3100
        %v4469 = vpack.c.b16 %v3109, %v3101
        %v4470 = vpack.c.b16 %v3110, %v3102
        %v4471 = vpack.c.b16 %v3111, %v3103
        %v4472 = vpack.c.b16 %v3112, %v3104
        %v4473 = vpack.c.b16 %v3113, %v3105
        %v4474 = vpack.c.b16 %v3114, %v3106
        %v4475 = vpack.c.b16 %v3123, %v3115
        %v4476 = vpack.c.b16 %v3124, %v3116
        %v4477 = vpack.c.b16 %v3125, %v3117
        %v4478 = vpack.c.b16 %v3126, %v3118
        %v4479 = vpack.c.b16 %v3127, %v3119
        %v4480 = vpack.c.b16 %v3128, %v3120
        %v4481 = vpack.c.b16 %v3129, %v3121
        %v4482 = vpack.c.b16 %v3130, %v3122
        %v4483 = vpack.c.b16 %v3139, %v3131
        %v4484 = vpack.c.b16 %v3140, %v3132
        %v4485 = vpack.c.b16 %v3141, %v3133
        %v4486 = vpack.c.b16 %v3142, %v3134
        %v4487 = vpack.c.b16 %v3143, %v3135
        %v4488 = vpack.c.b16 %v3144, %v3136
        %v4489 = vpack.c.b16 %v3145, %v3137
        %v4490 = vpack.c.b16 %v3146, %v3138
        %v4491 = vpack.c.b16 %v3155, %v3147
        %v4492 = vpack.c.b16 %v3156, %v3148
        %v4493 = vpack.c.b16 %v3157, %v3149
        %v4494 = vpack.c.b16 %v3158, %v3150
        %v4495 = vpack.c.b16 %v3159, %v3151
        %v4496 = vpack.c.b16 %v3160, %v3152
        %v4497 = vpack.c.b16 %v3161, %v3153
        %v4498 = vpack.c.b16 %v3162, %v3154
        %v4499 = vpack.c.b16 %v3171, %v3163
        %v4500 = vpack.c.b16 %v3172, %v3164
        %v4501 = vpack.c.b16 %v3173, %v3165
        %v4502 = vpack.c.b16 %v3174, %v3166
        %v4503 = vpack.c.b16 %v3175, %v3167
        %v4504 = vpack.c.b16 %v3176, %v3168
        %v4505 = vpack.c.b16 %v3177, %v3169
        %v4506 = vpack.c.b16 %v3178, %v3170
        %v4507 = vpack.c.b16 %v3187, %v3179
        %v4508 = vpack.c.b16 %v3188, %v3180
        %v4509 = vpack.c.b16 %v3189, %v3181
        %v4510 = vpack.c.b16 %v3190, %v3182
        %v4511 = vpack.c.b16 %v3191, %v3183
        %v4512 = vpack.c.b16 %v3192, %v3184
        %v4513 = vpack.c.b16 %v3193, %v3185
        %v4514 = vpack.c.b16 %v3194, %v3186
        %v4515 = vpack.c.b16 %v3203, %v3195
        %v4516 = vpack.c.b16 %v3204, %v3196
        %v4517 = vpack.c.b16 %v3205, %v3197
        %v4518 = vpack.c.b16 %v3206, %v3198
        %v4519 = vpack.c.b16 %v3207, %v3199
        %v4520 = vpack.c.b16 %v3208, %v3200
        %v4521 = vpack.c.b16 %v3209, %v3201
        %v4522 = vpack.c.b16 %v3210, %v3202
        %v4523 = vpack.c.b16 %v3219, %v3211
        %v4524 = vpack.c.b16 %v3220, %v3212
        %v4525 = vpack.c.b16 %v3221, %v3213
        %v4526 = vpack.c.b16 %v3222, %v3214
        %v4527 = vpack.c.b16 %v3223, %v3215
        %v4528 = vpack.c.b16 %v3224, %v3216
        %v4529 = vpack.c.b16 %v3225, %v3217
        %v4530 = vpack.c.b16 %v3226, %v3218
        %v4531 = vpack.c.b16 %v3235, %v3227
        %v4532 = vpack.c.b16 %v3236, %v3228
        %v4533 = vpack.c.b16 %v3237, %v3229
        %v4534 = vpack.c.b16 %v3238, %v3230
        %v4535 = vpack.c.b16 %v3239, %v3231
        %v4536 = vpack.c.b16 %v3240, %v3232
        %v4537 = vpack.c.b16 %v3241, %v3233
        %v4538 = vpack.c.b16 %v3242, %v3234
        %v4539 = vpack.c.b16 %v3251, %v3243
        %v4540 = vpack.c.b16 %v3252, %v3244
        %v4541 = vpack.c.b16 %v3253, %v3245
        %v4542 = vpack.c.b16 %v3254, %v3246
        %v4543 = vpack.c.b16 %v3255, %v3247
        %v4544 = vpack.c.b16 %v3256, %v3248
        %v4545 = vpack.c.b16 %v3257, %v3249
        %v4546 = vpack.c.b16 %v3258, %v3250
        %v4547 = vpack.c.b16 %v3267, %v3259
        %v4548 = vpack.c.b16 %v3268, %v3260
        %v4549 = vpack.c.b16 %v3269, %v3261
        %v4550 = vpack.c.b16 %v3270, %v3262
        %v4551 = vpack.c.b16 %v3271, %v3263
        %v4552 = vpack.c.b16 %v3272, %v3264
        %v4553 = vpack.c.b16 %v3273, %v3265
        %v4554 = vpack.c.b16 %v3274, %v3266
        %v4555 = vpack.c.b16 %v3283, %v3275
        %v4556 = vpack.c.b16 %v3284, %v3276
        %v4557 = vpack.c.b16 %v3285, %v3277
        %v4558 = vpack.c.b16 %v3286, %v3278
        %v4559 = vpack.c.b16 %v3287, %v3279
        %v4560 = vpack.c.b16 %v3288, %v3280
        %v4561 = vpack.c.b16 %v3289, %v3281
        %v4562 = vpack.c.b16 %v3290, %v3282
        %v4563 = vpack.c.b16 %v3299, %v3291
        %v4564 = vpack.c.b16 %v3300, %v3292
        %v4565 = vpack.c.b16 %v3301, %v3293
        %v4566 = vpack.c.b16 %v3302, %v3294
        %v4567 = vpack.c.b16 %v3303, %v3295
        %v4568 = vpack.c.b16 %v3304, %v3296
        %v4569 = vpack.c.b16 %v3305, %v3297
        %v4570 = vpack.c.b16 %v3306, %v3298
        %v4571 = vpack.c.b16 %v3315, %v3307
        %v4572 = vpack.c.b16 %v3316, %v3308
        %v4573 = vpack.c.b16 %v3317, %v3309
        %v4574 = vpack.c.b16 %v3318, %v3310
        %v4575 = vpack.c.b16 %v3319, %v3311
        %v4576 = vpack.c.b16 %v3320, %v3312
        %v4577 = vpack.c.b16 %v3321, %v3313
        %v4578 = vpack.c.b16 %v3322, %v3314
        %v4579 = vpack.c.b16 %v3331, %v3323
        %v4580 = vpack.c.b16 %v3332, %v3324
        %v4581 = vpack.c.b16 %v3333, %v3325
        %v4582 = vpack.c.b16 %v3334, %v3326
        %v4583 = vpack.c.b16 %v3335, %v3327
        %v4584 = vpack.c.b16 %v3336, %v3328
        %v4585 = vpack.c.b16 %v3337, %v3329
        %v4586 = vpack.c.b16 %v3338, %v3330
        %v4587 = vpack.c.b16 %v3347, %v3339
        %v4588 = vpack.c.b16 %v3348, %v3340
        %v4589 = vpack.c.b16 %v3349, %v3341
        %v4590 = vpack.c.b16 %v3350, %v3342
        %v4591 = vpack.c.b16 %v3351, %v3343
        %v4592 = vpack.c.b16 %v3352, %v3344
        %v4593 = vpack.c.b16 %v3353, %v3345
        %v4594 = vpack.c.b16 %v3354, %v3346
        %v4595 = vpack.c.b16 %v3363, %v3355
        %v4596 = vpack.c.b16 %v3364, %v3356
        %v4597 = vpack.c.b16 %v3365, %v3357
        %v4598 = vpack.c.b16 %v3366, %v3358
        %v4599 = vpack.c.b16 %v3367, %v3359
        %v4600 = vpack.c.b16 %v3368, %v3360
        %v4601 = vpack.c.b16 %v3369, %v3361
        %v4602 = vpack.c.b16 %v3370, %v3362
        %v4603 = vpack.c.b16 %v3379, %v3371
        %v4604 = vpack.c.b16 %v3380, %v3372
        %v4605 = vpack.c.b16 %v3381, %v3373
        %v4606 = vpack.c.b16 %v3382, %v3374
        %v4607 = vpack.c.b16 %v3383, %v3375
        %v4608 = vpack.c.b16 %v3384, %v3376
        %v4609 = vpack.c.b16 %v3385, %v3377
        %v4610 = vpack.c.b16 %v3386, %v3378
        %v4611 = vpack.c.b16 %v3395, %v3387
        %v4612 = vpack.c.b16 %v3396, %v3388
        %v4613 = vpack.c.b16 %v3397, %v3389
        %v4614 = vpack.c.b16 %v3398, %v3390
        %v4615 = vpack.c.b16 %v3399, %v3391
        %v4616 = vpack.c.b16 %v3400, %v3392
        %v4617 = vpack.c.b16 %v3401, %v3393
        %v4618 = vpack.c.b16 %v3402, %v3394
        %v4619 = vpack.c.b16 %v3411, %v3403
        %v4620 = vpack.c.b16 %v3412, %v3404
        %v4621 = vpack.c.b16 %v3413, %v3405
        %v4622 = vpack.c.b16 %v3414, %v3406
        %v4623 = vpack.c.b16 %v3415, %v3407
        %v4624 = vpack.c.b16 %v3416, %v3408
        %v4625 = vpack.c.b16 %v3417, %v3409
        %v4626 = vpack.c.b16 %v3418, %v3410
        %v4627 = vpack.c.b16 %v3427, %v3419
        %v4628 = vpack.c.b16 %v3428, %v3420
        %v4629 = vpack.c.b16 %v3429, %v3421
        %v4630 = vpack.c.b16 %v3430, %v3422
        %v4631 = vpack.c.b16 %v3431, %v3423
        %v4632 = vpack.c.b16 %v3432, %v3424
        %v4633 = vpack.c.b16 %v3433, %v3425
        %v4634 = vpack.c.b16 %v3434, %v3426
        %v4635 = vpack.c.b16 %v3443, %v3435
        %v4636 = vpack.c.b16 %v3444, %v3436
        %v4637 = vpack.c.b16 %v3445, %v3437
        %v4638 = vpack.c.b16 %v3446, %v3438
        %v4639 = vpack.c.b16 %v3447, %v3439
        %v4640 = vpack.c.b16 %v3448, %v3440
        %v4641 = vpack.c.b16 %v3449, %v3441
        %v4642 = vpack.c.b16 %v3450, %v3442
        %v4643 = vpack.c.b16 %v3459, %v3451
        %v4644 = vpack.c.b16 %v3460, %v3452
        %v4645 = vpack.c.b16 %v3461, %v3453
        %v4646 = vpack.c.b16 %v3462, %v3454
        %v4647 = vpack.c.b16 %v3463, %v3455
        %v4648 = vpack.c.b16 %v3464, %v3456
        %v4649 = vpack.c.b16 %v3465, %v3457
        %v4650 = vpack.c.b16 %v3466, %v3458
        %v4651 = vpack.c.b16 %v3475, %v3467
        %v4652 = vpack.c.b16 %v3476, %v3468
        %v4653 = vpack.c.b16 %v3477, %v3469
        %v4654 = vpack.c.b16 %v3478, %v3470
        %v4655 = vpack.c.b16 %v3479, %v3471
        %v4656 = vpack.c.b16 %v3480, %v3472
        %v4657 = vpack.c.b16 %v3481, %v3473
        %v4658 = vpack.c.b16 %v3482, %v3474
        %v4659 = vpack.c.b16 %v3491, %v3483
        %v4660 = vpack.c.b16 %v3492, %v3484
        %v4661 = vpack.c.b16 %v3493, %v3485
        %v4662 = vpack.c.b16 %v3494, %v3486
        %v4663 = vpack.c.b16 %v3495, %v3487
        %v4664 = vpack.c.b16 %v3496, %v3488
        %v4665 = vpack.c.b16 %v3497, %v3489
        %v4666 = vpack.c.b16 %v3498, %v3490
        %v4667 = vpack.c.b16 %v3507, %v3499
        %v4668 = vpack.c.b16 %v3508, %v3500
        %v4669 = vpack.c.b16 %v3509, %v3501
        %v4670 = vpack.c.b16 %v3510, %v3502
        %v4671 = vpack.c.b16 %v3511, %v3503
        %v4672 = vpack.c.b16 %v3512, %v3504
        %v4673 = vpack.c.b16 %v3513, %v3505
        %v4674 = vpack.c.b16 %v3514, %v3506
        %v4675 = vpack.c.b16 %v3523, %v3515
        %v4676 = vpack.c.b16 %v3524, %v3516
        %v4677 = vpack.c.b16 %v3525, %v3517
        %v4678 = vpack.c.b16 %v3526, %v3518
        %v4679 = vpack.c.b16 %v3527, %v3519
        %v4680 = vpack.c.b16 %v3528, %v3520
        %v4681 = vpack.c.b16 %v3529, %v3521
        %v4682 = vpack.c.b16 %v3530, %v3522
        %v4683 = vpack.c.b16 %v3539, %v3531
        %v4684 = vpack.c.b16 %v3540, %v3532
        %v4685 = vpack.c.b16 %v3541, %v3533
        %v4686 = vpack.c.b16 %v3542, %v3534
        %v4687 = vpack.c.b16 %v3543, %v3535
        %v4688 = vpack.c.b16 %v3544, %v3536
        %v4689 = vpack.c.b16 %v3545, %v3537
        %v4690 = vpack.c.b16 %v3546, %v3538
        %v4691 = vpack.c.b16 %v3555, %v3547
        %v4692 = vpack.c.b16 %v3556, %v3548
        %v4693 = vpack.c.b16 %v3557, %v3549
        %v4694 = vpack.c.b16 %v3558, %v3550
        %v4695 = vpack.c.b16 %v3559, %v3551
        %v4696 = vpack.c.b16 %v3560, %v3552
        %v4697 = vpack.c.b16 %v3561, %v3553
        %v4698 = vpack.c.b16 %v3562, %v3554
        %v4699 = vpack.c.b16 %v3571, %v3563
        %v4700 = vpack.c.b16 %v3572, %v3564
        %v4701 = vpack.c.b16 %v3573, %v3565
        %v4702 = vpack.c.b16 %v3574, %v3566
        %v4703 = vpack.c.b16 %v3575, %v3567
        %v4704 = vpack.c.b16 %v3576, %v3568
        %v4705 = vpack.c.b16 %v3577, %v3569
        %v4706 = vpack.c.b16 %v3578, %v3570
        %v4707 = vpack.c.b16 %v3587, %v3579
        %v4708 = vpack.c.b16 %v3588, %v3580
        %v4709 = vpack.c.b16 %v3589, %v3581
        %v4710 = vpack.c.b16 %v3590, %v3582
        %v4711 = vpack.c.b16 %v3591, %v3583
        %v4712 = vpack.c.b16 %v3592, %v3584
        %v4713 = vpack.c.b16 %v3593, %v3585
        %v4714 = vpack.c.b16 %v3594, %v3586
        %v4715 = vpack.c.b16 %v3603, %v3595
        %v4716 = vpack.c.b16 %v3604, %v3596
        %v4717 = vpack.c.b16 %v3605, %v3597
        %v4718 = vpack.c.b16 %v3606, %v3598
        %v4719 = vpack.c.b16 %v3607, %v3599
        %v4720 = vpack.c.b16 %v3608, %v3600
        %v4721 = vpack.c.b16 %v3609, %v3601
        %v4722 = vpack.c.b16 %v3610, %v3602
        %v4723 = vpack.c.b16 %v3619, %v3611
        %v4724 = vpack.c.b16 %v3620, %v3612
        %v4725 = vpack.c.b16 %v3621, %v3613
        %v4726 = vpack.c.b16 %v3622, %v3614
        %v4727 = vpack.c.b16 %v3623, %v3615
        %v4728 = vpack.c.b16 %v3624, %v3616
        %v4729 = vpack.c.b16 %v3625, %v3617
        %v4730 = vpack.c.b16 %v3626, %v3618
        %v4731 = vpack.c.b16 %v3635, %v3627
        %v4732 = vpack.c.b16 %v3636, %v3628
        %v4733 = vpack.c.b16 %v3637, %v3629
        %v4734 = vpack.c.b16 %v3638, %v3630
        %v4735 = vpack.c.b16 %v3639, %v3631
        %v4736 = vpack.c.b16 %v3640, %v3632
        %v4737 = vpack.c.b16 %v3641, %v3633
        %v4738 = vpack.c.b16 %v3642, %v3634
        %v4739 = vpack.c.b16 %v3651, %v3643
        %v4740 = vpack.c.b16 %v3652, %v3644
        %v4741 = vpack.c.b16 %v3653, %v3645
        %v4742 = vpack.c.b16 %v3654, %v3646
        %v4743 = vpack.c.b16 %v3655, %v3647
        %v4744 = vpack.c.b16 %v3656, %v3648
        %v4745 = vpack.c.b16 %v3657, %v3649
        %v4746 = vpack.c.b16 %v3658, %v3650
        %v4747 = vpack.c.b16 %v3667, %v3659
        %v4748 = vpack.c.b16 %v3668, %v3660
        %v4749 = vpack.c.b16 %v3669, %v3661
        %v4750 = vpack.c.b16 %v3670, %v3662
        %v4751 = vpack.c.b16 %v3671, %v3663
        %v4752 = vpack.c.b16 %v3672, %v3664
        %v4753 = vpack.c.b16 %v3673, %v3665
        %v4754 = vpack.c.b16 %v3674, %v3666
        %v4755 = vpack.c.b16 %v3683, %v3675
        %v4756 = vpack.c.b16 %v3684, %v3676
        %v4757 = vpack.c.b16 %v3685, %v3677
        %v4758 = vpack.c.b16 %v3686, %v3678
        %v4759 = vpack.c.b16 %v3687, %v3679
        %v4760 = vpack.c.b16 %v3688, %v3680
        %v4761 = vpack.c.b16 %v3689, %v3681
        %v4762 = vpack.c.b16 %v3690, %v3682
        %v4763 = vpack.c.b16 %v3699, %v3691
        %v4764 = vpack.c.b16 %v3700, %v3692
        %v4765 = vpack.c.b16 %v3701, %v3693
        %v4766 = vpack.c.b16 %v3702, %v3694
        %v4767 = vpack.c.b16 %v3703, %v3695
        %v4768 = vpack.c.b16 %v3704, %v3696
        %v4769 = vpack.c.b16 %v3705, %v3697
        %v4770 = vpack.c.b16 %v3706, %v3698
        %v4771 = vpack.c.b16 %v3715, %v3707
        %v4772 = vpack.c.b16 %v3716, %v3708
        %v4773 = vpack.c.b16 %v3717, %v3709
        %v4774 = vpack.c.b16 %v3718, %v3710
        %v4775 = vpack.c.b16 %v3719, %v3711
        %v4776 = vpack.c.b16 %v3720, %v3712
        %v4777 = vpack.c.b16 %v3721, %v3713
        %v4778 = vpack.c.b16 %v3722, %v3714
        %v4779 = vpack.c.b16 %v3731, %v3723
        %v4780 = vpack.c.b16 %v3732, %v3724
        %v4781 = vpack.c.b16 %v3733, %v3725
        %v4782 = vpack.c.b16 %v3734, %v3726
        %v4783 = vpack.c.b16 %v3735, %v3727
        %v4784 = vpack.c.b16 %v3736, %v3728
        %v4785 = vpack.c.b16 %v3737, %v3729
        %v4786 = vpack.c.b16 %v3738, %v3730
        %v4787 = vpack.c.b16 %v3747, %v3739
        %v4788 = vpack.c.b16 %v3748, %v3740
        %v4789 = vpack.c.b16 %v3749, %v3741
        %v4790 = vpack.c.b16 %v3750, %v3742
        %v4791 = vpack.c.b16 %v3751, %v3743
        %v4792 = vpack.c.b16 %v3752, %v3744
        %v4793 = vpack.c.b16 %v3753, %v3745
        %v4794 = vpack.c.b16 %v3754, %v3746
        %v4795 = vpack.c.b16 %v3763, %v3755
        %v4796 = vpack.c.b16 %v3764, %v3756
        %v4797 = vpack.c.b16 %v3765, %v3757
        %v4798 = vpack.c.b16 %v3766, %v3758
        %v4799 = vpack.c.b16 %v3767, %v3759
        %v4800 = vpack.c.b16 %v3768, %v3760
        %v4801 = vpack.c.b16 %v3769, %v3761
        %v4802 = vpack.c.b16 %v3770, %v3762
        %v4803 = vpack.c.b16 %v3779, %v3771
        %v4804 = vpack.c.b16 %v3780, %v3772
        %v4805 = vpack.c.b16 %v3781, %v3773
        %v4806 = vpack.c.b16 %v3782, %v3774
        %v4807 = vpack.c.b16 %v3783, %v3775
        %v4808 = vpack.c.b16 %v3784, %v3776
        %v4809 = vpack.c.b16 %v3785, %v3777
        %v4810 = vpack.c.b16 %v3786, %v3778
        %v4811 = vpack.c.b16 %v3795, %v3787
        %v4812 = vpack.c.b16 %v3796, %v3788
        %v4813 = vpack.c.b16 %v3797, %v3789
        %v4814 = vpack.c.b16 %v3798, %v3790
        %v4815 = vpack.c.b16 %v3799, %v3791
        %v4816 = vpack.c.b16 %v3800, %v3792
        %v4817 = vpack.c.b16 %v3801, %v3793
        %v4818 = vpack.c.b16 %v3802, %v3794
        %v4819 = vpack.c.b16 %v3811, %v3803
        %v4820 = vpack.c.b16 %v3812, %v3804
        %v4821 = vpack.c.b16 %v3813, %v3805
        %v4822 = vpack.c.b16 %v3814, %v3806
        %v4823 = vpack.c.b16 %v3815, %v3807
        %v4824 = vpack.c.b16 %v3816, %v3808
        %v4825 = vpack.c.b16 %v3817, %v3809
        %v4826 = vpack.c.b16 %v3818, %v3810
        %v4827 = vpack.c.b16 %v3827, %v3819
        %v4828 = vpack.c.b16 %v3828, %v3820
        %v4829 = vpack.c.b16 %v3829, %v3821
        %v4830 = vpack.c.b16 %v3830, %v3822
        %v4831 = vpack.c.b16 %v3831, %v3823
        %v4832 = vpack.c.b16 %v3832, %v3824
        %v4833 = vpack.c.b16 %v3833, %v3825
        %v4834 = vpack.c.b16 %v3834, %v3826
        %v4835 = vpack.c.b16 %v3843, %v3835
        %v4836 = vpack.c.b16 %v3844, %v3836
        %v4837 = vpack.c.b16 %v3845, %v3837
        %v4838 = vpack.c.b16 %v3846, %v3838
        %v4839 = vpack.c.b16 %v3847, %v3839
        %v4840 = vpack.c.b16 %v3848, %v3840
        %v4841 = vpack.c.b16 %v3849, %v3841
        %v4842 = vpack.c.b16 %v3850, %v3842
        %v4843 = vpack.c.b16 %v3859, %v3851
        %v4844 = vpack.c.b16 %v3860, %v3852
        %v4845 = vpack.c.b16 %v3861, %v3853
        %v4846 = vpack.c.b16 %v3862, %v3854
        %v4847 = vpack.c.b16 %v3863, %v3855
        %v4848 = vpack.c.b16 %v3864, %v3856
        %v4849 = vpack.c.b16 %v3865, %v3857
        %v4850 = vpack.c.b16 %v3866, %v3858
        %v4851 = vpack.c.b16 %v3875, %v3867
        %v4852 = vpack.c.b16 %v3876, %v3868
        %v4853 = vpack.c.b16 %v3877, %v3869
        %v4854 = vpack.c.b16 %v3878, %v3870
        %v4855 = vpack.c.b16 %v3879, %v3871
        %v4856 = vpack.c.b16 %v3880, %v3872
        %v4857 = vpack.c.b16 %v3881, %v3873
        %v4858 = vpack.c.b16 %v3882, %v3874
        %v4859 = vpack.c.b16 %v3891, %v3883
        %v4860 = vpack.c.b16 %v3892, %v3884
        %v4861 = vpack.c.b16 %v3893, %v3885
        %v4862 = vpack.c.b16 %v3894, %v3886
        %v4863 = vpack.c.b16 %v3895, %v3887
        %v4864 = vpack.c.b16 %v3896, %v3888
        %v4865 = vpack.c.b16 %v3897, %v3889
        %v4866 = vpack.c.b16 %v3898, %v3890
        %v4867 = vpack.c.b16 %v3907, %v3899
        %v4868 = vpack.c.b16 %v3908, %v3900
        %v4869 = vpack.c.b16 %v3909, %v3901
        %v4870 = vpack.c.b16 %v3910, %v3902
        %v4871 = vpack.c.b16 %v3911, %v3903
        %v4872 = vpack.c.b16 %v3912, %v3904
        %v4873 = vpack.c.b16 %v3913, %v3905
        %v4874 = vpack.c.b16 %v3914, %v3906
        %v4875 = vpack.c.b16 %v3923, %v3915
        %v4876 = vpack.c.b16 %v3924, %v3916
        %v4877 = vpack.c.b16 %v3925, %v3917
        %v4878 = vpack.c.b16 %v3926, %v3918
        %v4879 = vpack.c.b16 %v3927, %v3919
        %v4880 = vpack.c.b16 %v3928, %v3920
        %v4881 = vpack.c.b16 %v3929, %v3921
        %v4882 = vpack.c.b16 %v3930, %v3922
        %v4883 = vpack.c.b16 %v3939, %v3931
        %v4884 = vpack.c.b16 %v3940, %v3932
        %v4885 = vpack.c.b16 %v3941, %v3933
        %v4886 = vpack.c.b16 %v3942, %v3934
        %v4887 = vpack.c.b16 %v3943, %v3935
        %v4888 = vpack.c.b16 %v3944, %v3936
        %v4889 = vpack.c.b16 %v3945, %v3937
        %v4890 = vpack.c.b16 %v3946, %v3938
        %v4891 = vpack.c.b16 %v3955, %v3947
        %v4892 = vpack.c.b16 %v3956, %v3948
        %v4893 = vpack.c.b16 %v3957, %v3949
        %v4894 = vpack.c.b16 %v3958, %v3950
        %v4895 = vpack.c.b16 %v3959, %v3951
        %v4896 = vpack.c.b16 %v3960, %v3952
        %v4897 = vpack.c.b16 %v3961, %v3953
        %v4898 = vpack.c.b16 %v3962, %v3954
        %v4899 = vpack.c.b16 %v3971, %v3963
        %v4900 = vpack.c.b16 %v3972, %v3964
        %v4901 = vpack.c.b16 %v3973, %v3965
        %v4902 = vpack.c.b16 %v3974, %v3966
        %v4903 = vpack.c.b16 %v3975, %v3967
        %v4904 = vpack.c.b16 %v3976, %v3968
        %v4905 = vpack.c.b16 %v3977, %v3969
        %v4906 = vpack.c.b16 %v3978, %v3970
        %v4907 = vpack.c.b16 %v3987, %v3979
        %v4908 = vpack.c.b16 %v3988, %v3980
        %v4909 = vpack.c.b16 %v3989, %v3981
        %v4910 = vpack.c.b16 %v3990, %v3982
        %v4911 = vpack.c.b16 %v3991, %v3983
        %v4912 = vpack.c.b16 %v3992, %v3984
        %v4913 = vpack.c.b16 %v3993, %v3985
        %v4914 = vpack.c.b16 %v3994, %v3986
        %v4915 = vpack.c.b16 %v4003, %v3995
        %v4916 = vpack.c.b16 %v4004, %v3996
        %v4917 = vpack.c.b16 %v4005, %v3997
        %v4918 = vpack.c.b16 %v4006, %v3998
        %v4919 = vpack.c.b16 %v4007, %v3999
        %v4920 = vpack.c.b16 %v4008, %v4000
        %v4921 = vpack.c.b16 %v4009, %v4001
        %v4922 = vpack.c.b16 %v4010, %v4002
        %v4923 = vpack.c.b16 %v4019, %v4011
        %v4924 = vpack.c.b16 %v4020, %v4012
        %v4925 = vpack.c.b16 %v4021, %v4013
        %v4926 = vpack.c.b16 %v4022, %v4014
        %v4927 = vpack.c.b16 %v4023, %v4015
        %v4928 = vpack.c.b16 %v4024, %v4016
        %v4929 = vpack.c.b16 %v4025, %v4017
        %v4930 = vpack.c.b16 %v4026, %v4018
        %v4931 = vpack.c.b16 %v4035, %v4027
        %v4932 = vpack.c.b16 %v4036, %v4028
        %v4933 = vpack.c.b16 %v4037, %v4029
        %v4934 = vpack.c.b16 %v4038, %v4030
        %v4935 = vpack.c.b16 %v4039, %v4031
        %v4936 = vpack.c.b16 %v4040, %v4032
        %v4937 = vpack.c.b16 %v4041, %v4033
        %v4938 = vpack.c.b16 %v4042, %v4034
        %5835 = vmatprep.subr.bf16.mxu0 %v4044
        %5836 = vmatpush1.bf16.msra.mxu0 %v4043
        %5837 = vmatprep.subr.bf16.mxu0 %v4052
        %5838 = vmatpush1.bf16.msra.mxu0 %v4051
        %5839 = vmatprep.subr.bf16.mxu0 %v4060
        %5840 = vmatpush1.bf16.msra.mxu0 %v4059
        %5841 = vmatprep.subr.bf16.mxu0 %v4068
        %5842 = vmatpush1.bf16.msra.mxu0 %v4067
        %5843 = vmatprep.subr.bf16.mxu0 %v4076
        %5844 = vmatpush1.bf16.msra.mxu0 %v4075
        %5845 = vmatprep.subr.bf16.mxu0 %v4084
        %5846 = vmatpush1.bf16.msra.mxu0 %v4083
        %5847 = vmatprep.subr.bf16.mxu0 %v4092
        %5848 = vmatpush1.bf16.msra.mxu0 %v4091
        %5849 = vmatprep.subr.bf16.mxu0 %v4100
        %5850 = vmatpush1.bf16.msra.mxu0 %v4099
        %5851 = vmatprep.subr.bf16.mxu0 %v4108
        %5852 = vmatpush1.bf16.msra.mxu0 %v4107
        %5853 = vmatprep.subr.bf16.mxu0 %v4116
        %5854 = vmatpush1.bf16.msra.mxu0 %v4115
        %5855 = vmatprep.subr.bf16.mxu0 %v4124
        %5856 = vmatpush1.bf16.msra.mxu0 %v4123
        %5857 = vmatprep.subr.bf16.mxu0 %v4132
        %5858 = vmatpush1.bf16.msra.mxu0 %v4131
        %5859 = vmatprep.subr.bf16.mxu0 %v4140
        %5860 = vmatpush1.bf16.msra.mxu0 %v4139
        %5861 = vmatprep.subr.bf16.mxu0 %v4148
        %5862 = vmatpush1.bf16.msra.mxu0 %v4147
        %5863 = vmatprep.subr.bf16.mxu0 %v4156
        %5864 = vmatpush1.bf16.msra.mxu0 %v4155
        %5865 = vmatprep.subr.bf16.mxu0 %v4164
        %5866 = vmatpush1.bf16.msra.mxu0 %v4163
        %5867 = vmatprep.mubr.bf16.mxu0 %v1328
        %5868 = vmatmul.mubr.bf16.gmra.mrb[0].mxu0 %v1327
        %v5869 = vpop.f32.mrb[0].mxu0
        %v5870 = vadd.f32 0.0, %v5869
        %v5871 = vpop.f32.mrb[0].mxu0
        %v5872 = vadd.f32 0.0, %v5871
        %v5873 = vpop.f32.mrb[0].mxu0
        %v5874 = vpop.f32.mrb[0].mxu0
        %5875 = vdwg.mxu0
        %5876 = vmatprep.subr.bf16.mxu0 %v4172
        %5877 = vmatpush1.bf16.msra.mxu0 %v4171
        %5878 = vmatprep.subr.bf16.mxu0 %v4180
        %5879 = vmatpush1.bf16.msra.mxu0 %v4179
        %5880 = vmatprep.subr.bf16.mxu0 %v4188
        %5881 = vmatpush1.bf16.msra.mxu0 %v4187
        %5882 = vmatprep.subr.bf16.mxu0 %v4196
        %5883 = vmatpush1.bf16.msra.mxu0 %v4195
        %5884 = vmatprep.subr.bf16.mxu0 %v4204
        %5885 = vmatpush1.bf16.msra.mxu0 %v4203
        %5886 = vmatprep.subr.bf16.mxu0 %v4212
        %5887 = vmatpush1.bf16.msra.mxu0 %v4211
        %5888 = vmatprep.subr.bf16.mxu0 %v4220
        %5889 = vmatpush1.bf16.msra.mxu0 %v4219
        %5890 = vmatprep.subr.bf16.mxu0 %v4228
        %5891 = vmatpush1.bf16.msra.mxu0 %v4227
        %5892 = vmatprep.subr.bf16.mxu0 %v4236
        %5893 = vmatpush1.bf16.msra.mxu0 %v4235
        %5894 = vmatprep.subr.bf16.mxu0 %v4244
        %5895 = vmatpush1.bf16.msra.mxu0 %v4243
        %5896 = vmatprep.subr.bf16.mxu0 %v4252
        %5897 = vmatpush1.bf16.msra.mxu0 %v4251
        %5898 = vmatprep.subr.bf16.mxu0 %v4260
        %5899 = vmatpush1.bf16.msra.mxu0 %v4259
        %5900 = vmatprep.subr.bf16.mxu0 %v4268
        %5901 = vmatpush1.bf16.msra.mxu0 %v4267
        %5902 = vmatprep.subr.bf16.mxu0 %v4276
        %5903 = vmatpush1.bf16.msra.mxu0 %v4275
        %5904 = vmatprep.subr.bf16.mxu0 %v4284
        %5905 = vmatpush1.bf16.msra.mxu0 %v4283
        %5906 = vmatprep.subr.bf16.mxu0 %v4292
        %5907 = vmatpush1.bf16.msra.mxu0 %v4291
        %5908 = vmatprep.mubr.bf16.mxu0 %v1330
        %5909 = vmatmul.mubr.bf16.gmra.mrb[0].mxu0 %v1329
        %v5910 = vpop.f32.mrb[0].mxu0
        %v5911 = vadd.f32 %v5870, %v5910
        %v5912 = vpop.f32.mrb[0].mxu0
        %v5913 = vadd.f32 %v5872, %v5912
        %v5914 = vpop.f32.mrb[0].mxu0
        %v5915 = vpop.f32.mrb[0].mxu0
        %5916 = vdwg.mxu0
        %5917 = vmatprep.subr.bf16.mxu0 %v4300
        %5918 = vmatpush1.bf16.msra.mxu0 %v4299
        %5919 = vmatprep.subr.bf16.mxu0 %v4308
        %5920 = vmatpush1.bf16.msra.mxu0 %v4307
        %5921 = vmatprep.subr.bf16.mxu0 %v4316
        %5922 = vmatpush1.bf16.msra.mxu0 %v4315
        %5923 = vmatprep.subr.bf16.mxu0 %v4324
        %5924 = vmatpush1.bf16.msra.mxu0 %v4323
        %5925 = vmatprep.subr.bf16.mxu0 %v4332
        %5926 = vmatpush1.bf16.msra.mxu0 %v4331
        %5927 = vmatprep.subr.bf16.mxu0 %v4340
        %5928 = vmatpush1.bf16.msra.mxu0 %v4339
        %5929 = vmatprep.subr.bf16.mxu0 %v4348
        %5930 = vmatpush1.bf16.msra.mxu0 %v4347
        %5931 = vmatprep.subr.bf16.mxu0 %v4356
        %5932 = vmatpush1.bf16.msra.mxu0 %v4355
        %5933 = vmatprep.subr.bf16.mxu0 %v4364
        %5934 = vmatpush1.bf16.msra.mxu0 %v4363
        %5935 = vmatprep.subr.bf16.mxu0 %v4372
        %5936 = vmatpush1.bf16.msra.mxu0 %v4371
        %5937 = vmatprep.subr.bf16.mxu0 %v4380
        %5938 = vmatpush1.bf16.msra.mxu0 %v4379
        %5939 = vmatprep.subr.bf16.mxu0 %v4388
        %5940 = vmatpush1.bf16.msra.mxu0 %v4387
        %5941 = vmatprep.subr.bf16.mxu0 %v4396
        %5942 = vmatpush1.bf16.msra.mxu0 %v4395
        %5943 = vmatprep.subr.bf16.mxu0 %v4404
        %5944 = vmatpush1.bf16.msra.mxu0 %v4403
        %5945 = vmatprep.subr.bf16.mxu0 %v4412
        %5946 = vmatpush1.bf16.msra.mxu0 %v4411
        %5947 = vmatprep.subr.bf16.mxu0 %v4420
        %5948 = vmatpush1.bf16.msra.mxu0 %v4419
        %5949 = vmatprep.mubr.bf16.mxu0 %v1332
        %5950 = vmatmul.mubr.bf16.gmra.mrb[0].mxu0 %v1331
        %v5951 = vpop.f32.mrb[0].mxu0
        %v5952 = vadd.f32 %v5911, %v5951
        %v5953 = vpop.f32.mrb[0].mxu0
        %v5954 = vadd.f32 %v5913, %v5953
        %v5955 = vpop.f32.mrb[0].mxu0
        %v5956 = vpop.f32.mrb[0].mxu0
        %5957 = vdwg.mxu0
        %5958 = vmatprep.subr.bf16.mxu0 %v4428
        %5959 = vmatpush1.bf16.msra.mxu0 %v4427
        %5960 = vmatprep.subr.bf16.mxu0 %v4436
        %5961 = vmatpush1.bf16.msra.mxu0 %v4435
        %5962 = vmatprep.subr.bf16.mxu0 %v4444
        %5963 = vmatpush1.bf16.msra.mxu0 %v4443
        %5964 = vmatprep.subr.bf16.mxu0 %v4452
        %5965 = vmatpush1.bf16.msra.mxu0 %v4451
        %5966 = vmatprep.subr.bf16.mxu0 %v4460
        %5967 = vmatpush1.bf16.msra.mxu0 %v4459
        %5968 = vmatprep.subr.bf16.mxu0 %v4468
        %5969 = vmatpush1.bf16.msra.mxu0 %v4467
        %5970 = vmatprep.subr.bf16.mxu0 %v4476
        %5971 = vmatpush1.bf16.msra.mxu0 %v4475
        %5972 = vmatprep.subr.bf16.mxu0 %v4484
        %5973 = vmatpush1.bf16.msra.mxu0 %v4483
        %5974 = vmatprep.subr.bf16.mxu0 %v4492
        %5975 = vmatpush1.bf16.msra.mxu0 %v4491
        %5976 = vmatprep.subr.bf16.mxu0 %v4500
        %5977 = vmatpush1.bf16.msra.mxu0 %v4499
        %5978 = vmatprep.subr.bf16.mxu0 %v4508
        %5979 = vmatpush1.bf16.msra.mxu0 %v4507
        %5980 = vmatprep.subr.bf16.mxu0 %v4516
        %5981 = vmatpush1.bf16.msra.mxu0 %v4515
        %5982 = vmatprep.subr.bf16.mxu0 %v4524
        %5983 = vmatpush1.bf16.msra.mxu0 %v4523
        %5984 = vmatprep.subr.bf16.mxu0 %v4532
        %5985 = vmatpush1.bf16.msra.mxu0 %v4531
        %5986 = vmatprep.subr.bf16.mxu0 %v4540
        %5987 = vmatpush1.bf16.msra.mxu0 %v4539
        %5988 = vmatprep.subr.bf16.mxu0 %v4548
        %5989 = vmatpush1.bf16.msra.mxu0 %v4547
        %5990 = vmatprep.mubr.bf16.mxu0 %v1334
        %5991 = vmatmul.mubr.bf16.gmra.mrb[0].mxu0 %v1333
        %v5992 = vpop.f32.mrb[0].mxu0
        %v5993 = vadd.f32 %v5952, %v5992
        %v5994 = vpop.f32.mrb[0].mxu0
        %v5995 = vadd.f32 %v5954, %v5994
        %v5996 = vpop.f32.mrb[0].mxu0
        %v5997 = vpop.f32.mrb[0].mxu0
        %5998 = vdwg.mxu0
        %5999 = vmatprep.subr.bf16.mxu0 %v4556
        %6000 = vmatpush1.bf16.msra.mxu0 %v4555
        %6001 = vmatprep.subr.bf16.mxu0 %v4564
        %6002 = vmatpush1.bf16.msra.mxu0 %v4563
        %6003 = vmatprep.subr.bf16.mxu0 %v4572
        %6004 = vmatpush1.bf16.msra.mxu0 %v4571
        %6005 = vmatprep.subr.bf16.mxu0 %v4580
        %6006 = vmatpush1.bf16.msra.mxu0 %v4579
        %6007 = vmatprep.subr.bf16.mxu0 %v4588
        %6008 = vmatpush1.bf16.msra.mxu0 %v4587
        %6009 = vmatprep.subr.bf16.mxu0 %v4596
        %6010 = vmatpush1.bf16.msra.mxu0 %v4595
        %6011 = vmatprep.subr.bf16.mxu0 %v4604
        %6012 = vmatpush1.bf16.msra.mxu0 %v4603
        %6013 = vmatprep.subr.bf16.mxu0 %v4612
        %6014 = vmatpush1.bf16.msra.mxu0 %v4611
        %6015 = vmatprep.subr.bf16.mxu0 %v4620
        %6016 = vmatpush1.bf16.msra.mxu0 %v4619
        %6017 = vmatprep.subr.bf16.mxu0 %v4628
        %6018 = vmatpush1.bf16.msra.mxu0 %v4627
        %6019 = vmatprep.subr.bf16.mxu0 %v4636
        %6020 = vmatpush1.bf16.msra.mxu0 %v4635
        %6021 = vmatprep.subr.bf16.mxu0 %v4644
        %6022 = vmatpush1.bf16.msra.mxu0 %v4643
        %6023 = vmatprep.subr.bf16.mxu0 %v4652
        %6024 = vmatpush1.bf16.msra.mxu0 %v4651
        %6025 = vmatprep.subr.bf16.mxu0 %v4660
        %6026 = vmatpush1.bf16.msra.mxu0 %v4659
        %6027 = vmatprep.subr.bf16.mxu0 %v4668
        %6028 = vmatpush1.bf16.msra.mxu0 %v4667
        %6029 = vmatprep.subr.bf16.mxu0 %v4676
        %6030 = vmatpush1.bf16.msra.mxu0 %v4675
        %6031 = vmatprep.mubr.bf16.mxu0 %v1336
        %6032 = vmatmul.mubr.bf16.gmra.mrb[0].mxu0 %v1335
        %v6033 = vpop.f32.mrb[0].mxu0
        %v6034 = vadd.f32 %v5993, %v6033
        %v6035 = vpop.f32.mrb[0].mxu0
        %v6036 = vadd.f32 %v5995, %v6035
        %v6037 = vpop.f32.mrb[0].mxu0
        %v6038 = vpop.f32.mrb[0].mxu0
        %6039 = vdwg.mxu0
        %6040 = vmatprep.subr.bf16.mxu0 %v4684
        %6041 = vmatpush1.bf16.msra.mxu0 %v4683
        %6042 = vmatprep.subr.bf16.mxu0 %v4692
        %6043 = vmatpush1.bf16.msra.mxu0 %v4691
        %6044 = vmatprep.subr.bf16.mxu0 %v4700
        %6045 = vmatpush1.bf16.msra.mxu0 %v4699
        %6046 = vmatprep.subr.bf16.mxu0 %v4708
        %6047 = vmatpush1.bf16.msra.mxu0 %v4707
        %6048 = vmatprep.subr.bf16.mxu0 %v4716
        %6049 = vmatpush1.bf16.msra.mxu0 %v4715
        %6050 = vmatprep.subr.bf16.mxu0 %v4724
        %6051 = vmatpush1.bf16.msra.mxu0 %v4723
        %6052 = vmatprep.subr.bf16.mxu0 %v4732
        %6053 = vmatpush1.bf16.msra.mxu0 %v4731
        %6054 = vmatprep.subr.bf16.mxu0 %v4740
        %6055 = vmatpush1.bf16.msra.mxu0 %v4739
        %6056 = vmatprep.subr.bf16.mxu0 %v4748
        %6057 = vmatpush1.bf16.msra.mxu0 %v4747
        %6058 = vmatprep.subr.bf16.mxu0 %v4756
        %6059 = vmatpush1.bf16.msra.mxu0 %v4755
        %6060 = vmatprep.subr.bf16.mxu0 %v4764
        %6061 = vmatpush1.bf16.msra.mxu0 %v4763
        %6062 = vmatprep.subr.bf16.mxu0 %v4772
        %6063 = vmatpush1.bf16.msra.mxu0 %v4771
        %6064 = vmatprep.subr.bf16.mxu0 %v4780
        %6065 = vmatpush1.bf16.msra.mxu0 %v4779
        %6066 = vmatprep.subr.bf16.mxu0 %v4788
        %6067 = vmatpush1.bf16.msra.mxu0 %v4787
        %6068 = vmatprep.subr.bf16.mxu0 %v4796
        %6069 = vmatpush1.bf16.msra.mxu0 %v4795
        %6070 = vmatprep.subr.bf16.mxu0 %v4804
        %6071 = vmatpush1.bf16.msra.mxu0 %v4803
        %6072 = vmatprep.mubr.bf16.mxu0 %v1338
        %6073 = vmatmul.mubr.bf16.gmra.mrb[0].mxu0 %v1337
        %v6074 = vpop.f32.mrb[0].mxu0
        %v6075 = vadd.f32 %v6034, %v6074
        %v6076 = vpop.f32.mrb[0].mxu0
        %v6077 = vadd.f32 %v6036, %v6076
        %v6078 = vpop.f32.mrb[0].mxu0
        %v6079 = vpop.f32.mrb[0].mxu0
        %6080 = vdwg.mxu0
        %6081 = vmatprep.subr.bf16.mxu0 %v4812
        %6082 = vmatpush1.bf16.msra.mxu0 %v4811
        %6083 = vmatprep.subr.bf16.mxu0 %v4820
        %6084 = vmatpush1.bf16.msra.mxu0 %v4819
        %6085 = vmatprep.subr.bf16.mxu0 %v4828
        %6086 = vmatpush1.bf16.msra.mxu0 %v4827
        %6087 = vmatprep.subr.bf16.mxu0 %v4836
        %6088 = vmatpush1.bf16.msra.mxu0 %v4835
        %6089 = vmatprep.subr.bf16.mxu0 %v4844
        %6090 = vmatpush1.bf16.msra.mxu0 %v4843
        %6091 = vmatprep.subr.bf16.mxu0 %v4852
        %6092 = vmatpush1.bf16.msra.mxu0 %v4851
        %6093 = vmatprep.subr.bf16.mxu0 %v4860
        %6094 = vmatpush1.bf16.msra.mxu0 %v4859
        %6095 = vmatprep.subr.bf16.mxu0 %v4868
        %6096 = vmatpush1.bf16.msra.mxu0 %v4867
        %6097 = vmatprep.subr.bf16.mxu0 %v4876
        %6098 = vmatpush1.bf16.msra.mxu0 %v4875
        %6099 = vmatprep.subr.bf16.mxu0 %v4884
        %6100 = vmatpush1.bf16.msra.mxu0 %v4883
        %6101 = vmatprep.subr.bf16.mxu0 %v4892
        %6102 = vmatpush1.bf16.msra.mxu0 %v4891
        %6103 = vmatprep.subr.bf16.mxu0 %v4900
        %6104 = vmatpush1.bf16.msra.mxu0 %v4899
        %6105 = vmatprep.subr.bf16.mxu0 %v4908
        %6106 = vmatpush1.bf16.msra.mxu0 %v4907
        %6107 = vmatprep.subr.bf16.mxu0 %v4916
        %6108 = vmatpush1.bf16.msra.mxu0 %v4915
        %6109 = vmatprep.subr.bf16.mxu0 %v4924
        %6110 = vmatpush1.bf16.msra.mxu0 %v4923
        %6111 = vmatprep.subr.bf16.mxu0 %v4932
        %6112 = vmatpush1.bf16.msra.mxu0 %v4931
        %6113 = vmatprep.mubr.bf16.mxu0 %v1340
        %6114 = vmatmul.mubr.bf16.gmra.mrb[0].mxu0 %v1339
        %v6115 = vpop.f32.mrb[0].mxu0
        %v6116 = vadd.f32 %v6075, %v6115
        %v6117 = vpop.f32.mrb[0].mxu0
        %v6118 = vadd.f32 %v6077, %v6117
        %v6119 = vpop.f32.mrb[0].mxu0
        %v6120 = vpop.f32.mrb[0].mxu0
        %6121 = vdwg.mxu0
        %6122 = vmatprep.subr.bf16.mxu0 %v4046
        %6123 = vmatpush1.bf16.msra.mxu0 %v4045
        %6124 = vmatprep.subr.bf16.mxu0 %v4054
        %6125 = vmatpush1.bf16.msra.mxu0 %v4053
        %6126 = vmatprep.subr.bf16.mxu0 %v4062
        %6127 = vmatpush1.bf16.msra.mxu0 %v4061
        %6128 = vmatprep.subr.bf16.mxu0 %v4070
        %6129 = vmatpush1.bf16.msra.mxu0 %v4069
        %6130 = vmatprep.subr.bf16.mxu0 %v4078
        %6131 = vmatpush1.bf16.msra.mxu0 %v4077
        %6132 = vmatprep.subr.bf16.mxu0 %v4086
        %6133 = vmatpush1.bf16.msra.mxu0 %v4085
        %6134 = vmatprep.subr.bf16.mxu0 %v4094
        %6135 = vmatpush1.bf16.msra.mxu0 %v4093
        %6136 = vmatprep.subr.bf16.mxu0 %v4102
        %6137 = vmatpush1.bf16.msra.mxu0 %v4101
        %6138 = vmatprep.subr.bf16.mxu0 %v4110
        %6139 = vmatpush1.bf16.msra.mxu0 %v4109
        %6140 = vmatprep.subr.bf16.mxu0 %v4118
        %6141 = vmatpush1.bf16.msra.mxu0 %v4117
        %6142 = vmatprep.subr.bf16.mxu0 %v4126
        %6143 = vmatpush1.bf16.msra.mxu0 %v4125
        %6144 = vmatprep.subr.bf16.mxu0 %v4134
        %6145 = vmatpush1.bf16.msra.mxu0 %v4133
        %6146 = vmatprep.subr.bf16.mxu0 %v4142
        %6147 = vmatpush1.bf16.msra.mxu0 %v4141
        %6148 = vmatprep.subr.bf16.mxu0 %v4150
        %6149 = vmatpush1.bf16.msra.mxu0 %v4149
        %6150 = vmatprep.subr.bf16.mxu0 %v4158
        %6151 = vmatpush1.bf16.msra.mxu0 %v4157
        %6152 = vmatprep.subr.bf16.mxu0 %v4166
        %6153 = vmatpush1.bf16.msra.mxu0 %v4165
        %6154 = vmatprep.mubr.bf16.mxu0 %v1328
        %6155 = vmatmul.mubr.bf16.gmra.mrb[0].mxu0 %v1327
        %v6156 = vpop.f32.mrb[0].mxu0
        %v6157 = vadd.f32 0.0, %v6156
        %v6158 = vpop.f32.mrb[0].mxu0
        %v6159 = vadd.f32 0.0, %v6158
        %v6160 = vpop.f32.mrb[0].mxu0
        %v6161 = vpop.f32.mrb[0].mxu0
        %6162 = vdwg.mxu0
        %6163 = vmatprep.subr.bf16.mxu0 %v4174
        %6164 = vmatpush1.bf16.msra.mxu0 %v4173
        %6165 = vmatprep.subr.bf16.mxu0 %v4182
        %6166 = vmatpush1.bf16.msra.mxu0 %v4181
        %6167 = vmatprep.subr.bf16.mxu0 %v4190
        %6168 = vmatpush1.bf16.msra.mxu0 %v4189
        %6169 = vmatprep.subr.bf16.mxu0 %v4198
        %6170 = vmatpush1.bf16.msra.mxu0 %v4197
        %6171 = vmatprep.subr.bf16.mxu0 %v4206
        %6172 = vmatpush1.bf16.msra.mxu0 %v4205
        %6173 = vmatprep.subr.bf16.mxu0 %v4214
        %6174 = vmatpush1.bf16.msra.mxu0 %v4213
        %6175 = vmatprep.subr.bf16.mxu0 %v4222
        %6176 = vmatpush1.bf16.msra.mxu0 %v4221
        %6177 = vmatprep.subr.bf16.mxu0 %v4230
        %6178 = vmatpush1.bf16.msra.mxu0 %v4229
        %6179 = vmatprep.subr.bf16.mxu0 %v4238
        %6180 = vmatpush1.bf16.msra.mxu0 %v4237
        %6181 = vmatprep.subr.bf16.mxu0 %v4246
        %6182 = vmatpush1.bf16.msra.mxu0 %v4245
        %6183 = vmatprep.subr.bf16.mxu0 %v4254
        %6184 = vmatpush1.bf16.msra.mxu0 %v4253
        %6185 = vmatprep.subr.bf16.mxu0 %v4262
        %6186 = vmatpush1.bf16.msra.mxu0 %v4261
        %6187 = vmatprep.subr.bf16.mxu0 %v4270
        %6188 = vmatpush1.bf16.msra.mxu0 %v4269
        %6189 = vmatprep.subr.bf16.mxu0 %v4278
        %6190 = vmatpush1.bf16.msra.mxu0 %v4277
        %6191 = vmatprep.subr.bf16.mxu0 %v4286
        %6192 = vmatpush1.bf16.msra.mxu0 %v4285
        %6193 = vmatprep.subr.bf16.mxu0 %v4294
        %6194 = vmatpush1.bf16.msra.mxu0 %v4293
        %6195 = vmatprep.mubr.bf16.mxu0 %v1330
        %6196 = vmatmul.mubr.bf16.gmra.mrb[0].mxu0 %v1329
        %v6197 = vpop.f32.mrb[0].mxu0
        %v6198 = vadd.f32 %v6157, %v6197
        %v6199 = vpop.f32.mrb[0].mxu0
        %v6200 = vadd.f32 %v6159, %v6199
        %v6201 = vpop.f32.mrb[0].mxu0
        %v6202 = vpop.f32.mrb[0].mxu0
        %6203 = vdwg.mxu0
        %6204 = vmatprep.subr.bf16.mxu0 %v4302
        %6205 = vmatpush1.bf16.msra.mxu0 %v4301
        %6206 = vmatprep.subr.bf16.mxu0 %v4310
        %6207 = vmatpush1.bf16.msra.mxu0 %v4309
        %6208 = vmatprep.subr.bf16.mxu0 %v4318
        %6209 = vmatpush1.bf16.msra.mxu0 %v4317
        %6210 = vmatprep.subr.bf16.mxu0 %v4326
        %6211 = vmatpush1.bf16.msra.mxu0 %v4325
        %6212 = vmatprep.subr.bf16.mxu0 %v4334
        %6213 = vmatpush1.bf16.msra.mxu0 %v4333
        %6214 = vmatprep.subr.bf16.mxu0 %v4342
        %6215 = vmatpush1.bf16.msra.mxu0 %v4341
        %6216 = vmatprep.subr.bf16.mxu0 %v4350
        %6217 = vmatpush1.bf16.msra.mxu0 %v4349
        %6218 = vmatprep.subr.bf16.mxu0 %v4358
        %6219 = vmatpush1.bf16.msra.mxu0 %v4357
        %6220 = vmatprep.subr.bf16.mxu0 %v4366
        %6221 = vmatpush1.bf16.msra.mxu0 %v4365
        %6222 = vmatprep.subr.bf16.mxu0 %v4374
        %6223 = vmatpush1.bf16.msra.mxu0 %v4373
        %6224 = vmatprep.subr.bf16.mxu0 %v4382
        %6225 = vmatpush1.bf16.msra.mxu0 %v4381
        %6226 = vmatprep.subr.bf16.mxu0 %v4390
        %6227 = vmatpush1.bf16.msra.mxu0 %v4389
        %6228 = vmatprep.subr.bf16.mxu0 %v4398
        %6229 = vmatpush1.bf16.msra.mxu0 %v4397
        %6230 = vmatprep.subr.bf16.mxu0 %v4406
        %6231 = vmatpush1.bf16.msra.mxu0 %v4405
        %6232 = vmatprep.subr.bf16.mxu0 %v4414
        %6233 = vmatpush1.bf16.msra.mxu0 %v4413
        %6234 = vmatprep.subr.bf16.mxu0 %v4422
        %6235 = vmatpush1.bf16.msra.mxu0 %v4421
        %6236 = vmatprep.mubr.bf16.mxu0 %v1332
        %6237 = vmatmul.mubr.bf16.gmra.mrb[0].mxu0 %v1331
        %v6238 = vpop.f32.mrb[0].mxu0
        %v6239 = vadd.f32 %v6198, %v6238
        %v6240 = vpop.f32.mrb[0].mxu0
        %v6241 = vadd.f32 %v6200, %v6240
        %v6242 = vpop.f32.mrb[0].mxu0
        %v6243 = vpop.f32.mrb[0].mxu0
        %6244 = vdwg.mxu0
        %6245 = vmatprep.subr.bf16.mxu0 %v4430
        %6246 = vmatpush1.bf16.msra.mxu0 %v4429
        %6247 = vmatprep.subr.bf16.mxu0 %v4438
        %6248 = vmatpush1.bf16.msra.mxu0 %v4437
        %6249 = vmatprep.subr.bf16.mxu0 %v4446
        %6250 = vmatpush1.bf16.msra.mxu0 %v4445
        %6251 = vmatprep.subr.bf16.mxu0 %v4454
        %6252 = vmatpush1.bf16.msra.mxu0 %v4453
        %6253 = vmatprep.subr.bf16.mxu0 %v4462
        %6254 = vmatpush1.bf16.msra.mxu0 %v4461
        %6255 = vmatprep.subr.bf16.mxu0 %v4470
        %6256 = vmatpush1.bf16.msra.mxu0 %v4469
        %6257 = vmatprep.subr.bf16.mxu0 %v4478
        %6258 = vmatpush1.bf16.msra.mxu0 %v4477
        %6259 = vmatprep.subr.bf16.mxu0 %v4486
        %6260 = vmatpush1.bf16.msra.mxu0 %v4485
        %6261 = vmatprep.subr.bf16.mxu0 %v4494
        %6262 = vmatpush1.bf16.msra.mxu0 %v4493
        %6263 = vmatprep.subr.bf16.mxu0 %v4502
        %6264 = vmatpush1.bf16.msra.mxu0 %v4501
        %6265 = vmatprep.subr.bf16.mxu0 %v4510
        %6266 = vmatpush1.bf16.msra.mxu0 %v4509
        %6267 = vmatprep.subr.bf16.mxu0 %v4518
        %6268 = vmatpush1.bf16.msra.mxu0 %v4517
        %6269 = vmatprep.subr.bf16.mxu0 %v4526
        %6270 = vmatpush1.bf16.msra.mxu0 %v4525
        %6271 = vmatprep.subr.bf16.mxu0 %v4534
        %6272 = vmatpush1.bf16.msra.mxu0 %v4533
        %6273 = vmatprep.subr.bf16.mxu0 %v4542
        %6274 = vmatpush1.bf16.msra.mxu0 %v4541
        %6275 = vmatprep.subr.bf16.mxu0 %v4550
        %6276 = vmatpush1.bf16.msra.mxu0 %v4549
        %6277 = vmatprep.mubr.bf16.mxu0 %v1334
        %6278 = vmatmul.mubr.bf16.gmra.mrb[0].mxu0 %v1333
        %v6279 = vpop.f32.mrb[0].mxu0
        %v6280 = vadd.f32 %v6239, %v6279
        %v6281 = vpop.f32.mrb[0].mxu0
        %v6282 = vadd.f32 %v6241, %v6281
        %v6283 = vpop.f32.mrb[0].mxu0
        %v6284 = vpop.f32.mrb[0].mxu0
        %6285 = vdwg.mxu0
        %6286 = vmatprep.subr.bf16.mxu0 %v4558
        %6287 = vmatpush1.bf16.msra.mxu0 %v4557
        %6288 = vmatprep.subr.bf16.mxu0 %v4566
        %6289 = vmatpush1.bf16.msra.mxu0 %v4565
        %6290 = vmatprep.subr.bf16.mxu0 %v4574
        %6291 = vmatpush1.bf16.msra.mxu0 %v4573
        %6292 = vmatprep.subr.bf16.mxu0 %v4582
        %6293 = vmatpush1.bf16.msra.mxu0 %v4581
        %6294 = vmatprep.subr.bf16.mxu0 %v4590
        %6295 = vmatpush1.bf16.msra.mxu0 %v4589
        %6296 = vmatprep.subr.bf16.mxu0 %v4598
        %6297 = vmatpush1.bf16.msra.mxu0 %v4597
        %6298 = vmatprep.subr.bf16.mxu0 %v4606
        %6299 = vmatpush1.bf16.msra.mxu0 %v4605
        %6300 = vmatprep.subr.bf16.mxu0 %v4614
        %6301 = vmatpush1.bf16.msra.mxu0 %v4613
        %6302 = vmatprep.subr.bf16.mxu0 %v4622
        %6303 = vmatpush1.bf16.msra.mxu0 %v4621
        %6304 = vmatprep.subr.bf16.mxu0 %v4630
        %6305 = vmatpush1.bf16.msra.mxu0 %v4629
        %6306 = vmatprep.subr.bf16.mxu0 %v4638
        %6307 = vmatpush1.bf16.msra.mxu0 %v4637
        %6308 = vmatprep.subr.bf16.mxu0 %v4646
        %6309 = vmatpush1.bf16.msra.mxu0 %v4645
        %6310 = vmatprep.subr.bf16.mxu0 %v4654
        %6311 = vmatpush1.bf16.msra.mxu0 %v4653
        %6312 = vmatprep.subr.bf16.mxu0 %v4662
        %6313 = vmatpush1.bf16.msra.mxu0 %v4661
        %6314 = vmatprep.subr.bf16.mxu0 %v4670
        %6315 = vmatpush1.bf16.msra.mxu0 %v4669
        %6316 = vmatprep.subr.bf16.mxu0 %v4678
        %6317 = vmatpush1.bf16.msra.mxu0 %v4677
        %6318 = vmatprep.mubr.bf16.mxu0 %v1336
        %6319 = vmatmul.mubr.bf16.gmra.mrb[0].mxu0 %v1335
        %v6320 = vpop.f32.mrb[0].mxu0
        %v6321 = vadd.f32 %v6280, %v6320
        %v6322 = vpop.f32.mrb[0].mxu0
        %v6323 = vadd.f32 %v6282, %v6322
        %v6324 = vpop.f32.mrb[0].mxu0
        %v6325 = vpop.f32.mrb[0].mxu0
        %6326 = vdwg.mxu0
        %6327 = vmatprep.subr.bf16.mxu0 %v4686
        %6328 = vmatpush1.bf16.msra.mxu0 %v4685
        %6329 = vmatprep.subr.bf16.mxu0 %v4694
        %6330 = vmatpush1.bf16.msra.mxu0 %v4693
        %6331 = vmatprep.subr.bf16.mxu0 %v4702
        %6332 = vmatpush1.bf16.msra.mxu0 %v4701
        %6333 = vmatprep.subr.bf16.mxu0 %v4710
        %6334 = vmatpush1.bf16.msra.mxu0 %v4709
        %6335 = vmatprep.subr.bf16.mxu0 %v4718
        %6336 = vmatpush1.bf16.msra.mxu0 %v4717
        %6337 = vmatprep.subr.bf16.mxu0 %v4726
        %6338 = vmatpush1.bf16.msra.mxu0 %v4725
        %6339 = vmatprep.subr.bf16.mxu0 %v4734
        %6340 = vmatpush1.bf16.msra.mxu0 %v4733
        %6341 = vmatprep.subr.bf16.mxu0 %v4742
        %6342 = vmatpush1.bf16.msra.mxu0 %v4741
        %6343 = vmatprep.subr.bf16.mxu0 %v4750
        %6344 = vmatpush1.bf16.msra.mxu0 %v4749
        %6345 = vmatprep.subr.bf16.mxu0 %v4758
        %6346 = vmatpush1.bf16.msra.mxu0 %v4757
        %6347 = vmatprep.subr.bf16.mxu0 %v4766
        %6348 = vmatpush1.bf16.msra.mxu0 %v4765
        %6349 = vmatprep.subr.bf16.mxu0 %v4774
        %6350 = vmatpush1.bf16.msra.mxu0 %v4773
        %6351 = vmatprep.subr.bf16.mxu0 %v4782
        %6352 = vmatpush1.bf16.msra.mxu0 %v4781
        %6353 = vmatprep.subr.bf16.mxu0 %v4790
        %6354 = vmatpush1.bf16.msra.mxu0 %v4789
        %6355 = vmatprep.subr.bf16.mxu0 %v4798
        %6356 = vmatpush1.bf16.msra.mxu0 %v4797
        %6357 = vmatprep.subr.bf16.mxu0 %v4806
        %6358 = vmatpush1.bf16.msra.mxu0 %v4805
        %6359 = vmatprep.mubr.bf16.mxu0 %v1338
        %6360 = vmatmul.mubr.bf16.gmra.mrb[0].mxu0 %v1337
        %v6361 = vpop.f32.mrb[0].mxu0
        %v6362 = vadd.f32 %v6321, %v6361
        %v6363 = vpop.f32.mrb[0].mxu0
        %v6364 = vadd.f32 %v6323, %v6363
        %v6365 = vpop.f32.mrb[0].mxu0
        %v6366 = vpop.f32.mrb[0].mxu0
        %6367 = vdwg.mxu0
        %6368 = vmatprep.subr.bf16.mxu0 %v4814
        %6369 = vmatpush1.bf16.msra.mxu0 %v4813
        %6370 = vmatprep.subr.bf16.mxu0 %v4822
        %6371 = vmatpush1.bf16.msra.mxu0 %v4821
        %6372 = vmatprep.subr.bf16.mxu0 %v4830
        %6373 = vmatpush1.bf16.msra.mxu0 %v4829
        %6374 = vmatprep.subr.bf16.mxu0 %v4838
        %6375 = vmatpush1.bf16.msra.mxu0 %v4837
        %6376 = vmatprep.subr.bf16.mxu0 %v4846
        %6377 = vmatpush1.bf16.msra.mxu0 %v4845
        %6378 = vmatprep.subr.bf16.mxu0 %v4854
        %6379 = vmatpush1.bf16.msra.mxu0 %v4853
        %6380 = vmatprep.subr.bf16.mxu0 %v4862
        %6381 = vmatpush1.bf16.msra.mxu0 %v4861
        %6382 = vmatprep.subr.bf16.mxu0 %v4870
        %6383 = vmatpush1.bf16.msra.mxu0 %v4869
        %6384 = vmatprep.subr.bf16.mxu0 %v4878
        %6385 = vmatpush1.bf16.msra.mxu0 %v4877
        %6386 = vmatprep.subr.bf16.mxu0 %v4886
        %6387 = vmatpush1.bf16.msra.mxu0 %v4885
        %6388 = vmatprep.subr.bf16.mxu0 %v4894
        %6389 = vmatpush1.bf16.msra.mxu0 %v4893
        %6390 = vmatprep.subr.bf16.mxu0 %v4902
        %6391 = vmatpush1.bf16.msra.mxu0 %v4901
        %6392 = vmatprep.subr.bf16.mxu0 %v4910
        %6393 = vmatpush1.bf16.msra.mxu0 %v4909
        %6394 = vmatprep.subr.bf16.mxu0 %v4918
        %6395 = vmatpush1.bf16.msra.mxu0 %v4917
        %6396 = vmatprep.subr.bf16.mxu0 %v4926
        %6397 = vmatpush1.bf16.msra.mxu0 %v4925
        %6398 = vmatprep.subr.bf16.mxu0 %v4934
        %6399 = vmatpush1.bf16.msra.mxu0 %v4933
        %6400 = vmatprep.mubr.bf16.mxu0 %v1340
        %6401 = vmatmul.mubr.bf16.gmra.mrb[0].mxu0 %v1339
        %v6402 = vpop.f32.mrb[0].mxu0
        %v6403 = vadd.f32 %v6362, %v6402
        %v6404 = vpop.f32.mrb[0].mxu0
        %v6405 = vadd.f32 %v6364, %v6404
        %v6406 = vpop.f32.mrb[0].mxu0
        %v6407 = vpop.f32.mrb[0].mxu0
        %6408 = vdwg.mxu0
        %6409 = vmatprep.subr.bf16.mxu0 %v4048
        %6410 = vmatpush1.bf16.msra.mxu0 %v4047
        %6411 = vmatprep.subr.bf16.mxu0 %v4056
        %6412 = vmatpush1.bf16.msra.mxu0 %v4055
        %6413 = vmatprep.subr.bf16.mxu0 %v4064
        %6414 = vmatpush1.bf16.msra.mxu0 %v4063
        %6415 = vmatprep.subr.bf16.mxu0 %v4072
        %6416 = vmatpush1.bf16.msra.mxu0 %v4071
        %6417 = vmatprep.subr.bf16.mxu0 %v4080
        %6418 = vmatpush1.bf16.msra.mxu0 %v4079
        %6419 = vmatprep.subr.bf16.mxu0 %v4088
        %6420 = vmatpush1.bf16.msra.mxu0 %v4087
        %6421 = vmatprep.subr.bf16.mxu0 %v4096
        %6422 = vmatpush1.bf16.msra.mxu0 %v4095
        %6423 = vmatprep.subr.bf16.mxu0 %v4104
        %6424 = vmatpush1.bf16.msra.mxu0 %v4103
        %6425 = vmatprep.subr.bf16.mxu0 %v4112
        %6426 = vmatpush1.bf16.msra.mxu0 %v4111
        %6427 = vmatprep.subr.bf16.mxu0 %v4120
        %6428 = vmatpush1.bf16.msra.mxu0 %v4119
        %6429 = vmatprep.subr.bf16.mxu0 %v4128
        %6430 = vmatpush1.bf16.msra.mxu0 %v4127
        %6431 = vmatprep.subr.bf16.mxu0 %v4136
        %6432 = vmatpush1.bf16.msra.mxu0 %v4135
        %6433 = vmatprep.subr.bf16.mxu0 %v4144
        %6434 = vmatpush1.bf16.msra.mxu0 %v4143
        %6435 = vmatprep.subr.bf16.mxu0 %v4152
        %6436 = vmatpush1.bf16.msra.mxu0 %v4151
        %6437 = vmatprep.subr.bf16.mxu0 %v4160
        %6438 = vmatpush1.bf16.msra.mxu0 %v4159
        %6439 = vmatprep.subr.bf16.mxu0 %v4168
        %6440 = vmatpush1.bf16.msra.mxu0 %v4167
        %6441 = vmatprep.mubr.bf16.mxu0 %v1328
        %6442 = vmatmul.mubr.bf16.gmra.mrb[0].mxu0 %v1327
        %v6443 = vpop.f32.mrb[0].mxu0
        %v6444 = vadd.f32 0.0, %v6443
        %v6445 = vpop.f32.mrb[0].mxu0
        %v6446 = vadd.f32 0.0, %v6445
        %v6447 = vpop.f32.mrb[0].mxu0
        %v6448 = vpop.f32.mrb[0].mxu0
        %6449 = vdwg.mxu0
        %6450 = vmatprep.subr.bf16.mxu0 %v4176
        %6451 = vmatpush1.bf16.msra.mxu0 %v4175
        %6452 = vmatprep.subr.bf16.mxu0 %v4184
        %6453 = vmatpush1.bf16.msra.mxu0 %v4183
        %6454 = vmatprep.subr.bf16.mxu0 %v4192
        %6455 = vmatpush1.bf16.msra.mxu0 %v4191
        %6456 = vmatprep.subr.bf16.mxu0 %v4200
        %6457 = vmatpush1.bf16.msra.mxu0 %v4199
        %6458 = vmatprep.subr.bf16.mxu0 %v4208
        %6459 = vmatpush1.bf16.msra.mxu0 %v4207
        %6460 = vmatprep.subr.bf16.mxu0 %v4216
        %6461 = vmatpush1.bf16.msra.mxu0 %v4215
        %6462 = vmatprep.subr.bf16.mxu0 %v4224
        %6463 = vmatpush1.bf16.msra.mxu0 %v4223
        %6464 = vmatprep.subr.bf16.mxu0 %v4232
        %6465 = vmatpush1.bf16.msra.mxu0 %v4231
        %6466 = vmatprep.subr.bf16.mxu0 %v4240
        %6467 = vmatpush1.bf16.msra.mxu0 %v4239
        %6468 = vmatprep.subr.bf16.mxu0 %v4248
        %6469 = vmatpush1.bf16.msra.mxu0 %v4247
        %6470 = vmatprep.subr.bf16.mxu0 %v4256
        %6471 = vmatpush1.bf16.msra.mxu0 %v4255
        %6472 = vmatprep.subr.bf16.mxu0 %v4264
        %6473 = vmatpush1.bf16.msra.mxu0 %v4263
        %6474 = vmatprep.subr.bf16.mxu0 %v4272
        %6475 = vmatpush1.bf16.msra.mxu0 %v4271
        %6476 = vmatprep.subr.bf16.mxu0 %v4280
        %6477 = vmatpush1.bf16.msra.mxu0 %v4279
        %6478 = vmatprep.subr.bf16.mxu0 %v4288
        %6479 = vmatpush1.bf16.msra.mxu0 %v4287
        %6480 = vmatprep.subr.bf16.mxu0 %v4296
        %6481 = vmatpush1.bf16.msra.mxu0 %v4295
        %6482 = vmatprep.mubr.bf16.mxu0 %v1330
        %6483 = vmatmul.mubr.bf16.gmra.mrb[0].mxu0 %v1329
        %v6484 = vpop.f32.mrb[0].mxu0
        %v6485 = vadd.f32 %v6444, %v6484
        %v6486 = vpop.f32.mrb[0].mxu0
        %v6487 = vadd.f32 %v6446, %v6486
        %v6488 = vpop.f32.mrb[0].mxu0
        %v6489 = vpop.f32.mrb[0].mxu0
        %6490 = vdwg.mxu0
        %6491 = vmatprep.subr.bf16.mxu0 %v4304
        %6492 = vmatpush1.bf16.msra.mxu0 %v4303
        %6493 = vmatprep.subr.bf16.mxu0 %v4312
        %6494 = vmatpush1.bf16.msra.mxu0 %v4311
        %6495 = vmatprep.subr.bf16.mxu0 %v4320
        %6496 = vmatpush1.bf16.msra.mxu0 %v4319
        %6497 = vmatprep.subr.bf16.mxu0 %v4328
        %6498 = vmatpush1.bf16.msra.mxu0 %v4327
        %6499 = vmatprep.subr.bf16.mxu0 %v4336
        %6500 = vmatpush1.bf16.msra.mxu0 %v4335
        %6501 = vmatprep.subr.bf16.mxu0 %v4344
        %6502 = vmatpush1.bf16.msra.mxu0 %v4343
        %6503 = vmatprep.subr.bf16.mxu0 %v4352
        %6504 = vmatpush1.bf16.msra.mxu0 %v4351
        %6505 = vmatprep.subr.bf16.mxu0 %v4360
        %6506 = vmatpush1.bf16.msra.mxu0 %v4359
        %6507 = vmatprep.subr.bf16.mxu0 %v4368
        %6508 = vmatpush1.bf16.msra.mxu0 %v4367
        %6509 = vmatprep.subr.bf16.mxu0 %v4376
        %6510 = vmatpush1.bf16.msra.mxu0 %v4375
        %6511 = vmatprep.subr.bf16.mxu0 %v4384
        %6512 = vmatpush1.bf16.msra.mxu0 %v4383
        %6513 = vmatprep.subr.bf16.mxu0 %v4392
        %6514 = vmatpush1.bf16.msra.mxu0 %v4391
        %6515 = vmatprep.subr.bf16.mxu0 %v4400
        %6516 = vmatpush1.bf16.msra.mxu0 %v4399
        %6517 = vmatprep.subr.bf16.mxu0 %v4408
        %6518 = vmatpush1.bf16.msra.mxu0 %v4407
        %6519 = vmatprep.subr.bf16.mxu0 %v4416
        %6520 = vmatpush1.bf16.msra.mxu0 %v4415
        %6521 = vmatprep.subr.bf16.mxu0 %v4424
        %6522 = vmatpush1.bf16.msra.mxu0 %v4423
        %6523 = vmatprep.mubr.bf16.mxu0 %v1332
        %6524 = vmatmul.mubr.bf16.gmra.mrb[0].mxu0 %v1331
        %v6525 = vpop.f32.mrb[0].mxu0
        %v6526 = vadd.f32 %v6485, %v6525
        %v6527 = vpop.f32.mrb[0].mxu0
        %v6528 = vadd.f32 %v6487, %v6527
        %v6529 = vpop.f32.mrb[0].mxu0
        %v6530 = vpop.f32.mrb[0].mxu0
        %6531 = vdwg.mxu0
        %6532 = vmatprep.subr.bf16.mxu0 %v4432
        %6533 = vmatpush1.bf16.msra.mxu0 %v4431
        %6534 = vmatprep.subr.bf16.mxu0 %v4440
        %6535 = vmatpush1.bf16.msra.mxu0 %v4439
        %6536 = vmatprep.subr.bf16.mxu0 %v4448
        %6537 = vmatpush1.bf16.msra.mxu0 %v4447
        %6538 = vmatprep.subr.bf16.mxu0 %v4456
        %6539 = vmatpush1.bf16.msra.mxu0 %v4455
        %6540 = vmatprep.subr.bf16.mxu0 %v4464
        %6541 = vmatpush1.bf16.msra.mxu0 %v4463
        %6542 = vmatprep.subr.bf16.mxu0 %v4472
        %6543 = vmatpush1.bf16.msra.mxu0 %v4471
        %6544 = vmatprep.subr.bf16.mxu0 %v4480
        %6545 = vmatpush1.bf16.msra.mxu0 %v4479
        %6546 = vmatprep.subr.bf16.mxu0 %v4488
        %6547 = vmatpush1.bf16.msra.mxu0 %v4487
        %6548 = vmatprep.subr.bf16.mxu0 %v4496
        %6549 = vmatpush1.bf16.msra.mxu0 %v4495
        %6550 = vmatprep.subr.bf16.mxu0 %v4504
        %6551 = vmatpush1.bf16.msra.mxu0 %v4503
        %6552 = vmatprep.subr.bf16.mxu0 %v4512
        %6553 = vmatpush1.bf16.msra.mxu0 %v4511
        %6554 = vmatprep.subr.bf16.mxu0 %v4520
        %6555 = vmatpush1.bf16.msra.mxu0 %v4519
        %6556 = vmatprep.subr.bf16.mxu0 %v4528
        %6557 = vmatpush1.bf16.msra.mxu0 %v4527
        %6558 = vmatprep.subr.bf16.mxu0 %v4536
        %6559 = vmatpush1.bf16.msra.mxu0 %v4535
        %6560 = vmatprep.subr.bf16.mxu0 %v4544
        %6561 = vmatpush1.bf16.msra.mxu0 %v4543
        %6562 = vmatprep.subr.bf16.mxu0 %v4552
        %6563 = vmatpush1.bf16.msra.mxu0 %v4551
        %6564 = vmatprep.mubr.bf16.mxu0 %v1334
        %6565 = vmatmul.mubr.bf16.gmra.mrb[0].mxu0 %v1333
        %v6566 = vpop.f32.mrb[0].mxu0
        %v6567 = vadd.f32 %v6526, %v6566
        %v6568 = vpop.f32.mrb[0].mxu0
        %v6569 = vadd.f32 %v6528, %v6568
        %v6570 = vpop.f32.mrb[0].mxu0
        %v6571 = vpop.f32.mrb[0].mxu0
        %6572 = vdwg.mxu0
        %6573 = vmatprep.subr.bf16.mxu0 %v4560
        %6574 = vmatpush1.bf16.msra.mxu0 %v4559
        %6575 = vmatprep.subr.bf16.mxu0 %v4568
        %6576 = vmatpush1.bf16.msra.mxu0 %v4567
        %6577 = vmatprep.subr.bf16.mxu0 %v4576
        %6578 = vmatpush1.bf16.msra.mxu0 %v4575
        %6579 = vmatprep.subr.bf16.mxu0 %v4584
        %6580 = vmatpush1.bf16.msra.mxu0 %v4583
        %6581 = vmatprep.subr.bf16.mxu0 %v4592
        %6582 = vmatpush1.bf16.msra.mxu0 %v4591
        %6583 = vmatprep.subr.bf16.mxu0 %v4600
        %6584 = vmatpush1.bf16.msra.mxu0 %v4599
        %6585 = vmatprep.subr.bf16.mxu0 %v4608
        %6586 = vmatpush1.bf16.msra.mxu0 %v4607
        %6587 = vmatprep.subr.bf16.mxu0 %v4616
        %6588 = vmatpush1.bf16.msra.mxu0 %v4615
        %6589 = vmatprep.subr.bf16.mxu0 %v4624
        %6590 = vmatpush1.bf16.msra.mxu0 %v4623
        %6591 = vmatprep.subr.bf16.mxu0 %v4632
        %6592 = vmatpush1.bf16.msra.mxu0 %v4631
        %6593 = vmatprep.subr.bf16.mxu0 %v4640
        %6594 = vmatpush1.bf16.msra.mxu0 %v4639
        %6595 = vmatprep.subr.bf16.mxu0 %v4648
        %6596 = vmatpush1.bf16.msra.mxu0 %v4647
        %6597 = vmatprep.subr.bf16.mxu0 %v4656
        %6598 = vmatpush1.bf16.msra.mxu0 %v4655
        %6599 = vmatprep.subr.bf16.mxu0 %v4664
        %6600 = vmatpush1.bf16.msra.mxu0 %v4663
        %6601 = vmatprep.subr.bf16.mxu0 %v4672
        %6602 = vmatpush1.bf16.msra.mxu0 %v4671
        %6603 = vmatprep.subr.bf16.mxu0 %v4680
        %6604 = vmatpush1.bf16.msra.mxu0 %v4679
        %6605 = vmatprep.mubr.bf16.mxu0 %v1336
        %6606 = vmatmul.mubr.bf16.gmra.mrb[0].mxu0 %v1335
        %v6607 = vpop.f32.mrb[0].mxu0
        %v6608 = vadd.f32 %v6567, %v6607
        %v6609 = vpop.f32.mrb[0].mxu0
        %v6610 = vadd.f32 %v6569, %v6609
        %v6611 = vpop.f32.mrb[0].mxu0
        %v6612 = vpop.f32.mrb[0].mxu0
        %6613 = vdwg.mxu0
        %6614 = vmatprep.subr.bf16.mxu0 %v4688
        %6615 = vmatpush1.bf16.msra.mxu0 %v4687
        %6616 = vmatprep.subr.bf16.mxu0 %v4696
        %6617 = vmatpush1.bf16.msra.mxu0 %v4695
        %6618 = vmatprep.subr.bf16.mxu0 %v4704
        %6619 = vmatpush1.bf16.msra.mxu0 %v4703
        %6620 = vmatprep.subr.bf16.mxu0 %v4712
        %6621 = vmatpush1.bf16.msra.mxu0 %v4711
        %6622 = vmatprep.subr.bf16.mxu0 %v4720
        %6623 = vmatpush1.bf16.msra.mxu0 %v4719
        %6624 = vmatprep.subr.bf16.mxu0 %v4728
        %6625 = vmatpush1.bf16.msra.mxu0 %v4727
        %6626 = vmatprep.subr.bf16.mxu0 %v4736
        %6627 = vmatpush1.bf16.msra.mxu0 %v4735
        %6628 = vmatprep.subr.bf16.mxu0 %v4744
        %6629 = vmatpush1.bf16.msra.mxu0 %v4743
        %6630 = vmatprep.subr.bf16.mxu0 %v4752
        %6631 = vmatpush1.bf16.msra.mxu0 %v4751
        %6632 = vmatprep.subr.bf16.mxu0 %v4760
        %6633 = vmatpush1.bf16.msra.mxu0 %v4759
        %6634 = vmatprep.subr.bf16.mxu0 %v4768
        %6635 = vmatpush1.bf16.msra.mxu0 %v4767
        %6636 = vmatprep.subr.bf16.mxu0 %v4776
        %6637 = vmatpush1.bf16.msra.mxu0 %v4775
        %6638 = vmatprep.subr.bf16.mxu0 %v4784
        %6639 = vmatpush1.bf16.msra.mxu0 %v4783
        %6640 = vmatprep.subr.bf16.mxu0 %v4792
        %6641 = vmatpush1.bf16.msra.mxu0 %v4791
        %6642 = vmatprep.subr.bf16.mxu0 %v4800
        %6643 = vmatpush1.bf16.msra.mxu0 %v4799
        %6644 = vmatprep.subr.bf16.mxu0 %v4808
        %6645 = vmatpush1.bf16.msra.mxu0 %v4807
        %6646 = vmatprep.mubr.bf16.mxu0 %v1338
        %6647 = vmatmul.mubr.bf16.gmra.mrb[0].mxu0 %v1337
        %v6648 = vpop.f32.mrb[0].mxu0
        %v6649 = vadd.f32 %v6608, %v6648
        %v6650 = vpop.f32.mrb[0].mxu0
        %v6651 = vadd.f32 %v6610, %v6650
        %v6652 = vpop.f32.mrb[0].mxu0
        %v6653 = vpop.f32.mrb[0].mxu0
        %6654 = vdwg.mxu0
        %6655 = vmatprep.subr.bf16.mxu0 %v4816
        %6656 = vmatpush1.bf16.msra.mxu0 %v4815
        %6657 = vmatprep.subr.bf16.mxu0 %v4824
        %6658 = vmatpush1.bf16.msra.mxu0 %v4823
        %6659 = vmatprep.subr.bf16.mxu0 %v4832
        %6660 = vmatpush1.bf16.msra.mxu0 %v4831
        %6661 = vmatprep.subr.bf16.mxu0 %v4840
        %6662 = vmatpush1.bf16.msra.mxu0 %v4839
        %6663 = vmatprep.subr.bf16.mxu0 %v4848
        %6664 = vmatpush1.bf16.msra.mxu0 %v4847
        %6665 = vmatprep.subr.bf16.mxu0 %v4856
        %6666 = vmatpush1.bf16.msra.mxu0 %v4855
        %6667 = vmatprep.subr.bf16.mxu0 %v4864
        %6668 = vmatpush1.bf16.msra.mxu0 %v4863
        %6669 = vmatprep.subr.bf16.mxu0 %v4872
        %6670 = vmatpush1.bf16.msra.mxu0 %v4871
        %6671 = vmatprep.subr.bf16.mxu0 %v4880
        %6672 = vmatpush1.bf16.msra.mxu0 %v4879
        %6673 = vmatprep.subr.bf16.mxu0 %v4888
        %6674 = vmatpush1.bf16.msra.mxu0 %v4887
        %6675 = vmatprep.subr.bf16.mxu0 %v4896
        %6676 = vmatpush1.bf16.msra.mxu0 %v4895
        %6677 = vmatprep.subr.bf16.mxu0 %v4904
        %6678 = vmatpush1.bf16.msra.mxu0 %v4903
        %6679 = vmatprep.subr.bf16.mxu0 %v4912
        %6680 = vmatpush1.bf16.msra.mxu0 %v4911
        %6681 = vmatprep.subr.bf16.mxu0 %v4920
        %6682 = vmatpush1.bf16.msra.mxu0 %v4919
        %6683 = vmatprep.subr.bf16.mxu0 %v4928
        %6684 = vmatpush1.bf16.msra.mxu0 %v4927
        %6685 = vmatprep.subr.bf16.mxu0 %v4936
        %6686 = vmatpush1.bf16.msra.mxu0 %v4935
        %6687 = vmatprep.mubr.bf16.mxu0 %v1340
        %6688 = vmatmul.mubr.bf16.gmra.mrb[0].mxu0 %v1339
        %v6689 = vpop.f32.mrb[0].mxu0
        %v6690 = vadd.f32 %v6649, %v6689
        %v6691 = vpop.f32.mrb[0].mxu0
        %v6692 = vadd.f32 %v6651, %v6691
        %v6693 = vpop.f32.mrb[0].mxu0
        %v6694 = vpop.f32.mrb[0].mxu0
        %6695 = vdwg.mxu0
        %6696 = vmatprep.subr.bf16.mxu0 %v4050
        %6697 = vmatpush1.bf16.msra.mxu0 %v4049
        %6698 = vmatprep.subr.bf16.mxu0 %v4058
        %6699 = vmatpush1.bf16.msra.mxu0 %v4057
        %6700 = vmatprep.subr.bf16.mxu0 %v4066
        %6701 = vmatpush1.bf16.msra.mxu0 %v4065
        %6702 = vmatprep.subr.bf16.mxu0 %v4074
        %6703 = vmatpush1.bf16.msra.mxu0 %v4073
        %6704 = vmatprep.subr.bf16.mxu0 %v4082
        %6705 = vmatpush1.bf16.msra.mxu0 %v4081
        %6706 = vmatprep.subr.bf16.mxu0 %v4090
        %6707 = vmatpush1.bf16.msra.mxu0 %v4089
        %6708 = vmatprep.subr.bf16.mxu0 %v4098
        %6709 = vmatpush1.bf16.msra.mxu0 %v4097
        %6710 = vmatprep.subr.bf16.mxu0 %v4106
        %6711 = vmatpush1.bf16.msra.mxu0 %v4105
        %6712 = vmatprep.subr.bf16.mxu0 %v4114
        %6713 = vmatpush1.bf16.msra.mxu0 %v4113
        %6714 = vmatprep.subr.bf16.mxu0 %v4122
        %6715 = vmatpush1.bf16.msra.mxu0 %v4121
        %6716 = vmatprep.subr.bf16.mxu0 %v4130
        %6717 = vmatpush1.bf16.msra.mxu0 %v4129
        %6718 = vmatprep.subr.bf16.mxu0 %v4138
        %6719 = vmatpush1.bf16.msra.mxu0 %v4137
        %6720 = vmatprep.subr.bf16.mxu0 %v4146
        %6721 = vmatpush1.bf16.msra.mxu0 %v4145
        %6722 = vmatprep.subr.bf16.mxu0 %v4154
        %6723 = vmatpush1.bf16.msra.mxu0 %v4153
        %6724 = vmatprep.subr.bf16.mxu0 %v4162
        %6725 = vmatpush1.bf16.msra.mxu0 %v4161
        %6726 = vmatprep.subr.bf16.mxu0 %v4170
        %6727 = vmatpush1.bf16.msra.mxu0 %v4169
        %6728 = vmatprep.mubr.bf16.mxu0 %v1328
        %6729 = vmatmul.mubr.bf16.gmra.mrb[0].mxu0 %v1327
        %v6730 = vpop.f32.mrb[0].mxu0
        %v6731 = vadd.f32 0.0, %v6730
        %v6732 = vpop.f32.mrb[0].mxu0
        %v6733 = vadd.f32 0.0, %v6732
        %v6734 = vpop.f32.mrb[0].mxu0
        %v6735 = vpop.f32.mrb[0].mxu0
        %6736 = vdwg.mxu0
        %6737 = vmatprep.subr.bf16.mxu0 %v4178
        %6738 = vmatpush1.bf16.msra.mxu0 %v4177
        %6739 = vmatprep.subr.bf16.mxu0 %v4186
        %6740 = vmatpush1.bf16.msra.mxu0 %v4185
        %6741 = vmatprep.subr.bf16.mxu0 %v4194
        %6742 = vmatpush1.bf16.msra.mxu0 %v4193
        %6743 = vmatprep.subr.bf16.mxu0 %v4202
        %6744 = vmatpush1.bf16.msra.mxu0 %v4201
        %6745 = vmatprep.subr.bf16.mxu0 %v4210
        %6746 = vmatpush1.bf16.msra.mxu0 %v4209
        %6747 = vmatprep.subr.bf16.mxu0 %v4218
        %6748 = vmatpush1.bf16.msra.mxu0 %v4217
        %6749 = vmatprep.subr.bf16.mxu0 %v4226
        %6750 = vmatpush1.bf16.msra.mxu0 %v4225
        %6751 = vmatprep.subr.bf16.mxu0 %v4234
        %6752 = vmatpush1.bf16.msra.mxu0 %v4233
        %6753 = vmatprep.subr.bf16.mxu0 %v4242
        %6754 = vmatpush1.bf16.msra.mxu0 %v4241
        %6755 = vmatprep.subr.bf16.mxu0 %v4250
        %6756 = vmatpush1.bf16.msra.mxu0 %v4249
        %6757 = vmatprep.subr.bf16.mxu0 %v4258
        %6758 = vmatpush1.bf16.msra.mxu0 %v4257
        %6759 = vmatprep.subr.bf16.mxu0 %v4266
        %6760 = vmatpush1.bf16.msra.mxu0 %v4265
        %6761 = vmatprep.subr.bf16.mxu0 %v4274
        %6762 = vmatpush1.bf16.msra.mxu0 %v4273
        %6763 = vmatprep.subr.bf16.mxu0 %v4282
        %6764 = vmatpush1.bf16.msra.mxu0 %v4281
        %6765 = vmatprep.subr.bf16.mxu0 %v4290
        %6766 = vmatpush1.bf16.msra.mxu0 %v4289
        %6767 = vmatprep.subr.bf16.mxu0 %v4298
        %6768 = vmatpush1.bf16.msra.mxu0 %v4297
        %6769 = vmatprep.mubr.bf16.mxu0 %v1330
        %6770 = vmatmul.mubr.bf16.gmra.mrb[0].mxu0 %v1329
        %v6771 = vpop.f32.mrb[0].mxu0
        %v6772 = vadd.f32 %v6731, %v6771
        %v6773 = vpop.f32.mrb[0].mxu0
        %v6774 = vadd.f32 %v6733, %v6773
        %v6775 = vpop.f32.mrb[0].mxu0
        %v6776 = vpop.f32.mrb[0].mxu0
        %6777 = vdwg.mxu0
        %6778 = vmatprep.subr.bf16.mxu0 %v4306
        %6779 = vmatpush1.bf16.msra.mxu0 %v4305
        %6780 = vmatprep.subr.bf16.mxu0 %v4314
        %6781 = vmatpush1.bf16.msra.mxu0 %v4313
        %6782 = vmatprep.subr.bf16.mxu0 %v4322
        %6783 = vmatpush1.bf16.msra.mxu0 %v4321
        %6784 = vmatprep.subr.bf16.mxu0 %v4330
        %6785 = vmatpush1.bf16.msra.mxu0 %v4329
        %6786 = vmatprep.subr.bf16.mxu0 %v4338
        %6787 = vmatpush1.bf16.msra.mxu0 %v4337
        %6788 = vmatprep.subr.bf16.mxu0 %v4346
        %6789 = vmatpush1.bf16.msra.mxu0 %v4345
        %6790 = vmatprep.subr.bf16.mxu0 %v4354
        %6791 = vmatpush1.bf16.msra.mxu0 %v4353
        %6792 = vmatprep.subr.bf16.mxu0 %v4362
        %6793 = vmatpush1.bf16.msra.mxu0 %v4361
        %6794 = vmatprep.subr.bf16.mxu0 %v4370
        %6795 = vmatpush1.bf16.msra.mxu0 %v4369
        %6796 = vmatprep.subr.bf16.mxu0 %v4378
        %6797 = vmatpush1.bf16.msra.mxu0 %v4377
        %6798 = vmatprep.subr.bf16.mxu0 %v4386
        %6799 = vmatpush1.bf16.msra.mxu0 %v4385
        %6800 = vmatprep.subr.bf16.mxu0 %v4394
        %6801 = vmatpush1.bf16.msra.mxu0 %v4393
        %6802 = vmatprep.subr.bf16.mxu0 %v4402
        %6803 = vmatpush1.bf16.msra.mxu0 %v4401
        %6804 = vmatprep.subr.bf16.mxu0 %v4410
        %6805 = vmatpush1.bf16.msra.mxu0 %v4409
        %6806 = vmatprep.subr.bf16.mxu0 %v4418
        %6807 = vmatpush1.bf16.msra.mxu0 %v4417
        %6808 = vmatprep.subr.bf16.mxu0 %v4426
        %6809 = vmatpush1.bf16.msra.mxu0 %v4425
        %6810 = vmatprep.mubr.bf16.mxu0 %v1332
        %6811 = vmatmul.mubr.bf16.gmra.mrb[0].mxu0 %v1331
        %v6812 = vpop.f32.mrb[0].mxu0
        %v6813 = vadd.f32 %v6772, %v6812
        %v6814 = vpop.f32.mrb[0].mxu0
        %v6815 = vadd.f32 %v6774, %v6814
        %v6816 = vpop.f32.mrb[0].mxu0
        %v6817 = vpop.f32.mrb[0].mxu0
        %6818 = vdwg.mxu0
        %6819 = vmatprep.subr.bf16.mxu0 %v4434
        %6820 = vmatpush1.bf16.msra.mxu0 %v4433
        %6821 = vmatprep.subr.bf16.mxu0 %v4442
        %6822 = vmatpush1.bf16.msra.mxu0 %v4441
        %6823 = vmatprep.subr.bf16.mxu0 %v4450
        %6824 = vmatpush1.bf16.msra.mxu0 %v4449
        %6825 = vmatprep.subr.bf16.mxu0 %v4458
        %6826 = vmatpush1.bf16.msra.mxu0 %v4457
        %6827 = vmatprep.subr.bf16.mxu0 %v4466
        %6828 = vmatpush1.bf16.msra.mxu0 %v4465
        %6829 = vmatprep.subr.bf16.mxu0 %v4474
        %6830 = vmatpush1.bf16.msra.mxu0 %v4473
        %6831 = vmatprep.subr.bf16.mxu0 %v4482
        %6832 = vmatpush1.bf16.msra.mxu0 %v4481
        %6833 = vmatprep.subr.bf16.mxu0 %v4490
        %6834 = vmatpush1.bf16.msra.mxu0 %v4489
        %6835 = vmatprep.subr.bf16.mxu0 %v4498
        %6836 = vmatpush1.bf16.msra.mxu0 %v4497
        %6837 = vmatprep.subr.bf16.mxu0 %v4506
        %6838 = vmatpush1.bf16.msra.mxu0 %v4505
        %6839 = vmatprep.subr.bf16.mxu0 %v4514
        %6840 = vmatpush1.bf16.msra.mxu0 %v4513
        %6841 = vmatprep.subr.bf16.mxu0 %v4522
        %6842 = vmatpush1.bf16.msra.mxu0 %v4521
        %6843 = vmatprep.subr.bf16.mxu0 %v4530
        %6844 = vmatpush1.bf16.msra.mxu0 %v4529
        %6845 = vmatprep.subr.bf16.mxu0 %v4538
        %6846 = vmatpush1.bf16.msra.mxu0 %v4537
        %6847 = vmatprep.subr.bf16.mxu0 %v4546
        %6848 = vmatpush1.bf16.msra.mxu0 %v4545
        %6849 = vmatprep.subr.bf16.mxu0 %v4554
        %6850 = vmatpush1.bf16.msra.mxu0 %v4553
        %6851 = vmatprep.mubr.bf16.mxu0 %v1334
        %6852 = vmatmul.mubr.bf16.gmra.mrb[0].mxu0 %v1333
        %v6853 = vpop.f32.mrb[0].mxu0
        %v6854 = vadd.f32 %v6813, %v6853
        %v6855 = vpop.f32.mrb[0].mxu0
        %v6856 = vadd.f32 %v6815, %v6855
        %v6857 = vpop.f32.mrb[0].mxu0
        %v6858 = vpop.f32.mrb[0].mxu0
        %6859 = vdwg.mxu0
        %6860 = vmatprep.subr.bf16.mxu0 %v4562
        %6861 = vmatpush1.bf16.msra.mxu0 %v4561
        %6862 = vmatprep.subr.bf16.mxu0 %v4570
        %6863 = vmatpush1.bf16.msra.mxu0 %v4569
        %6864 = vmatprep.subr.bf16.mxu0 %v4578
        %6865 = vmatpush1.bf16.msra.mxu0 %v4577
        %6866 = vmatprep.subr.bf16.mxu0 %v4586
        %6867 = vmatpush1.bf16.msra.mxu0 %v4585
        %6868 = vmatprep.subr.bf16.mxu0 %v4594
        %6869 = vmatpush1.bf16.msra.mxu0 %v4593
        %6870 = vmatprep.subr.bf16.mxu0 %v4602
        %6871 = vmatpush1.bf16.msra.mxu0 %v4601
        %6872 = vmatprep.subr.bf16.mxu0 %v4610
        %6873 = vmatpush1.bf16.msra.mxu0 %v4609
        %6874 = vmatprep.subr.bf16.mxu0 %v4618
        %6875 = vmatpush1.bf16.msra.mxu0 %v4617
        %6876 = vmatprep.subr.bf16.mxu0 %v4626
        %6877 = vmatpush1.bf16.msra.mxu0 %v4625
        %6878 = vmatprep.subr.bf16.mxu0 %v4634
        %6879 = vmatpush1.bf16.msra.mxu0 %v4633
        %6880 = vmatprep.subr.bf16.mxu0 %v4642
        %6881 = vmatpush1.bf16.msra.mxu0 %v4641
        %6882 = vmatprep.subr.bf16.mxu0 %v4650
        %6883 = vmatpush1.bf16.msra.mxu0 %v4649
        %6884 = vmatprep.subr.bf16.mxu0 %v4658
        %6885 = vmatpush1.bf16.msra.mxu0 %v4657
        %6886 = vmatprep.subr.bf16.mxu0 %v4666
        %6887 = vmatpush1.bf16.msra.mxu0 %v4665
        %6888 = vmatprep.subr.bf16.mxu0 %v4674
        %6889 = vmatpush1.bf16.msra.mxu0 %v4673
        %6890 = vmatprep.subr.bf16.mxu0 %v4682
        %6891 = vmatpush1.bf16.msra.mxu0 %v4681
        %6892 = vmatprep.mubr.bf16.mxu0 %v1336
        %6893 = vmatmul.mubr.bf16.gmra.mrb[0].mxu0 %v1335
        %v6894 = vpop.f32.mrb[0].mxu0
        %v6895 = vadd.f32 %v6854, %v6894
        %v6896 = vpop.f32.mrb[0].mxu0
        %v6897 = vadd.f32 %v6856, %v6896
        %v6898 = vpop.f32.mrb[0].mxu0
        %v6899 = vpop.f32.mrb[0].mxu0
        %6900 = vdwg.mxu0
        %6901 = vmatprep.subr.bf16.mxu0 %v4690
        %6902 = vmatpush1.bf16.msra.mxu0 %v4689
        %6903 = vmatprep.subr.bf16.mxu0 %v4698
        %6904 = vmatpush1.bf16.msra.mxu0 %v4697
        %6905 = vmatprep.subr.bf16.mxu0 %v4706
        %6906 = vmatpush1.bf16.msra.mxu0 %v4705
        %6907 = vmatprep.subr.bf16.mxu0 %v4714
        %6908 = vmatpush1.bf16.msra.mxu0 %v4713
        %6909 = vmatprep.subr.bf16.mxu0 %v4722
        %6910 = vmatpush1.bf16.msra.mxu0 %v4721
        %6911 = vmatprep.subr.bf16.mxu0 %v4730
        %6912 = vmatpush1.bf16.msra.mxu0 %v4729
        %6913 = vmatprep.subr.bf16.mxu0 %v4738
        %6914 = vmatpush1.bf16.msra.mxu0 %v4737
        %6915 = vmatprep.subr.bf16.mxu0 %v4746
        %6916 = vmatpush1.bf16.msra.mxu0 %v4745
        %6917 = vmatprep.subr.bf16.mxu0 %v4754
        %6918 = vmatpush1.bf16.msra.mxu0 %v4753
        %6919 = vmatprep.subr.bf16.mxu0 %v4762
        %6920 = vmatpush1.bf16.msra.mxu0 %v4761
        %6921 = vmatprep.subr.bf16.mxu0 %v4770
        %6922 = vmatpush1.bf16.msra.mxu0 %v4769
        %6923 = vmatprep.subr.bf16.mxu0 %v4778
        %6924 = vmatpush1.bf16.msra.mxu0 %v4777
        %6925 = vmatprep.subr.bf16.mxu0 %v4786
        %6926 = vmatpush1.bf16.msra.mxu0 %v4785
        %6927 = vmatprep.subr.bf16.mxu0 %v4794
        %6928 = vmatpush1.bf16.msra.mxu0 %v4793
        %6929 = vmatprep.subr.bf16.mxu0 %v4802
        %6930 = vmatpush1.bf16.msra.mxu0 %v4801
        %6931 = vmatprep.subr.bf16.mxu0 %v4810
        %6932 = vmatpush1.bf16.msra.mxu0 %v4809
        %6933 = vmatprep.mubr.bf16.mxu0 %v1338
        %6934 = vmatmul.mubr.bf16.gmra.mrb[0].mxu0 %v1337
        %v6935 = vpop.f32.mrb[0].mxu0
        %v6936 = vadd.f32 %v6895, %v6935
        %v6937 = vpop.f32.mrb[0].mxu0
        %v6938 = vadd.f32 %v6897, %v6937
        %v6939 = vpop.f32.mrb[0].mxu0
        %v6940 = vpop.f32.mrb[0].mxu0
        %6941 = vdwg.mxu0
        %6942 = vmatprep.subr.bf16.mxu0 %v4818
        %6943 = vmatpush1.bf16.msra.mxu0 %v4817
        %6944 = vmatprep.subr.bf16.mxu0 %v4826
        %6945 = vmatpush1.bf16.msra.mxu0 %v4825
        %6946 = vmatprep.subr.bf16.mxu0 %v4834
        %6947 = vmatpush1.bf16.msra.mxu0 %v4833
        %6948 = vmatprep.subr.bf16.mxu0 %v4842
        %6949 = vmatpush1.bf16.msra.mxu0 %v4841
        %6950 = vmatprep.subr.bf16.mxu0 %v4850
        %6951 = vmatpush1.bf16.msra.mxu0 %v4849
        %6952 = vmatprep.subr.bf16.mxu0 %v4858
        %6953 = vmatpush1.bf16.msra.mxu0 %v4857
        %6954 = vmatprep.subr.bf16.mxu0 %v4866
        %6955 = vmatpush1.bf16.msra.mxu0 %v4865
        %6956 = vmatprep.subr.bf16.mxu0 %v4874
        %6957 = vmatpush1.bf16.msra.mxu0 %v4873
        %6958 = vmatprep.subr.bf16.mxu0 %v4882
        %6959 = vmatpush1.bf16.msra.mxu0 %v4881
        %6960 = vmatprep.subr.bf16.mxu0 %v4890
        %6961 = vmatpush1.bf16.msra.mxu0 %v4889
        %6962 = vmatprep.subr.bf16.mxu0 %v4898
        %6963 = vmatpush1.bf16.msra.mxu0 %v4897
        %6964 = vmatprep.subr.bf16.mxu0 %v4906
        %6965 = vmatpush1.bf16.msra.mxu0 %v4905
        %6966 = vmatprep.subr.bf16.mxu0 %v4914
        %6967 = vmatpush1.bf16.msra.mxu0 %v4913
        %6968 = vmatprep.subr.bf16.mxu0 %v4922
        %6969 = vmatpush1.bf16.msra.mxu0 %v4921
        %6970 = vmatprep.subr.bf16.mxu0 %v4930
        %6971 = vmatpush1.bf16.msra.mxu0 %v4929
        %6972 = vmatprep.subr.bf16.mxu0 %v4938
        %6973 = vmatpush1.bf16.msra.mxu0 %v4937
        %6974 = vmatprep.mubr.bf16.mxu0 %v1340
        %6975 = vmatmul.mubr.bf16.gmra.mrb[0].mxu0 %v1339
        %v6976 = vpop.f32.mrb[0].mxu0
        %v6977 = vadd.f32 %v6936, %v6976
        %v6978 = vpop.f32.mrb[0].mxu0
        %v6979 = vadd.f32 %v6938, %v6978
        %v6980 = vpop.f32.mrb[0].mxu0
        %v6981 = vpop.f32.mrb[0].mxu0
        %6982 = vdwg.mxu0
        %v6983 = vadd.f32 %v402, %v6116
        %v6984 = vadd.f32 %v403, %v6118
        %v6985 = vadd.f32 %v404, %v6403
        %v6986 = vadd.f32 %v405, %v6405
        %v6987 = vadd.f32 %v406, %v6690
        %v6988 = vadd.f32 %v407, %v6692
        %v6989 = vadd.f32 %v408, %v6977
        %v6990 = vadd.f32 %v409, %v6979
        %6991 = vst [vmem:[#allocation2] sm:$0xff] %v6983
        %6992 = vst [vmem:[#allocation2 + $0x8] sm:$0xff] %v6984
        %6993 = vst [vmem:[#allocation2 + $0x10] sm:$0xff] %v6985
        %6994 = vst [vmem:[#allocation2 + $0x18] sm:$0xff] %v6986
        %6995 = vst [vmem:[#allocation2 + $0x20] sm:$0xff] %v6987
        %6996 = vst [vmem:[#allocation2 + $0x28] sm:$0xff] %v6988
        %6997 = vst [vmem:[#allocation2 + $0x30] sm:$0xff] %v6989
        %6998 = vst [vmem:[#allocation2 + $0x38] sm:$0xff] %v6990
        %p6999 = scmp.eq.s32.totalorder %s28, 1
        // Predicated region
        $region77: #{tpu_custom_call.1} parent=47 // pred_check
          %p7000 = pneg %p6999
        $region78: #{tpu_custom_call.1} parent=47 // pred_check_branch
          %7002 = sbr.rel (%p7000) target = $region80
        $region79: #{tpu_custom_call.1} parent=47 // pred_region
          %v7003 = vld [vmem:[#allocation2] sm:$0xff]
          %v7004 = vld [vmem:[#allocation2 + $0x8] sm:$0xff]
          %v7005 = vld [vmem:[#allocation2 + $0x10] sm:$0xff]
          %v7006 = vld [vmem:[#allocation2 + $0x18] sm:$0xff]
          %v7007 = vld [vmem:[#allocation2 + $0x20] sm:$0xff]
          %v7008 = vld [vmem:[#allocation2 + $0x28] sm:$0xff]
          %v7009 = vld [vmem:[#allocation2 + $0x30] sm:$0xff]
          %v7010 = vld [vmem:[#allocation2 + $0x38] sm:$0xff]
          %v7011 = vld [vmem:[#allocation8] sm:$0xff]
          %v7013 = vlaneseq
          %v7014 = vshrl.u32 %v7013, 7
          %v7015 = vsub.s32 0, %v7014
          %v7016 = vrot.slane %v7011, %v7015
          %v7017 = vlaneseq
          %v7018 = vshrl.u32 %v7017, 7
          %v7019 = vsub.s32 1, %v7018
          %v7020 = vrot.slane %v7011, %v7019
          %v7021 = vlaneseq
          %v7022 = vshrl.u32 %v7021, 7
          %v7023 = vsub.s32 2, %v7022
          %v7024 = vrot.slane %v7011, %v7023
          %v7025 = vlaneseq
          %v7026 = vshrl.u32 %v7025, 7
          %v7027 = vsub.s32 3, %v7026
          %v7028 = vrot.slane %v7011, %v7027
          %v7029 = vlaneseq
          %v7030 = vshrl.u32 %v7029, 7
          %v7031 = vsub.s32 4, %v7030
          %v7032 = vrot.slane %v7011, %v7031
          %v7033 = vlaneseq
          %v7034 = vshrl.u32 %v7033, 7
          %v7035 = vsub.s32 5, %v7034
          %v7036 = vrot.slane %v7011, %v7035
          %v7037 = vlaneseq
          %v7038 = vshrl.u32 %v7037, 7
          %v7039 = vsub.s32 6, %v7038
          %v7040 = vrot.slane %v7011, %v7039
          %v7041 = vlaneseq
          %v7042 = vshrl.u32 %v7041, 7
          %v7043 = vsub.s32 7, %v7042
          %v7044 = vrot.slane %v7011, %v7043
          %v7053 = vadd.f32 %v7003, %v7016
          %v7054 = vadd.f32 %v7004, %v7020
          %v7055 = vadd.f32 %v7005, %v7024
          %v7056 = vadd.f32 %v7006, %v7028
          %v7057 = vadd.f32 %v7007, %v7032
          %v7058 = vadd.f32 %v7008, %v7036
          %v7059 = vadd.f32 %v7009, %v7040
          %v7060 = vadd.f32 %v7010, %v7044
          %v7061 = vmax.f32 %v7053, 0.0
          %v7062 = vmax.f32 %v7054, 0.0
          %v7063 = vmax.f32 %v7055, 0.0
          %v7064 = vmax.f32 %v7056, 0.0
          %v7065 = vmax.f32 %v7057, 0.0
          %v7066 = vmax.f32 %v7058, 0.0
          %v7067 = vmax.f32 %v7059, 0.0
          %v7068 = vmax.f32 %v7060, 0.0
          %v7069 = vpack.c.bf16 %v7061, %v7061
          %v7070 = vpack.c.bf16 %v7062, %v7062
          %v7071 = vpack.c.bf16 %v7063, %v7063
          %v7072 = vpack.c.bf16 %v7064, %v7064
          %v7073 = vpack.c.bf16 %v7065, %v7065
          %v7074 = vpack.c.bf16 %v7066, %v7066
          %v7075 = vpack.c.bf16 %v7067, %v7067
          %v7076 = vpack.c.bf16 %v7068, %v7068
          %v7077 = vld [vmem:[#allocation9] sm:$0xff]
          %v7078 = vld [vmem:[#allocation9 + $0x8] sm:$0xff]
          %v7079 = vld [vmem:[#allocation9 + $0x10] sm:$0xff]
          %v7080 = vld [vmem:[#allocation9 + $0x18] sm:$0xff]
          %v7081 = vld [vmem:[#allocation9 + $0x20] sm:$0xff]
          %v7082 = vld [vmem:[#allocation9 + $0x28] sm:$0xff]
          %v7083 = vld [vmem:[#allocation9 + $0x30] sm:$0xff]
          %v7084 = vld [vmem:[#allocation9 + $0x38] sm:$0xff]
          %v7085 = vld [vmem:[#allocation9 + $0x40] sm:$0xff]
          %v7086 = vld [vmem:[#allocation9 + $0x48] sm:$0xff]
          %v7087 = vld [vmem:[#allocation9 + $0x50] sm:$0xff]
          %v7088 = vld [vmem:[#allocation9 + $0x58] sm:$0xff]
          %v7089 = vld [vmem:[#allocation9 + $0x60] sm:$0xff]
          %v7090 = vld [vmem:[#allocation9 + $0x68] sm:$0xff]
          %v7091 = vld [vmem:[#allocation9 + $0x70] sm:$0xff]
          %v7092 = vld [vmem:[#allocation9 + $0x78] sm:$0xff]
          %v7093 = vld [vmem:[#allocation9 + $0x80] sm:$0xff]
          %v7094 = vld [vmem:[#allocation9 + $0x88] sm:$0xff]
          %v7095 = vld [vmem:[#allocation9 + $0x90] sm:$0xff]
          %v7096 = vld [vmem:[#allocation9 + $0x98] sm:$0xff]
          %v7097 = vld [vmem:[#allocation9 + $0xa0] sm:$0xff]
          %v7098 = vld [vmem:[#allocation9 + $0xa8] sm:$0xff]
          %v7099 = vld [vmem:[#allocation9 + $0xb0] sm:$0xff]
          %v7100 = vld [vmem:[#allocation9 + $0xb8] sm:$0xff]
          %v7101 = vld [vmem:[#allocation9 + $0xc0] sm:$0xff]
          %v7102 = vld [vmem:[#allocation9 + $0xc8] sm:$0xff]
          %v7103 = vld [vmem:[#allocation9 + $0xd0] sm:$0xff]
          %v7104 = vld [vmem:[#allocation9 + $0xd8] sm:$0xff]
          %v7105 = vld [vmem:[#allocation9 + $0xe0] sm:$0xff]
          %v7106 = vld [vmem:[#allocation9 + $0xe8] sm:$0xff]
          %v7107 = vld [vmem:[#allocation9 + $0xf0] sm:$0xff]
          %v7108 = vld [vmem:[#allocation9 + $0xf8] sm:$0xff]
          %v7109 = vld [vmem:[#allocation9 + $0x100] sm:$0xff]
          %v7110 = vld [vmem:[#allocation9 + $0x108] sm:$0xff]
          %v7111 = vld [vmem:[#allocation9 + $0x110] sm:$0xff]
          %v7112 = vld [vmem:[#allocation9 + $0x118] sm:$0xff]
          %v7113 = vld [vmem:[#allocation9 + $0x120] sm:$0xff]
          %v7114 = vld [vmem:[#allocation9 + $0x128] sm:$0xff]
          %v7115 = vld [vmem:[#allocation9 + $0x130] sm:$0xff]
          %v7116 = vld [vmem:[#allocation9 + $0x138] sm:$0xff]
          %v7117 = vld [vmem:[#allocation9 + $0x140] sm:$0xff]
          %v7118 = vld [vmem:[#allocation9 + $0x148] sm:$0xff]
          %v7119 = vld [vmem:[#allocation9 + $0x150] sm:$0xff]
          %v7120 = vld [vmem:[#allocation9 + $0x158] sm:$0xff]
          %v7121 = vld [vmem:[#allocation9 + $0x160] sm:$0xff]
          %v7122 = vld [vmem:[#allocation9 + $0x168] sm:$0xff]
          %v7123 = vld [vmem:[#allocation9 + $0x170] sm:$0xff]
          %v7124 = vld [vmem:[#allocation9 + $0x178] sm:$0xff]
          %v7125 = vld [vmem:[#allocation9 + $0x180] sm:$0xff]
          %v7126 = vld [vmem:[#allocation9 + $0x188] sm:$0xff]
          %v7127 = vld [vmem:[#allocation9 + $0x190] sm:$0xff]
          %v7128 = vld [vmem:[#allocation9 + $0x198] sm:$0xff]
          %v7129 = vld [vmem:[#allocation9 + $0x1a0] sm:$0xff]
          %v7130 = vld [vmem:[#allocation9 + $0x1a8] sm:$0xff]
          %v7131 = vld [vmem:[#allocation9 + $0x1b0] sm:$0xff]
          %v7132 = vld [vmem:[#allocation9 + $0x1b8] sm:$0xff]
          %v7133 = vld [vmem:[#allocation9 + $0x1c0] sm:$0xff]
          %v7134 = vld [vmem:[#allocation9 + $0x1c8] sm:$0xff]
          %v7135 = vld [vmem:[#allocation9 + $0x1d0] sm:$0xff]
          %v7136 = vld [vmem:[#allocation9 + $0x1d8] sm:$0xff]
          %v7137 = vld [vmem:[#allocation9 + $0x1e0] sm:$0xff]
          %v7138 = vld [vmem:[#allocation9 + $0x1e8] sm:$0xff]
          %v7139 = vld [vmem:[#allocation9 + $0x1f0] sm:$0xff]
          %v7140 = vld [vmem:[#allocation9 + $0x1f8] sm:$0xff]
          %v7141 = vld [vmem:[#allocation9 + $0x200] sm:$0xff]
          %v7142 = vld [vmem:[#allocation9 + $0x208] sm:$0xff]
          %v7143 = vld [vmem:[#allocation9 + $0x210] sm:$0xff]
          %v7144 = vld [vmem:[#allocation9 + $0x218] sm:$0xff]
          %v7145 = vld [vmem:[#allocation9 + $0x220] sm:$0xff]
          %v7146 = vld [vmem:[#allocation9 + $0x228] sm:$0xff]
          %v7147 = vld [vmem:[#allocation9 + $0x230] sm:$0xff]
          %v7148 = vld [vmem:[#allocation9 + $0x238] sm:$0xff]
          %v7149 = vld [vmem:[#allocation9 + $0x240] sm:$0xff]
          %v7150 = vld [vmem:[#allocation9 + $0x248] sm:$0xff]
          %v7151 = vld [vmem:[#allocation9 + $0x250] sm:$0xff]
          %v7152 = vld [vmem:[#allocation9 + $0x258] sm:$0xff]
          %v7153 = vld [vmem:[#allocation9 + $0x260] sm:$0xff]
          %v7154 = vld [vmem:[#allocation9 + $0x268] sm:$0xff]
          %v7155 = vld [vmem:[#allocation9 + $0x270] sm:$0xff]
          %v7156 = vld [vmem:[#allocation9 + $0x278] sm:$0xff]
          %v7157 = vld [vmem:[#allocation9 + $0x280] sm:$0xff]
          %v7158 = vld [vmem:[#allocation9 + $0x288] sm:$0xff]
          %v7159 = vld [vmem:[#allocation9 + $0x290] sm:$0xff]
          %v7160 = vld [vmem:[#allocation9 + $0x298] sm:$0xff]
          %v7161 = vld [vmem:[#allocation9 + $0x2a0] sm:$0xff]
          %v7162 = vld [vmem:[#allocation9 + $0x2a8] sm:$0xff]
          %v7163 = vld [vmem:[#allocation9 + $0x2b0] sm:$0xff]
          %v7164 = vld [vmem:[#allocation9 + $0x2b8] sm:$0xff]
          %v7165 = vld [vmem:[#allocation9 + $0x2c0] sm:$0xff]
          %v7166 = vld [vmem:[#allocation9 + $0x2c8] sm:$0xff]
          %v7167 = vld [vmem:[#allocation9 + $0x2d0] sm:$0xff]
          %v7168 = vld [vmem:[#allocation9 + $0x2d8] sm:$0xff]
          %v7169 = vld [vmem:[#allocation9 + $0x2e0] sm:$0xff]
          %v7170 = vld [vmem:[#allocation9 + $0x2e8] sm:$0xff]
          %v7171 = vld [vmem:[#allocation9 + $0x2f0] sm:$0xff]
          %v7172 = vld [vmem:[#allocation9 + $0x2f8] sm:$0xff]
          %v7173 = vld [vmem:[#allocation9 + $0x300] sm:$0xff]
          %v7174 = vld [vmem:[#allocation9 + $0x308] sm:$0xff]
          %v7175 = vld [vmem:[#allocation9 + $0x310] sm:$0xff]
          %v7176 = vld [vmem:[#allocation9 + $0x318] sm:$0xff]
          %v7177 = vld [vmem:[#allocation9 + $0x320] sm:$0xff]
          %v7178 = vld [vmem:[#allocation9 + $0x328] sm:$0xff]
          %v7179 = vld [vmem:[#allocation9 + $0x330] sm:$0xff]
          %v7180 = vld [vmem:[#allocation9 + $0x338] sm:$0xff]
          %v7181 = vld [vmem:[#allocation9 + $0x340] sm:$0xff]
          %v7182 = vld [vmem:[#allocation9 + $0x348] sm:$0xff]
          %v7183 = vld [vmem:[#allocation9 + $0x350] sm:$0xff]
          %v7184 = vld [vmem:[#allocation9 + $0x358] sm:$0xff]
          %v7185 = vld [vmem:[#allocation9 + $0x360] sm:$0xff]
          %v7186 = vld [vmem:[#allocation9 + $0x368] sm:$0xff]
          %v7187 = vld [vmem:[#allocation9 + $0x370] sm:$0xff]
          %v7188 = vld [vmem:[#allocation9 + $0x378] sm:$0xff]
          %v7189 = vld [vmem:[#allocation9 + $0x380] sm:$0xff]
          %v7190 = vld [vmem:[#allocation9 + $0x388] sm:$0xff]
          %v7191 = vld [vmem:[#allocation9 + $0x390] sm:$0xff]
          %v7192 = vld [vmem:[#allocation9 + $0x398] sm:$0xff]
          %v7193 = vld [vmem:[#allocation9 + $0x3a0] sm:$0xff]
          %v7194 = vld [vmem:[#allocation9 + $0x3a8] sm:$0xff]
          %v7195 = vld [vmem:[#allocation9 + $0x3b0] sm:$0xff]
          %v7196 = vld [vmem:[#allocation9 + $0x3b8] sm:$0xff]
          %v7197 = vld [vmem:[#allocation9 + $0x3c0] sm:$0xff]
          %v7198 = vld [vmem:[#allocation9 + $0x3c8] sm:$0xff]
          %v7199 = vld [vmem:[#allocation9 + $0x3d0] sm:$0xff]
          %v7200 = vld [vmem:[#allocation9 + $0x3d8] sm:$0xff]
          %v7201 = vld [vmem:[#allocation9 + $0x3e0] sm:$0xff]
          %v7202 = vld [vmem:[#allocation9 + $0x3e8] sm:$0xff]
          %v7203 = vld [vmem:[#allocation9 + $0x3f0] sm:$0xff]
          %v7204 = vld [vmem:[#allocation9 + $0x3f8] sm:$0xff]
          %v7205 = vld [vmem:[#allocation11] sm:$0x3]
          %v7207 = vlaneseq
          %v7208 = vshrl.u32 %v7207, 7
          %v7209 = vsub.s32 0, %v7208
          %v7210 = vrot.slane %v7205, %v7209
          %v7211 = vlaneseq
          %v7212 = vshrl.u32 %v7211, 7
          %v7213 = vsub.s32 1, %v7212
          %v7214 = vrot.slane %v7205, %v7213
          %v7345 = vunpack.c.l.b16 %v7077
          %v7346 = vunpack.c.h.b16 %v7077
          %v7347 = vunpack.c.l.b16 %v7078
          %v7348 = vunpack.c.h.b16 %v7078
          %v7349 = vunpack.c.l.b16 %v7079
          %v7350 = vunpack.c.h.b16 %v7079
          %v7351 = vunpack.c.l.b16 %v7080
          %v7352 = vunpack.c.h.b16 %v7080
          %v7353 = vunpack.c.l.b16 %v7081
          %v7354 = vunpack.c.h.b16 %v7081
          %v7355 = vunpack.c.l.b16 %v7082
          %v7356 = vunpack.c.h.b16 %v7082
          %v7357 = vunpack.c.l.b16 %v7083
          %v7358 = vunpack.c.h.b16 %v7083
          %v7359 = vunpack.c.l.b16 %v7084
          %v7360 = vunpack.c.h.b16 %v7084
          %v7361 = vunpack.c.l.b16 %v7085
          %v7362 = vunpack.c.h.b16 %v7085
          %v7363 = vunpack.c.l.b16 %v7086
          %v7364 = vunpack.c.h.b16 %v7086
          %v7365 = vunpack.c.l.b16 %v7087
          %v7366 = vunpack.c.h.b16 %v7087
          %v7367 = vunpack.c.l.b16 %v7088
          %v7368 = vunpack.c.h.b16 %v7088
          %v7369 = vunpack.c.l.b16 %v7089
          %v7370 = vunpack.c.h.b16 %v7089
          %v7371 = vunpack.c.l.b16 %v7090
          %v7372 = vunpack.c.h.b16 %v7090
          %v7373 = vunpack.c.l.b16 %v7091
          %v7374 = vunpack.c.h.b16 %v7091
          %v7375 = vunpack.c.l.b16 %v7092
          %v7376 = vunpack.c.h.b16 %v7092
          %v7377 = vunpack.c.l.b16 %v7093
          %v7378 = vunpack.c.h.b16 %v7093
          %v7379 = vunpack.c.l.b16 %v7094
          %v7380 = vunpack.c.h.b16 %v7094
          %v7381 = vunpack.c.l.b16 %v7095
          %v7382 = vunpack.c.h.b16 %v7095
          %v7383 = vunpack.c.l.b16 %v7096
          %v7384 = vunpack.c.h.b16 %v7096
          %v7385 = vunpack.c.l.b16 %v7097
          %v7386 = vunpack.c.h.b16 %v7097
          %v7387 = vunpack.c.l.b16 %v7098
          %v7388 = vunpack.c.h.b16 %v7098
          %v7389 = vunpack.c.l.b16 %v7099
          %v7390 = vunpack.c.h.b16 %v7099
          %v7391 = vunpack.c.l.b16 %v7100
          %v7392 = vunpack.c.h.b16 %v7100
          %v7393 = vunpack.c.l.b16 %v7101
          %v7394 = vunpack.c.h.b16 %v7101
          %v7395 = vunpack.c.l.b16 %v7102
          %v7396 = vunpack.c.h.b16 %v7102
          %v7397 = vunpack.c.l.b16 %v7103
          %v7398 = vunpack.c.h.b16 %v7103
          %v7399 = vunpack.c.l.b16 %v7104
          %v7400 = vunpack.c.h.b16 %v7104
          %v7401 = vunpack.c.l.b16 %v7105
          %v7402 = vunpack.c.h.b16 %v7105
          %v7403 = vunpack.c.l.b16 %v7106
          %v7404 = vunpack.c.h.b16 %v7106
          %v7405 = vunpack.c.l.b16 %v7107
          %v7406 = vunpack.c.h.b16 %v7107
          %v7407 = vunpack.c.l.b16 %v7108
          %v7408 = vunpack.c.h.b16 %v7108
          %v7409 = vunpack.c.l.b16 %v7109
          %v7410 = vunpack.c.h.b16 %v7109
          %v7411 = vunpack.c.l.b16 %v7110
          %v7412 = vunpack.c.h.b16 %v7110
          %v7413 = vunpack.c.l.b16 %v7111
          %v7414 = vunpack.c.h.b16 %v7111
          %v7415 = vunpack.c.l.b16 %v7112
          %v7416 = vunpack.c.h.b16 %v7112
          %v7417 = vunpack.c.l.b16 %v7113
          %v7418 = vunpack.c.h.b16 %v7113
          %v7419 = vunpack.c.l.b16 %v7114
          %v7420 = vunpack.c.h.b16 %v7114
          %v7421 = vunpack.c.l.b16 %v7115
          %v7422 = vunpack.c.h.b16 %v7115
          %v7423 = vunpack.c.l.b16 %v7116
          %v7424 = vunpack.c.h.b16 %v7116
          %v7425 = vunpack.c.l.b16 %v7117
          %v7426 = vunpack.c.h.b16 %v7117
          %v7427 = vunpack.c.l.b16 %v7118
          %v7428 = vunpack.c.h.b16 %v7118
          %v7429 = vunpack.c.l.b16 %v7119
          %v7430 = vunpack.c.h.b16 %v7119
          %v7431 = vunpack.c.l.b16 %v7120
          %v7432 = vunpack.c.h.b16 %v7120
          %v7433 = vunpack.c.l.b16 %v7121
          %v7434 = vunpack.c.h.b16 %v7121
          %v7435 = vunpack.c.l.b16 %v7122
          %v7436 = vunpack.c.h.b16 %v7122
          %v7437 = vunpack.c.l.b16 %v7123
          %v7438 = vunpack.c.h.b16 %v7123
          %v7439 = vunpack.c.l.b16 %v7124
          %v7440 = vunpack.c.h.b16 %v7124
          %v7441 = vunpack.c.l.b16 %v7125
          %v7442 = vunpack.c.h.b16 %v7125
          %v7443 = vunpack.c.l.b16 %v7126
          %v7444 = vunpack.c.h.b16 %v7126
          %v7445 = vunpack.c.l.b16 %v7127
          %v7446 = vunpack.c.h.b16 %v7127
          %v7447 = vunpack.c.l.b16 %v7128
          %v7448 = vunpack.c.h.b16 %v7128
          %v7449 = vunpack.c.l.b16 %v7129
          %v7450 = vunpack.c.h.b16 %v7129
          %v7451 = vunpack.c.l.b16 %v7130
          %v7452 = vunpack.c.h.b16 %v7130
          %v7453 = vunpack.c.l.b16 %v7131
          %v7454 = vunpack.c.h.b16 %v7131
          %v7455 = vunpack.c.l.b16 %v7132
          %v7456 = vunpack.c.h.b16 %v7132
          %v7457 = vunpack.c.l.b16 %v7133
          %v7458 = vunpack.c.h.b16 %v7133
          %v7459 = vunpack.c.l.b16 %v7134
          %v7460 = vunpack.c.h.b16 %v7134
          %v7461 = vunpack.c.l.b16 %v7135
          %v7462 = vunpack.c.h.b16 %v7135
          %v7463 = vunpack.c.l.b16 %v7136
          %v7464 = vunpack.c.h.b16 %v7136
          %v7465 = vunpack.c.l.b16 %v7137
          %v7466 = vunpack.c.h.b16 %v7137
          %v7467 = vunpack.c.l.b16 %v7138
          %v7468 = vunpack.c.h.b16 %v7138
          %v7469 = vunpack.c.l.b16 %v7139
          %v7470 = vunpack.c.h.b16 %v7139
          %v7471 = vunpack.c.l.b16 %v7140
          %v7472 = vunpack.c.h.b16 %v7140
          %v7473 = vunpack.c.l.b16 %v7141
          %v7474 = vunpack.c.h.b16 %v7141
          %v7475 = vunpack.c.l.b16 %v7142
          %v7476 = vunpack.c.h.b16 %v7142
          %v7477 = vunpack.c.l.b16 %v7143
          %v7478 = vunpack.c.h.b16 %v7143
          %v7479 = vunpack.c.l.b16 %v7144
          %v7480 = vunpack.c.h.b16 %v7144
          %v7481 = vunpack.c.l.b16 %v7145
          %v7482 = vunpack.c.h.b16 %v7145
          %v7483 = vunpack.c.l.b16 %v7146
          %v7484 = vunpack.c.h.b16 %v7146
          %v7485 = vunpack.c.l.b16 %v7147
          %v7486 = vunpack.c.h.b16 %v7147
          %v7487 = vunpack.c.l.b16 %v7148
          %v7488 = vunpack.c.h.b16 %v7148
          %v7489 = vunpack.c.l.b16 %v7149
          %v7490 = vunpack.c.h.b16 %v7149
          %v7491 = vunpack.c.l.b16 %v7150
          %v7492 = vunpack.c.h.b16 %v7150
          %v7493 = vunpack.c.l.b16 %v7151
          %v7494 = vunpack.c.h.b16 %v7151
          %v7495 = vunpack.c.l.b16 %v7152
          %v7496 = vunpack.c.h.b16 %v7152
          %v7497 = vunpack.c.l.b16 %v7153
          %v7498 = vunpack.c.h.b16 %v7153
          %v7499 = vunpack.c.l.b16 %v7154
          %v7500 = vunpack.c.h.b16 %v7154
          %v7501 = vunpack.c.l.b16 %v7155
          %v7502 = vunpack.c.h.b16 %v7155
          %v7503 = vunpack.c.l.b16 %v7156
          %v7504 = vunpack.c.h.b16 %v7156
          %v7505 = vunpack.c.l.b16 %v7157
          %v7506 = vunpack.c.h.b16 %v7157
          %v7507 = vunpack.c.l.b16 %v7158
          %v7508 = vunpack.c.h.b16 %v7158
          %v7509 = vunpack.c.l.b16 %v7159
          %v7510 = vunpack.c.h.b16 %v7159
          %v7511 = vunpack.c.l.b16 %v7160
          %v7512 = vunpack.c.h.b16 %v7160
          %v7513 = vunpack.c.l.b16 %v7161
          %v7514 = vunpack.c.h.b16 %v7161
          %v7515 = vunpack.c.l.b16 %v7162
          %v7516 = vunpack.c.h.b16 %v7162
          %v7517 = vunpack.c.l.b16 %v7163
          %v7518 = vunpack.c.h.b16 %v7163
          %v7519 = vunpack.c.l.b16 %v7164
          %v7520 = vunpack.c.h.b16 %v7164
          %v7521 = vunpack.c.l.b16 %v7165
          %v7522 = vunpack.c.h.b16 %v7165
          %v7523 = vunpack.c.l.b16 %v7166
          %v7524 = vunpack.c.h.b16 %v7166
          %v7525 = vunpack.c.l.b16 %v7167
          %v7526 = vunpack.c.h.b16 %v7167
          %v7527 = vunpack.c.l.b16 %v7168
          %v7528 = vunpack.c.h.b16 %v7168
          %v7529 = vunpack.c.l.b16 %v7169
          %v7530 = vunpack.c.h.b16 %v7169
          %v7531 = vunpack.c.l.b16 %v7170
          %v7532 = vunpack.c.h.b16 %v7170
          %v7533 = vunpack.c.l.b16 %v7171
          %v7534 = vunpack.c.h.b16 %v7171
          %v7535 = vunpack.c.l.b16 %v7172
          %v7536 = vunpack.c.h.b16 %v7172
          %v7537 = vunpack.c.l.b16 %v7173
          %v7538 = vunpack.c.h.b16 %v7173
          %v7539 = vunpack.c.l.b16 %v7174
          %v7540 = vunpack.c.h.b16 %v7174
          %v7541 = vunpack.c.l.b16 %v7175
          %v7542 = vunpack.c.h.b16 %v7175
          %v7543 = vunpack.c.l.b16 %v7176
          %v7544 = vunpack.c.h.b16 %v7176
          %v7545 = vunpack.c.l.b16 %v7177
          %v7546 = vunpack.c.h.b16 %v7177
          %v7547 = vunpack.c.l.b16 %v7178
          %v7548 = vunpack.c.h.b16 %v7178
          %v7549 = vunpack.c.l.b16 %v7179
          %v7550 = vunpack.c.h.b16 %v7179
          %v7551 = vunpack.c.l.b16 %v7180
          %v7552 = vunpack.c.h.b16 %v7180
          %v7553 = vunpack.c.l.b16 %v7181
          %v7554 = vunpack.c.h.b16 %v7181
          %v7555 = vunpack.c.l.b16 %v7182
          %v7556 = vunpack.c.h.b16 %v7182
          %v7557 = vunpack.c.l.b16 %v7183
          %v7558 = vunpack.c.h.b16 %v7183
          %v7559 = vunpack.c.l.b16 %v7184
          %v7560 = vunpack.c.h.b16 %v7184
          %v7561 = vunpack.c.l.b16 %v7185
          %v7562 = vunpack.c.h.b16 %v7185
          %v7563 = vunpack.c.l.b16 %v7186
          %v7564 = vunpack.c.h.b16 %v7186
          %v7565 = vunpack.c.l.b16 %v7187
          %v7566 = vunpack.c.h.b16 %v7187
          %v7567 = vunpack.c.l.b16 %v7188
          %v7568 = vunpack.c.h.b16 %v7188
          %v7569 = vunpack.c.l.b16 %v7189
          %v7570 = vunpack.c.h.b16 %v7189
          %v7571 = vunpack.c.l.b16 %v7190
          %v7572 = vunpack.c.h.b16 %v7190
          %v7573 = vunpack.c.l.b16 %v7191
          %v7574 = vunpack.c.h.b16 %v7191
          %v7575 = vunpack.c.l.b16 %v7192
          %v7576 = vunpack.c.h.b16 %v7192
          %v7577 = vunpack.c.l.b16 %v7193
          %v7578 = vunpack.c.h.b16 %v7193
          %v7579 = vunpack.c.l.b16 %v7194
          %v7580 = vunpack.c.h.b16 %v7194
          %v7581 = vunpack.c.l.b16 %v7195
          %v7582 = vunpack.c.h.b16 %v7195
          %v7583 = vunpack.c.l.b16 %v7196
          %v7584 = vunpack.c.h.b16 %v7196
          %v7585 = vunpack.c.l.b16 %v7197
          %v7586 = vunpack.c.h.b16 %v7197
          %v7587 = vunpack.c.l.b16 %v7198
          %v7588 = vunpack.c.h.b16 %v7198
          %v7589 = vunpack.c.l.b16 %v7199
          %v7590 = vunpack.c.h.b16 %v7199
          %v7591 = vunpack.c.l.b16 %v7200
          %v7592 = vunpack.c.h.b16 %v7200
          %v7593 = vunpack.c.l.b16 %v7201
          %v7594 = vunpack.c.h.b16 %v7201
          %v7595 = vunpack.c.l.b16 %v7202
          %v7596 = vunpack.c.h.b16 %v7202
          %v7597 = vunpack.c.l.b16 %v7203
          %v7598 = vunpack.c.h.b16 %v7203
          %v7599 = vunpack.c.l.b16 %v7204
          %v7600 = vunpack.c.h.b16 %v7204
          %v7601 = vpack.c.b16 %v7347, %v7345
          %v7602 = vpack.c.b16 %v7348, %v7346
          %v7603 = vpack.c.b16 %v7351, %v7349
          %v7604 = vpack.c.b16 %v7352, %v7350
          %v7605 = vpack.c.b16 %v7355, %v7353
          %v7606 = vpack.c.b16 %v7356, %v7354
          %v7607 = vpack.c.b16 %v7359, %v7357
          %v7608 = vpack.c.b16 %v7360, %v7358
          %v7609 = vpack.c.b16 %v7363, %v7361
          %v7610 = vpack.c.b16 %v7364, %v7362
          %v7611 = vpack.c.b16 %v7367, %v7365
          %v7612 = vpack.c.b16 %v7368, %v7366
          %v7613 = vpack.c.b16 %v7371, %v7369
          %v7614 = vpack.c.b16 %v7372, %v7370
          %v7615 = vpack.c.b16 %v7375, %v7373
          %v7616 = vpack.c.b16 %v7376, %v7374
          %v7617 = vpack.c.b16 %v7379, %v7377
          %v7618 = vpack.c.b16 %v7380, %v7378
          %v7619 = vpack.c.b16 %v7383, %v7381
          %v7620 = vpack.c.b16 %v7384, %v7382
          %v7621 = vpack.c.b16 %v7387, %v7385
          %v7622 = vpack.c.b16 %v7388, %v7386
          %v7623 = vpack.c.b16 %v7391, %v7389
          %v7624 = vpack.c.b16 %v7392, %v7390
          %v7625 = vpack.c.b16 %v7395, %v7393
          %v7626 = vpack.c.b16 %v7396, %v7394
          %v7627 = vpack.c.b16 %v7399, %v7397
          %v7628 = vpack.c.b16 %v7400, %v7398
          %v7629 = vpack.c.b16 %v7403, %v7401
          %v7630 = vpack.c.b16 %v7404, %v7402
          %v7631 = vpack.c.b16 %v7407, %v7405
          %v7632 = vpack.c.b16 %v7408, %v7406
          %v7633 = vpack.c.b16 %v7411, %v7409
          %v7634 = vpack.c.b16 %v7412, %v7410
          %v7635 = vpack.c.b16 %v7415, %v7413
          %v7636 = vpack.c.b16 %v7416, %v7414
          %v7637 = vpack.c.b16 %v7419, %v7417
          %v7638 = vpack.c.b16 %v7420, %v7418
          %v7639 = vpack.c.b16 %v7423, %v7421
          %v7640 = vpack.c.b16 %v7424, %v7422
          %v7641 = vpack.c.b16 %v7427, %v7425
          %v7642 = vpack.c.b16 %v7428, %v7426
          %v7643 = vpack.c.b16 %v7431, %v7429
          %v7644 = vpack.c.b16 %v7432, %v7430
          %v7645 = vpack.c.b16 %v7435, %v7433
          %v7646 = vpack.c.b16 %v7436, %v7434
          %v7647 = vpack.c.b16 %v7439, %v7437
          %v7648 = vpack.c.b16 %v7440, %v7438
          %v7649 = vpack.c.b16 %v7443, %v7441
          %v7650 = vpack.c.b16 %v7444, %v7442
          %v7651 = vpack.c.b16 %v7447, %v7445
          %v7652 = vpack.c.b16 %v7448, %v7446
          %v7653 = vpack.c.b16 %v7451, %v7449
          %v7654 = vpack.c.b16 %v7452, %v7450
          %v7655 = vpack.c.b16 %v7455, %v7453
          %v7656 = vpack.c.b16 %v7456, %v7454
          %v7657 = vpack.c.b16 %v7459, %v7457
          %v7658 = vpack.c.b16 %v7460, %v7458
          %v7659 = vpack.c.b16 %v7463, %v7461
          %v7660 = vpack.c.b16 %v7464, %v7462
          %v7661 = vpack.c.b16 %v7467, %v7465
          %v7662 = vpack.c.b16 %v7468, %v7466
          %v7663 = vpack.c.b16 %v7471, %v7469
          %v7664 = vpack.c.b16 %v7472, %v7470
          %v7665 = vpack.c.b16 %v7475, %v7473
          %v7666 = vpack.c.b16 %v7476, %v7474
          %v7667 = vpack.c.b16 %v7479, %v7477
          %v7668 = vpack.c.b16 %v7480, %v7478
          %v7669 = vpack.c.b16 %v7483, %v7481
          %v7670 = vpack.c.b16 %v7484, %v7482
          %v7671 = vpack.c.b16 %v7487, %v7485
          %v7672 = vpack.c.b16 %v7488, %v7486
          %v7673 = vpack.c.b16 %v7491, %v7489
          %v7674 = vpack.c.b16 %v7492, %v7490
          %v7675 = vpack.c.b16 %v7495, %v7493
          %v7676 = vpack.c.b16 %v7496, %v7494
          %v7677 = vpack.c.b16 %v7499, %v7497
          %v7678 = vpack.c.b16 %v7500, %v7498
          %v7679 = vpack.c.b16 %v7503, %v7501
          %v7680 = vpack.c.b16 %v7504, %v7502
          %v7681 = vpack.c.b16 %v7507, %v7505
          %v7682 = vpack.c.b16 %v7508, %v7506
          %v7683 = vpack.c.b16 %v7511, %v7509
          %v7684 = vpack.c.b16 %v7512, %v7510
          %v7685 = vpack.c.b16 %v7515, %v7513
          %v7686 = vpack.c.b16 %v7516, %v7514
          %v7687 = vpack.c.b16 %v7519, %v7517
          %v7688 = vpack.c.b16 %v7520, %v7518
          %v7689 = vpack.c.b16 %v7523, %v7521
          %v7690 = vpack.c.b16 %v7524, %v7522
          %v7691 = vpack.c.b16 %v7527, %v7525
          %v7692 = vpack.c.b16 %v7528, %v7526
          %v7693 = vpack.c.b16 %v7531, %v7529
          %v7694 = vpack.c.b16 %v7532, %v7530
          %v7695 = vpack.c.b16 %v7535, %v7533
          %v7696 = vpack.c.b16 %v7536, %v7534
          %v7697 = vpack.c.b16 %v7539, %v7537
          %v7698 = vpack.c.b16 %v7540, %v7538
          %v7699 = vpack.c.b16 %v7543, %v7541
          %v7700 = vpack.c.b16 %v7544, %v7542
          %v7701 = vpack.c.b16 %v7547, %v7545
          %v7702 = vpack.c.b16 %v7548, %v7546
          %v7703 = vpack.c.b16 %v7551, %v7549
          %v7704 = vpack.c.b16 %v7552, %v7550
          %v7705 = vpack.c.b16 %v7555, %v7553
          %v7706 = vpack.c.b16 %v7556, %v7554
          %v7707 = vpack.c.b16 %v7559, %v7557
          %v7708 = vpack.c.b16 %v7560, %v7558
          %v7709 = vpack.c.b16 %v7563, %v7561
          %v7710 = vpack.c.b16 %v7564, %v7562
          %v7711 = vpack.c.b16 %v7567, %v7565
          %v7712 = vpack.c.b16 %v7568, %v7566
          %v7713 = vpack.c.b16 %v7571, %v7569
          %v7714 = vpack.c.b16 %v7572, %v7570
          %v7715 = vpack.c.b16 %v7575, %v7573
          %v7716 = vpack.c.b16 %v7576, %v7574
          %v7717 = vpack.c.b16 %v7579, %v7577
          %v7718 = vpack.c.b16 %v7580, %v7578
          %v7719 = vpack.c.b16 %v7583, %v7581
          %v7720 = vpack.c.b16 %v7584, %v7582
          %v7721 = vpack.c.b16 %v7587, %v7585
          %v7722 = vpack.c.b16 %v7588, %v7586
          %v7723 = vpack.c.b16 %v7591, %v7589
          %v7724 = vpack.c.b16 %v7592, %v7590
          %v7725 = vpack.c.b16 %v7595, %v7593
          %v7726 = vpack.c.b16 %v7596, %v7594
          %v7727 = vpack.c.b16 %v7599, %v7597
          %v7728 = vpack.c.b16 %v7600, %v7598
          %7857 = vmatprep.subr.bf16.mxu0 %v7602
          %7858 = vmatpush1.bf16.msra.mxu0 %v7601
          %7859 = vmatprep.subr.bf16.mxu0 %v7604
          %7860 = vmatpush1.bf16.msra.mxu0 %v7603
          %7861 = vmatprep.subr.bf16.mxu0 %v7606
          %7862 = vmatpush1.bf16.msra.mxu0 %v7605
          %7863 = vmatprep.subr.bf16.mxu0 %v7608
          %7864 = vmatpush1.bf16.msra.mxu0 %v7607
          %7865 = vmatprep.subr.bf16.mxu0 %v7610
          %7866 = vmatpush1.bf16.msra.mxu0 %v7609
          %7867 = vmatprep.subr.bf16.mxu0 %v7612
          %7868 = vmatpush1.bf16.msra.mxu0 %v7611
          %7869 = vmatprep.subr.bf16.mxu0 %v7614
          %7870 = vmatpush1.bf16.msra.mxu0 %v7613
          %7871 = vmatprep.subr.bf16.mxu0 %v7616
          %7872 = vmatpush1.bf16.msra.mxu0 %v7615
          %7873 = vmatprep.subr.bf16.mxu0 %v7618
          %7874 = vmatpush1.bf16.msra.mxu0 %v7617
          %7875 = vmatprep.subr.bf16.mxu0 %v7620
          %7876 = vmatpush1.bf16.msra.mxu0 %v7619
          %7877 = vmatprep.subr.bf16.mxu0 %v7622
          %7878 = vmatpush1.bf16.msra.mxu0 %v7621
          %7879 = vmatprep.subr.bf16.mxu0 %v7624
          %7880 = vmatpush1.bf16.msra.mxu0 %v7623
          %7881 = vmatprep.subr.bf16.mxu0 %v7626
          %7882 = vmatpush1.bf16.msra.mxu0 %v7625
          %7883 = vmatprep.subr.bf16.mxu0 %v7628
          %7884 = vmatpush1.bf16.msra.mxu0 %v7627
          %7885 = vmatprep.subr.bf16.mxu0 %v7630
          %7886 = vmatpush1.bf16.msra.mxu0 %v7629
          %7887 = vmatprep.subr.bf16.mxu0 %v7632
          %7888 = vmatpush1.bf16.msra.mxu0 %v7631
          %7889 = vmatprep.mubr.bf16.mxu0 %v7070
          %7890 = vmatmul.mubr.bf16.gmra.mrb[0].mxu0 %v7069
          %v7891 = vpop.f32.mrb[0].mxu0
          %v7892 = vadd.f32 %v7210, %v7891
          %v7893 = vpop.f32.mrb[0].mxu0
          %v7894 = vadd.f32 %v7214, %v7893
          %v7895 = vpop.f32.mrb[0].mxu0
          %v7896 = vpop.f32.mrb[0].mxu0
          %7897 = vdwg.mxu0
          %7898 = vmatprep.subr.bf16.mxu0 %v7634
          %7899 = vmatpush1.bf16.msra.mxu0 %v7633
          %7900 = vmatprep.subr.bf16.mxu0 %v7636
          %7901 = vmatpush1.bf16.msra.mxu0 %v7635
          %7902 = vmatprep.subr.bf16.mxu0 %v7638
          %7903 = vmatpush1.bf16.msra.mxu0 %v7637
          %7904 = vmatprep.subr.bf16.mxu0 %v7640
          %7905 = vmatpush1.bf16.msra.mxu0 %v7639
          %7906 = vmatprep.subr.bf16.mxu0 %v7642
          %7907 = vmatpush1.bf16.msra.mxu0 %v7641
          %7908 = vmatprep.subr.bf16.mxu0 %v7644
          %7909 = vmatpush1.bf16.msra.mxu0 %v7643
          %7910 = vmatprep.subr.bf16.mxu0 %v7646
          %7911 = vmatpush1.bf16.msra.mxu0 %v7645
          %7912 = vmatprep.subr.bf16.mxu0 %v7648
          %7913 = vmatpush1.bf16.msra.mxu0 %v7647
          %7914 = vmatprep.subr.bf16.mxu0 %v7650
          %7915 = vmatpush1.bf16.msra.mxu0 %v7649
          %7916 = vmatprep.subr.bf16.mxu0 %v7652
          %7917 = vmatpush1.bf16.msra.mxu0 %v7651
          %7918 = vmatprep.subr.bf16.mxu0 %v7654
          %7919 = vmatpush1.bf16.msra.mxu0 %v7653
          %7920 = vmatprep.subr.bf16.mxu0 %v7656
          %7921 = vmatpush1.bf16.msra.mxu0 %v7655
          %7922 = vmatprep.subr.bf16.mxu0 %v7658
          %7923 = vmatpush1.bf16.msra.mxu0 %v7657
          %7924 = vmatprep.subr.bf16.mxu0 %v7660
          %7925 = vmatpush1.bf16.msra.mxu0 %v7659
          %7926 = vmatprep.subr.bf16.mxu0 %v7662
          %7927 = vmatpush1.bf16.msra.mxu0 %v7661
          %7928 = vmatprep.subr.bf16.mxu0 %v7664
          %7929 = vmatpush1.bf16.msra.mxu0 %v7663
          %7930 = vmatprep.mubr.bf16.mxu0 %v7072
          %7931 = vmatmul.mubr.bf16.gmra.mrb[0].mxu0 %v7071
          %v7932 = vpop.f32.mrb[0].mxu0
          %v7933 = vadd.f32 %v7892, %v7932
          %v7934 = vpop.f32.mrb[0].mxu0
          %v7935 = vadd.f32 %v7894, %v7934
          %v7936 = vpop.f32.mrb[0].mxu0
          %v7937 = vpop.f32.mrb[0].mxu0
          %7938 = vdwg.mxu0
          %7939 = vmatprep.subr.bf16.mxu0 %v7666
          %7940 = vmatpush1.bf16.msra.mxu0 %v7665
          %7941 = vmatprep.subr.bf16.mxu0 %v7668
          %7942 = vmatpush1.bf16.msra.mxu0 %v7667
          %7943 = vmatprep.subr.bf16.mxu0 %v7670
          %7944 = vmatpush1.bf16.msra.mxu0 %v7669
          %7945 = vmatprep.subr.bf16.mxu0 %v7672
          %7946 = vmatpush1.bf16.msra.mxu0 %v7671
          %7947 = vmatprep.subr.bf16.mxu0 %v7674
          %7948 = vmatpush1.bf16.msra.mxu0 %v7673
          %7949 = vmatprep.subr.bf16.mxu0 %v7676
          %7950 = vmatpush1.bf16.msra.mxu0 %v7675
          %7951 = vmatprep.subr.bf16.mxu0 %v7678
          %7952 = vmatpush1.bf16.msra.mxu0 %v7677
          %7953 = vmatprep.subr.bf16.mxu0 %v7680
          %7954 = vmatpush1.bf16.msra.mxu0 %v7679
          %7955 = vmatprep.subr.bf16.mxu0 %v7682
          %7956 = vmatpush1.bf16.msra.mxu0 %v7681
          %7957 = vmatprep.subr.bf16.mxu0 %v7684
          %7958 = vmatpush1.bf16.msra.mxu0 %v7683
          %7959 = vmatprep.subr.bf16.mxu0 %v7686
          %7960 = vmatpush1.bf16.msra.mxu0 %v7685
          %7961 = vmatprep.subr.bf16.mxu0 %v7688
          %7962 = vmatpush1.bf16.msra.mxu0 %v7687
          %7963 = vmatprep.subr.bf16.mxu0 %v7690
          %7964 = vmatpush1.bf16.msra.mxu0 %v7689
          %7965 = vmatprep.subr.bf16.mxu0 %v7692
          %7966 = vmatpush1.bf16.msra.mxu0 %v7691
          %7967 = vmatprep.subr.bf16.mxu0 %v7694
          %7968 = vmatpush1.bf16.msra.mxu0 %v7693
          %7969 = vmatprep.subr.bf16.mxu0 %v7696
          %7970 = vmatpush1.bf16.msra.mxu0 %v7695
          %7971 = vmatprep.mubr.bf16.mxu0 %v7074
          %7972 = vmatmul.mubr.bf16.gmra.mrb[0].mxu0 %v7073
          %v7973 = vpop.f32.mrb[0].mxu0
          %v7974 = vadd.f32 %v7933, %v7973
          %v7975 = vpop.f32.mrb[0].mxu0
          %v7976 = vadd.f32 %v7935, %v7975
          %v7977 = vpop.f32.mrb[0].mxu0
          %v7978 = vpop.f32.mrb[0].mxu0
          %7979 = vdwg.mxu0
          %7980 = vmatprep.subr.bf16.mxu0 %v7698
          %7981 = vmatpush1.bf16.msra.mxu0 %v7697
          %7982 = vmatprep.subr.bf16.mxu0 %v7700
          %7983 = vmatpush1.bf16.msra.mxu0 %v7699
          %7984 = vmatprep.subr.bf16.mxu0 %v7702
          %7985 = vmatpush1.bf16.msra.mxu0 %v7701
          %7986 = vmatprep.subr.bf16.mxu0 %v7704
          %7987 = vmatpush1.bf16.msra.mxu0 %v7703
          %7988 = vmatprep.subr.bf16.mxu0 %v7706
          %7989 = vmatpush1.bf16.msra.mxu0 %v7705
          %7990 = vmatprep.subr.bf16.mxu0 %v7708
          %7991 = vmatpush1.bf16.msra.mxu0 %v7707
          %7992 = vmatprep.subr.bf16.mxu0 %v7710
          %7993 = vmatpush1.bf16.msra.mxu0 %v7709
          %7994 = vmatprep.subr.bf16.mxu0 %v7712
          %7995 = vmatpush1.bf16.msra.mxu0 %v7711
          %7996 = vmatprep.subr.bf16.mxu0 %v7714
          %7997 = vmatpush1.bf16.msra.mxu0 %v7713
          %7998 = vmatprep.subr.bf16.mxu0 %v7716
          %7999 = vmatpush1.bf16.msra.mxu0 %v7715
          %8000 = vmatprep.subr.bf16.mxu0 %v7718
          %8001 = vmatpush1.bf16.msra.mxu0 %v7717
          %8002 = vmatprep.subr.bf16.mxu0 %v7720
          %8003 = vmatpush1.bf16.msra.mxu0 %v7719
          %8004 = vmatprep.subr.bf16.mxu0 %v7722
          %8005 = vmatpush1.bf16.msra.mxu0 %v7721
          %8006 = vmatprep.subr.bf16.mxu0 %v7724
          %8007 = vmatpush1.bf16.msra.mxu0 %v7723
          %8008 = vmatprep.subr.bf16.mxu0 %v7726
          %8009 = vmatpush1.bf16.msra.mxu0 %v7725
          %8010 = vmatprep.subr.bf16.mxu0 %v7728
          %8011 = vmatpush1.bf16.msra.mxu0 %v7727
          %8012 = vmatprep.mubr.bf16.mxu0 %v7076
          %8013 = vmatmul.mubr.bf16.gmra.mrb[0].mxu0 %v7075
          %v8014 = vpop.f32.mrb[0].mxu0
          %v8015 = vadd.f32 %v7974, %v8014
          %v8016 = vpop.f32.mrb[0].mxu0
          %v8017 = vadd.f32 %v7976, %v8016
          %v8018 = vpop.f32.mrb[0].mxu0
          %v8019 = vpop.f32.mrb[0].mxu0
          %8020 = vdwg.mxu0
          %v8021 = vmax.f32 %v8015, 0.0
          %v8022 = vmax.f32 %v8017, 0.0
          %v8023 = vld [vmem:[#allocation12] sm:$0x3]
          %v8024 = vunpack.c.l.bf16 %v8023
          %v8026 = vlaneseq
          %v8027 = vshrl.u32 %v8026, 7
          %v8028 = vsub.s32 0, %v8027
          %v8029 = vrot.slane %v8024, %v8028
          %v8030 = vlaneseq
          %v8031 = vshrl.u32 %v8030, 7
          %v8032 = vsub.s32 2, %v8031
          %v8033 = vrot.slane %v8024, %v8032
          %v8036 = vlaneseq
          %v8037 = vshrl.u32 %v8036, 7
          %v8038 = vsub.s32 0, %v8037
          %v8039 = vrot.slane %v8029, %v8038
          %v8040 = vlaneseq
          %v8041 = vshrl.u32 %v8040, 7
          %v8042 = vsub.s32 0, %v8041
          %v8043 = vrot.slane %v8033, %v8042
          %v8044 = vmul.f32 %v8021, %v8039
          %v8045 = vmul.f32 %v8022, %v8043
          %v8046 = vadd.f32 %v8044, %v8045
          %8047 = vadd.xlane.f32.xlu0 %v8046
          %v8048 = vpop.xlane.xlu0 %8047
          %v8049 = vld [vmem:[#allocation3] sm:$0x1]
          %v8051 = vlaneseq
          %v8052 = vshrl.u32 %v8051, 7
          %v8053 = vsub.s32 0, %v8052
          %v8054 = vrot.slane %v8049, %v8053
          %v8056 = vadd.f32 %v8048, %v8054
          %vm8057 = vcmask 7168
          %8058 = vst.msk [vmem:[%s8] sm:$0xff] %vm8057, %v8056
          %v8059 = vsub.f32 %v8056, %v8056
          %v8060 = vmul.f32 %v8059, 1.442695
          %v8061 = vpow.pop %v8060
          %v8062 = vadd.f32 %v8061, 0.0
          %v8063 = vrcp.pop %v8062
          %v8064 = vmul.f32 %v8061, %v8063
          %8065 = vst.msk [vmem:[%s7] sm:$0xff] %vm8057, %v8064
        $region80: #{tpu_custom_call.1} parent=47 // pred_fallthru
          _
        // Predicated region
        $region81: #{tpu_custom_call.1} parent=47 // pred_check
          %p8066 = pneg %p193
        $region82: #{tpu_custom_call.1} parent=47 // pred_check_branch
          %8068 = sbr.rel (%p8066) target = $region84
        $region83: #{tpu_custom_call.1} parent=47 // pred_region
          _
        $region84: #{tpu_custom_call.1} parent=47 // pred_fallthru
          _
        // Predicated region
        $region85: #{tpu_custom_call.1} parent=47 // pred_check
          %p8069 = pneg %p214
        $region86: #{tpu_custom_call.1} parent=47 // pred_check_branch
          %8071 = sbr.rel (%p8069) target = $region88
        $region87: #{tpu_custom_call.1} parent=47 // pred_region
          _
        $region88: #{tpu_custom_call.1} parent=47 // pred_fallthru
          _
        // Predicated region
        $region89: #{tpu_custom_call.1} parent=47 // pred_check
          %p8072 = pneg %p193
        $region90: #{tpu_custom_call.1} parent=47 // pred_check_branch
          %8074 = sbr.rel (%p8072) target = $region92
        $region91: #{tpu_custom_call.1} parent=47 // pred_region
          _
        $region92: #{tpu_custom_call.1} parent=47 // pred_fallthru
          _
        // Predicated region
        $region93: #{tpu_custom_call.1} parent=47 // pred_check
          %p8075 = pneg %p214
        $region94: #{tpu_custom_call.1} parent=47 // pred_check_branch
          %8077 = sbr.rel (%p8075) target = $region96
        $region95: #{tpu_custom_call.1} parent=47 // pred_region
          _
        $region96: #{tpu_custom_call.1} parent=47 // pred_fallthru
          _
      $region48: #{tpu_custom_call.1} parent=5 // pred_fallthru
        _
      %p8078 = scmp.le.s32.totalorder 2, %s23
      // Predicated region
      $region97: #{tpu_custom_call.1} parent=5 // pred_check
        %p8079 = pneg %p8078
      $region98: #{tpu_custom_call.1} parent=5 // pred_check_branch
        %8081 = sbr.rel (%p8079) target = $region100
      $region99: #{tpu_custom_call.1} parent=5 // pred_region
        %s8082 = ssub.s32 %s23, 2
      $region100: #{tpu_custom_call.1} parent=5 // pred_fallthru
        _
    $region6: #{tpu_custom_call.1} parent=1 // loop_footer
      %s27 = sadd.s32 1, %s23
    $region7: #{tpu_custom_call.1} parent=1 // loop_footer_branch
      %22 = sbr.rel target = $region3
    $region8: #{tpu_custom_call.1} parent=1 // loop_exit
      _
    %8083 = vsyncpa [#allocation5], 1
    %s8084 = scalar_lea.sflag [#allocation5], 1
    %8085 = vsyncpa %s8084, 1
    %8086 = vsyncpa [#allocation7], 1
    %s8087 = scalar_lea.sflag [#allocation7], 1
    %8088 = vsyncpa %s8087, 1
    %8089 = vsyncpa [#allocation10], 1
    %8090 = vsyncpa [#allocation13], 1

</llo_original>
